<compile_context>
chip_gen: v7x
topology: tpu7x:2x2x1
jax: 0.10.0
libtpu: 0.0.40
codegen_flags: <defaults>
</compile_context>

<pallas_src>
import functools
import math

import jax
import jax.numpy as jnp
from jax.experimental import pallas as pl
from jax.experimental.pallas import tpu as pltpu


# --------------------------------------------------------------------------------------
# helpers
# --------------------------------------------------------------------------------------

def _round_up(n, m):
    return ((n + m - 1) // m) * m


def _pick_tile(n, candidates):
    for c in candidates:
        if n % c == 0:
            return c
    return n


def _sigmoid(x):
    # explicit form (exp lowers to EUP)
    return 1.0 / (1.0 + jnp.exp(-x))


W_SCALE = -math.exp(-0.5)   # fla RWKV7Attention: w = -exp(-0.5) * sigmoid(w_lora(xw))


# --------------------------------------------------------------------------------------
# Linear (tiled, optional bias / ReLU)
# --------------------------------------------------------------------------------------

def _linear_kernel(x_ref, w_ref, *rest, relu, has_bias):
    if has_bias:
        b_ref, o_ref = rest
    else:
        (o_ref,) = rest
    acc = jnp.dot(x_ref[...], w_ref[...], preferred_element_type=jnp.float32)
    if has_bias:
        acc = acc + b_ref[...]
    if relu:
        acc = jnp.maximum(acc, 0.0)
    o_ref[...] = acc.astype(o_ref.dtype)


def pallas_linear(x, w, b=None, relu=False):
    """y = x @ w (+ b).  x: (..., K), w: (K, N) (PyTorch Linear weight pre-transposed)."""
    orig_shape = x.shape
    K = orig_shape[-1]
    N = w.shape[1]
    x2 = x.reshape(-1, K)
    M = x2.shape[0]
    bm = min(256, _round_up(M, 8))
    Mp = _round_up(M, bm)
    if Mp != M:
        x2 = jnp.pad(x2, ((0, Mp - M), (0, 0)))
    bn = N if N <= 512 else _pick_tile(N, (512, 384, 256, 128))
    grid = (Mp // bm, N // bn)
    in_specs = [
        pl.BlockSpec((bm, K), lambda i, j: (i, 0)),
        pl.BlockSpec((K, bn), lambda i, j: (0, j)),
    ]
    args = [x2, w]
    has_bias = b is not None
    if has_bias:
        in_specs.append(pl.BlockSpec((1, bn), lambda i, j: (0, j)))
        args.append(b.reshape(1, N).astype(jnp.float32))
    out = pl.pallas_call(
        functools.partial(_linear_kernel, relu=relu, has_bias=has_bias),
        out_shape=jax.ShapeDtypeStruct((Mp, N), x.dtype),
        grid=grid,
        in_specs=in_specs,
        out_specs=pl.BlockSpec((bm, bn), lambda i, j: (i, j)),
        compiler_params=pltpu.CompilerParams(dimension_semantics=("parallel", "parallel")),
    )(*args)
    if Mp != M:
        out = out[:M]
    return out.reshape(*orig_shape[:-1], N)


# --------------------------------------------------------------------------------------
# Fused token-shift mixes + r/k/v projections + all LoRA branches (one pallas_call)
# --------------------------------------------------------------------------------------

def _proj_kernel(x_ref, dx_ref, mix_ref,
                 rw_ref, kw_ref, vw_ref,
                 wa_ref, wb_ref, wbias_ref,
                 aa_ref, ab_ref, abias_ref,
                 ga_ref, gb_ref,
                 *rest, has_vmix):
    if has_vmix:
        va_ref, vb_ref, vbias_ref = rest[:3]
        r_ref, k_ref, v_ref, w_ref, a_ref, g_ref, vm_ref = rest[3:]
    else:
        r_ref, k_ref, v_ref, w_ref, a_ref, g_ref = rest

    f32 = jnp.float32
    x = x_ref[...]
    dx = dx_ref[...]
    mix = mix_ref[...]                      # (6, K): rows = x_r, x_w, x_k, x_v, x_a, x_g
    xr = x + dx * mix[0:1, :]
    xw = x + dx * mix[1:2, :]
    xk = x + dx * mix[2:3, :]
    xv = x + dx * mix[3:4, :]
    xa = x + dx * mix[4:5, :]
    xg = x + dx * mix[5:6, :]

    r_ref[...] = jnp.dot(xr, rw_ref[...], preferred_element_type=f32).astype(r_ref.dtype)
    k_ref[...] = jnp.dot(xk, kw_ref[...], preferred_element_type=f32).astype(k_ref.dtype)
    v_ref[...] = jnp.dot(xv, vw_ref[...], preferred_element_type=f32).astype(v_ref.dtype)

    hw = jnp.tanh(jnp.dot(xw, wa_ref[...], preferred_element_type=f32))
    wv = _sigmoid(jnp.dot(hw, wb_ref[...], preferred_element_type=f32) + wbias_ref[...]) * W_SCALE
    w_ref[...] = wv.astype(w_ref.dtype)

    ha = jnp.dot(xa, aa_ref[...], preferred_element_type=f32)
    av = _sigmoid(jnp.dot(ha, ab_ref[...], preferred_element_type=f32) + abias_ref[...])
    a_ref[...] = av.astype(a_ref.dtype)

    hg = _sigmoid(jnp.dot(xg, ga_ref[...], preferred_element_type=f32))
    g_ref[...] = jnp.dot(hg, gb_ref[...], preferred_element_type=f32).astype(g_ref.dtype)

    if has_vmix:
        hv = jnp.dot(xv, va_ref[...], preferred_element_type=f32)
        vmv = _sigmoid(jnp.dot(hv, vb_ref[...], preferred_element_type=f32) + vbias_ref[...])
        vm_ref[...] = vmv.astype(vm_ref.dtype)


def pallas_fused_proj(x2, dx2, mix, attn, has_vmix):
    M, K = x2.shape
    D = attn['r_w'].shape[1]
    bm = min(128, _round_up(M, 8))
    Mp = _round_up(M, bm)
    if Mp != M:
        x2 = jnp.pad(x2, ((0, Mp - M), (0, 0)))
        dx2 = jnp.pad(dx2, ((0, Mp - M), (0, 0)))
    bn = D if D <= 512 else _pick_tile(D, (512, 256, 128))
    grid = (Mp // bm, D // bn)

    row = pl.BlockSpec((bm, K), lambda i, j: (i, 0))
    wcol = pl.BlockSpec((K, bn), lambda i, j: (0, j))
    bias = pl.BlockSpec((1, bn), lambda i, j: (0, j))
    mix_spec = pl.BlockSpec((6, K), lambda i, j: (0, 0))

    def lora_a_spec(rank):
        return pl.BlockSpec((K, rank), lambda i, j: (0, 0))

    def lora_b_spec(rank):
        return pl.BlockSpec((rank, bn), lambda i, j: (0, j))

    Rw = attn['w_lora_a'].shape[1]
    Ra = attn['a_lora_a'].shape[1]
    Rg = attn['g_lora_a'].shape[1]

    in_specs = [row, row, mix_spec,
                wcol, wcol, wcol,
                lora_a_spec(Rw), lora_b_spec(Rw), bias,
                lora_a_spec(Ra), lora_b_spec(Ra), bias,
                lora_a_spec(Rg), lora_b_spec(Rg)]
    args = [x2, dx2, mix,
            attn['r_w'], attn['k_w'], attn['v_w'],
            attn['w_lora_a'], attn['w_lora_b'], attn['w_lora_bias'].reshape(1, D),
            attn['a_lora_a'], attn['a_lora_b'], attn['a_lora_bias'].reshape(1, D),
            attn['g_lora_a'], attn['g_lora_b']]
    n_out = 6
    if has_vmix:
        Rv = attn['v_lora_a'].shape[1]
        in_specs += [lora_a_spec(Rv), lora_b_spec(Rv), bias]
        args += [attn['v_lora_a'], attn['v_lora_b'], attn['v_lora_bias'].reshape(1, D)]
        n_out = 7

    out_block = pl.BlockSpec((bm, bn), lambda i, j: (i, j))
    outs = pl.pallas_call(
        functools.partial(_proj_kernel, has_vmix=has_vmix),
        out_shape=[jax.ShapeDtypeStruct((Mp, D), x2.dtype) for _ in range(n_out)],
        grid=grid,
        in_specs=in_specs,
        out_specs=[out_block] * n_out,
        compiler_params=pltpu.CompilerParams(dimension_semantics=("parallel", "parallel")),
    )(*args)
    if Mp != M:
        outs = tuple(o[:M] for o in outs)
    return tuple(outs)


# --------------------------------------------------------------------------------------
# LayerNorm
# --------------------------------------------------------------------------------------

def _norm_kernel(x_ref, g_ref, b_ref, o_ref, *, eps):
    x = x_ref[...].astype(jnp.float32)
    mu = jnp.mean(x, axis=-1, keepdims=True)
    xc = x - mu
    var = jnp.mean(xc * xc, axis=-1, keepdims=True)        # biased variance (torch semantics)
    y = xc * jax.lax.rsqrt(var + eps)
    o_ref[...] = (y * g_ref[...] + b_ref[...]).astype(o_ref.dtype)


def layernorm(x, gamma, beta, eps=1e-5):
    shp = x.shape
    D = shp[-1]
    x2 = x.reshape(-1, D)
    M = x2.shape[0]
    bm = min(256, _round_up(M, 8))
    Mp = _round_up(M, bm)
    if Mp != M:
        x2 = jnp.pad(x2, ((0, Mp - M), (0, 0)))
    out = pl.pallas_call(
        functools.partial(_norm_kernel, eps=eps),
        out_shape=jax.ShapeDtypeStruct((Mp, D), x2.dtype),
        grid=(Mp // bm,),
        in_specs=[
            pl.BlockSpec((bm, D), lambda i: (i, 0)),
            pl.BlockSpec((1, D), lambda i: (0, 0)),
            pl.BlockSpec((1, D), lambda i: (0, 0)),
        ],
        out_specs=pl.BlockSpec((bm, D), lambda i: (i, 0)),
        compiler_params=pltpu.CompilerParams(dimension_semantics=("parallel",)),
    )(x2, gamma.reshape(1, D).astype(jnp.float32), beta.reshape(1, D).astype(jnp.float32))
    if Mp != M:
        out = out[:M]
    return out.reshape(shp)


# --------------------------------------------------------------------------------------
# Fused GroupNorm (per head) + affine + add residual term + gate-by-g
#   y = (GroupNorm(o) * w + b + extra) * g          (matches fla: o_proj((GN(o)+rk*v)*g))
# --------------------------------------------------------------------------------------

def _gn_gate_kernel(x_ref, g_ref, e_ref, w_ref, b_ref, o_ref, *, eps):
    x = x_ref[...].astype(jnp.float32)                       # (bm, H, Dv)
    mu = jnp.mean(x, axis=-1, keepdims=True)
    xc = x - mu
    var = jnp.mean(xc * xc, axis=-1, keepdims=True)
    y = xc * jax.lax.rsqrt(var + eps)
    y = y * w_ref[...] + b_ref[...]
    y = (y + e_ref[...].astype(jnp.float32)) * g_ref[...].astype(jnp.float32)
    o_ref[...] = y.astype(o_ref.dtype)


def pallas_groupnorm_gate(o, g, extra, gn_w, gn_b, eps):
    # o, extra: (B, T, H, Dv);  g: (B, T, H*Dv)
    B, T, H, Dv = o.shape
    M = B * T
    bm = min(256, _round_up(M, 8))
    Mp = _round_up(M, bm)
    o2 = o.reshape(M, H, Dv)
    g2 = g.reshape(M, H, Dv)
    e2 = extra.reshape(M, H, Dv)
    if Mp != M:
        pad = ((0, Mp - M), (0, 0), (0, 0))
        o2, g2, e2 = jnp.pad(o2, pad), jnp.pad(g2, pad), jnp.pad(e2, pad)
    row = pl.BlockSpec((bm, H, Dv), lambda i: (i, 0, 0))
    par = pl.BlockSpec((1, H, Dv), lambda i: (0, 0, 0))
    out = pl.pallas_call(
        functools.partial(_gn_gate_kernel, eps=eps),
        out_shape=jax.ShapeDtypeStruct((Mp, H, Dv), g.dtype),
        grid=(Mp // bm,),
        in_specs=[row, row, row, par, par],
        out_specs=row,
        compiler_params=pltpu.CompilerParams(dimension_semantics=("parallel",)),
    )(o2, g2, e2,
      gn_w.reshape(1, H, Dv).astype(jnp.float32), gn_b.reshape(1, H, Dv).astype(jnp.float32))
    if Mp != M:
        out = out[:M]
    return out.reshape(B, T, H * Dv)


# --------------------------------------------------------------------------------------
# RWKV-7 recurrence, chunk-parallel (matmul) form.
#
#   S_t = S_{t-1} diag(exp(w_t)) + (S_{t-1} a_t) b_t^T + v_t k_t^T ,   o_t = S_t r_t
#
# Per chunk (exact):
#   W_i = cumsum(w), g_i = exp(W_i);   a^ = a*exp(W_{i-1}), r^ = r*g, b~ = b/g, k~ = k/g
#   u_i = S0 a^_i + sum_{j<i}(b~_j.a^_i) u_j + sum_{j<i}(k~_j.a^_i) v_j
#     =>  U = (I - strict_tril(A^ B~^T))^{-1} (A^ S0^T + strict_tril(A^ K~^T) V)
#   O = R^ S0^T + tril(R^ B~^T) U + tril(R^ K~^T) V
#   S_C = (S0 + U^T B~ + V^T K~) * g_C
# The unit-lower-triangular inverse is computed with a log2(C) Neumann-doubling scheme
# (pure MXU matmuls).  State (H, Dv, Dk) fp32 lives in VMEM scratch and is reset at the
# first chunk of each batch row (chunk axis is the innermost, sequentially iterated axis).
# --------------------------------------------------------------------------------------

def _bdot(x, y, cx, cy):
    # batched (over leading head dim) dot_general contracting x dim cx with y dim cy
    return jax.lax.dot_general(
        x, y,
        dimension_numbers=(((cx,), (cy,)), ((0,), (0,))),
        preferred_element_type=jnp.float32)


def _rwkv7_chunk_kernel(r_ref, w_ref, k_ref, v_ref, a_ref, b_ref, o_ref, S_ref):
    # blocks: (1, C, H, Dk) for r/w/k/a/b, (1, C, H, Dv) for v/o;  S_ref: (H, Dv, Dk) fp32
    @pl.when(pl.program_id(1) == 0)
    def _():
        S_ref[...] = jnp.zeros_like(S_ref)

    def hct(ref):
        # (1, C, H, D) block -> (H, C, D) f32   (free for H == 1)
        return jnp.transpose(ref[0].astype(jnp.float32), (1, 0, 2))

    r = hct(r_ref); w = hct(w_ref); k = hct(k_ref)
    v = hct(v_ref); a = hct(a_ref); b = hct(b_ref)
    H = r.shape[0]
    C = r.shape[1]

    ii = jax.lax.broadcasted_iota(jnp.int32, (C, C), 0)
    jj = jax.lax.broadcasted_iota(jnp.int32, (C, C), 1)
    incl = ii >= jj
    strict = ii > jj
    tril_ones = jnp.broadcast_to(incl.astype(jnp.float32), (H, C, C))

    # cumulative log-decay along time (one MXU matmul, no EUP/XLU on any per-step path)
    W_inc = _bdot(tril_ones, w, 2, 1)                       # (H, C, Dk)
    W_exc = W_inc - w
    g_inc = jnp.exp(W_inc)
    g_exc = jnp.exp(W_exc)
    g_inv = jnp.exp(-W_inc)
    g_last = g_inc[:, C - 1:C, :]                           # (H, 1, Dk)

    a_hat = a * g_exc
    r_hat = r * g_inc
    b_til = b * g_inv
    k_til = k * g_inv

    S0 = S_ref[...]                                         # (H, Dv, Dk)

    L_ab = jnp.where(strict, _bdot(a_hat, b_til, 2, 2), 0.0)    # (H, C, C)
    L_ak = jnp.where(strict, _bdot(a_hat, k_til, 2, 2), 0.0)
    M_rb = jnp.where(incl, _bdot(r_hat, b_til, 2, 2), 0.0)
    M_rk = jnp.where(incl, _bdot(r_hat, k_til, 2, 2), 0.0)

    # U = (I - L_ab)^{-1} (A^ S0^T + L_ak V)
    X = _bdot(a_hat, S0, 2, 2) + _bdot(L_ak, v, 2, 1)       # (H, C, Dv)
    eye = (ii == jj).astype(jnp.float32)
    Tm = eye + L_ab                                         # I + L
    P = L_ab
    span = 2
    while span < C:                                         # Neumann doubling (static loop)
        P = _bdot(P, P, 2, 1)
        Tm = Tm + _bdot(P, Tm, 2, 1)
        span *= 2
    U = _bdot(Tm, X, 2, 1)                                  # (H, C, Dv)

    # per-step outputs for the chunk
    O = _bdot(r_hat, S0, 2, 2) + _bdot(M_rb, U, 2, 1) + _bdot(M_rk, v, 2, 1)

    # end-of-chunk state
    S_ref[...] = (S0 + _bdot(U, b_til, 1, 1) + _bdot(v, k_til, 1, 1)) * g_last

    o_ref[0] = jnp.transpose(O, (1, 0, 2)).astype(o_ref.dtype)   # dense (C, H, Dv) store


def rwkv7_recurrence(r, w, k, v, a, b):
    """Inputs (B, T, H, D) in native layout. Returns o of shape (B, T, H, Dv);
    zero initial state, scale = 1.0 (matches fla chunk_rwkv7 semantics)."""
    B, T, H, Dk = r.shape
    Dv = v.shape[-1]

    C = min(64, _round_up(T, 8))       # C<=64 keeps exp(|cumsum(w)|) comfortably inside f32
    Tp = _round_up(T, C)
    if Tp != T:
        # zero-pad time: w=0 -> decay 1, k=v=a=b=0 -> state untouched; padded outputs dropped
        pad = ((0, 0), (0, Tp - T), (0, 0), (0, 0))
        r, w, k, v, a, b = (jnp.pad(t, pad) for t in (r, w, k, v, a, b))
    NC = Tp // C

    spec_k = pl.BlockSpec((1, C, H, Dk), lambda i, c: (i, c, 0, 0))
    spec_v = pl.BlockSpec((1, C, H, Dv), lambda i, c: (i, c, 0, 0))
    o = pl.pallas_call(
        _rwkv7_chunk_kernel,
        out_shape=jax.ShapeDtypeStruct((B, Tp, H, Dv), v.dtype),
        grid=(B, NC),                       # chunk axis innermost & sequential -> state carry OK
        in_specs=[spec_k, spec_k, spec_k, spec_v, spec_k, spec_k],
        out_specs=spec_v,
        scratch_shapes=[pltpu.VMEM((H, Dv, Dk), jnp.float32)],
        compiler_params=pltpu.CompilerParams(dimension_semantics=("parallel", "arbitrary")),
    )(r, w, k, v, a, b)
    if Tp != T:
        o = o[:, :T]
    return o


# --------------------------------------------------------------------------------------
# Model (glue around the Pallas kernels)
# --------------------------------------------------------------------------------------

def rwkv7_attention(p, x, v_first, layer_idx, H, Dk, Dv):
    B, T, D = x.shape
    M = B * T

    # time_shift = ZeroPad2d((0,0,1,-1)): prepend a zero token, drop the last one
    shifted = jnp.pad(x, ((0, 0), (1, 0), (0, 0)))[:, :T, :]
    delta = shifted - x
    x2 = x.reshape(M, D)
    dx2 = delta.reshape(M, D)

    mix = jnp.stack([p['x_r'], p['x_w'], p['x_k'], p['x_v'], p['x_a'], p['x_g']], axis=0)
    has_vmix = layer_idx != 0
    outs = pallas_fused_proj(x2, dx2, mix, p, has_vmix)
    if has_vmix:
        r2, k2, v2, w2, a2, g2, vm2 = outs
    else:
        r2, k2, v2, w2, a2, g2 = outs

    r = r2.reshape(B, T, D)
    k = k2.reshape(B, T, D)
    v = v2.reshape(B, T, D)
    w = w2.reshape(B, T, D)
    a = a2.reshape(B, T, D)
    g = g2.reshape(B, T, D)

    if layer_idx == 0:
        v_first = v
    else:
        v_mix = vm2.reshape(B, T, D)
        v = v + v_mix * (v_first - v)                      # torch.lerp(v, v_first, v_mix)

    kk = k * p['k_k']
    kk_h = kk.reshape(B, T, H, Dk)
    kk_h = kk_h / jnp.maximum(
        jnp.sqrt(jnp.sum(kk_h * kk_h, axis=-1, keepdims=True)), 1e-12)   # F.normalize
    k_mod = k * (1.0 + (a - 1.0) * p['k_a'])

    r_h = r.reshape(B, T, H, Dk)
    w_h = w.reshape(B, T, H, Dk)
    k_h = k_mod.reshape(B, T, H, Dk)
    v_h = v.reshape(B, T, H, Dv)
    a_h = a.reshape(B, T, H, Dk)

    o = rwkv7_recurrence(r_h, w_h, k_h, v_h, -kk_h, kk_h * a_h)          # (B, T, H, Dv)

    # o = o_proj( (GroupNorm(o) + (r.k.r_k).sum * v) * g )
    rk = jnp.sum(r_h * k_h * p['r_k'][None, None], axis=-1, keepdims=True)   # (B,T,H,1)
    extra = rk * v_h
    o_n = pallas_groupnorm_gate(o, g, extra, p['gn_w'], p['gn_b'], eps=Dk * 1e-5)
    o_out = pallas_linear(o_n, p['o_w'])
    return o_out, v_first


def cmix(p, x):
    h = pallas_linear(x, p['w1'], p['b1'], relu=True)
    return pallas_linear(h, p['w2'], p['b2'])


def rwkv7_block(p, x, v_first, layer_idx, H, Dk, Dv):
    h = layernorm(x, p['ln1_w'], p['ln1_b'])
    attn_out, v_first = rwkv7_attention(p['attn'], h, v_first, layer_idx, H, Dk, Dv)
    x = x + attn_out
    h = layernorm(x, p['ln2_w'], p['ln2_b'])
    x = x + cmix(p['mlp'], h)
    return x, v_first


@functools.partial(jax.jit, static_argnums=(2, 3))
def rwkv7_forward(params, audio_tokens, num_heads, head_dim):
    # RWKV7.forward, branch `text is None and audio is not None`:  x = audio_embed(audio)
    # TODO(synk): the (text, audio) branch does data-dependent ragged mask/concat/padding in
    # Python; that dynamic-shape logic has no static Pallas equivalent and is not exercised.
    x = jnp.take(params['audio_embed'], audio_tokens, axis=0)   # (B, T, D)
    x = layernorm(x, params['norm_in_w'], params['norm_in_b'])
    v_first = None
    for i, blk in enumerate(params['blocks']):
        x, v_first = rwkv7_block(blk, x, v_first, i, num_heads, head_dim, head_dim)
    x = layernorm(x, params['norm_out_w'], params['norm_out_b'])
    return pallas_linear(x, params['lmhead_w'], params['lmhead_b'])  # (B, T, audio_vocab)


# --------------------------------------------------------------------------------------
# Deterministic parameter initialization (synthetic; shapes follow the module __init__)
# --------------------------------------------------------------------------------------

def _dense(key, fan_in, fan_out):
    return (1.0 / math.sqrt(fan_in)) * jax.random.normal(key, (fan_in, fan_out), jnp.float32)


def init_params(key, text_vocab, audio_vocab, dim, n_blocks, head_dim,
                decay_lr=16, a_lr=16, v_lr=8, g_lr=16):
    H = dim // head_dim
    keys = iter(jax.random.split(key, 512))
    nk = lambda: next(keys)
    params = {
        'audio_embed': 0.02 * jax.random.normal(nk(), (audio_vocab, dim), jnp.float32),
        'text_embed': 0.02 * jax.random.normal(nk(), (text_vocab, dim), jnp.float32),
        'norm_in_w': jnp.ones((dim,), jnp.float32), 'norm_in_b': jnp.zeros((dim,), jnp.float32),
        'norm_out_w': jnp.ones((dim,), jnp.float32), 'norm_out_b': jnp.zeros((dim,), jnp.float32),
        'lmhead_w': _dense(nk(), dim, audio_vocab),
        'lmhead_b': jnp.zeros((audio_vocab,), jnp.float32),
        'blocks': [],
    }
    for i in range(n_blocks):
        attn = {
            'x_r': 0.1 * jax.random.normal(nk(), (dim,), jnp.float32),
            'x_w': 0.1 * jax.random.normal(nk(), (dim,), jnp.float32),
            'x_k': 0.1 * jax.random.normal(nk(), (dim,), jnp.float32),
            'x_v': 0.1 * jax.random.normal(nk(), (dim,), jnp.float32),
            'x_a': 0.1 * jax.random.normal(nk(), (dim,), jnp.float32),
            'x_g': 0.1 * jax.random.normal(nk(), (dim,), jnp.float32),
            'r_w': _dense(nk(), dim, dim),
            'k_w': _dense(nk(), dim, dim),
            'v_w': _dense(nk(), dim, dim),
            'o_w': _dense(nk(), dim, dim),
            'w_lora_a': _dense(nk(), dim, decay_lr),
            'w_lora_b': _dense(nk(), decay_lr, dim),
            'w_lora_bias': 0.1 * jax.random.normal(nk(), (dim,), jnp.float32),
            'a_lora_a': _dense(nk(), dim, a_lr),
            'a_lora_b': _dense(nk(), a_lr, dim),
            'a_lora_bias': jnp.zeros((dim,), jnp.float32),
            'g_lora_a': _dense(nk(), dim, g_lr),
            'g_lora_b': _dense(nk(), g_lr, dim),
            'k_k': 0.85 * jnp.ones((dim,), jnp.float32),
            'k_a': jnp.ones((dim,), jnp.float32),
            'r_k': 0.05 * jax.random.normal(nk(), (H, head_dim), jnp.float32),
            'gn_w': jnp.ones((dim,), jnp.float32),
            'gn_b': jnp.zeros((dim,), jnp.float32),
        }
        if i != 0:   # v_lora only exists for layer_idx != 0
            attn['v_lora_a'] = _dense(nk(), dim, v_lr)
            attn['v_lora_b'] = _dense(nk(), v_lr, dim)
            attn['v_lora_bias'] = jnp.zeros((dim,), jnp.float32)
        mlp = {
            'w1': _dense(nk(), dim, 2 * dim), 'b1': jnp.zeros((2 * dim,), jnp.float32),
            'w2': _dense(nk(), 2 * dim, dim), 'b2': jnp.zeros((dim,), jnp.float32),
        }
        params['blocks'].append({
            'attn': attn, 'mlp': mlp,
            'ln1_w': jnp.ones((dim,), jnp.float32), 'ln1_b': jnp.zeros((dim,), jnp.float32),
            'ln2_w': jnp.ones((dim,), jnp.float32), 'ln2_b': jnp.zeros((dim,), jnp.float32),
        })
    return params


if __name__ == "__main__":
    key = jax.random.PRNGKey(0)
    pkey, dkey = jax.random.split(key)

    text_vocab, audio_vocab = 64, 128
    dim, n_blocks, head_dim = 64, 2, 64       # 1 head of size 64
    B, T = 2, 8

    params = init_params(pkey, text_vocab, audio_vocab, dim, n_blocks, head_dim)
    audio = jax.random.randint(dkey, (B, T), 0, audio_vocab, dtype=jnp.int32)

    # RWKV7.forward(text=None, text_attention_mask=None, audio=audio)
    logits = rwkv7_forward(params, audio, dim // head_dim, head_dim)
    logits = jax.block_until_ready(logits)

    assert logits.shape == (B, T, audio_vocab), logits.shape
    assert bool(jnp.all(jnp.isfinite(logits)))
    print("KERNEL_OK")
</pallas_src>

<mosaic_0001>
module attributes {stable_mosaic.version = 11 : i64} {
  func.func @_norm_kernel(%arg0: i32, %arg1: memref<16x64xf32, #tpu.memory_space<vmem>>, %arg2: memref<1x64xf32, #tpu.memory_space<vmem>>, %arg3: memref<1x64xf32, #tpu.memory_space<vmem>>, %arg4: memref<16x64xf32, #tpu.memory_space<vmem>>) attributes {dimension_semantics = [#tpu.dimension_semantics<parallel>], iteration_bounds = array<i64: 1>, scalar_prefetch = 0 : i64, scratch_operands = 0 : i64, tpu.core_type = #tpu.core_type<tc>, window_params = [{transform_indices = @transform_0, window_bounds = array<i64: 16, 64>}, {pipeline_mode = #tpu.pipeline_mode<synchronous>, transform_indices = @transform_1, window_bounds = array<i64: 1, 64>}, {pipeline_mode = #tpu.pipeline_mode<synchronous>, transform_indices = @transform_2, window_bounds = array<i64: 1, 64>}, {transform_indices = @transform_3, window_bounds = array<i64: 16, 64>}]} {
    %c0 = arith.constant 0 : index
    %c0_0 = arith.constant 0 : index
    %0 = vector.load %arg1[%c0, %c0_0] : memref<16x64xf32, #tpu.memory_space<vmem>>, vector<16x64xf32>
    %cst = arith.constant dense<0.000000e+00> : vector<16xf32>
    %1 = vector.multi_reduction <add>, %0, %cst [1] : vector<16x64xf32> to vector<16xf32>
    %2 = vector.shape_cast %1 : vector<16xf32> to vector<16x1xf32>
    %cst_1 = arith.constant 6.400000e+01 : f32
    %3 = vector.broadcast %cst_1 : f32 to vector<16x1xf32>
    %4 = arith.divf %2, %3 : vector<16x1xf32>
    %5 = vector.broadcast %4 : vector<16x1xf32> to vector<16x64xf32>
    %6 = arith.subf %0, %5 : vector<16x64xf32>
    %7 = arith.mulf %6, %6 : vector<16x64xf32>
    %cst_2 = arith.constant dense<0.000000e+00> : vector<16xf32>
    %8 = vector.multi_reduction <add>, %7, %cst_2 [1] : vector<16x64xf32> to vector<16xf32>
    %9 = vector.shape_cast %8 : vector<16xf32> to vector<16x1xf32>
    %cst_3 = arith.constant 6.400000e+01 : f32
    %10 = vector.broadcast %cst_3 : f32 to vector<16x1xf32>
    %11 = arith.divf %9, %10 : vector<16x1xf32>
    %cst_4 = arith.constant 9.99999974E-6 : f32
    %12 = vector.broadcast %cst_4 : f32 to vector<16x1xf32>
    %13 = arith.addf %11, %12 : vector<16x1xf32>
    %14 = math.rsqrt %13 : vector<16x1xf32>
    %15 = vector.broadcast %14 : vector<16x1xf32> to vector<16x64xf32>
    %16 = arith.mulf %6, %15 : vector<16x64xf32>
    %c0_5 = arith.constant 0 : index
    %c0_6 = arith.constant 0 : index
    %17 = vector.load %arg2[%c0_5, %c0_6] : memref<1x64xf32, #tpu.memory_space<vmem>>, vector<1x64xf32>
    %18 = vector.broadcast %17 : vector<1x64xf32> to vector<16x64xf32>
    %19 = arith.mulf %16, %18 : vector<16x64xf32>
    %c0_7 = arith.constant 0 : index
    %c0_8 = arith.constant 0 : index
    %20 = vector.load %arg3[%c0_7, %c0_8] : memref<1x64xf32, #tpu.memory_space<vmem>>, vector<1x64xf32>
    %21 = vector.broadcast %20 : vector<1x64xf32> to vector<16x64xf32>
    %22 = arith.addf %19, %21 : vector<16x64xf32>
    %c0_9 = arith.constant 0 : index
    %c0_10 = arith.constant 0 : index
    %23 = vector.load %arg4[%c0_9, %c0_10] : memref<16x64xf32, #tpu.memory_space<vmem>>, vector<16x64xf32>
    tpu.vector_store %arg4[%c0_9, %c0_10], %22 {strides = array<i32>} : memref<16x64xf32, #tpu.memory_space<vmem>>, vector<16x64xf32>,
    return
  }
  func.func @transform_0(%arg0: i32) -> (i32, i32) {
    %c0_i32 = arith.constant 0 : i32
    %c0_i32_0 = arith.constant 0 : i32
    return %arg0, %c0_i32 : i32, i32
  }
  func.func @transform_1(%arg0: i32) -> (i32, i32) {
    %c0_i32 = arith.constant 0 : i32
    %c0_i32_0 = arith.constant 0 : i32
    %c0_i32_1 = arith.constant 0 : i32
    return %c0_i32, %c0_i32_0 : i32, i32
  }
  func.func @transform_2(%arg0: i32) -> (i32, i32) {
    %c0_i32 = arith.constant 0 : i32
    %c0_i32_0 = arith.constant 0 : i32
    %c0_i32_1 = arith.constant 0 : i32
    return %c0_i32, %c0_i32_0 : i32, i32
  }
  func.func @transform_3(%arg0: i32) -> (i32, i32) {
    %c0_i32 = arith.constant 0 : i32
    %c0_i32_0 = arith.constant 0 : i32
    return %arg0, %c0_i32 : i32, i32
  }
}

module attributes {stable_mosaic.version = 11 : i64} {
  func.func @_proj_kernel(%arg0: i32, %arg1: i32, %arg2: memref<16x64xf32, #tpu.memory_space<vmem>>, %arg3: memref<16x64xf32, #tpu.memory_space<vmem>>, %arg4: memref<6x64xf32, #tpu.memory_space<vmem>>, %arg5: memref<64x64xf32, #tpu.memory_space<vmem>>, %arg6: memref<64x64xf32, #tpu.memory_space<vmem>>, %arg7: memref<64x64xf32, #tpu.memory_space<vmem>>, %arg8: memref<64x16xf32, #tpu.memory_space<vmem>>, %arg9: memref<16x64xf32, #tpu.memory_space<vmem>>, %arg10: memref<1x64xf32, #tpu.memory_space<vmem>>, %arg11: memref<64x16xf32, #tpu.memory_space<vmem>>, %arg12: memref<16x64xf32, #tpu.memory_space<vmem>>, %arg13: memref<1x64xf32, #tpu.memory_space<vmem>>, %arg14: memref<64x16xf32, #tpu.memory_space<vmem>>, %arg15: memref<16x64xf32, #tpu.memory_space<vmem>>, %arg16: memref<16x64xf32, #tpu.memory_space<vmem>>, %arg17: memref<16x64xf32, #tpu.memory_space<vmem>>, %arg18: memref<16x64xf32, #tpu.memory_space<vmem>>, %arg19: memref<16x64xf32, #tpu.memory_space<vmem>>, %arg20: memref<16x64xf32, #tpu.memory_space<vmem>>, %arg21: memref<16x64xf32, #tpu.memory_space<vmem>>) attributes {dimension_semantics = [#tpu.dimension_semantics<parallel>, #tpu.dimension_semantics<parallel>], iteration_bounds = array<i64: 1, 1>, scalar_prefetch = 0 : i64, scratch_operands = 0 : i64, tpu.core_type = #tpu.core_type<tc>, window_params = [{transform_indices = @transform_0, window_bounds = array<i64: 16, 64>}, {transform_indices = @transform_1, window_bounds = array<i64: 16, 64>}, {pipeline_mode = #tpu.pipeline_mode<synchronous>, transform_indices = @transform_2, window_bounds = array<i64: 6, 64>}, {transform_indices = @transform_3, window_bounds = array<i64: 64, 64>}, {transform_indices = @transform_4, window_bounds = array<i64: 64, 64>}, {transform_indices = @transform_5, window_bounds = array<i64: 64, 64>}, {pipeline_mode = #tpu.pipeline_mode<synchronous>, transform_indices = @transform_6, window_bounds = array<i64: 64, 16>}, {transform_indices = @transform_7, window_bounds = array<i64: 16, 64>}, {transform_indices = @transform_8, window_bounds = array<i64: 1, 64>}, {pipeline_mode = #tpu.pipeline_mode<synchronous>, transform_indices = @transform_9, window_bounds = array<i64: 64, 16>}, {transform_indices = @transform_10, window_bounds = array<i64: 16, 64>}, {transform_indices = @transform_11, window_bounds = array<i64: 1, 64>}, {pipeline_mode = #tpu.pipeline_mode<synchronous>, transform_indices = @transform_12, window_bounds = array<i64: 64, 16>}, {transform_indices = @transform_13, window_bounds = array<i64: 16, 64>}, {transform_indices = @transform_14, window_bounds = array<i64: 16, 64>}, {transform_indices = @transform_15, window_bounds = array<i64: 16, 64>}, {transform_indices = @transform_16, window_bounds = array<i64: 16, 64>}, {transform_indices = @transform_17, window_bounds = array<i64: 16, 64>}, {transform_indices = @transform_18, window_bounds = array<i64: 16, 64>}, {transform_indices = @transform_19, window_bounds = array<i64: 16, 64>}]} {
    %c0 = arith.constant 0 : index
    %c0_0 = arith.constant 0 : index
    %0 = vector.load %arg2[%c0, %c0_0] : memref<16x64xf32, #tpu.memory_space<vmem>>, vector<16x64xf32>
    %c0_1 = arith.constant 0 : index
    %c0_2 = arith.constant 0 : index
    %1 = vector.load %arg3[%c0_1, %c0_2] : memref<16x64xf32, #tpu.memory_space<vmem>>, vector<16x64xf32>
    %c0_3 = arith.constant 0 : index
    %c0_4 = arith.constant 0 : index
    %2 = vector.load %arg4[%c0_3, %c0_4] : memref<6x64xf32, #tpu.memory_space<vmem>>, vector<6x64xf32>
    %3 = vector.extract_strided_slice %2 {offsets = [0, 0], sizes = [1, 64], strides = [1, 1]} : vector<6x64xf32> to vector<1x64xf32>
    %4 = vector.broadcast %3 : vector<1x64xf32> to vector<16x64xf32>
    %5 = arith.mulf %1, %4 : vector<16x64xf32>
    %6 = arith.addf %0, %5 : vector<16x64xf32>
    %7 = vector.extract_strided_slice %2 {offsets = [1, 0], sizes = [1, 64], strides = [1, 1]} : vector<6x64xf32> to vector<1x64xf32>
    %8 = vector.broadcast %7 : vector<1x64xf32> to vector<16x64xf32>
    %9 = arith.mulf %1, %8 : vector<16x64xf32>
    %10 = arith.addf %0, %9 : vector<16x64xf32>
    %11 = vector.extract_strided_slice %2 {offsets = [2, 0], sizes = [1, 64], strides = [1, 1]} : vector<6x64xf32> to vector<1x64xf32>
    %12 = vector.broadcast %11 : vector<1x64xf32> to vector<16x64xf32>
    %13 = arith.mulf %1, %12 : vector<16x64xf32>
    %14 = arith.addf %0, %13 : vector<16x64xf32>
    %15 = vector.extract_strided_slice %2 {offsets = [3, 0], sizes = [1, 64], strides = [1, 1]} : vector<6x64xf32> to vector<1x64xf32>
    %16 = vector.broadcast %15 : vector<1x64xf32> to vector<16x64xf32>
    %17 = arith.mulf %1, %16 : vector<16x64xf32>
    %18 = arith.addf %0, %17 : vector<16x64xf32>
    %19 = vector.extract_strided_slice %2 {offsets = [4, 0], sizes = [1, 64], strides = [1, 1]} : vector<6x64xf32> to vector<1x64xf32>
    %20 = vector.broadcast %19 : vector<1x64xf32> to vector<16x64xf32>
    %21 = arith.mulf %1, %20 : vector<16x64xf32>
    %22 = arith.addf %0, %21 : vector<16x64xf32>
    %23 = vector.extract_strided_slice %2 {offsets = [5, 0], sizes = [1, 64], strides = [1, 1]} : vector<6x64xf32> to vector<1x64xf32>
    %24 = vector.broadcast %23 : vector<1x64xf32> to vector<16x64xf32>
    %25 = arith.mulf %1, %24 : vector<16x64xf32>
    %26 = arith.addf %0, %25 : vector<16x64xf32>
    %c0_5 = arith.constant 0 : index
    %c0_6 = arith.constant 0 : index
    %27 = vector.load %arg5[%c0_5, %c0_6] : memref<64x64xf32, #tpu.memory_space<vmem>>, vector<64x64xf32>
    %cst = arith.constant dense<0.000000e+00> : vector<16x64xf32>
    %28 = tpu.matmul %6, %27, %cst {dimension_numbers = #tpu.dot_dimension_numbers<[1], [0], [0], [1], [0, 0, 1, 1], [], []>} : vector<16x64xf32>, vector<64x64xf32>, vector<16x64xf32> -> vector<16x64xf32>
    %c0_7 = arith.constant 0 : index
    %c0_8 = arith.constant 0 : index
    %29 = vector.load %arg16[%c0_7, %c0_8] : memref<16x64xf32, #tpu.memory_space<vmem>>, vector<16x64xf32>
    tpu.vector_store %arg16[%c0_7, %c0_8], %28 {strides = array<i32>} : memref<16x64xf32, #tpu.memory_space<vmem>>, vector<16x64xf32>,
    %c0_9 = arith.constant 0 : index
    %c0_10 = arith.constant 0 : index
    %30 = vector.load %arg6[%c0_9, %c0_10] : memref<64x64xf32, #tpu.memory_space<vmem>>, vector<64x64xf32>
    %cst_11 = arith.constant dense<0.000000e+00> : vector<16x64xf32>
    %31 = tpu.matmul %14, %30, %cst_11 {dimension_numbers = #tpu.dot_dimension_numbers<[1], [0], [0], [1], [0, 0, 1, 1], [], []>} : vector<16x64xf32>, vector<64x64xf32>, vector<16x64xf32> -> vector<16x64xf32>
    %c0_12 = arith.constant 0 : index
    %c0_13 = arith.constant 0 : index
    %32 = vector.load %arg17[%c0_12, %c0_13] : memref<16x64xf32, #tpu.memory_space<vmem>>, vector<16x64xf32>
    tpu.vector_store %arg17[%c0_12, %c0_13], %31 {strides = array<i32>} : memref<16x64xf32, #tpu.memory_space<vmem>>, vector<16x64xf32>,
    %c0_14 = arith.constant 0 : index
    %c0_15 = arith.constant 0 : index
    %33 = vector.load %arg7[%c0_14, %c0_15] : memref<64x64xf32, #tpu.memory_space<vmem>>, vector<64x64xf32>
    %cst_16 = arith.constant dense<0.000000e+00> : vector<16x64xf32>
    %34 = tpu.matmul %18, %33, %cst_16 {dimension_numbers = #tpu.dot_dimension_numbers<[1], [0], [0], [1], [0, 0, 1, 1], [], []>} : vector<16x64xf32>, vector<64x64xf32>, vector<16x64xf32> -> vector<16x64xf32>
    %c0_17 = arith.constant 0 : index
    %c0_18 = arith.constant 0 : index
    %35 = vector.load %arg18[%c0_17, %c0_18] : memref<16x64xf32, #tpu.memory_space<vmem>>, vector<16x64xf32>
    tpu.vector_store %arg18[%c0_17, %c0_18], %34 {strides = array<i32>} : memref<16x64xf32, #tpu.memory_space<vmem>>, vector<16x64xf32>,
    %c0_19 = arith.constant 0 : index
    %c0_20 = arith.constant 0 : index
    %36 = vector.load %arg8[%c0_19, %c0_20] : memref<64x16xf32, #tpu.memory_space<vmem>>, vector<64x16xf32>
    %cst_21 = arith.constant dense<0.000000e+00> : vector<16x16xf32>
    %37 = tpu.matmul %10, %36, %cst_21 {dimension_numbers = #tpu.dot_dimension_numbers<[1], [0], [0], [1], [0, 0, 1, 1], [], []>} : vector<16x64xf32>, vector<64x16xf32>, vector<16x16xf32> -> vector<16x16xf32>
    %38 = math.tanh %37 : vector<16x16xf32>
    %c0_22 = arith.constant 0 : index
    %c0_23 = arith.constant 0 : index
    %39 = vector.load %arg9[%c0_22, %c0_23] : memref<16x64xf32, #tpu.memory_space<vmem>>, vector<16x64xf32>
    %cst_24 = arith.constant dense<0.000000e+00> : vector<16x64xf32>
    %40 = tpu.matmul %38, %39, %cst_24 {dimension_numbers = #tpu.dot_dimension_numbers<[1], [0], [0], [1], [0, 0, 1, 1], [], []>} : vector<16x16xf32>, vector<16x64xf32>, vector<16x64xf32> -> vector<16x64xf32>
    %c0_25 = arith.constant 0 : index
    %c0_26 = arith.constant 0 : index
    %41 = vector.load %arg10[%c0_25, %c0_26] : memref<1x64xf32, #tpu.memory_space<vmem>>, vector<1x64xf32>
    %42 = vector.broadcast %41 : vector<1x64xf32> to vector<16x64xf32>
    %43 = arith.addf %40, %42 : vector<16x64xf32>
    %cst_27 = arith.constant 0.000000e+00 : f32
    %44 = vector.broadcast %cst_27 : f32 to vector<16x64xf32>
    %45 = arith.subf %44, %43 : vector<16x64xf32>
    %46 = math.exp %45 : vector<16x64xf32>
    %cst_28 = arith.constant 1.000000e+00 : f32
    %47 = vector.broadcast %cst_28 : f32 to vector<16x64xf32>
    %48 = arith.addf %47, %46 : vector<16x64xf32>
    %cst_29 = arith.constant 1.000000e+00 : f32
    %49 = vector.broadcast %cst_29 : f32 to vector<16x64xf32>
    %50 = arith.divf %49, %48 : vector<16x64xf32>
    %cst_30 = arith.constant -0.606530666 : f32
    %51 = vector.broadcast %cst_30 : f32 to vector<16x64xf32>
    %52 = arith.mulf %50, %51 : vector<16x64xf32>
    %c0_31 = arith.constant 0 : index
    %c0_32 = arith.constant 0 : index
    %53 = vector.load %arg19[%c0_31, %c0_32] : memref<16x64xf32, #tpu.memory_space<vmem>>, vector<16x64xf32>
    tpu.vector_store %arg19[%c0_31, %c0_32], %52 {strides = array<i32>} : memref<16x64xf32, #tpu.memory_space<vmem>>, vector<16x64xf32>,
    %c0_33 = arith.constant 0 : index
    %c0_34 = arith.constant 0 : index
    %54 = vector.load %arg11[%c0_33, %c0_34] : memref<64x16xf32, #tpu.memory_space<vmem>>, vector<64x16xf32>
    %cst_35 = arith.constant dense<0.000000e+00> : vector<16x16xf32>
    %55 = tpu.matmul %22, %54, %cst_35 {dimension_numbers = #tpu.dot_dimension_numbers<[1], [0], [0], [1], [0, 0, 1, 1], [], []>} : vector<16x64xf32>, vector<64x16xf32>, vector<16x16xf32> -> vector<16x16xf32>
    %c0_36 = arith.constant 0 : index
    %c0_37 = arith.constant 0 : index
    %56 = vector.load %arg12[%c0_36, %c0_37] : memref<16x64xf32, #tpu.memory_space<vmem>>, vector<16x64xf32>
    %cst_38 = arith.constant dense<0.000000e+00> : vector<16x64xf32>
    %57 = tpu.matmul %55, %56, %cst_38 {dimension_numbers = #tpu.dot_dimension_numbers<[1], [0], [0], [1], [0, 0, 1, 1], [], []>} : vector<16x16xf32>, vector<16x64xf32>, vector<16x64xf32> -> vector<16x64xf32>
    %c0_39 = arith.constant 0 : index
    %c0_40 = arith.constant 0 : index
    %58 = vector.load %arg13[%c0_39, %c0_40] : memref<1x64xf32, #tpu.memory_space<vmem>>, vector<1x64xf32>
    %59 = vector.broadcast %58 : vector<1x64xf32> to vector<16x64xf32>
    %60 = arith.addf %57, %59 : vector<16x64xf32>
    %cst_41 = arith.constant 0.000000e+00 : f32
    %61 = vector.broadcast %cst_41 : f32 to vector<16x64xf32>
    %62 = arith.subf %61, %60 : vector<16x64xf32>
    %63 = math.exp %62 : vector<16x64xf32>
    %cst_42 = arith.constant 1.000000e+00 : f32
    %64 = vector.broadcast %cst_42 : f32 to vector<16x64xf32>
    %65 = arith.addf %64, %63 : vector<16x64xf32>
    %cst_43 = arith.constant 1.000000e+00 : f32
    %66 = vector.broadcast %cst_43 : f32 to vector<16x64xf32>
    %67 = arith.divf %66, %65 : vector<16x64xf32>
    %c0_44 = arith.constant 0 : index
    %c0_45 = arith.constant 0 : index
    %68 = vector.load %arg20[%c0_44, %c0_45] : memref<16x64xf32, #tpu.memory_space<vmem>>, vector<16x64xf32>
    tpu.vector_store %arg20[%c0_44, %c0_45], %67 {strides = array<i32>} : memref<16x64xf32, #tpu.memory_space<vmem>>, vector<16x64xf32>,
    %c0_46 = arith.constant 0 : index
    %c0_47 = arith.constant 0 : index
    %69 = vector.load %arg14[%c0_46, %c0_47] : memref<64x16xf32, #tpu.memory_space<vmem>>, vector<64x16xf32>
    %cst_48 = arith.constant dense<0.000000e+00> : vector<16x16xf32>
    %70 = tpu.matmul %26, %69, %cst_48 {dimension_numbers = #tpu.dot_dimension_numbers<[1], [0], [0], [1], [0, 0, 1, 1], [], []>} : vector<16x64xf32>, vector<64x16xf32>, vector<16x16xf32> -> vector<16x16xf32>
    %cst_49 = arith.constant 0.000000e+00 : f32
    %71 = vector.broadcast %cst_49 : f32 to vector<16x16xf32>
    %72 = arith.subf %71, %70 : vector<16x16xf32>
    %73 = math.exp %72 : vector<16x16xf32>
    %cst_50 = arith.constant 1.000000e+00 : f32
    %74 = vector.broadcast %cst_50 : f32 to vector<16x16xf32>
    %75 = arith.addf %74, %73 : vector<16x16xf32>
    %cst_51 = arith.constant 1.000000e+00 : f32
    %76 = vector.broadcast %cst_51 : f32 to vector<16x16xf32>
    %77 = arith.divf %76, %75 : vector<16x16xf32>
    %c0_52 = arith.constant 0 : index
    %c0_53 = arith.constant 0 : index
    %78 = vector.load %arg15[%c0_52, %c0_53] : memref<16x64xf32, #tpu.memory_space<vmem>>, vector<16x64xf32>
    %cst_54 = arith.constant dense<0.000000e+00> : vector<16x64xf32>
    %79 = tpu.matmul %77, %78, %cst_54 {dimension_numbers = #tpu.dot_dimension_numbers<[1], [0], [0], [1], [0, 0, 1, 1], [], []>} : vector<16x16xf32>, vector<16x64xf32>, vector<16x64xf32> -> vector<16x64xf32>
    %c0_55 = arith.constant 0 : index
    %c0_56 = arith.constant 0 : index
    %80 = vector.load %arg21[%c0_55, %c0_56] : memref<16x64xf32, #tpu.memory_space<vmem>>, vector<16x64xf32>
    tpu.vector_store %arg21[%c0_55, %c0_56], %79 {strides = array<i32>} : memref<16x64xf32, #tpu.memory_space<vmem>>, vector<16x64xf32>,
    return
  }
  func.func @transform_0(%arg0: i32, %arg1: i32) -> (i32, i32) {
    %c0_i32 = arith.constant 0 : i32
    %c0_i32_0 = arith.constant 0 : i32
    return %arg0, %c0_i32 : i32, i32
  }
  func.func @transform_1(%arg0: i32, %arg1: i32) -> (i32, i32) {
    %c0_i32 = arith.constant 0 : i32
    %c0_i32_0 = arith.constant 0 : i32
    return %arg0, %c0_i32 : i32, i32
  }
  func.func @transform_2(%arg0: i32, %arg1: i32) -> (i32, i32) {
    %c0_i32 = arith.constant 0 : i32
    %c0_i32_0 = arith.constant 0 : i32
    %c0_i32_1 = arith.constant 0 : i32
    return %c0_i32, %c0_i32_0 : i32, i32
  }
  func.func @transform_3(%arg0: i32, %arg1: i32) -> (i32, i32) {
    %c0_i32 = arith.constant 0 : i32
    %c0_i32_0 = arith.constant 0 : i32
    return %c0_i32, %arg1 : i32, i32
  }
  func.func @transform_4(%arg0: i32, %arg1: i32) -> (i32, i32) {
    %c0_i32 = arith.constant 0 : i32
    %c0_i32_0 = arith.constant 0 : i32
    return %c0_i32, %arg1 : i32, i32
  }
  func.func @transform_5(%arg0: i32, %arg1: i32) -> (i32, i32) {
    %c0_i32 = arith.constant 0 : i32
    %c0_i32_0 = arith.constant 0 : i32
    return %c0_i32, %arg1 : i32, i32
  }
  func.func @transform_6(%arg0: i32, %arg1: i32) -> (i32, i32) {
    %c0_i32 = arith.constant 0 : i32
    %c0_i32_0 = arith.constant 0 : i32
    %c0_i32_1 = arith.constant 0 : i32
    return %c0_i32, %c0_i32_0 : i32, i32
  }
  func.func @transform_7(%arg0: i32, %arg1: i32) -> (i32, i32) {
    %c0_i32 = arith.constant 0 : i32
    %c0_i32_0 = arith.constant 0 : i32
    return %c0_i32, %arg1 : i32, i32
  }
  func.func @transform_8(%arg0: i32, %arg1: i32) -> (i32, i32) {
    %c0_i32 = arith.constant 0 : i32
    %c0_i32_0 = arith.constant 0 : i32
    return %c0_i32, %arg1 : i32, i32
  }
  func.func @transform_9(%arg0: i32, %arg1: i32) -> (i32, i32) {
    %c0_i32 = arith.constant 0 : i32
    %c0_i32_0 = arith.constant 0 : i32
    %c0_i32_1 = arith.constant 0 : i32
    return %c0_i32, %c0_i32_0 : i32, i32
  }
  func.func @transform_10(%arg0: i32, %arg1: i32) -> (i32, i32) {
    %c0_i32 = arith.constant 0 : i32
    %c0_i32_0 = arith.constant 0 : i32
    return %c0_i32, %arg1 : i32, i32
  }
  func.func @transform_11(%arg0: i32, %arg1: i32) -> (i32, i32) {
    %c0_i32 = arith.constant 0 : i32
    %c0_i32_0 = arith.constant 0 : i32
    return %c0_i32, %arg1 : i32, i32
  }
  func.func @transform_12(%arg0: i32, %arg1: i32) -> (i32, i32) {
    %c0_i32 = arith.constant 0 : i32
    %c0_i32_0 = arith.constant 0 : i32
    %c0_i32_1 = arith.constant 0 : i32
    return %c0_i32, %c0_i32_0 : i32, i32
  }
  func.func @transform_13(%arg0: i32, %arg1: i32) -> (i32, i32) {
    %c0_i32 = arith.constant 0 : i32
    %c0_i32_0 = arith.constant 0 : i32
    return %c0_i32, %arg1 : i32, i32
  }
  func.func @transform_14(%arg0: i32, %arg1: i32) -> (i32, i32) {
    %c0_i32 = arith.constant 0 : i32
    return %arg0, %arg1 : i32, i32
  }
  func.func @transform_15(%arg0: i32, %arg1: i32) -> (i32, i32) {
    %c0_i32 = arith.constant 0 : i32
    return %arg0, %arg1 : i32, i32
  }
  func.func @transform_16(%arg0: i32, %arg1: i32) -> (i32, i32) {
    %c0_i32 = arith.constant 0 : i32
    return %arg0, %arg1 : i32, i32
  }
  func.func @transform_17(%arg0: i32, %arg1: i32) -> (i32, i32) {
    %c0_i32 = arith.constant 0 : i32
    return %arg0, %arg1 : i32, i32
  }
  func.func @transform_18(%arg0: i32, %arg1: i32) -> (i32, i32) {
    %c0_i32 = arith.constant 0 : i32
    return %arg0, %arg1 : i32, i32
  }
  func.func @transform_19(%arg0: i32, %arg1: i32) -> (i32, i32) {
    %c0_i32 = arith.constant 0 : i32
    return %arg0, %arg1 : i32, i32
  }
}

module attributes {stable_mosaic.version = 11 : i64} {
  func.func @_rwkv7_chunk_kernel(%arg0: i32, %arg1: i32, %arg2: memref<1x8x1x64xf32, #tpu.memory_space<vmem>>, %arg3: memref<1x8x1x64xf32, #tpu.memory_space<vmem>>, %arg4: memref<1x8x1x64xf32, #tpu.memory_space<vmem>>, %arg5: memref<1x8x1x64xf32, #tpu.memory_space<vmem>>, %arg6: memref<1x8x1x64xf32, #tpu.memory_space<vmem>>, %arg7: memref<1x8x1x64xf32, #tpu.memory_space<vmem>>, %arg8: memref<1x8x1x64xf32, #tpu.memory_space<vmem>>, %arg9: memref<1x64x64xf32, #tpu.memory_space<vmem>>) attributes {dimension_semantics = [#tpu.dimension_semantics<parallel>, #tpu.dimension_semantics<arbitrary>], iteration_bounds = array<i64: 2, 1>, scalar_prefetch = 0 : i64, scratch_operands = 1 : i64, tpu.core_type = #tpu.core_type<tc>, window_params = [{transform_indices = @transform_0, window_bounds = array<i64: 1, 8, 1, 64>}, {transform_indices = @transform_1, window_bounds = array<i64: 1, 8, 1, 64>}, {transform_indices = @transform_2, window_bounds = array<i64: 1, 8, 1, 64>}, {transform_indices = @transform_3, window_bounds = array<i64: 1, 8, 1, 64>}, {transform_indices = @transform_4, window_bounds = array<i64: 1, 8, 1, 64>}, {transform_indices = @transform_5, window_bounds = array<i64: 1, 8, 1, 64>}, {transform_indices = @transform_6, window_bounds = array<i64: 1, 8, 1, 64>}]} {
    %c0_i32 = arith.constant 0 : i32
    %0 = arith.cmpi eq, %arg1, %c0_i32 : i32
    %1 = arith.extui %0 : i1 to i32
    %c0_i32_0 = arith.constant 0 : i32
    %2 = arith.cmpi ne, %1, %c0_i32_0 : i32
    scf.if %2 {
      %cst_55 = arith.constant 0.000000e+00 : f32
      %88 = vector.broadcast %cst_55 : f32 to vector<1x64x64xf32>
      %c0_56 = arith.constant 0 : index
      %c0_57 = arith.constant 0 : index
      %c0_58 = arith.constant 0 : index
      %89 = vector.load %arg9[%c0_56, %c0_57, %c0_58] : memref<1x64x64xf32, #tpu.memory_space<vmem>>, vector<1x64x64xf32>
      tpu.vector_store %arg9[%c0_56, %c0_57, %c0_58], %88 {strides = array<i32>} : memref<1x64x64xf32, #tpu.memory_space<vmem>>, vector<1x64x64xf32>,
    } else {
    }
    %c0 = arith.constant 0 : index
    %c0_1 = arith.constant 0 : index
    %c0_2 = arith.constant 0 : index
    %c0_3 = arith.constant 0 : index
    %3 = vector.load %arg2[%c0, %c0_1, %c0_2, %c0_3] : memref<1x8x1x64xf32, #tpu.memory_space<vmem>>, vector<1x8x1x64xf32>
    %4 = vector.shape_cast %3 : vector<1x8x1x64xf32> to vector<8x1x64xf32>
    %5 = tpu.transpose %4, [1, 0, 2] : vector<8x1x64xf32> -> vector<1x8x64xf32>
    %c0_4 = arith.constant 0 : index
    %c0_5 = arith.constant 0 : index
    %c0_6 = arith.constant 0 : index
    %c0_7 = arith.constant 0 : index
    %6 = vector.load %arg3[%c0_4, %c0_5, %c0_6, %c0_7] : memref<1x8x1x64xf32, #tpu.memory_space<vmem>>, vector<1x8x1x64xf32>
    %7 = vector.shape_cast %6 : vector<1x8x1x64xf32> to vector<8x1x64xf32>
    %8 = tpu.transpose %7, [1, 0, 2] : vector<8x1x64xf32> -> vector<1x8x64xf32>
    %c0_8 = arith.constant 0 : index
    %c0_9 = arith.constant 0 : index
    %c0_10 = arith.constant 0 : index
    %c0_11 = arith.constant 0 : index
    %9 = vector.load %arg4[%c0_8, %c0_9, %c0_10, %c0_11] : memref<1x8x1x64xf32, #tpu.memory_space<vmem>>, vector<1x8x1x64xf32>
    %10 = vector.shape_cast %9 : vector<1x8x1x64xf32> to vector<8x1x64xf32>
    %11 = tpu.transpose %10, [1, 0, 2] : vector<8x1x64xf32> -> vector<1x8x64xf32>
    %c0_12 = arith.constant 0 : index
    %c0_13 = arith.constant 0 : index
    %c0_14 = arith.constant 0 : index
    %c0_15 = arith.constant 0 : index
    %12 = vector.load %arg5[%c0_12, %c0_13, %c0_14, %c0_15] : memref<1x8x1x64xf32, #tpu.memory_space<vmem>>, vector<1x8x1x64xf32>
    %13 = vector.shape_cast %12 : vector<1x8x1x64xf32> to vector<8x1x64xf32>
    %14 = tpu.transpose %13, [1, 0, 2] : vector<8x1x64xf32> -> vector<1x8x64xf32>
    %c0_16 = arith.constant 0 : index
    %c0_17 = arith.constant 0 : index
    %c0_18 = arith.constant 0 : index
    %c0_19 = arith.constant 0 : index
    %15 = vector.load %arg6[%c0_16, %c0_17, %c0_18, %c0_19] : memref<1x8x1x64xf32, #tpu.memory_space<vmem>>, vector<1x8x1x64xf32>
    %16 = vector.shape_cast %15 : vector<1x8x1x64xf32> to vector<8x1x64xf32>
    %17 = tpu.transpose %16, [1, 0, 2] : vector<8x1x64xf32> -> vector<1x8x64xf32>
    %c0_20 = arith.constant 0 : index
    %c0_21 = arith.constant 0 : index
    %c0_22 = arith.constant 0 : index
    %c0_23 = arith.constant 0 : index
    %18 = vector.load %arg7[%c0_20, %c0_21, %c0_22, %c0_23] : memref<1x8x1x64xf32, #tpu.memory_space<vmem>>, vector<1x8x1x64xf32>
    %19 = vector.shape_cast %18 : vector<1x8x1x64xf32> to vector<8x1x64xf32>
    %20 = tpu.transpose %19, [1, 0, 2] : vector<8x1x64xf32> -> vector<1x8x64xf32>
    %21 = tpu.iota {dimensions = array<i32: 0>} : vector<8x8xi32>
    %22 = tpu.iota {dimensions = array<i32: 1>} : vector<8x8xi32>
    %23 = arith.cmpi sge, %21, %22 : vector<8x8xi32>
    %24 = arith.cmpi sgt, %21, %22 : vector<8x8xi32>
    %25 = arith.extui %23 : vector<8x8xi1> to vector<8x8xi32>
    %26 = arith.sitofp %25 : vector<8x8xi32> to vector<8x8xf32>
    %27 = vector.shape_cast %26 : vector<8x8xf32> to vector<1x8x8xf32>
    %cst = arith.constant dense<0.000000e+00> : vector<1x8x64xf32>
    %28 = tpu.matmul %27, %8, %cst {dimension_numbers = #tpu.dot_dimension_numbers<[2], [1], [1], [2], [0, 0, 0, 1, 1, 2], [0], [0]>} : vector<1x8x8xf32>, vector<1x8x64xf32>, vector<1x8x64xf32> -> vector<1x8x64xf32>
    %29 = arith.subf %28, %8 : vector<1x8x64xf32>
    %30 = math.exp %28 : vector<1x8x64xf32>
    %31 = math.exp %29 : vector<1x8x64xf32>
    %cst_24 = arith.constant 0.000000e+00 : f32
    %32 = vector.broadcast %cst_24 : f32 to vector<1x8x64xf32>
    %33 = arith.subf %32, %28 : vector<1x8x64xf32>
    %34 = math.exp %33 : vector<1x8x64xf32>
    %35 = vector.extract_strided_slice %30 {offsets = [0, 7, 0], sizes = [1, 1, 64], strides = [1, 1, 1]} : vector<1x8x64xf32> to vector<1x1x64xf32>
    %36 = arith.mulf %17, %31 : vector<1x8x64xf32>
    %37 = arith.mulf %5, %30 : vector<1x8x64xf32>
    %38 = arith.mulf %20, %34 : vector<1x8x64xf32>
    %39 = arith.mulf %11, %34 : vector<1x8x64xf32>
    %c0_25 = arith.constant 0 : index
    %c0_26 = arith.constant 0 : index
    %c0_27 = arith.constant 0 : index
    %40 = vector.load %arg9[%c0_25, %c0_26, %c0_27] : memref<1x64x64xf32, #tpu.memory_space<vmem>>, vector<1x64x64xf32>
    %cst_28 = arith.constant dense<0.000000e+00> : vector<1x8x8xf32>
    %41 = tpu.matmul %36, %38, %cst_28 {dimension_numbers = #tpu.dot_dimension_numbers<[2], [2], [1], [1], [0, 0, 0, 1, 1, 1], [0], [0]>} : vector<1x8x64xf32>, vector<1x8x64xf32>, vector<1x8x8xf32> -> vector<1x8x8xf32>
    %cst_29 = arith.constant 0.000000e+00 : f32
    %42 = vector.shape_cast %24 : vector<8x8xi1> to vector<1x8x8xi1>
    %43 = vector.broadcast %cst_29 : f32 to vector<1x8x8xf32>
    %44 = arith.select %42, %41, %43 : vector<1x8x8xi1>, vector<1x8x8xf32>
    %cst_30 = arith.constant dense<0.000000e+00> : vector<1x8x8xf32>
    %45 = tpu.matmul %36, %39, %cst_30 {dimension_numbers = #tpu.dot_dimension_numbers<[2], [2], [1], [1], [0, 0, 0, 1, 1, 1], [0], [0]>} : vector<1x8x64xf32>, vector<1x8x64xf32>, vector<1x8x8xf32> -> vector<1x8x8xf32>
    %cst_31 = arith.constant 0.000000e+00 : f32
    %46 = vector.shape_cast %24 : vector<8x8xi1> to vector<1x8x8xi1>
    %47 = vector.broadcast %cst_31 : f32 to vector<1x8x8xf32>
    %48 = arith.select %46, %45, %47 : vector<1x8x8xi1>, vector<1x8x8xf32>
    %cst_32 = arith.constant dense<0.000000e+00> : vector<1x8x8xf32>
    %49 = tpu.matmul %37, %38, %cst_32 {dimension_numbers = #tpu.dot_dimension_numbers<[2], [2], [1], [1], [0, 0, 0, 1, 1, 1], [0], [0]>} : vector<1x8x64xf32>, vector<1x8x64xf32>, vector<1x8x8xf32> -> vector<1x8x8xf32>
    %cst_33 = arith.constant 0.000000e+00 : f32
    %50 = vector.shape_cast %23 : vector<8x8xi1> to vector<1x8x8xi1>
    %51 = vector.broadcast %cst_33 : f32 to vector<1x8x8xf32>
    %52 = arith.select %50, %49, %51 : vector<1x8x8xi1>, vector<1x8x8xf32>
    %cst_34 = arith.constant dense<0.000000e+00> : vector<1x8x8xf32>
    %53 = tpu.matmul %37, %39, %cst_34 {dimension_numbers = #tpu.dot_dimension_numbers<[2], [2], [1], [1], [0, 0, 0, 1, 1, 1], [0], [0]>} : vector<1x8x64xf32>, vector<1x8x64xf32>, vector<1x8x8xf32> -> vector<1x8x8xf32>
    %cst_35 = arith.constant 0.000000e+00 : f32
    %54 = vector.shape_cast %23 : vector<8x8xi1> to vector<1x8x8xi1>
    %55 = vector.broadcast %cst_35 : f32 to vector<1x8x8xf32>
    %56 = arith.select %54, %53, %55 : vector<1x8x8xi1>, vector<1x8x8xf32>
    %cst_36 = arith.constant dense<0.000000e+00> : vector<1x8x64xf32>
    %57 = tpu.matmul %36, %40, %cst_36 {dimension_numbers = #tpu.dot_dimension_numbers<[2], [2], [1], [1], [0, 0, 0, 1, 1, 1], [0], [0]>} : vector<1x8x64xf32>, vector<1x64x64xf32>, vector<1x8x64xf32> -> vector<1x8x64xf32>
    %cst_37 = arith.constant dense<0.000000e+00> : vector<1x8x64xf32>
    %58 = tpu.matmul %48, %14, %cst_37 {dimension_numbers = #tpu.dot_dimension_numbers<[2], [1], [1], [2], [0, 0, 0, 1, 1, 2], [0], [0]>} : vector<1x8x8xf32>, vector<1x8x64xf32>, vector<1x8x64xf32> -> vector<1x8x64xf32>
    %59 = arith.addf %57, %58 : vector<1x8x64xf32>
    %60 = arith.cmpi eq, %21, %22 : vector<8x8xi32>
    %61 = arith.extui %60 : vector<8x8xi1> to vector<8x8xi32>
    %62 = arith.sitofp %61 : vector<8x8xi32> to vector<8x8xf32>
    %63 = vector.shape_cast %62 : vector<8x8xf32> to vector<1x8x8xf32>
    %64 = arith.addf %63, %44 : vector<1x8x8xf32>
    %cst_38 = arith.constant dense<0.000000e+00> : vector<1x8x8xf32>
    %65 = tpu.matmul %44, %44, %cst_38 {dimension_numbers = #tpu.dot_dimension_numbers<[2], [1], [1], [2], [0, 0, 0, 1, 1, 2], [0], [0]>} : vector<1x8x8xf32>, vector<1x8x8xf32>, vector<1x8x8xf32> -> vector<1x8x8xf32>
    %cst_39 = arith.constant dense<0.000000e+00> : vector<1x8x8xf32>
    %66 = tpu.matmul %65, %64, %cst_39 {dimension_numbers = #tpu.dot_dimension_numbers<[2], [1], [1], [2], [0, 0, 0, 1, 1, 2], [0], [0]>} : vector<1x8x8xf32>, vector<1x8x8xf32>, vector<1x8x8xf32> -> vector<1x8x8xf32>
    %67 = arith.addf %64, %66 : vector<1x8x8xf32>
    %cst_40 = arith.constant dense<0.000000e+00> : vector<1x8x8xf32>
    %68 = tpu.matmul %65, %65, %cst_40 {dimension_numbers = #tpu.dot_dimension_numbers<[2], [1], [1], [2], [0, 0, 0, 1, 1, 2], [0], [0]>} : vector<1x8x8xf32>, vector<1x8x8xf32>, vector<1x8x8xf32> -> vector<1x8x8xf32>
    %cst_41 = arith.constant dense<0.000000e+00> : vector<1x8x8xf32>
    %69 = tpu.matmul %68, %67, %cst_41 {dimension_numbers = #tpu.dot_dimension_numbers<[2], [1], [1], [2], [0, 0, 0, 1, 1, 2], [0], [0]>} : vector<1x8x8xf32>, vector<1x8x8xf32>, vector<1x8x8xf32> -> vector<1x8x8xf32>
    %70 = arith.addf %67, %69 : vector<1x8x8xf32>
    %cst_42 = arith.constant dense<0.000000e+00> : vector<1x8x64xf32>
    %71 = tpu.matmul %70, %59, %cst_42 {dimension_numbers = #tpu.dot_dimension_numbers<[2], [1], [1], [2], [0, 0, 0, 1, 1, 2], [0], [0]>} : vector<1x8x8xf32>, vector<1x8x64xf32>, vector<1x8x64xf32> -> vector<1x8x64xf32>
    %cst_43 = arith.constant dense<0.000000e+00> : vector<1x8x64xf32>
    %72 = tpu.matmul %37, %40, %cst_43 {dimension_numbers = #tpu.dot_dimension_numbers<[2], [2], [1], [1], [0, 0, 0, 1, 1, 1], [0], [0]>} : vector<1x8x64xf32>, vector<1x64x64xf32>, vector<1x8x64xf32> -> vector<1x8x64xf32>
    %cst_44 = arith.constant dense<0.000000e+00> : vector<1x8x64xf32>
    %73 = tpu.matmul %52, %71, %cst_44 {dimension_numbers = #tpu.dot_dimension_numbers<[2], [1], [1], [2], [0, 0, 0, 1, 1, 2], [0], [0]>} : vector<1x8x8xf32>, vector<1x8x64xf32>, vector<1x8x64xf32> -> vector<1x8x64xf32>
    %74 = arith.addf %72, %73 : vector<1x8x64xf32>
    %cst_45 = arith.constant dense<0.000000e+00> : vector<1x8x64xf32>
    %75 = tpu.matmul %56, %14, %cst_45 {dimension_numbers = #tpu.dot_dimension_numbers<[2], [1], [1], [2], [0, 0, 0, 1, 1, 2], [0], [0]>} : vector<1x8x8xf32>, vector<1x8x64xf32>, vector<1x8x64xf32> -> vector<1x8x64xf32>
    %76 = arith.addf %74, %75 : vector<1x8x64xf32>
    %cst_46 = arith.constant dense<0.000000e+00> : vector<1x64x64xf32>
    %77 = tpu.matmul %71, %38, %cst_46 {dimension_numbers = #tpu.dot_dimension_numbers<[1], [1], [2], [2], [0, 0, 0, 2, 1, 2], [0], [0]>} : vector<1x8x64xf32>, vector<1x8x64xf32>, vector<1x64x64xf32> -> vector<1x64x64xf32>
    %78 = arith.addf %40, %77 : vector<1x64x64xf32>
    %cst_47 = arith.constant dense<0.000000e+00> : vector<1x64x64xf32>
    %79 = tpu.matmul %14, %39, %cst_47 {dimension_numbers = #tpu.dot_dimension_numbers<[1], [1], [2], [2], [0, 0, 0, 2, 1, 2], [0], [0]>} : vector<1x8x64xf32>, vector<1x8x64xf32>, vector<1x64x64xf32> -> vector<1x64x64xf32>
    %80 = arith.addf %78, %79 : vector<1x64x64xf32>
    %81 = vector.broadcast %35 : vector<1x1x64xf32> to vector<1x64x64xf32>
    %82 = arith.mulf %80, %81 : vector<1x64x64xf32>
    %c0_48 = arith.constant 0 : index
    %c0_49 = arith.constant 0 : index
    %c0_50 = arith.constant 0 : index
    %83 = vector.load %arg9[%c0_48, %c0_49, %c0_50] : memref<1x64x64xf32, #tpu.memory_space<vmem>>, vector<1x64x64xf32>
    tpu.vector_store %arg9[%c0_48, %c0_49, %c0_50], %82 {strides = array<i32>} : memref<1x64x64xf32, #tpu.memory_space<vmem>>, vector<1x64x64xf32>,
    %84 = tpu.transpose %76, [1, 0, 2] : vector<1x8x64xf32> -> vector<8x1x64xf32>
    %c0_51 = arith.constant 0 : index
    %c0_52 = arith.constant 0 : index
    %c0_53 = arith.constant 0 : index
    %c0_54 = arith.constant 0 : index
    %85 = vector.load %arg8[%c0_51, %c0_52, %c0_53, %c0_54] : memref<1x8x1x64xf32, #tpu.memory_space<vmem>>, vector<1x8x1x64xf32>
    %86 = vector.shape_cast %85 : vector<1x8x1x64xf32> to vector<8x1x64xf32>
    %87 = vector.shape_cast %84 : vector<8x1x64xf32> to vector<1x8x1x64xf32>
    tpu.vector_store %arg8[%c0_51, %c0_52, %c0_53, %c0_54], %87 {strides = array<i32>} : memref<1x8x1x64xf32, #tpu.memory_space<vmem>>, vector<1x8x1x64xf32>,
    return
  }
  func.func @transform_0(%arg0: i32, %arg1: i32) -> (i32, i32, i32, i32) {
    %c0_i32 = arith.constant 0 : i32
    %c0_i32_0 = arith.constant 0 : i32
    %c0_i32_1 = arith.constant 0 : i32
    return %arg0, %arg1, %c0_i32, %c0_i32_0 : i32, i32, i32, i32
  }
  func.func @transform_1(%arg0: i32, %arg1: i32) -> (i32, i32, i32, i32) {
    %c0_i32 = arith.constant 0 : i32
    %c0_i32_0 = arith.constant 0 : i32
    %c0_i32_1 = arith.constant 0 : i32
    return %arg0, %arg1, %c0_i32, %c0_i32_0 : i32, i32, i32, i32
  }
  func.func @transform_2(%arg0: i32, %arg1: i32) -> (i32, i32, i32, i32) {
    %c0_i32 = arith.constant 0 : i32
    %c0_i32_0 = arith.constant 0 : i32
    %c0_i32_1 = arith.constant 0 : i32
    return %arg0, %arg1, %c0_i32, %c0_i32_0 : i32, i32, i32, i32
  }
  func.func @transform_3(%arg0: i32, %arg1: i32) -> (i32, i32, i32, i32) {
    %c0_i32 = arith.constant 0 : i32
    %c0_i32_0 = arith.constant 0 : i32
    %c0_i32_1 = arith.constant 0 : i32
    return %arg0, %arg1, %c0_i32, %c0_i32_0 : i32, i32, i32, i32
  }
  func.func @transform_4(%arg0: i32, %arg1: i32) -> (i32, i32, i32, i32) {
    %c0_i32 = arith.constant 0 : i32
    %c0_i32_0 = arith.constant 0 : i32
    %c0_i32_1 = arith.constant 0 : i32
    return %arg0, %arg1, %c0_i32, %c0_i32_0 : i32, i32, i32, i32
  }
  func.func @transform_5(%arg0: i32, %arg1: i32) -> (i32, i32, i32, i32) {
    %c0_i32 = arith.constant 0 : i32
    %c0_i32_0 = arith.constant 0 : i32
    %c0_i32_1 = arith.constant 0 : i32
    return %arg0, %arg1, %c0_i32, %c0_i32_0 : i32, i32, i32, i32
  }
  func.func @transform_6(%arg0: i32, %arg1: i32) -> (i32, i32, i32, i32) {
    %c0_i32 = arith.constant 0 : i32
    %c0_i32_0 = arith.constant 0 : i32
    %c0_i32_1 = arith.constant 0 : i32
    return %arg0, %arg1, %c0_i32, %c0_i32_0 : i32, i32, i32, i32
  }
}

module attributes {stable_mosaic.version = 11 : i64} {
  func.func @_gn_gate_kernel(%arg0: i32, %arg1: memref<16x1x64xf32, #tpu.memory_space<vmem>>, %arg2: memref<16x1x64xf32, #tpu.memory_space<vmem>>, %arg3: memref<16x1x64xf32, #tpu.memory_space<vmem>>, %arg4: memref<1x1x64xf32, #tpu.memory_space<vmem>>, %arg5: memref<1x1x64xf32, #tpu.memory_space<vmem>>, %arg6: memref<16x1x64xf32, #tpu.memory_space<vmem>>) attributes {dimension_semantics = [#tpu.dimension_semantics<parallel>], iteration_bounds = array<i64: 1>, scalar_prefetch = 0 : i64, scratch_operands = 0 : i64, tpu.core_type = #tpu.core_type<tc>, window_params = [{transform_indices = @transform_0, window_bounds = array<i64: 16, 1, 64>}, {transform_indices = @transform_1, window_bounds = array<i64: 16, 1, 64>}, {transform_indices = @transform_2, window_bounds = array<i64: 16, 1, 64>}, {pipeline_mode = #tpu.pipeline_mode<synchronous>, transform_indices = @transform_3, window_bounds = array<i64: 1, 1, 64>}, {pipeline_mode = #tpu.pipeline_mode<synchronous>, transform_indices = @transform_4, window_bounds = array<i64: 1, 1, 64>}, {transform_indices = @transform_5, window_bounds = array<i64: 16, 1, 64>}]} {
    %c0 = arith.constant 0 : index
    %c0_0 = arith.constant 0 : index
    %c0_1 = arith.constant 0 : index
    %0 = vector.load %arg1[%c0, %c0_0, %c0_1] : memref<16x1x64xf32, #tpu.memory_space<vmem>>, vector<16x1x64xf32>
    %cst = arith.constant dense<0.000000e+00> : vector<16x1xf32>
    %1 = vector.multi_reduction <add>, %0, %cst [2] : vector<16x1x64xf32> to vector<16x1xf32>
    %2 = vector.shape_cast %1 : vector<16x1xf32> to vector<16x1x1xf32>
    %cst_2 = arith.constant 6.400000e+01 : f32
    %3 = vector.broadcast %cst_2 : f32 to vector<16x1x1xf32>
    %4 = arith.divf %2, %3 : vector<16x1x1xf32>
    %5 = vector.broadcast %4 : vector<16x1x1xf32> to vector<16x1x64xf32>
    %6 = arith.subf %0, %5 : vector<16x1x64xf32>
    %7 = arith.mulf %6, %6 : vector<16x1x64xf32>
    %cst_3 = arith.constant dense<0.000000e+00> : vector<16x1xf32>
    %8 = vector.multi_reduction <add>, %7, %cst_3 [2] : vector<16x1x64xf32> to vector<16x1xf32>
    %9 = vector.shape_cast %8 : vector<16x1xf32> to vector<16x1x1xf32>
    %cst_4 = arith.constant 6.400000e+01 : f32
    %10 = vector.broadcast %cst_4 : f32 to vector<16x1x1xf32>
    %11 = arith.divf %9, %10 : vector<16x1x1xf32>
    %cst_5 = arith.constant 6.400000e-04 : f32
    %12 = vector.broadcast %cst_5 : f32 to vector<16x1x1xf32>
    %13 = arith.addf %11, %12 : vector<16x1x1xf32>
    %14 = math.rsqrt %13 : vector<16x1x1xf32>
    %15 = vector.broadcast %14 : vector<16x1x1xf32> to vector<16x1x64xf32>
    %16 = arith.mulf %6, %15 : vector<16x1x64xf32>
    %c0_6 = arith.constant 0 : index
    %c0_7 = arith.constant 0 : index
    %c0_8 = arith.constant 0 : index
    %17 = vector.load %arg4[%c0_6, %c0_7, %c0_8] : memref<1x1x64xf32, #tpu.memory_space<vmem>>, vector<1x1x64xf32>
    %18 = vector.broadcast %17 : vector<1x1x64xf32> to vector<16x1x64xf32>
    %19 = arith.mulf %16, %18 : vector<16x1x64xf32>
    %c0_9 = arith.constant 0 : index
    %c0_10 = arith.constant 0 : index
    %c0_11 = arith.constant 0 : index
    %20 = vector.load %arg5[%c0_9, %c0_10, %c0_11] : memref<1x1x64xf32, #tpu.memory_space<vmem>>, vector<1x1x64xf32>
    %21 = vector.broadcast %20 : vector<1x1x64xf32> to vector<16x1x64xf32>
    %22 = arith.addf %19, %21 : vector<16x1x64xf32>
    %c0_12 = arith.constant 0 : index
    %c0_13 = arith.constant 0 : index
    %c0_14 = arith.constant 0 : index
    %23 = vector.load %arg3[%c0_12, %c0_13, %c0_14] : memref<16x1x64xf32, #tpu.memory_space<vmem>>, vector<16x1x64xf32>
    %24 = arith.addf %22, %23 : vector<16x1x64xf32>
    %c0_15 = arith.constant 0 : index
    %c0_16 = arith.constant 0 : index
    %c0_17 = arith.constant 0 : index
    %25 = vector.load %arg2[%c0_15, %c0_16, %c0_17] : memref<16x1x64xf32, #tpu.memory_space<vmem>>, vector<16x1x64xf32>
    %26 = arith.mulf %24, %25 : vector<16x1x64xf32>
    %c0_18 = arith.constant 0 : index
    %c0_19 = arith.constant 0 : index
    %c0_20 = arith.constant 0 : index
    %27 = vector.load %arg6[%c0_18, %c0_19, %c0_20] : memref<16x1x64xf32, #tpu.memory_space<vmem>>, vector<16x1x64xf32>
    tpu.vector_store %arg6[%c0_18, %c0_19, %c0_20], %26 {strides = array<i32>} : memref<16x1x64xf32, #tpu.memory_space<vmem>>, vector<16x1x64xf32>,
    return
  }
  func.func @transform_0(%arg0: i32) -> (i32, i32, i32) {
    %c0_i32 = arith.constant 0 : i32
    %c0_i32_0 = arith.constant 0 : i32
    %c0_i32_1 = arith.constant 0 : i32
    return %arg0, %c0_i32, %c0_i32_0 : i32, i32, i32
  }
  func.func @transform_1(%arg0: i32) -> (i32, i32, i32) {
    %c0_i32 = arith.constant 0 : i32
    %c0_i32_0 = arith.constant 0 : i32
    %c0_i32_1 = arith.constant 0 : i32
    return %arg0, %c0_i32, %c0_i32_0 : i32, i32, i32
  }
  func.func @transform_2(%arg0: i32) -> (i32, i32, i32) {
    %c0_i32 = arith.constant 0 : i32
    %c0_i32_0 = arith.constant 0 : i32
    %c0_i32_1 = arith.constant 0 : i32
    return %arg0, %c0_i32, %c0_i32_0 : i32, i32, i32
  }
  func.func @transform_3(%arg0: i32) -> (i32, i32, i32) {
    %c0_i32 = arith.constant 0 : i32
    %c0_i32_0 = arith.constant 0 : i32
    %c0_i32_1 = arith.constant 0 : i32
    %c0_i32_2 = arith.constant 0 : i32
    return %c0_i32, %c0_i32_0, %c0_i32_1 : i32, i32, i32
  }
  func.func @transform_4(%arg0: i32) -> (i32, i32, i32) {
    %c0_i32 = arith.constant 0 : i32
    %c0_i32_0 = arith.constant 0 : i32
    %c0_i32_1 = arith.constant 0 : i32
    %c0_i32_2 = arith.constant 0 : i32
    return %c0_i32, %c0_i32_0, %c0_i32_1 : i32, i32, i32
  }
  func.func @transform_5(%arg0: i32) -> (i32, i32, i32) {
    %c0_i32 = arith.constant 0 : i32
    %c0_i32_0 = arith.constant 0 : i32
    %c0_i32_1 = arith.constant 0 : i32
    return %arg0, %c0_i32, %c0_i32_0 : i32, i32, i32
  }
}

module attributes {stable_mosaic.version = 11 : i64} {
  func.func @_linear_kernel(%arg0: i32, %arg1: i32, %arg2: memref<16x64xf32, #tpu.memory_space<vmem>>, %arg3: memref<64x64xf32, #tpu.memory_space<vmem>>, %arg4: memref<16x64xf32, #tpu.memory_space<vmem>>) attributes {dimension_semantics = [#tpu.dimension_semantics<parallel>, #tpu.dimension_semantics<parallel>], iteration_bounds = array<i64: 1, 1>, scalar_prefetch = 0 : i64, scratch_operands = 0 : i64, tpu.core_type = #tpu.core_type<tc>, window_params = [{transform_indices = @transform_0, window_bounds = array<i64: 16, 64>}, {transform_indices = @transform_1, window_bounds = array<i64: 64, 64>}, {transform_indices = @transform_2, window_bounds = array<i64: 16, 64>}]} {
    %c0 = arith.constant 0 : index
    %c0_0 = arith.constant 0 : index
    %0 = vector.load %arg2[%c0, %c0_0] : memref<16x64xf32, #tpu.memory_space<vmem>>, vector<16x64xf32>
    %c0_1 = arith.constant 0 : index
    %c0_2 = arith.constant 0 : index
    %1 = vector.load %arg3[%c0_1, %c0_2] : memref<64x64xf32, #tpu.memory_space<vmem>>, vector<64x64xf32>
    %cst = arith.constant dense<0.000000e+00> : vector<16x64xf32>
    %2 = tpu.matmul %0, %1, %cst {dimension_numbers = #tpu.dot_dimension_numbers<[1], [0], [0], [1], [0, 0, 1, 1], [], []>} : vector<16x64xf32>, vector<64x64xf32>, vector<16x64xf32> -> vector<16x64xf32>
    %c0_3 = arith.constant 0 : index
    %c0_4 = arith.constant 0 : index
    %3 = vector.load %arg4[%c0_3, %c0_4] : memref<16x64xf32, #tpu.memory_space<vmem>>, vector<16x64xf32>
    tpu.vector_store %arg4[%c0_3, %c0_4], %2 {strides = array<i32>} : memref<16x64xf32, #tpu.memory_space<vmem>>, vector<16x64xf32>,
    return
  }
  func.func @transform_0(%arg0: i32, %arg1: i32) -> (i32, i32) {
    %c0_i32 = arith.constant 0 : i32
    %c0_i32_0 = arith.constant 0 : i32
    return %arg0, %c0_i32 : i32, i32
  }
  func.func @transform_1(%arg0: i32, %arg1: i32) -> (i32, i32) {
    %c0_i32 = arith.constant 0 : i32
    %c0_i32_0 = arith.constant 0 : i32
    return %c0_i32, %arg1 : i32, i32
  }
  func.func @transform_2(%arg0: i32, %arg1: i32) -> (i32, i32) {
    %c0_i32 = arith.constant 0 : i32
    return %arg0, %arg1 : i32, i32
  }
}

module attributes {stable_mosaic.version = 11 : i64} {
  func.func @_linear_kernel(%arg0: i32, %arg1: i32, %arg2: memref<16x64xf32, #tpu.memory_space<vmem>>, %arg3: memref<64x128xf32, #tpu.memory_space<vmem>>, %arg4: memref<1x128xf32, #tpu.memory_space<vmem>>, %arg5: memref<16x128xf32, #tpu.memory_space<vmem>>) attributes {dimension_semantics = [#tpu.dimension_semantics<parallel>, #tpu.dimension_semantics<parallel>], iteration_bounds = array<i64: 1, 1>, scalar_prefetch = 0 : i64, scratch_operands = 0 : i64, tpu.core_type = #tpu.core_type<tc>, window_params = [{transform_indices = @transform_0, window_bounds = array<i64: 16, 64>}, {transform_indices = @transform_1, window_bounds = array<i64: 64, 128>}, {transform_indices = @transform_2, window_bounds = array<i64: 1, 128>}, {transform_indices = @transform_3, window_bounds = array<i64: 16, 128>}]} {
    %c0 = arith.constant 0 : index
    %c0_0 = arith.constant 0 : index
    %0 = vector.load %arg2[%c0, %c0_0] : memref<16x64xf32, #tpu.memory_space<vmem>>, vector<16x64xf32>
    %c0_1 = arith.constant 0 : index
    %c0_2 = arith.constant 0 : index
    %1 = vector.load %arg3[%c0_1, %c0_2] : memref<64x128xf32, #tpu.memory_space<vmem>>, vector<64x128xf32>
    %cst = arith.constant dense<0.000000e+00> : vector<16x128xf32>
    %2 = tpu.matmul %0, %1, %cst {dimension_numbers = #tpu.dot_dimension_numbers<[1], [0], [0], [1], [0, 0, 1, 1], [], []>} : vector<16x64xf32>, vector<64x128xf32>, vector<16x128xf32> -> vector<16x128xf32>
    %c0_3 = arith.constant 0 : index
    %c0_4 = arith.constant 0 : index
    %3 = vector.load %arg4[%c0_3, %c0_4] : memref<1x128xf32, #tpu.memory_space<vmem>>, vector<1x128xf32>
    %4 = vector.broadcast %3 : vector<1x128xf32> to vector<16x128xf32>
    %5 = arith.addf %2, %4 : vector<16x128xf32>
    %cst_5 = arith.constant 0.000000e+00 : f32
    %6 = vector.broadcast %cst_5 : f32 to vector<16x128xf32>
    %7 = arith.maximumf %5, %6 : vector<16x128xf32>
    %c0_6 = arith.constant 0 : index
    %c0_7 = arith.constant 0 : index
    %8 = vector.load %arg5[%c0_6, %c0_7] : memref<16x128xf32, #tpu.memory_space<vmem>>, vector<16x128xf32>
    tpu.vector_store %arg5[%c0_6, %c0_7], %7 {strides = array<i32>} : memref<16x128xf32, #tpu.memory_space<vmem>>, vector<16x128xf32>,
    return
  }
  func.func @transform_0(%arg0: i32, %arg1: i32) -> (i32, i32) {
    %c0_i32 = arith.constant 0 : i32
    %c0_i32_0 = arith.constant 0 : i32
    return %arg0, %c0_i32 : i32, i32
  }
  func.func @transform_1(%arg0: i32, %arg1: i32) -> (i32, i32) {
    %c0_i32 = arith.constant 0 : i32
    %c0_i32_0 = arith.constant 0 : i32
    return %c0_i32, %arg1 : i32, i32
  }
  func.func @transform_2(%arg0: i32, %arg1: i32) -> (i32, i32) {
    %c0_i32 = arith.constant 0 : i32
    %c0_i32_0 = arith.constant 0 : i32
    return %c0_i32, %arg1 : i32, i32
  }
  func.func @transform_3(%arg0: i32, %arg1: i32) -> (i32, i32) {
    %c0_i32 = arith.constant 0 : i32
    return %arg0, %arg1 : i32, i32
  }
}

module attributes {stable_mosaic.version = 11 : i64} {
  func.func @_linear_kernel(%arg0: i32, %arg1: i32, %arg2: memref<16x128xf32, #tpu.memory_space<vmem>>, %arg3: memref<128x64xf32, #tpu.memory_space<vmem>>, %arg4: memref<1x64xf32, #tpu.memory_space<vmem>>, %arg5: memref<16x64xf32, #tpu.memory_space<vmem>>) attributes {dimension_semantics = [#tpu.dimension_semantics<parallel>, #tpu.dimension_semantics<parallel>], iteration_bounds = array<i64: 1, 1>, scalar_prefetch = 0 : i64, scratch_operands = 0 : i64, tpu.core_type = #tpu.core_type<tc>, window_params = [{transform_indices = @transform_0, window_bounds = array<i64: 16, 128>}, {transform_indices = @transform_1, window_bounds = array<i64: 128, 64>}, {transform_indices = @transform_2, window_bounds = array<i64: 1, 64>}, {transform_indices = @transform_3, window_bounds = array<i64: 16, 64>}]} {
    %c0 = arith.constant 0 : index
    %c0_0 = arith.constant 0 : index
    %0 = vector.load %arg2[%c0, %c0_0] : memref<16x128xf32, #tpu.memory_space<vmem>>, vector<16x128xf32>
    %c0_1 = arith.constant 0 : index
    %c0_2 = arith.constant 0 : index
    %1 = vector.load %arg3[%c0_1, %c0_2] : memref<128x64xf32, #tpu.memory_space<vmem>>, vector<128x64xf32>
    %cst = arith.constant dense<0.000000e+00> : vector<16x64xf32>
    %2 = tpu.matmul %0, %1, %cst {dimension_numbers = #tpu.dot_dimension_numbers<[1], [0], [0], [1], [0, 0, 1, 1], [], []>} : vector<16x128xf32>, vector<128x64xf32>, vector<16x64xf32> -> vector<16x64xf32>
    %c0_3 = arith.constant 0 : index
    %c0_4 = arith.constant 0 : index
    %3 = vector.load %arg4[%c0_3, %c0_4] : memref<1x64xf32, #tpu.memory_space<vmem>>, vector<1x64xf32>
    %4 = vector.broadcast %3 : vector<1x64xf32> to vector<16x64xf32>
    %5 = arith.addf %2, %4 : vector<16x64xf32>
    %c0_5 = arith.constant 0 : index
    %c0_6 = arith.constant 0 : index
    %6 = vector.load %arg5[%c0_5, %c0_6] : memref<16x64xf32, #tpu.memory_space<vmem>>, vector<16x64xf32>
    tpu.vector_store %arg5[%c0_5, %c0_6], %5 {strides = array<i32>} : memref<16x64xf32, #tpu.memory_space<vmem>>, vector<16x64xf32>,
    return
  }
  func.func @transform_0(%arg0: i32, %arg1: i32) -> (i32, i32) {
    %c0_i32 = arith.constant 0 : i32
    %c0_i32_0 = arith.constant 0 : i32
    return %arg0, %c0_i32 : i32, i32
  }
  func.func @transform_1(%arg0: i32, %arg1: i32) -> (i32, i32) {
    %c0_i32 = arith.constant 0 : i32
    %c0_i32_0 = arith.constant 0 : i32
    return %c0_i32, %arg1 : i32, i32
  }
  func.func @transform_2(%arg0: i32, %arg1: i32) -> (i32, i32) {
    %c0_i32 = arith.constant 0 : i32
    %c0_i32_0 = arith.constant 0 : i32
    return %c0_i32, %arg1 : i32, i32
  }
  func.func @transform_3(%arg0: i32, %arg1: i32) -> (i32, i32) {
    %c0_i32 = arith.constant 0 : i32
    return %arg0, %arg1 : i32, i32
  }
}

module attributes {stable_mosaic.version = 11 : i64} {
  func.func @_proj_kernel(%arg0: i32, %arg1: i32, %arg2: memref<16x64xf32, #tpu.memory_space<vmem>>, %arg3: memref<16x64xf32, #tpu.memory_space<vmem>>, %arg4: memref<6x64xf32, #tpu.memory_space<vmem>>, %arg5: memref<64x64xf32, #tpu.memory_space<vmem>>, %arg6: memref<64x64xf32, #tpu.memory_space<vmem>>, %arg7: memref<64x64xf32, #tpu.memory_space<vmem>>, %arg8: memref<64x16xf32, #tpu.memory_space<vmem>>, %arg9: memref<16x64xf32, #tpu.memory_space<vmem>>, %arg10: memref<1x64xf32, #tpu.memory_space<vmem>>, %arg11: memref<64x16xf32, #tpu.memory_space<vmem>>, %arg12: memref<16x64xf32, #tpu.memory_space<vmem>>, %arg13: memref<1x64xf32, #tpu.memory_space<vmem>>, %arg14: memref<64x16xf32, #tpu.memory_space<vmem>>, %arg15: memref<16x64xf32, #tpu.memory_space<vmem>>, %arg16: memref<64x8xf32, #tpu.memory_space<vmem>>, %arg17: memref<8x64xf32, #tpu.memory_space<vmem>>, %arg18: memref<1x64xf32, #tpu.memory_space<vmem>>, %arg19: memref<16x64xf32, #tpu.memory_space<vmem>>, %arg20: memref<16x64xf32, #tpu.memory_space<vmem>>, %arg21: memref<16x64xf32, #tpu.memory_space<vmem>>, %arg22: memref<16x64xf32, #tpu.memory_space<vmem>>, %arg23: memref<16x64xf32, #tpu.memory_space<vmem>>, %arg24: memref<16x64xf32, #tpu.memory_space<vmem>>, %arg25: memref<16x64xf32, #tpu.memory_space<vmem>>) attributes {dimension_semantics = [#tpu.dimension_semantics<parallel>, #tpu.dimension_semantics<parallel>], iteration_bounds = array<i64: 1, 1>, scalar_prefetch = 0 : i64, scratch_operands = 0 : i64, tpu.core_type = #tpu.core_type<tc>, window_params = [{transform_indices = @transform_0, window_bounds = array<i64: 16, 64>}, {transform_indices = @transform_1, window_bounds = array<i64: 16, 64>}, {pipeline_mode = #tpu.pipeline_mode<synchronous>, transform_indices = @transform_2, window_bounds = array<i64: 6, 64>}, {transform_indices = @transform_3, window_bounds = array<i64: 64, 64>}, {transform_indices = @transform_4, window_bounds = array<i64: 64, 64>}, {transform_indices = @transform_5, window_bounds = array<i64: 64, 64>}, {pipeline_mode = #tpu.pipeline_mode<synchronous>, transform_indices = @transform_6, window_bounds = array<i64: 64, 16>}, {transform_indices = @transform_7, window_bounds = array<i64: 16, 64>}, {transform_indices = @transform_8, window_bounds = array<i64: 1, 64>}, {pipeline_mode = #tpu.pipeline_mode<synchronous>, transform_indices = @transform_9, window_bounds = array<i64: 64, 16>}, {transform_indices = @transform_10, window_bounds = array<i64: 16, 64>}, {transform_indices = @transform_11, window_bounds = array<i64: 1, 64>}, {pipeline_mode = #tpu.pipeline_mode<synchronous>, transform_indices = @transform_12, window_bounds = array<i64: 64, 16>}, {transform_indices = @transform_13, window_bounds = array<i64: 16, 64>}, {pipeline_mode = #tpu.pipeline_mode<synchronous>, transform_indices = @transform_14, window_bounds = array<i64: 64, 8>}, {transform_indices = @transform_15, window_bounds = array<i64: 8, 64>}, {transform_indices = @transform_16, window_bounds = array<i64: 1, 64>}, {transform_indices = @transform_17, window_bounds = array<i64: 16, 64>}, {transform_indices = @transform_18, window_bounds = array<i64: 16, 64>}, {transform_indices = @transform_19, window_bounds = array<i64: 16, 64>}, {transform_indices = @transform_20, window_bounds = array<i64: 16, 64>}, {transform_indices = @transform_21, window_bounds = array<i64: 16, 64>}, {transform_indices = @transform_22, window_bounds = array<i64: 16, 64>}, {transform_indices = @transform_23, window_bounds = array<i64: 16, 64>}]} {
    %c0 = arith.constant 0 : index
    %c0_0 = arith.constant 0 : index
    %0 = vector.load %arg2[%c0, %c0_0] : memref<16x64xf32, #tpu.memory_space<vmem>>, vector<16x64xf32>
    %c0_1 = arith.constant 0 : index
    %c0_2 = arith.constant 0 : index
    %1 = vector.load %arg3[%c0_1, %c0_2] : memref<16x64xf32, #tpu.memory_space<vmem>>, vector<16x64xf32>
    %c0_3 = arith.constant 0 : index
    %c0_4 = arith.constant 0 : index
    %2 = vector.load %arg4[%c0_3, %c0_4] : memref<6x64xf32, #tpu.memory_space<vmem>>, vector<6x64xf32>
    %3 = vector.extract_strided_slice %2 {offsets = [0, 0], sizes = [1, 64], strides = [1, 1]} : vector<6x64xf32> to vector<1x64xf32>
    %4 = vector.broadcast %3 : vector<1x64xf32> to vector<16x64xf32>
    %5 = arith.mulf %1, %4 : vector<16x64xf32>
    %6 = arith.addf %0, %5 : vector<16x64xf32>
    %7 = vector.extract_strided_slice %2 {offsets = [1, 0], sizes = [1, 64], strides = [1, 1]} : vector<6x64xf32> to vector<1x64xf32>
    %8 = vector.broadcast %7 : vector<1x64xf32> to vector<16x64xf32>
    %9 = arith.mulf %1, %8 : vector<16x64xf32>
    %10 = arith.addf %0, %9 : vector<16x64xf32>
    %11 = vector.extract_strided_slice %2 {offsets = [2, 0], sizes = [1, 64], strides = [1, 1]} : vector<6x64xf32> to vector<1x64xf32>
    %12 = vector.broadcast %11 : vector<1x64xf32> to vector<16x64xf32>
    %13 = arith.mulf %1, %12 : vector<16x64xf32>
    %14 = arith.addf %0, %13 : vector<16x64xf32>
    %15 = vector.extract_strided_slice %2 {offsets = [3, 0], sizes = [1, 64], strides = [1, 1]} : vector<6x64xf32> to vector<1x64xf32>
    %16 = vector.broadcast %15 : vector<1x64xf32> to vector<16x64xf32>
    %17 = arith.mulf %1, %16 : vector<16x64xf32>
    %18 = arith.addf %0, %17 : vector<16x64xf32>
    %19 = vector.extract_strided_slice %2 {offsets = [4, 0], sizes = [1, 64], strides = [1, 1]} : vector<6x64xf32> to vector<1x64xf32>
    %20 = vector.broadcast %19 : vector<1x64xf32> to vector<16x64xf32>
    %21 = arith.mulf %1, %20 : vector<16x64xf32>
    %22 = arith.addf %0, %21 : vector<16x64xf32>
    %23 = vector.extract_strided_slice %2 {offsets = [5, 0], sizes = [1, 64], strides = [1, 1]} : vector<6x64xf32> to vector<1x64xf32>
    %24 = vector.broadcast %23 : vector<1x64xf32> to vector<16x64xf32>
    %25 = arith.mulf %1, %24 : vector<16x64xf32>
    %26 = arith.addf %0, %25 : vector<16x64xf32>
    %c0_5 = arith.constant 0 : index
    %c0_6 = arith.constant 0 : index
    %27 = vector.load %arg5[%c0_5, %c0_6] : memref<64x64xf32, #tpu.memory_space<vmem>>, vector<64x64xf32>
    %cst = arith.constant dense<0.000000e+00> : vector<16x64xf32>
    %28 = tpu.matmul %6, %27, %cst {dimension_numbers = #tpu.dot_dimension_numbers<[1], [0], [0], [1], [0, 0, 1, 1], [], []>} : vector<16x64xf32>, vector<64x64xf32>, vector<16x64xf32> -> vector<16x64xf32>
    %c0_7 = arith.constant 0 : index
    %c0_8 = arith.constant 0 : index
    %29 = vector.load %arg19[%c0_7, %c0_8] : memref<16x64xf32, #tpu.memory_space<vmem>>, vector<16x64xf32>
    tpu.vector_store %arg19[%c0_7, %c0_8], %28 {strides = array<i32>} : memref<16x64xf32, #tpu.memory_space<vmem>>, vector<16x64xf32>,
    %c0_9 = arith.constant 0 : index
    %c0_10 = arith.constant 0 : index
    %30 = vector.load %arg6[%c0_9, %c0_10] : memref<64x64xf32, #tpu.memory_space<vmem>>, vector<64x64xf32>
    %cst_11 = arith.constant dense<0.000000e+00> : vector<16x64xf32>
    %31 = tpu.matmul %14, %30, %cst_11 {dimension_numbers = #tpu.dot_dimension_numbers<[1], [0], [0], [1], [0, 0, 1, 1], [], []>} : vector<16x64xf32>, vector<64x64xf32>, vector<16x64xf32> -> vector<16x64xf32>
    %c0_12 = arith.constant 0 : index
    %c0_13 = arith.constant 0 : index
    %32 = vector.load %arg20[%c0_12, %c0_13] : memref<16x64xf32, #tpu.memory_space<vmem>>, vector<16x64xf32>
    tpu.vector_store %arg20[%c0_12, %c0_13], %31 {strides = array<i32>} : memref<16x64xf32, #tpu.memory_space<vmem>>, vector<16x64xf32>,
    %c0_14 = arith.constant 0 : index
    %c0_15 = arith.constant 0 : index
    %33 = vector.load %arg7[%c0_14, %c0_15] : memref<64x64xf32, #tpu.memory_space<vmem>>, vector<64x64xf32>
    %cst_16 = arith.constant dense<0.000000e+00> : vector<16x64xf32>
    %34 = tpu.matmul %18, %33, %cst_16 {dimension_numbers = #tpu.dot_dimension_numbers<[1], [0], [0], [1], [0, 0, 1, 1], [], []>} : vector<16x64xf32>, vector<64x64xf32>, vector<16x64xf32> -> vector<16x64xf32>
    %c0_17 = arith.constant 0 : index
    %c0_18 = arith.constant 0 : index
    %35 = vector.load %arg21[%c0_17, %c0_18] : memref<16x64xf32, #tpu.memory_space<vmem>>, vector<16x64xf32>
    tpu.vector_store %arg21[%c0_17, %c0_18], %34 {strides = array<i32>} : memref<16x64xf32, #tpu.memory_space<vmem>>, vector<16x64xf32>,
    %c0_19 = arith.constant 0 : index
    %c0_20 = arith.constant 0 : index
    %36 = vector.load %arg8[%c0_19, %c0_20] : memref<64x16xf32, #tpu.memory_space<vmem>>, vector<64x16xf32>
    %cst_21 = arith.constant dense<0.000000e+00> : vector<16x16xf32>
    %37 = tpu.matmul %10, %36, %cst_21 {dimension_numbers = #tpu.dot_dimension_numbers<[1], [0], [0], [1], [0, 0, 1, 1], [], []>} : vector<16x64xf32>, vector<64x16xf32>, vector<16x16xf32> -> vector<16x16xf32>
    %38 = math.tanh %37 : vector<16x16xf32>
    %c0_22 = arith.constant 0 : index
    %c0_23 = arith.constant 0 : index
    %39 = vector.load %arg9[%c0_22, %c0_23] : memref<16x64xf32, #tpu.memory_space<vmem>>, vector<16x64xf32>
    %cst_24 = arith.constant dense<0.000000e+00> : vector<16x64xf32>
    %40 = tpu.matmul %38, %39, %cst_24 {dimension_numbers = #tpu.dot_dimension_numbers<[1], [0], [0], [1], [0, 0, 1, 1], [], []>} : vector<16x16xf32>, vector<16x64xf32>, vector<16x64xf32> -> vector<16x64xf32>
    %c0_25 = arith.constant 0 : index
    %c0_26 = arith.constant 0 : index
    %41 = vector.load %arg10[%c0_25, %c0_26] : memref<1x64xf32, #tpu.memory_space<vmem>>, vector<1x64xf32>
    %42 = vector.broadcast %41 : vector<1x64xf32> to vector<16x64xf32>
    %43 = arith.addf %40, %42 : vector<16x64xf32>
    %cst_27 = arith.constant 0.000000e+00 : f32
    %44 = vector.broadcast %cst_27 : f32 to vector<16x64xf32>
    %45 = arith.subf %44, %43 : vector<16x64xf32>
    %46 = math.exp %45 : vector<16x64xf32>
    %cst_28 = arith.constant 1.000000e+00 : f32
    %47 = vector.broadcast %cst_28 : f32 to vector<16x64xf32>
    %48 = arith.addf %47, %46 : vector<16x64xf32>
    %cst_29 = arith.constant 1.000000e+00 : f32
    %49 = vector.broadcast %cst_29 : f32 to vector<16x64xf32>
    %50 = arith.divf %49, %48 : vector<16x64xf32>
    %cst_30 = arith.constant -0.606530666 : f32
    %51 = vector.broadcast %cst_30 : f32 to vector<16x64xf32>
    %52 = arith.mulf %50, %51 : vector<16x64xf32>
    %c0_31 = arith.constant 0 : index
    %c0_32 = arith.constant 0 : index
    %53 = vector.load %arg22[%c0_31, %c0_32] : memref<16x64xf32, #tpu.memory_space<vmem>>, vector<16x64xf32>
    tpu.vector_store %arg22[%c0_31, %c0_32], %52 {strides = array<i32>} : memref<16x64xf32, #tpu.memory_space<vmem>>, vector<16x64xf32>,
    %c0_33 = arith.constant 0 : index
    %c0_34 = arith.constant 0 : index
    %54 = vector.load %arg11[%c0_33, %c0_34] : memref<64x16xf32, #tpu.memory_space<vmem>>, vector<64x16xf32>
    %cst_35 = arith.constant dense<0.000000e+00> : vector<16x16xf32>
    %55 = tpu.matmul %22, %54, %cst_35 {dimension_numbers = #tpu.dot_dimension_numbers<[1], [0], [0], [1], [0, 0, 1, 1], [], []>} : vector<16x64xf32>, vector<64x16xf32>, vector<16x16xf32> -> vector<16x16xf32>
    %c0_36 = arith.constant 0 : index
    %c0_37 = arith.constant 0 : index
    %56 = vector.load %arg12[%c0_36, %c0_37] : memref<16x64xf32, #tpu.memory_space<vmem>>, vector<16x64xf32>
    %cst_38 = arith.constant dense<0.000000e+00> : vector<16x64xf32>
    %57 = tpu.matmul %55, %56, %cst_38 {dimension_numbers = #tpu.dot_dimension_numbers<[1], [0], [0], [1], [0, 0, 1, 1], [], []>} : vector<16x16xf32>, vector<16x64xf32>, vector<16x64xf32> -> vector<16x64xf32>
    %c0_39 = arith.constant 0 : index
    %c0_40 = arith.constant 0 : index
    %58 = vector.load %arg13[%c0_39, %c0_40] : memref<1x64xf32, #tpu.memory_space<vmem>>, vector<1x64xf32>
    %59 = vector.broadcast %58 : vector<1x64xf32> to vector<16x64xf32>
    %60 = arith.addf %57, %59 : vector<16x64xf32>
    %cst_41 = arith.constant 0.000000e+00 : f32
    %61 = vector.broadcast %cst_41 : f32 to vector<16x64xf32>
    %62 = arith.subf %61, %60 : vector<16x64xf32>
    %63 = math.exp %62 : vector<16x64xf32>
    %cst_42 = arith.constant 1.000000e+00 : f32
    %64 = vector.broadcast %cst_42 : f32 to vector<16x64xf32>
    %65 = arith.addf %64, %63 : vector<16x64xf32>
    %cst_43 = arith.constant 1.000000e+00 : f32
    %66 = vector.broadcast %cst_43 : f32 to vector<16x64xf32>
    %67 = arith.divf %66, %65 : vector<16x64xf32>
    %c0_44 = arith.constant 0 : index
    %c0_45 = arith.constant 0 : index
    %68 = vector.load %arg23[%c0_44, %c0_45] : memref<16x64xf32, #tpu.memory_space<vmem>>, vector<16x64xf32>
    tpu.vector_store %arg23[%c0_44, %c0_45], %67 {strides = array<i32>} : memref<16x64xf32, #tpu.memory_space<vmem>>, vector<16x64xf32>,
    %c0_46 = arith.constant 0 : index
    %c0_47 = arith.constant 0 : index
    %69 = vector.load %arg14[%c0_46, %c0_47] : memref<64x16xf32, #tpu.memory_space<vmem>>, vector<64x16xf32>
    %cst_48 = arith.constant dense<0.000000e+00> : vector<16x16xf32>
    %70 = tpu.matmul %26, %69, %cst_48 {dimension_numbers = #tpu.dot_dimension_numbers<[1], [0], [0], [1], [0, 0, 1, 1], [], []>} : vector<16x64xf32>, vector<64x16xf32>, vector<16x16xf32> -> vector<16x16xf32>
    %cst_49 = arith.constant 0.000000e+00 : f32
    %71 = vector.broadcast %cst_49 : f32 to vector<16x16xf32>
    %72 = arith.subf %71, %70 : vector<16x16xf32>
    %73 = math.exp %72 : vector<16x16xf32>
    %cst_50 = arith.constant 1.000000e+00 : f32
    %74 = vector.broadcast %cst_50 : f32 to vector<16x16xf32>
    %75 = arith.addf %74, %73 : vector<16x16xf32>
    %cst_51 = arith.constant 1.000000e+00 : f32
    %76 = vector.broadcast %cst_51 : f32 to vector<16x16xf32>
    %77 = arith.divf %76, %75 : vector<16x16xf32>
    %c0_52 = arith.constant 0 : index
    %c0_53 = arith.constant 0 : index
    %78 = vector.load %arg15[%c0_52, %c0_53] : memref<16x64xf32, #tpu.memory_space<vmem>>, vector<16x64xf32>
    %cst_54 = arith.constant dense<0.000000e+00> : vector<16x64xf32>
    %79 = tpu.matmul %77, %78, %cst_54 {dimension_numbers = #tpu.dot_dimension_numbers<[1], [0], [0], [1], [0, 0, 1, 1], [], []>} : vector<16x16xf32>, vector<16x64xf32>, vector<16x64xf32> -> vector<16x64xf32>
    %c0_55 = arith.constant 0 : index
    %c0_56 = arith.constant 0 : index
    %80 = vector.load %arg24[%c0_55, %c0_56] : memref<16x64xf32, #tpu.memory_space<vmem>>, vector<16x64xf32>
    tpu.vector_store %arg24[%c0_55, %c0_56], %79 {strides = array<i32>} : memref<16x64xf32, #tpu.memory_space<vmem>>, vector<16x64xf32>,
    %c0_57 = arith.constant 0 : index
    %c0_58 = arith.constant 0 : index
    %81 = vector.load %arg16[%c0_57, %c0_58] : memref<64x8xf32, #tpu.memory_space<vmem>>, vector<64x8xf32>
    %cst_59 = arith.constant dense<0.000000e+00> : vector<16x8xf32>
    %82 = tpu.matmul %18, %81, %cst_59 {dimension_numbers = #tpu.dot_dimension_numbers<[1], [0], [0], [1], [0, 0, 1, 1], [], []>} : vector<16x64xf32>, vector<64x8xf32>, vector<16x8xf32> -> vector<16x8xf32>
    %c0_60 = arith.constant 0 : index
    %c0_61 = arith.constant 0 : index
    %83 = vector.load %arg17[%c0_60, %c0_61] : memref<8x64xf32, #tpu.memory_space<vmem>>, vector<8x64xf32>
    %cst_62 = arith.constant dense<0.000000e+00> : vector<16x64xf32>
    %84 = tpu.matmul %82, %83, %cst_62 {dimension_numbers = #tpu.dot_dimension_numbers<[1], [0], [0], [1], [0, 0, 1, 1], [], []>} : vector<16x8xf32>, vector<8x64xf32>, vector<16x64xf32> -> vector<16x64xf32>
    %c0_63 = arith.constant 0 : index
    %c0_64 = arith.constant 0 : index
    %85 = vector.load %arg18[%c0_63, %c0_64] : memref<1x64xf32, #tpu.memory_space<vmem>>, vector<1x64xf32>
    %86 = vector.broadcast %85 : vector<1x64xf32> to vector<16x64xf32>
    %87 = arith.addf %84, %86 : vector<16x64xf32>
    %cst_65 = arith.constant 0.000000e+00 : f32
    %88 = vector.broadcast %cst_65 : f32 to vector<16x64xf32>
    %89 = arith.subf %88, %87 : vector<16x64xf32>
    %90 = math.exp %89 : vector<16x64xf32>
    %cst_66 = arith.constant 1.000000e+00 : f32
    %91 = vector.broadcast %cst_66 : f32 to vector<16x64xf32>
    %92 = arith.addf %91, %90 : vector<16x64xf32>
    %cst_67 = arith.constant 1.000000e+00 : f32
    %93 = vector.broadcast %cst_67 : f32 to vector<16x64xf32>
    %94 = arith.divf %93, %92 : vector<16x64xf32>
    %c0_68 = arith.constant 0 : index
    %c0_69 = arith.constant 0 : index
    %95 = vector.load %arg25[%c0_68, %c0_69] : memref<16x64xf32, #tpu.memory_space<vmem>>, vector<16x64xf32>
    tpu.vector_store %arg25[%c0_68, %c0_69], %94 {strides = array<i32>} : memref<16x64xf32, #tpu.memory_space<vmem>>, vector<16x64xf32>,
    return
  }
  func.func @transform_0(%arg0: i32, %arg1: i32) -> (i32, i32) {
    %c0_i32 = arith.constant 0 : i32
    %c0_i32_0 = arith.constant 0 : i32
    return %arg0, %c0_i32 : i32, i32
  }
  func.func @transform_1(%arg0: i32, %arg1: i32) -> (i32, i32) {
    %c0_i32 = arith.constant 0 : i32
    %c0_i32_0 = arith.constant 0 : i32
    return %arg0, %c0_i32 : i32, i32
  }
  func.func @transform_2(%arg0: i32, %arg1: i32) -> (i32, i32) {
    %c0_i32 = arith.constant 0 : i32
    %c0_i32_0 = arith.constant 0 : i32
    %c0_i32_1 = arith.constant 0 : i32
    return %c0_i32, %c0_i32_0 : i32, i32
  }
  func.func @transform_3(%arg0: i32, %arg1: i32) -> (i32, i32) {
    %c0_i32 = arith.constant 0 : i32
    %c0_i32_0 = arith.constant 0 : i32
    return %c0_i32, %arg1 : i32, i32
  }
  func.func @transform_4(%arg0: i32, %arg1: i32) -> (i32, i32) {
    %c0_i32 = arith.constant 0 : i32
    %c0_i32_0 = arith.constant 0 : i32
    return %c0_i32, %arg1 : i32, i32
  }
  func.func @transform_5(%arg0: i32, %arg1: i32) -> (i32, i32) {
    %c0_i32 = arith.constant 0 : i32
    %c0_i32_0 = arith.constant 0 : i32
    return %c0_i32, %arg1 : i32, i32
  }
  func.func @transform_6(%arg0: i32, %arg1: i32) -> (i32, i32) {
    %c0_i32 = arith.constant 0 : i32
    %c0_i32_0 = arith.constant 0 : i32
    %c0_i32_1 = arith.constant 0 : i32
    return %c0_i32, %c0_i32_0 : i32, i32
  }
  func.func @transform_7(%arg0: i32, %arg1: i32) -> (i32, i32) {
    %c0_i32 = arith.constant 0 : i32
    %c0_i32_0 = arith.constant 0 : i32
    return %c0_i32, %arg1 : i32, i32
  }
  func.func @transform_8(%arg0: i32, %arg1: i32) -> (i32, i32) {
    %c0_i32 = arith.constant 0 : i32
    %c0_i32_0 = arith.constant 0 : i32
    return %c0_i32, %arg1 : i32, i32
  }
  func.func @transform_9(%arg0: i32, %arg1: i32) -> (i32, i32) {
    %c0_i32 = arith.constant 0 : i32
    %c0_i32_0 = arith.constant 0 : i32
    %c0_i32_1 = arith.constant 0 : i32
    return %c0_i32, %c0_i32_0 : i32, i32
  }
  func.func @transform_10(%arg0: i32, %arg1: i32) -> (i32, i32) {
    %c0_i32 = arith.constant 0 : i32
    %c0_i32_0 = arith.constant 0 : i32
    return %c0_i32, %arg1 : i32, i32
  }
  func.func @transform_11(%arg0: i32, %arg1: i32) -> (i32, i32) {
    %c0_i32 = arith.constant 0 : i32
    %c0_i32_0 = arith.constant 0 : i32
    return %c0_i32, %arg1 : i32, i32
  }
  func.func @transform_12(%arg0: i32, %arg1: i32) -> (i32, i32) {
    %c0_i32 = arith.constant 0 : i32
    %c0_i32_0 = arith.constant 0 : i32
    %c0_i32_1 = arith.constant 0 : i32
    return %c0_i32, %c0_i32_0 : i32, i32
  }
  func.func @transform_13(%arg0: i32, %arg1: i32) -> (i32, i32) {
    %c0_i32 = arith.constant 0 : i32
    %c0_i32_0 = arith.constant 0 : i32
    return %c0_i32, %arg1 : i32, i32
  }
  func.func @transform_14(%arg0: i32, %arg1: i32) -> (i32, i32) {
    %c0_i32 = arith.constant 0 : i32
    %c0_i32_0 = arith.constant 0 : i32
    %c0_i32_1 = arith.constant 0 : i32
    return %c0_i32, %c0_i32_0 : i32, i32
  }
  func.func @transform_15(%arg0: i32, %arg1: i32) -> (i32, i32) {
    %c0_i32 = arith.constant 0 : i32
    %c0_i32_0 = arith.constant 0 : i32
    return %c0_i32, %arg1 : i32, i32
  }
  func.func @transform_16(%arg0: i32, %arg1: i32) -> (i32, i32) {
    %c0_i32 = arith.constant 0 : i32
    %c0_i32_0 = arith.constant 0 : i32
    return %c0_i32, %arg1 : i32, i32
  }
  func.func @transform_17(%arg0: i32, %arg1: i32) -> (i32, i32) {
    %c0_i32 = arith.constant 0 : i32
    return %arg0, %arg1 : i32, i32
  }
  func.func @transform_18(%arg0: i32, %arg1: i32) -> (i32, i32) {
    %c0_i32 = arith.constant 0 : i32
    return %arg0, %arg1 : i32, i32
  }
  func.func @transform_19(%arg0: i32, %arg1: i32) -> (i32, i32) {
    %c0_i32 = arith.constant 0 : i32
    return %arg0, %arg1 : i32, i32
  }
  func.func @transform_20(%arg0: i32, %arg1: i32) -> (i32, i32) {
    %c0_i32 = arith.constant 0 : i32
    return %arg0, %arg1 : i32, i32
  }
  func.func @transform_21(%arg0: i32, %arg1: i32) -> (i32, i32) {
    %c0_i32 = arith.constant 0 : i32
    return %arg0, %arg1 : i32, i32
  }
  func.func @transform_22(%arg0: i32, %arg1: i32) -> (i32, i32) {
    %c0_i32 = arith.constant 0 : i32
    return %arg0, %arg1 : i32, i32
  }
  func.func @transform_23(%arg0: i32, %arg1: i32) -> (i32, i32) {
    %c0_i32 = arith.constant 0 : i32
    return %arg0, %arg1 : i32, i32
  }
}

module attributes {stable_mosaic.version = 11 : i64} {
  func.func @_linear_kernel(%arg0: i32, %arg1: i32, %arg2: memref<16x64xf32, #tpu.memory_space<vmem>>, %arg3: memref<64x128xf32, #tpu.memory_space<vmem>>, %arg4: memref<1x128xf32, #tpu.memory_space<vmem>>, %arg5: memref<16x128xf32, #tpu.memory_space<vmem>>) attributes {dimension_semantics = [#tpu.dimension_semantics<parallel>, #tpu.dimension_semantics<parallel>], iteration_bounds = array<i64: 1, 1>, scalar_prefetch = 0 : i64, scratch_operands = 0 : i64, tpu.core_type = #tpu.core_type<tc>, window_params = [{transform_indices = @transform_0, window_bounds = array<i64: 16, 64>}, {transform_indices = @transform_1, window_bounds = array<i64: 64, 128>}, {transform_indices = @transform_2, window_bounds = array<i64: 1, 128>}, {transform_indices = @transform_3, window_bounds = array<i64: 16, 128>}]} {
    %c0 = arith.constant 0 : index
    %c0_0 = arith.constant 0 : index
    %0 = vector.load %arg2[%c0, %c0_0] : memref<16x64xf32, #tpu.memory_space<vmem>>, vector<16x64xf32>
    %c0_1 = arith.constant 0 : index
    %c0_2 = arith.constant 0 : index
    %1 = vector.load %arg3[%c0_1, %c0_2] : memref<64x128xf32, #tpu.memory_space<vmem>>, vector<64x128xf32>
    %cst = arith.constant dense<0.000000e+00> : vector<16x128xf32>
    %2 = tpu.matmul %0, %1, %cst {dimension_numbers = #tpu.dot_dimension_numbers<[1], [0], [0], [1], [0, 0, 1, 1], [], []>} : vector<16x64xf32>, vector<64x128xf32>, vector<16x128xf32> -> vector<16x128xf32>
    %c0_3 = arith.constant 0 : index
    %c0_4 = arith.constant 0 : index
    %3 = vector.load %arg4[%c0_3, %c0_4] : memref<1x128xf32, #tpu.memory_space<vmem>>, vector<1x128xf32>
    %4 = vector.broadcast %3 : vector<1x128xf32> to vector<16x128xf32>
    %5 = arith.addf %2, %4 : vector<16x128xf32>
    %c0_5 = arith.constant 0 : index
    %c0_6 = arith.constant 0 : index
    %6 = vector.load %arg5[%c0_5, %c0_6] : memref<16x128xf32, #tpu.memory_space<vmem>>, vector<16x128xf32>
    tpu.vector_store %arg5[%c0_5, %c0_6], %5 {strides = array<i32>} : memref<16x128xf32, #tpu.memory_space<vmem>>, vector<16x128xf32>,
    return
  }
  func.func @transform_0(%arg0: i32, %arg1: i32) -> (i32, i32) {
    %c0_i32 = arith.constant 0 : i32
    %c0_i32_0 = arith.constant 0 : i32
    return %arg0, %c0_i32 : i32, i32
  }
  func.func @transform_1(%arg0: i32, %arg1: i32) -> (i32, i32) {
    %c0_i32 = arith.constant 0 : i32
    %c0_i32_0 = arith.constant 0 : i32
    return %c0_i32, %arg1 : i32, i32
  }
  func.func @transform_2(%arg0: i32, %arg1: i32) -> (i32, i32) {
    %c0_i32 = arith.constant 0 : i32
    %c0_i32_0 = arith.constant 0 : i32
    return %c0_i32, %arg1 : i32, i32
  }
  func.func @transform_3(%arg0: i32, %arg1: i32) -> (i32, i32) {
    %c0_i32 = arith.constant 0 : i32
    return %arg0, %arg1 : i32, i32
  }
}

</mosaic_0001>

<llo_original>
// kernel: neg.16
$region0: #{neg.16}
  #allocation0 [shape = 's32[1]{0}', space=sflag, size = 0x4, scoped, tag = 'scoped memory for neg.16']
  %s0 = inlined_call_operand.vmem [shape: f32[2,8,1,64], index: 0, kind: input, shape index: {}]
  %s1 = inlined_call_operand.vmem [shape: f32[2,8,1,64], index: 1, kind: output, shape index: {}]
  %v2 = vld [vmem:[%s0] sm:$0x1]
  %3 = xla_tuple %v2
  %4 = xla_tuple %3
  %v5 = vxor.u32 %v2, 2147483648
  %6 = xla_tuple %v5
  %7 = vst [vmem:[%s1] sm:$0x1] %v5
  %s8 = scalar_lea.vmem %s0, 8
  %v9 = vld [vmem:[%s8] sm:$0x1]
  %10 = xla_tuple %v9
  %11 = xla_tuple %10
  %v12 = vxor.u32 %v9, 2147483648
  %13 = xla_tuple %v12
  %s14 = scalar_lea.vmem %s1, 8
  %15 = vst [vmem:[%s14] sm:$0x1] %v12
  %s16 = scalar_lea.vmem %s0, 1
  %v17 = vld [vmem:[%s16] sm:$0x1]
  %18 = xla_tuple %v17
  %19 = xla_tuple %18
  %v20 = vxor.u32 %v17, 2147483648
  %21 = xla_tuple %v20
  %s22 = scalar_lea.vmem %s1, 1
  %23 = vst [vmem:[%s22] sm:$0x1] %v20
  %s24 = scalar_lea.vmem %s0, 9
  %v25 = vld [vmem:[%s24] sm:$0x1]
  %26 = xla_tuple %v25
  %27 = xla_tuple %26
  %v28 = vxor.u32 %v25, 2147483648
  %29 = xla_tuple %v28
  %s30 = scalar_lea.vmem %s1, 9
  %31 = vst [vmem:[%s30] sm:$0x1] %v28
  %s32 = scalar_lea.vmem %s0, 2
  %v33 = vld [vmem:[%s32] sm:$0x1]
  %34 = xla_tuple %v33
  %35 = xla_tuple %34
  %v36 = vxor.u32 %v33, 2147483648
  %37 = xla_tuple %v36
  %s38 = scalar_lea.vmem %s1, 2
  %39 = vst [vmem:[%s38] sm:$0x1] %v36
  %s40 = scalar_lea.vmem %s0, 10
  %v41 = vld [vmem:[%s40] sm:$0x1]
  %42 = xla_tuple %v41
  %43 = xla_tuple %42
  %v44 = vxor.u32 %v41, 2147483648
  %45 = xla_tuple %v44
  %s46 = scalar_lea.vmem %s1, 10
  %47 = vst [vmem:[%s46] sm:$0x1] %v44
  %s48 = scalar_lea.vmem %s0, 3
  %v49 = vld [vmem:[%s48] sm:$0x1]
  %50 = xla_tuple %v49
  %51 = xla_tuple %50
  %v52 = vxor.u32 %v49, 2147483648
  %53 = xla_tuple %v52
  %s54 = scalar_lea.vmem %s1, 3
  %55 = vst [vmem:[%s54] sm:$0x1] %v52
  %s56 = scalar_lea.vmem %s0, 11
  %v57 = vld [vmem:[%s56] sm:$0x1]
  %58 = xla_tuple %v57
  %59 = xla_tuple %58
  %v60 = vxor.u32 %v57, 2147483648
  %61 = xla_tuple %v60
  %s62 = scalar_lea.vmem %s1, 11
  %63 = vst [vmem:[%s62] sm:$0x1] %v60
  %s64 = scalar_lea.vmem %s0, 4
  %v65 = vld [vmem:[%s64] sm:$0x1]
  %66 = xla_tuple %v65
  %67 = xla_tuple %66
  %v68 = vxor.u32 %v65, 2147483648
  %69 = xla_tuple %v68
  %s70 = scalar_lea.vmem %s1, 4
  %71 = vst [vmem:[%s70] sm:$0x1] %v68
  %s72 = scalar_lea.vmem %s0, 12
  %v73 = vld [vmem:[%s72] sm:$0x1]
  %74 = xla_tuple %v73
  %75 = xla_tuple %74
  %v76 = vxor.u32 %v73, 2147483648
  %77 = xla_tuple %v76
  %s78 = scalar_lea.vmem %s1, 12
  %79 = vst [vmem:[%s78] sm:$0x1] %v76
  %s80 = scalar_lea.vmem %s0, 5
  %v81 = vld [vmem:[%s80] sm:$0x1]
  %82 = xla_tuple %v81
  %83 = xla_tuple %82
  %v84 = vxor.u32 %v81, 2147483648
  %85 = xla_tuple %v84
  %s86 = scalar_lea.vmem %s1, 5
  %87 = vst [vmem:[%s86] sm:$0x1] %v84
  %s88 = scalar_lea.vmem %s0, 13
  %v89 = vld [vmem:[%s88] sm:$0x1]
  %90 = xla_tuple %v89
  %91 = xla_tuple %90
  %v92 = vxor.u32 %v89, 2147483648
  %93 = xla_tuple %v92
  %s94 = scalar_lea.vmem %s1, 13
  %95 = vst [vmem:[%s94] sm:$0x1] %v92
  %s96 = scalar_lea.vmem %s0, 6
  %v97 = vld [vmem:[%s96] sm:$0x1]
  %98 = xla_tuple %v97
  %99 = xla_tuple %98
  %v100 = vxor.u32 %v97, 2147483648
  %101 = xla_tuple %v100
  %s102 = scalar_lea.vmem %s1, 6
  %103 = vst [vmem:[%s102] sm:$0x1] %v100
  %s104 = scalar_lea.vmem %s0, 14
  %v105 = vld [vmem:[%s104] sm:$0x1]
  %106 = xla_tuple %v105
  %107 = xla_tuple %106
  %v108 = vxor.u32 %v105, 2147483648
  %109 = xla_tuple %v108
  %s110 = scalar_lea.vmem %s1, 14
  %111 = vst [vmem:[%s110] sm:$0x1] %v108
  %s112 = scalar_lea.vmem %s0, 7
  %v113 = vld [vmem:[%s112] sm:$0x1]
  %114 = xla_tuple %v113
  %115 = xla_tuple %114
  %v116 = vxor.u32 %v113, 2147483648
  %117 = xla_tuple %v116
  %s118 = scalar_lea.vmem %s1, 7
  %119 = vst [vmem:[%s118] sm:$0x1] %v116
  %s120 = scalar_lea.vmem %s0, 15
  %v121 = vld [vmem:[%s120] sm:$0x1]
  %122 = xla_tuple %v121
  %123 = xla_tuple %122
  %v124 = vxor.u32 %v121, 2147483648
  %125 = xla_tuple %v124
  %s126 = scalar_lea.vmem %s1, 15
  %127 = vst [vmem:[%s126] sm:$0x1] %v124

// kernel: rwkv7_forward.19
$region0: #{rwkv7_forward.19}
  #allocation0 [shape = 'u32[]', space=smem, size = 0x4, offset = 0x4, fixed_abs, tag = 'smem constant byte address 0x4 - core index']
  #allocation1 [shape = 'u32[144,128]{1,0:T(1,128)}', space=vmem, size = 0x12000, scoped, tag = 'internal scratch']
  %s0 = inlined_call_operand.vmem [shape: f32[16,64], index: 0, kind: input, shape index: {}]
  %s1 = inlined_call_operand.vmem [shape: f32[1,64], index: 1, kind: input, shape index: {}]
  %s2 = inlined_call_operand.vmem [shape: f32[1,64], index: 2, kind: input, shape index: {}]
  %s3 = inlined_call_operand.vmem [shape: f32[16,64], index: 3, kind: output, shape index: {}]
  %s4 = sld [smem:[#allocation0]]
  $region22: #{rwkv7_forward.19} parent=0
    _
  %s6 = ssub.s32 1, %s4
  %s7 = scalar_select 0, %s6, %s4
  // Predicated region
  $region2: #{rwkv7_forward.19} parent=0 // pred_check
    _
  $region3: #{rwkv7_forward.19} parent=0 // pred_check_branch
    %9 = sbr.rel (0) target = $region5
  $region4: #{rwkv7_forward.19} parent=0 // pred_region
    _
  $region5: #{rwkv7_forward.19} parent=0 // pred_fallthru
    _
  // Predicated region
  $region6: #{rwkv7_forward.19} parent=0 // pred_check
    _
  $region7: #{rwkv7_forward.19} parent=0 // pred_check_branch
    %11 = sbr.rel (0) target = $region9
  $region8: #{rwkv7_forward.19} parent=0 // pred_region
    _
  $region9: #{rwkv7_forward.19} parent=0 // pred_fallthru
    _
  // Predicated region
  $region10: #{rwkv7_forward.19} parent=0 // pred_check
    _
  $region11: #{rwkv7_forward.19} parent=0 // pred_check_branch
    %13 = sbr.rel (0) target = $region13
  $region12: #{rwkv7_forward.19} parent=0 // pred_region
    _
  $region13: #{rwkv7_forward.19} parent=0 // pred_fallthru
    _
  %v14 = vld [vmem:[%s0] sm:$0xff]
  %v15 = vld [vmem:[%s0 + $0x8] sm:$0xff]
  %vm16 = vcmask 523264
  %v17 = vsel %vm16, %v14, 0.0
  %18 = vadd.xlane.f32.xlu0 %v17
  %v19 = vpop.xlane.xlu0 %18
  %v20 = vsel %vm16, %v15, 0.0
  %21 = vadd.xlane.f32.xlu0 %v20
  %v22 = vpop.xlane.xlu0 %21
  %v23 = vrcp.pop 64.0
  %v24 = vmul.f32 %v19, %v23
  %v25 = vmul.f32 %v22, %v23
  %v26 = vsub.f32 %v14, %v24
  %v27 = vsub.f32 %v15, %v25
  %v28 = vmul.f32 %v26, %v26
  %v29 = vmul.f32 %v27, %v27
  %v30 = vsel %vm16, %v28, 0.0
  %31 = vadd.xlane.f32.xlu0 %v30
  %v32 = vpop.xlane.xlu0 %31
  %v33 = vsel %vm16, %v29, 0.0
  %34 = vadd.xlane.f32.xlu0 %v33
  %v35 = vpop.xlane.xlu0 %34
  %v36 = vmul.f32 %v32, %v23
  %v37 = vmul.f32 %v35, %v23
  %v38 = vadd.f32 %v36, 1e-05
  %v39 = vadd.f32 %v37, 1e-05
  %v40 = vrsqrt.pop %v38
  %v41 = vrsqrt.pop %v39
  %v42 = vmul.f32 %v26, %v40
  %v43 = vmul.f32 %v27, %v41
  %v44 = vld [vmem:[%s1] sm:$0x1]
  %v46 = vlaneseq
  %v47 = vshrl.u32 %v46, 7
  %v48 = vsub.s32 0, %v47
  %v49 = vrot.slane %v44, %v48
  %v51 = vmul.f32 %v42, %v49
  %v52 = vmul.f32 %v43, %v49
  %v53 = vld [vmem:[%s2] sm:$0x1]
  %v55 = vlaneseq
  %v56 = vshrl.u32 %v55, 7
  %v57 = vsub.s32 0, %v56
  %v58 = vrot.slane %v53, %v57
  %v60 = vadd.f32 %v51, %v58
  %v61 = vadd.f32 %v52, %v58
  %62 = vst.msk [vmem:[%s3] sm:$0xff] %vm16, %v60
  %63 = vst.msk [vmem:[%s3 + $0x8] sm:$0xff] %vm16, %v61
  // Predicated region
  $region14: #{rwkv7_forward.19} parent=0 // pred_check
    _
  $region15: #{rwkv7_forward.19} parent=0 // pred_check_branch
    %65 = sbr.rel (0) target = $region17
  $region16: #{rwkv7_forward.19} parent=0 // pred_region
    _
  $region17: #{rwkv7_forward.19} parent=0 // pred_fallthru
    _
  // Predicated region
  $region18: #{rwkv7_forward.19} parent=0 // pred_check
    _
  $region19: #{rwkv7_forward.19} parent=0 // pred_check_branch
    %67 = sbr.rel (0) target = $region21
  $region20: #{rwkv7_forward.19} parent=0 // pred_region
    _
  $region21: #{rwkv7_forward.19} parent=0 // pred_fallthru
    _

// kernel: rwkv7_forward.21
$region0: #{rwkv7_forward.21}
  #allocation0 [shape = 'u32[]', space=smem, size = 0x4, offset = 0x4, fixed_abs, tag = 'smem constant byte address 0x4 - core index']
  #allocation1 [shape = 'u32[144,128]{1,0:T(1,128)}', space=vmem, size = 0x12000, scoped, tag = 'internal scratch']
  %s0 = inlined_call_operand.vmem [shape: f32[16,64], index: 0, kind: input, shape index: {}]
  %s1 = inlined_call_operand.vmem [shape: f32[16,64], index: 1, kind: input, shape index: {}]
  %s2 = inlined_call_operand.vmem [shape: f32[6,64], index: 2, kind: input, shape index: {}]
  %s3 = inlined_call_operand.vmem [shape: f32[64,64], index: 3, kind: input, shape index: {}]
  %s4 = inlined_call_operand.vmem [shape: f32[64,64], index: 4, kind: input, shape index: {}]
  %s5 = inlined_call_operand.vmem [shape: f32[64,64], index: 5, kind: input, shape index: {}]
  %s6 = inlined_call_operand.vmem [shape: f32[64,16], index: 6, kind: input, shape index: {}]
  %s7 = inlined_call_operand.vmem [shape: f32[16,64], index: 7, kind: input, shape index: {}]
  %s8 = inlined_call_operand.vmem [shape: f32[1,64], index: 8, kind: input, shape index: {}]
  %s9 = inlined_call_operand.vmem [shape: f32[64,16], index: 9, kind: input, shape index: {}]
  %s10 = inlined_call_operand.vmem [shape: f32[16,64], index: 10, kind: input, shape index: {}]
  %s11 = inlined_call_operand.vmem [shape: f32[1,64], index: 11, kind: input, shape index: {}]
  %s12 = inlined_call_operand.vmem [shape: f32[64,16], index: 12, kind: input, shape index: {}]
  %s13 = inlined_call_operand.vmem [shape: f32[16,64], index: 13, kind: input, shape index: {}]
  %s14 = inlined_call_operand.vmem [shape: f32[16,64], index: 14, kind: output, shape index: {0}]
  %s15 = inlined_call_operand.vmem [shape: f32[16,64], index: 15, kind: output, shape index: {1}]
  %s16 = inlined_call_operand.vmem [shape: f32[16,64], index: 16, kind: output, shape index: {2}]
  %s17 = inlined_call_operand.vmem [shape: f32[16,64], index: 17, kind: output, shape index: {3}]
  %s18 = inlined_call_operand.vmem [shape: f32[16,64], index: 18, kind: output, shape index: {4}]
  %s19 = inlined_call_operand.vmem [shape: f32[16,64], index: 19, kind: output, shape index: {5}]
  %20 = xla_tuple %s14, %s15, %s16, %s17, %s18, %s19
  %s21 = sld [smem:[#allocation0]]
  $region106: #{rwkv7_forward.21} parent=0
    _
  %s23 = ssub.s32 1, %s21
  %s24 = scalar_select 0, %s23, %s21
  // Predicated region
  $region2: #{rwkv7_forward.21} parent=0 // pred_check
    _
  $region3: #{rwkv7_forward.21} parent=0 // pred_check_branch
    %26 = sbr.rel (0) target = $region5
  $region4: #{rwkv7_forward.21} parent=0 // pred_region
    _
  $region5: #{rwkv7_forward.21} parent=0 // pred_fallthru
    _
  // Predicated region
  $region6: #{rwkv7_forward.21} parent=0 // pred_check
    _
  $region7: #{rwkv7_forward.21} parent=0 // pred_check_branch
    %28 = sbr.rel (0) target = $region9
  $region8: #{rwkv7_forward.21} parent=0 // pred_region
    _
  $region9: #{rwkv7_forward.21} parent=0 // pred_fallthru
    _
  // Predicated region
  $region10: #{rwkv7_forward.21} parent=0 // pred_check
    _
  $region11: #{rwkv7_forward.21} parent=0 // pred_check_branch
    %30 = sbr.rel (0) target = $region13
  $region12: #{rwkv7_forward.21} parent=0 // pred_region
    _
  $region13: #{rwkv7_forward.21} parent=0 // pred_fallthru
    _
  // Predicated region
  $region14: #{rwkv7_forward.21} parent=0 // pred_check
    _
  $region15: #{rwkv7_forward.21} parent=0 // pred_check_branch
    %32 = sbr.rel (0) target = $region17
  $region16: #{rwkv7_forward.21} parent=0 // pred_region
    _
  $region17: #{rwkv7_forward.21} parent=0 // pred_fallthru
    _
  // Predicated region
  $region18: #{rwkv7_forward.21} parent=0 // pred_check
    _
  $region19: #{rwkv7_forward.21} parent=0 // pred_check_branch
    %34 = sbr.rel (0) target = $region21
  $region20: #{rwkv7_forward.21} parent=0 // pred_region
    _
  $region21: #{rwkv7_forward.21} parent=0 // pred_fallthru
    _
  // Predicated region
  $region22: #{rwkv7_forward.21} parent=0 // pred_check
    _
  $region23: #{rwkv7_forward.21} parent=0 // pred_check_branch
    %36 = sbr.rel (0) target = $region25
  $region24: #{rwkv7_forward.21} parent=0 // pred_region
    _
  $region25: #{rwkv7_forward.21} parent=0 // pred_fallthru
    _
  // Predicated region
  $region26: #{rwkv7_forward.21} parent=0 // pred_check
    _
  $region27: #{rwkv7_forward.21} parent=0 // pred_check_branch
    %38 = sbr.rel (0) target = $region29
  $region28: #{rwkv7_forward.21} parent=0 // pred_region
    _
  $region29: #{rwkv7_forward.21} parent=0 // pred_fallthru
    _
  // Predicated region
  $region30: #{rwkv7_forward.21} parent=0 // pred_check
    _
  $region31: #{rwkv7_forward.21} parent=0 // pred_check_branch
    %40 = sbr.rel (0) target = $region33
  $region32: #{rwkv7_forward.21} parent=0 // pred_region
    _
  $region33: #{rwkv7_forward.21} parent=0 // pred_fallthru
    _
  // Predicated region
  $region34: #{rwkv7_forward.21} parent=0 // pred_check
    _
  $region35: #{rwkv7_forward.21} parent=0 // pred_check_branch
    %42 = sbr.rel (0) target = $region37
  $region36: #{rwkv7_forward.21} parent=0 // pred_region
    _
  $region37: #{rwkv7_forward.21} parent=0 // pred_fallthru
    _
  // Predicated region
  $region38: #{rwkv7_forward.21} parent=0 // pred_check
    _
  $region39: #{rwkv7_forward.21} parent=0 // pred_check_branch
    %44 = sbr.rel (0) target = $region41
  $region40: #{rwkv7_forward.21} parent=0 // pred_region
    _
  $region41: #{rwkv7_forward.21} parent=0 // pred_fallthru
    _
  // Predicated region
  $region42: #{rwkv7_forward.21} parent=0 // pred_check
    _
  $region43: #{rwkv7_forward.21} parent=0 // pred_check_branch
    %46 = sbr.rel (0) target = $region45
  $region44: #{rwkv7_forward.21} parent=0 // pred_region
    _
  $region45: #{rwkv7_forward.21} parent=0 // pred_fallthru
    _
  // Predicated region
  $region46: #{rwkv7_forward.21} parent=0 // pred_check
    _
  $region47: #{rwkv7_forward.21} parent=0 // pred_check_branch
    %48 = sbr.rel (0) target = $region49
  $region48: #{rwkv7_forward.21} parent=0 // pred_region
    _
  $region49: #{rwkv7_forward.21} parent=0 // pred_fallthru
    _
  // Predicated region
  $region50: #{rwkv7_forward.21} parent=0 // pred_check
    _
  $region51: #{rwkv7_forward.21} parent=0 // pred_check_branch
    %50 = sbr.rel (0) target = $region53
  $region52: #{rwkv7_forward.21} parent=0 // pred_region
    _
  $region53: #{rwkv7_forward.21} parent=0 // pred_fallthru
    _
  // Predicated region
  $region54: #{rwkv7_forward.21} parent=0 // pred_check
    _
  $region55: #{rwkv7_forward.21} parent=0 // pred_check_branch
    %52 = sbr.rel (0) target = $region57
  $region56: #{rwkv7_forward.21} parent=0 // pred_region
    _
  $region57: #{rwkv7_forward.21} parent=0 // pred_fallthru
    _
  %v53 = vld [vmem:[%s0] sm:$0xff]
  %v54 = vld [vmem:[%s0 + $0x8] sm:$0xff]
  %v55 = vld [vmem:[%s1] sm:$0xff]
  %v56 = vld [vmem:[%s1 + $0x8] sm:$0xff]
  %v57 = vld [vmem:[%s2] sm:$0x3f]
  %v58 = vlaneseq
  %v59 = vshrl.u32 %v58, 7
  %v60 = vsub.s32 0, %v59
  %v61 = vrot.slane %v57, %v60
  %v62 = vmul.f32 %v55, %v61
  %v63 = vmul.f32 %v56, %v61
  %v64 = vadd.f32 %v53, %v62
  %v65 = vadd.f32 %v54, %v63
  %v66 = vlaneseq
  %v67 = vshrl.u32 %v66, 7
  %v68 = vsub.s32 1, %v67
  %v69 = vrot.slane %v57, %v68
  %v70 = vmul.f32 %v55, %v69
  %v71 = vmul.f32 %v56, %v69
  %v72 = vadd.f32 %v53, %v70
  %v73 = vadd.f32 %v54, %v71
  %v74 = vlaneseq
  %v75 = vshrl.u32 %v74, 7
  %v76 = vsub.s32 2, %v75
  %v77 = vrot.slane %v57, %v76
  %v78 = vmul.f32 %v55, %v77
  %v79 = vmul.f32 %v56, %v77
  %v80 = vadd.f32 %v53, %v78
  %v81 = vadd.f32 %v54, %v79
  %v82 = vlaneseq
  %v83 = vshrl.u32 %v82, 7
  %v84 = vsub.s32 3, %v83
  %v85 = vrot.slane %v57, %v84
  %v86 = vmul.f32 %v55, %v85
  %v87 = vmul.f32 %v56, %v85
  %v88 = vadd.f32 %v53, %v86
  %v89 = vadd.f32 %v54, %v87
  %v90 = vlaneseq
  %v91 = vshrl.u32 %v90, 7
  %v92 = vsub.s32 4, %v91
  %v93 = vrot.slane %v57, %v92
  %v94 = vmul.f32 %v55, %v93
  %v95 = vmul.f32 %v56, %v93
  %v96 = vadd.f32 %v53, %v94
  %v97 = vadd.f32 %v54, %v95
  %v98 = vlaneseq
  %v99 = vshrl.u32 %v98, 7
  %v100 = vsub.s32 5, %v99
  %v101 = vrot.slane %v57, %v100
  %v102 = vmul.f32 %v55, %v101
  %v103 = vmul.f32 %v56, %v101
  %v104 = vadd.f32 %v53, %v102
  %v105 = vadd.f32 %v54, %v103
  %v106 = vld [vmem:[%s3] sm:$0xff]
  %v107 = vld [vmem:[%s3 + $0x8] sm:$0xff]
  %v108 = vld [vmem:[%s3 + $0x10] sm:$0xff]
  %v109 = vld [vmem:[%s3 + $0x18] sm:$0xff]
  %v110 = vld [vmem:[%s3 + $0x20] sm:$0xff]
  %v111 = vld [vmem:[%s3 + $0x28] sm:$0xff]
  %v112 = vld [vmem:[%s3 + $0x30] sm:$0xff]
  %v113 = vld [vmem:[%s3 + $0x38] sm:$0xff]
  %vm114 = vcmask 523264
  %v116 = vsel %vm114, %v64, 0
  %v119 = vsel %vm114, %v65, 0
  %121 = vmatprep.subr.mxu0 0.0
  %122 = vmatpush1.msra.mxu0 %v106
  %123 = vmatprep.subr.mxu0 0.0
  %124 = vmatpush1.msra.mxu0 %v107
  %125 = vmatprep.subr.mxu0 0.0
  %126 = vmatpush1.msra.mxu0 %v108
  %127 = vmatprep.subr.mxu0 0.0
  %128 = vmatpush1.msra.mxu0 %v109
  %129 = vmatprep.subr.mxu0 0.0
  %130 = vmatpush1.msra.mxu0 %v110
  %131 = vmatprep.subr.mxu0 0.0
  %132 = vmatpush1.msra.mxu0 %v111
  %133 = vmatprep.subr.mxu0 0.0
  %134 = vmatpush1.msra.mxu0 %v112
  %135 = vmatprep.subr.mxu0 0.0
  %136 = vmatpush1.msra.mxu0 %v113
  %137 = vmatprep.subr.mxu0 0.0
  %138 = vmatpush1.msra.mxu0 0.0
  %139 = vmatprep.subr.mxu0 0.0
  %140 = vmatpush1.msra.mxu0 0.0
  %141 = vmatprep.subr.mxu0 0.0
  %142 = vmatpush1.msra.mxu0 0.0
  %143 = vmatprep.subr.mxu0 0.0
  %144 = vmatpush1.msra.mxu0 0.0
  %145 = vmatprep.subr.mxu0 0.0
  %146 = vmatpush1.msra.mxu0 0.0
  %147 = vmatprep.subr.mxu0 0.0
  %148 = vmatpush1.msra.mxu0 0.0
  %149 = vmatprep.subr.mxu0 0.0
  %150 = vmatpush1.msra.mxu0 0.0
  %151 = vmatprep.subr.mxu0 0.0
  %152 = vmatpush1.msra.mxu0 0.0
  %153 = vmatprep.subr.mxu0 0.0
  %154 = vmatpush1.msra.mxu0 0.0
  %155 = vmatprep.subr.mxu0 0.0
  %156 = vmatpush1.msra.mxu0 0.0
  %157 = vmatprep.subr.mxu0 0.0
  %158 = vmatpush1.msra.mxu0 0.0
  %159 = vmatprep.subr.mxu0 0.0
  %160 = vmatpush1.msra.mxu0 0.0
  %161 = vmatprep.subr.mxu0 0.0
  %162 = vmatpush1.msra.mxu0 0.0
  %163 = vmatprep.subr.mxu0 0.0
  %164 = vmatpush1.msra.mxu0 0.0
  %165 = vmatprep.subr.mxu0 0.0
  %166 = vmatpush1.msra.mxu0 0.0
  %167 = vmatprep.subr.mxu0 0.0
  %168 = vmatpush1.msra.mxu0 0.0
  %169 = vmatprep.subr.mxu0 0.0
  %170 = vmatpush1.msra.mxu0 0.0
  %171 = vmatprep.subr.mxu0 0.0
  %172 = vmatpush1.msra.mxu0 0.0
  %173 = vmatprep.subr.mxu0 0.0
  %174 = vmatpush1.msra.mxu0 0.0
  %175 = vmatprep.subr.mxu0 0.0
  %176 = vmatpush1.msra.mxu0 0.0
  %177 = vmatprep.subr.mxu0 0.0
  %178 = vmatpush1.msra.mxu0 0.0
  %179 = vmatprep.subr.mxu0 0.0
  %180 = vmatpush1.msra.mxu0 0.0
  %181 = vmatprep.subr.mxu0 0.0
  %182 = vmatpush1.msra.mxu0 0.0
  %183 = vmatprep.subr.mxu0 0.0
  %184 = vmatpush1.msra.mxu0 0.0
  %185 = vmatprep.mubr.f32.mxu0 0.0
  %186 = vmatmul.mubr.f32.gmra.mrb[0].mxu0 %v116
  %v187 = vpop.f32.mrb[0].mxu0
  %v188 = vadd.f32 0.0, %v187
  %v189 = vpop.f32.mrb[0].mxu0
  %190 = vmatprep.mubr.f32.mxu0 0.0
  %191 = vmatmul.mubr.f32.gmra.mrb[0].mxu0 %v119
  %v192 = vpop.f32.mrb[0].mxu0
  %v193 = vadd.f32 0.0, %v192
  %v194 = vpop.f32.mrb[0].mxu0
  %195 = vdwg.mxu0
  %196 = vst.msk [vmem:[%s14] sm:$0xff] %vm114, %v188
  %197 = vst.msk [vmem:[%s14 + $0x8] sm:$0xff] %vm114, %v193
  %v198 = vld [vmem:[%s4] sm:$0xff]
  %v199 = vld [vmem:[%s4 + $0x8] sm:$0xff]
  %v200 = vld [vmem:[%s4 + $0x10] sm:$0xff]
  %v201 = vld [vmem:[%s4 + $0x18] sm:$0xff]
  %v202 = vld [vmem:[%s4 + $0x20] sm:$0xff]
  %v203 = vld [vmem:[%s4 + $0x28] sm:$0xff]
  %v204 = vld [vmem:[%s4 + $0x30] sm:$0xff]
  %v205 = vld [vmem:[%s4 + $0x38] sm:$0xff]
  %v207 = vsel %vm114, %v80, 0
  %v210 = vsel %vm114, %v81, 0
  %212 = vmatprep.subr.mxu0 0.0
  %213 = vmatpush1.msra.mxu0 %v198
  %214 = vmatprep.subr.mxu0 0.0
  %215 = vmatpush1.msra.mxu0 %v199
  %216 = vmatprep.subr.mxu0 0.0
  %217 = vmatpush1.msra.mxu0 %v200
  %218 = vmatprep.subr.mxu0 0.0
  %219 = vmatpush1.msra.mxu0 %v201
  %220 = vmatprep.subr.mxu0 0.0
  %221 = vmatpush1.msra.mxu0 %v202
  %222 = vmatprep.subr.mxu0 0.0
  %223 = vmatpush1.msra.mxu0 %v203
  %224 = vmatprep.subr.mxu0 0.0
  %225 = vmatpush1.msra.mxu0 %v204
  %226 = vmatprep.subr.mxu0 0.0
  %227 = vmatpush1.msra.mxu0 %v205
  %228 = vmatprep.subr.mxu0 0.0
  %229 = vmatpush1.msra.mxu0 0.0
  %230 = vmatprep.subr.mxu0 0.0
  %231 = vmatpush1.msra.mxu0 0.0
  %232 = vmatprep.subr.mxu0 0.0
  %233 = vmatpush1.msra.mxu0 0.0
  %234 = vmatprep.subr.mxu0 0.0
  %235 = vmatpush1.msra.mxu0 0.0
  %236 = vmatprep.subr.mxu0 0.0
  %237 = vmatpush1.msra.mxu0 0.0
  %238 = vmatprep.subr.mxu0 0.0
  %239 = vmatpush1.msra.mxu0 0.0
  %240 = vmatprep.subr.mxu0 0.0
  %241 = vmatpush1.msra.mxu0 0.0
  %242 = vmatprep.subr.mxu0 0.0
  %243 = vmatpush1.msra.mxu0 0.0
  %244 = vmatprep.subr.mxu0 0.0
  %245 = vmatpush1.msra.mxu0 0.0
  %246 = vmatprep.subr.mxu0 0.0
  %247 = vmatpush1.msra.mxu0 0.0
  %248 = vmatprep.subr.mxu0 0.0
  %249 = vmatpush1.msra.mxu0 0.0
  %250 = vmatprep.subr.mxu0 0.0
  %251 = vmatpush1.msra.mxu0 0.0
  %252 = vmatprep.subr.mxu0 0.0
  %253 = vmatpush1.msra.mxu0 0.0
  %254 = vmatprep.subr.mxu0 0.0
  %255 = vmatpush1.msra.mxu0 0.0
  %256 = vmatprep.subr.mxu0 0.0
  %257 = vmatpush1.msra.mxu0 0.0
  %258 = vmatprep.subr.mxu0 0.0
  %259 = vmatpush1.msra.mxu0 0.0
  %260 = vmatprep.subr.mxu0 0.0
  %261 = vmatpush1.msra.mxu0 0.0
  %262 = vmatprep.subr.mxu0 0.0
  %263 = vmatpush1.msra.mxu0 0.0
  %264 = vmatprep.subr.mxu0 0.0
  %265 = vmatpush1.msra.mxu0 0.0
  %266 = vmatprep.subr.mxu0 0.0
  %267 = vmatpush1.msra.mxu0 0.0
  %268 = vmatprep.subr.mxu0 0.0
  %269 = vmatpush1.msra.mxu0 0.0
  %270 = vmatprep.subr.mxu0 0.0
  %271 = vmatpush1.msra.mxu0 0.0
  %272 = vmatprep.subr.mxu0 0.0
  %273 = vmatpush1.msra.mxu0 0.0
  %274 = vmatprep.subr.mxu0 0.0
  %275 = vmatpush1.msra.mxu0 0.0
  %276 = vmatprep.mubr.f32.mxu0 0.0
  %277 = vmatmul.mubr.f32.gmra.mrb[0].mxu0 %v207
  %v278 = vpop.f32.mrb[0].mxu0
  %v279 = vadd.f32 0.0, %v278
  %v280 = vpop.f32.mrb[0].mxu0
  %281 = vmatprep.mubr.f32.mxu0 0.0
  %282 = vmatmul.mubr.f32.gmra.mrb[0].mxu0 %v210
  %v283 = vpop.f32.mrb[0].mxu0
  %v284 = vadd.f32 0.0, %v283
  %v285 = vpop.f32.mrb[0].mxu0
  %286 = vdwg.mxu0
  %287 = vst.msk [vmem:[%s15] sm:$0xff] %vm114, %v279
  %288 = vst.msk [vmem:[%s15 + $0x8] sm:$0xff] %vm114, %v284
  %v289 = vld [vmem:[%s5] sm:$0xff]
  %v290 = vld [vmem:[%s5 + $0x8] sm:$0xff]
  %v291 = vld [vmem:[%s5 + $0x10] sm:$0xff]
  %v292 = vld [vmem:[%s5 + $0x18] sm:$0xff]
  %v293 = vld [vmem:[%s5 + $0x20] sm:$0xff]
  %v294 = vld [vmem:[%s5 + $0x28] sm:$0xff]
  %v295 = vld [vmem:[%s5 + $0x30] sm:$0xff]
  %v296 = vld [vmem:[%s5 + $0x38] sm:$0xff]
  %v298 = vsel %vm114, %v88, 0
  %v301 = vsel %vm114, %v89, 0
  %303 = vmatprep.subr.mxu0 0.0
  %304 = vmatpush1.msra.mxu0 %v289
  %305 = vmatprep.subr.mxu0 0.0
  %306 = vmatpush1.msra.mxu0 %v290
  %307 = vmatprep.subr.mxu0 0.0
  %308 = vmatpush1.msra.mxu0 %v291
  %309 = vmatprep.subr.mxu0 0.0
  %310 = vmatpush1.msra.mxu0 %v292
  %311 = vmatprep.subr.mxu0 0.0
  %312 = vmatpush1.msra.mxu0 %v293
  %313 = vmatprep.subr.mxu0 0.0
  %314 = vmatpush1.msra.mxu0 %v294
  %315 = vmatprep.subr.mxu0 0.0
  %316 = vmatpush1.msra.mxu0 %v295
  %317 = vmatprep.subr.mxu0 0.0
  %318 = vmatpush1.msra.mxu0 %v296
  %319 = vmatprep.subr.mxu0 0.0
  %320 = vmatpush1.msra.mxu0 0.0
  %321 = vmatprep.subr.mxu0 0.0
  %322 = vmatpush1.msra.mxu0 0.0
  %323 = vmatprep.subr.mxu0 0.0
  %324 = vmatpush1.msra.mxu0 0.0
  %325 = vmatprep.subr.mxu0 0.0
  %326 = vmatpush1.msra.mxu0 0.0
  %327 = vmatprep.subr.mxu0 0.0
  %328 = vmatpush1.msra.mxu0 0.0
  %329 = vmatprep.subr.mxu0 0.0
  %330 = vmatpush1.msra.mxu0 0.0
  %331 = vmatprep.subr.mxu0 0.0
  %332 = vmatpush1.msra.mxu0 0.0
  %333 = vmatprep.subr.mxu0 0.0
  %334 = vmatpush1.msra.mxu0 0.0
  %335 = vmatprep.subr.mxu0 0.0
  %336 = vmatpush1.msra.mxu0 0.0
  %337 = vmatprep.subr.mxu0 0.0
  %338 = vmatpush1.msra.mxu0 0.0
  %339 = vmatprep.subr.mxu0 0.0
  %340 = vmatpush1.msra.mxu0 0.0
  %341 = vmatprep.subr.mxu0 0.0
  %342 = vmatpush1.msra.mxu0 0.0
  %343 = vmatprep.subr.mxu0 0.0
  %344 = vmatpush1.msra.mxu0 0.0
  %345 = vmatprep.subr.mxu0 0.0
  %346 = vmatpush1.msra.mxu0 0.0
  %347 = vmatprep.subr.mxu0 0.0
  %348 = vmatpush1.msra.mxu0 0.0
  %349 = vmatprep.subr.mxu0 0.0
  %350 = vmatpush1.msra.mxu0 0.0
  %351 = vmatprep.subr.mxu0 0.0
  %352 = vmatpush1.msra.mxu0 0.0
  %353 = vmatprep.subr.mxu0 0.0
  %354 = vmatpush1.msra.mxu0 0.0
  %355 = vmatprep.subr.mxu0 0.0
  %356 = vmatpush1.msra.mxu0 0.0
  %357 = vmatprep.subr.mxu0 0.0
  %358 = vmatpush1.msra.mxu0 0.0
  %359 = vmatprep.subr.mxu0 0.0
  %360 = vmatpush1.msra.mxu0 0.0
  %361 = vmatprep.subr.mxu0 0.0
  %362 = vmatpush1.msra.mxu0 0.0
  %363 = vmatprep.subr.mxu0 0.0
  %364 = vmatpush1.msra.mxu0 0.0
  %365 = vmatprep.subr.mxu0 0.0
  %366 = vmatpush1.msra.mxu0 0.0
  %367 = vmatprep.mubr.f32.mxu0 0.0
  %368 = vmatmul.mubr.f32.gmra.mrb[0].mxu0 %v298
  %v369 = vpop.f32.mrb[0].mxu0
  %v370 = vadd.f32 0.0, %v369
  %v371 = vpop.f32.mrb[0].mxu0
  %372 = vmatprep.mubr.f32.mxu0 0.0
  %373 = vmatmul.mubr.f32.gmra.mrb[0].mxu0 %v301
  %v374 = vpop.f32.mrb[0].mxu0
  %v375 = vadd.f32 0.0, %v374
  %v376 = vpop.f32.mrb[0].mxu0
  %377 = vdwg.mxu0
  %378 = vst.msk [vmem:[%s16] sm:$0xff] %vm114, %v370
  %379 = vst.msk [vmem:[%s16 + $0x8] sm:$0xff] %vm114, %v375
  %v380 = vld [vmem:[%s6] sm:$0xff]
  %v381 = vld [vmem:[%s6 + $0x8] sm:$0xff]
  %v382 = vld [vmem:[%s6 + $0x10] sm:$0xff]
  %v383 = vld [vmem:[%s6 + $0x18] sm:$0xff]
  %v384 = vld [vmem:[%s6 + $0x20] sm:$0xff]
  %v385 = vld [vmem:[%s6 + $0x28] sm:$0xff]
  %v386 = vld [vmem:[%s6 + $0x30] sm:$0xff]
  %v387 = vld [vmem:[%s6 + $0x38] sm:$0xff]
  %v389 = vsel %vm114, %v72, 0
  %v392 = vsel %vm114, %v73, 0
  %394 = vmatprep.subr.mxu0 0.0
  %395 = vmatpush1.msra.mxu0 %v380
  %396 = vmatprep.subr.mxu0 0.0
  %397 = vmatpush1.msra.mxu0 %v381
  %398 = vmatprep.subr.mxu0 0.0
  %399 = vmatpush1.msra.mxu0 %v382
  %400 = vmatprep.subr.mxu0 0.0
  %401 = vmatpush1.msra.mxu0 %v383
  %402 = vmatprep.subr.mxu0 0.0
  %403 = vmatpush1.msra.mxu0 %v384
  %404 = vmatprep.subr.mxu0 0.0
  %405 = vmatpush1.msra.mxu0 %v385
  %406 = vmatprep.subr.mxu0 0.0
  %407 = vmatpush1.msra.mxu0 %v386
  %408 = vmatprep.subr.mxu0 0.0
  %409 = vmatpush1.msra.mxu0 %v387
  %410 = vmatprep.subr.mxu0 0.0
  %411 = vmatpush1.msra.mxu0 0.0
  %412 = vmatprep.subr.mxu0 0.0
  %413 = vmatpush1.msra.mxu0 0.0
  %414 = vmatprep.subr.mxu0 0.0
  %415 = vmatpush1.msra.mxu0 0.0
  %416 = vmatprep.subr.mxu0 0.0
  %417 = vmatpush1.msra.mxu0 0.0
  %418 = vmatprep.subr.mxu0 0.0
  %419 = vmatpush1.msra.mxu0 0.0
  %420 = vmatprep.subr.mxu0 0.0
  %421 = vmatpush1.msra.mxu0 0.0
  %422 = vmatprep.subr.mxu0 0.0
  %423 = vmatpush1.msra.mxu0 0.0
  %424 = vmatprep.subr.mxu0 0.0
  %425 = vmatpush1.msra.mxu0 0.0
  %426 = vmatprep.subr.mxu0 0.0
  %427 = vmatpush1.msra.mxu0 0.0
  %428 = vmatprep.subr.mxu0 0.0
  %429 = vmatpush1.msra.mxu0 0.0
  %430 = vmatprep.subr.mxu0 0.0
  %431 = vmatpush1.msra.mxu0 0.0
  %432 = vmatprep.subr.mxu0 0.0
  %433 = vmatpush1.msra.mxu0 0.0
  %434 = vmatprep.subr.mxu0 0.0
  %435 = vmatpush1.msra.mxu0 0.0
  %436 = vmatprep.subr.mxu0 0.0
  %437 = vmatpush1.msra.mxu0 0.0
  %438 = vmatprep.subr.mxu0 0.0
  %439 = vmatpush1.msra.mxu0 0.0
  %440 = vmatprep.subr.mxu0 0.0
  %441 = vmatpush1.msra.mxu0 0.0
  %442 = vmatprep.subr.mxu0 0.0
  %443 = vmatpush1.msra.mxu0 0.0
  %444 = vmatprep.subr.mxu0 0.0
  %445 = vmatpush1.msra.mxu0 0.0
  %446 = vmatprep.subr.mxu0 0.0
  %447 = vmatpush1.msra.mxu0 0.0
  %448 = vmatprep.subr.mxu0 0.0
  %449 = vmatpush1.msra.mxu0 0.0
  %450 = vmatprep.subr.mxu0 0.0
  %451 = vmatpush1.msra.mxu0 0.0
  %452 = vmatprep.subr.mxu0 0.0
  %453 = vmatpush1.msra.mxu0 0.0
  %454 = vmatprep.subr.mxu0 0.0
  %455 = vmatpush1.msra.mxu0 0.0
  %456 = vmatprep.subr.mxu0 0.0
  %457 = vmatpush1.msra.mxu0 0.0
  %458 = vmatprep.mubr.f32.mxu0 0.0
  %459 = vmatmul.mubr.f32.gmra.mrb[0].mxu0 %v389
  %v460 = vpop.f32.mrb[0].mxu0
  %v461 = vadd.f32 0.0, %v460
  %v462 = vpop.f32.mrb[0].mxu0
  %463 = vmatprep.mubr.f32.mxu0 0.0
  %464 = vmatmul.mubr.f32.gmra.mrb[0].mxu0 %v392
  %v465 = vpop.f32.mrb[0].mxu0
  %v466 = vadd.f32 0.0, %v465
  %v467 = vpop.f32.mrb[0].mxu0
  %468 = vdwg.mxu0
  %v469 = vtanh.pop %v461
  %v470 = vtanh.pop %v466
  %v471 = vld [vmem:[%s7] sm:$0xff]
  %v472 = vld [vmem:[%s7 + $0x8] sm:$0xff]
  %v473 = vld [vmem:[%s8] sm:$0x1]
  %v475 = vlaneseq
  %v476 = vshrl.u32 %v475, 7
  %v477 = vsub.s32 0, %v476
  %v478 = vrot.slane %v473, %v477
  %vm480 = vcmask 130048
  %v482 = vsel %vm480, %v469, 0
  %v485 = vsel %vm480, %v470, 0
  %487 = vmatprep.subr.mxu0 0.0
  %488 = vmatpush1.msra.mxu0 %v471
  %489 = vmatprep.subr.mxu0 0.0
  %490 = vmatpush1.msra.mxu0 %v472
  %491 = vmatprep.subr.mxu0 0.0
  %492 = vmatpush1.msra.mxu0 0.0
  %493 = vmatprep.subr.mxu0 0.0
  %494 = vmatpush1.msra.mxu0 0.0
  %495 = vmatprep.subr.mxu0 0.0
  %496 = vmatpush1.msra.mxu0 0.0
  %497 = vmatprep.subr.mxu0 0.0
  %498 = vmatpush1.msra.mxu0 0.0
  %499 = vmatprep.subr.mxu0 0.0
  %500 = vmatpush1.msra.mxu0 0.0
  %501 = vmatprep.subr.mxu0 0.0
  %502 = vmatpush1.msra.mxu0 0.0
  %503 = vmatprep.subr.mxu0 0.0
  %504 = vmatpush1.msra.mxu0 0.0
  %505 = vmatprep.subr.mxu0 0.0
  %506 = vmatpush1.msra.mxu0 0.0
  %507 = vmatprep.subr.mxu0 0.0
  %508 = vmatpush1.msra.mxu0 0.0
  %509 = vmatprep.subr.mxu0 0.0
  %510 = vmatpush1.msra.mxu0 0.0
  %511 = vmatprep.subr.mxu0 0.0
  %512 = vmatpush1.msra.mxu0 0.0
  %513 = vmatprep.subr.mxu0 0.0
  %514 = vmatpush1.msra.mxu0 0.0
  %515 = vmatprep.subr.mxu0 0.0
  %516 = vmatpush1.msra.mxu0 0.0
  %517 = vmatprep.subr.mxu0 0.0
  %518 = vmatpush1.msra.mxu0 0.0
  %519 = vmatprep.subr.mxu0 0.0
  %520 = vmatpush1.msra.mxu0 0.0
  %521 = vmatprep.subr.mxu0 0.0
  %522 = vmatpush1.msra.mxu0 0.0
  %523 = vmatprep.subr.mxu0 0.0
  %524 = vmatpush1.msra.mxu0 0.0
  %525 = vmatprep.subr.mxu0 0.0
  %526 = vmatpush1.msra.mxu0 0.0
  %527 = vmatprep.subr.mxu0 0.0
  %528 = vmatpush1.msra.mxu0 0.0
  %529 = vmatprep.subr.mxu0 0.0
  %530 = vmatpush1.msra.mxu0 0.0
  %531 = vmatprep.subr.mxu0 0.0
  %532 = vmatpush1.msra.mxu0 0.0
  %533 = vmatprep.subr.mxu0 0.0
  %534 = vmatpush1.msra.mxu0 0.0
  %535 = vmatprep.subr.mxu0 0.0
  %536 = vmatpush1.msra.mxu0 0.0
  %537 = vmatprep.subr.mxu0 0.0
  %538 = vmatpush1.msra.mxu0 0.0
  %539 = vmatprep.subr.mxu0 0.0
  %540 = vmatpush1.msra.mxu0 0.0
  %541 = vmatprep.subr.mxu0 0.0
  %542 = vmatpush1.msra.mxu0 0.0
  %543 = vmatprep.subr.mxu0 0.0
  %544 = vmatpush1.msra.mxu0 0.0
  %545 = vmatprep.subr.mxu0 0.0
  %546 = vmatpush1.msra.mxu0 0.0
  %547 = vmatprep.subr.mxu0 0.0
  %548 = vmatpush1.msra.mxu0 0.0
  %549 = vmatprep.subr.mxu0 0.0
  %550 = vmatpush1.msra.mxu0 0.0
  %551 = vmatprep.mubr.f32.mxu0 0.0
  %552 = vmatmul.mubr.f32.gmra.mrb[0].mxu0 %v482
  %v553 = vpop.f32.mrb[0].mxu0
  %v554 = vadd.f32 %v478, %v553
  %v555 = vpop.f32.mrb[0].mxu0
  %556 = vmatprep.mubr.f32.mxu0 0.0
  %557 = vmatmul.mubr.f32.gmra.mrb[0].mxu0 %v485
  %v558 = vpop.f32.mrb[0].mxu0
  %v559 = vadd.f32 %v478, %v558
  %v560 = vpop.f32.mrb[0].mxu0
  %561 = vdwg.mxu0
  %v562 = vsub.f32 0.0, %v554
  %v563 = vsub.f32 0.0, %v559
  %v564 = vmul.f32 %v562, 1.442695
  %v565 = vpow.pop %v564
  %v566 = vmul.f32 %v563, 1.442695
  %v567 = vpow.pop %v566
  %v568 = vadd.f32 %v565, 1.0
  %v569 = vadd.f32 %v567, 1.0
  %v570 = vrcp.pop %v568
  %v571 = vmul.f32 1.0, %v570
  %v572 = vrcp.pop %v569
  %v573 = vmul.f32 1.0, %v572
  %v574 = vmul.f32 %v571, -0.60653067
  %v575 = vmul.f32 %v573, -0.60653067
  %576 = vst.msk [vmem:[%s17] sm:$0xff] %vm114, %v574
  %577 = vst.msk [vmem:[%s17 + $0x8] sm:$0xff] %vm114, %v575
  %v578 = vld [vmem:[%s9] sm:$0xff]
  %v579 = vld [vmem:[%s9 + $0x8] sm:$0xff]
  %v580 = vld [vmem:[%s9 + $0x10] sm:$0xff]
  %v581 = vld [vmem:[%s9 + $0x18] sm:$0xff]
  %v582 = vld [vmem:[%s9 + $0x20] sm:$0xff]
  %v583 = vld [vmem:[%s9 + $0x28] sm:$0xff]
  %v584 = vld [vmem:[%s9 + $0x30] sm:$0xff]
  %v585 = vld [vmem:[%s9 + $0x38] sm:$0xff]
  %v587 = vsel %vm114, %v96, 0
  %v590 = vsel %vm114, %v97, 0
  %592 = vmatprep.subr.mxu0 0.0
  %593 = vmatpush1.msra.mxu0 %v578
  %594 = vmatprep.subr.mxu0 0.0
  %595 = vmatpush1.msra.mxu0 %v579
  %596 = vmatprep.subr.mxu0 0.0
  %597 = vmatpush1.msra.mxu0 %v580
  %598 = vmatprep.subr.mxu0 0.0
  %599 = vmatpush1.msra.mxu0 %v581
  %600 = vmatprep.subr.mxu0 0.0
  %601 = vmatpush1.msra.mxu0 %v582
  %602 = vmatprep.subr.mxu0 0.0
  %603 = vmatpush1.msra.mxu0 %v583
  %604 = vmatprep.subr.mxu0 0.0
  %605 = vmatpush1.msra.mxu0 %v584
  %606 = vmatprep.subr.mxu0 0.0
  %607 = vmatpush1.msra.mxu0 %v585
  %608 = vmatprep.subr.mxu0 0.0
  %609 = vmatpush1.msra.mxu0 0.0
  %610 = vmatprep.subr.mxu0 0.0
  %611 = vmatpush1.msra.mxu0 0.0
  %612 = vmatprep.subr.mxu0 0.0
  %613 = vmatpush1.msra.mxu0 0.0
  %614 = vmatprep.subr.mxu0 0.0
  %615 = vmatpush1.msra.mxu0 0.0
  %616 = vmatprep.subr.mxu0 0.0
  %617 = vmatpush1.msra.mxu0 0.0
  %618 = vmatprep.subr.mxu0 0.0
  %619 = vmatpush1.msra.mxu0 0.0
  %620 = vmatprep.subr.mxu0 0.0
  %621 = vmatpush1.msra.mxu0 0.0
  %622 = vmatprep.subr.mxu0 0.0
  %623 = vmatpush1.msra.mxu0 0.0
  %624 = vmatprep.subr.mxu0 0.0
  %625 = vmatpush1.msra.mxu0 0.0
  %626 = vmatprep.subr.mxu0 0.0
  %627 = vmatpush1.msra.mxu0 0.0
  %628 = vmatprep.subr.mxu0 0.0
  %629 = vmatpush1.msra.mxu0 0.0
  %630 = vmatprep.subr.mxu0 0.0
  %631 = vmatpush1.msra.mxu0 0.0
  %632 = vmatprep.subr.mxu0 0.0
  %633 = vmatpush1.msra.mxu0 0.0
  %634 = vmatprep.subr.mxu0 0.0
  %635 = vmatpush1.msra.mxu0 0.0
  %636 = vmatprep.subr.mxu0 0.0
  %637 = vmatpush1.msra.mxu0 0.0
  %638 = vmatprep.subr.mxu0 0.0
  %639 = vmatpush1.msra.mxu0 0.0
  %640 = vmatprep.subr.mxu0 0.0
  %641 = vmatpush1.msra.mxu0 0.0
  %642 = vmatprep.subr.mxu0 0.0
  %643 = vmatpush1.msra.mxu0 0.0
  %644 = vmatprep.subr.mxu0 0.0
  %645 = vmatpush1.msra.mxu0 0.0
  %646 = vmatprep.subr.mxu0 0.0
  %647 = vmatpush1.msra.mxu0 0.0
  %648 = vmatprep.subr.mxu0 0.0
  %649 = vmatpush1.msra.mxu0 0.0
  %650 = vmatprep.subr.mxu0 0.0
  %651 = vmatpush1.msra.mxu0 0.0
  %652 = vmatprep.subr.mxu0 0.0
  %653 = vmatpush1.msra.mxu0 0.0
  %654 = vmatprep.subr.mxu0 0.0
  %655 = vmatpush1.msra.mxu0 0.0
  %656 = vmatprep.mubr.f32.mxu0 0.0
  %657 = vmatmul.mubr.f32.gmra.mrb[0].mxu0 %v587
  %v658 = vpop.f32.mrb[0].mxu0
  %v659 = vadd.f32 0.0, %v658
  %v660 = vpop.f32.mrb[0].mxu0
  %661 = vmatprep.mubr.f32.mxu0 0.0
  %662 = vmatmul.mubr.f32.gmra.mrb[0].mxu0 %v590
  %v663 = vpop.f32.mrb[0].mxu0
  %v664 = vadd.f32 0.0, %v663
  %v665 = vpop.f32.mrb[0].mxu0
  %666 = vdwg.mxu0
  %v667 = vld [vmem:[%s10] sm:$0xff]
  %v668 = vld [vmem:[%s10 + $0x8] sm:$0xff]
  %v669 = vld [vmem:[%s11] sm:$0x1]
  %v671 = vlaneseq
  %v672 = vshrl.u32 %v671, 7
  %v673 = vsub.s32 0, %v672
  %v674 = vrot.slane %v669, %v673
  %v677 = vsel %vm480, %v659, 0
  %v680 = vsel %vm480, %v664, 0
  %682 = vmatprep.subr.mxu0 0.0
  %683 = vmatpush1.msra.mxu0 %v667
  %684 = vmatprep.subr.mxu0 0.0
  %685 = vmatpush1.msra.mxu0 %v668
  %686 = vmatprep.subr.mxu0 0.0
  %687 = vmatpush1.msra.mxu0 0.0
  %688 = vmatprep.subr.mxu0 0.0
  %689 = vmatpush1.msra.mxu0 0.0
  %690 = vmatprep.subr.mxu0 0.0
  %691 = vmatpush1.msra.mxu0 0.0
  %692 = vmatprep.subr.mxu0 0.0
  %693 = vmatpush1.msra.mxu0 0.0
  %694 = vmatprep.subr.mxu0 0.0
  %695 = vmatpush1.msra.mxu0 0.0
  %696 = vmatprep.subr.mxu0 0.0
  %697 = vmatpush1.msra.mxu0 0.0
  %698 = vmatprep.subr.mxu0 0.0
  %699 = vmatpush1.msra.mxu0 0.0
  %700 = vmatprep.subr.mxu0 0.0
  %701 = vmatpush1.msra.mxu0 0.0
  %702 = vmatprep.subr.mxu0 0.0
  %703 = vmatpush1.msra.mxu0 0.0
  %704 = vmatprep.subr.mxu0 0.0
  %705 = vmatpush1.msra.mxu0 0.0
  %706 = vmatprep.subr.mxu0 0.0
  %707 = vmatpush1.msra.mxu0 0.0
  %708 = vmatprep.subr.mxu0 0.0
  %709 = vmatpush1.msra.mxu0 0.0
  %710 = vmatprep.subr.mxu0 0.0
  %711 = vmatpush1.msra.mxu0 0.0
  %712 = vmatprep.subr.mxu0 0.0
  %713 = vmatpush1.msra.mxu0 0.0
  %714 = vmatprep.subr.mxu0 0.0
  %715 = vmatpush1.msra.mxu0 0.0
  %716 = vmatprep.subr.mxu0 0.0
  %717 = vmatpush1.msra.mxu0 0.0
  %718 = vmatprep.subr.mxu0 0.0
  %719 = vmatpush1.msra.mxu0 0.0
  %720 = vmatprep.subr.mxu0 0.0
  %721 = vmatpush1.msra.mxu0 0.0
  %722 = vmatprep.subr.mxu0 0.0
  %723 = vmatpush1.msra.mxu0 0.0
  %724 = vmatprep.subr.mxu0 0.0
  %725 = vmatpush1.msra.mxu0 0.0
  %726 = vmatprep.subr.mxu0 0.0
  %727 = vmatpush1.msra.mxu0 0.0
  %728 = vmatprep.subr.mxu0 0.0
  %729 = vmatpush1.msra.mxu0 0.0
  %730 = vmatprep.subr.mxu0 0.0
  %731 = vmatpush1.msra.mxu0 0.0
  %732 = vmatprep.subr.mxu0 0.0
  %733 = vmatpush1.msra.mxu0 0.0
  %734 = vmatprep.subr.mxu0 0.0
  %735 = vmatpush1.msra.mxu0 0.0
  %736 = vmatprep.subr.mxu0 0.0
  %737 = vmatpush1.msra.mxu0 0.0
  %738 = vmatprep.subr.mxu0 0.0
  %739 = vmatpush1.msra.mxu0 0.0
  %740 = vmatprep.subr.mxu0 0.0
  %741 = vmatpush1.msra.mxu0 0.0
  %742 = vmatprep.subr.mxu0 0.0
  %743 = vmatpush1.msra.mxu0 0.0
  %744 = vmatprep.subr.mxu0 0.0
  %745 = vmatpush1.msra.mxu0 0.0
  %746 = vmatprep.mubr.f32.mxu0 0.0
  %747 = vmatmul.mubr.f32.gmra.mrb[0].mxu0 %v677
  %v748 = vpop.f32.mrb[0].mxu0
  %v749 = vadd.f32 %v674, %v748
  %v750 = vpop.f32.mrb[0].mxu0
  %751 = vmatprep.mubr.f32.mxu0 0.0
  %752 = vmatmul.mubr.f32.gmra.mrb[0].mxu0 %v680
  %v753 = vpop.f32.mrb[0].mxu0
  %v754 = vadd.f32 %v674, %v753
  %v755 = vpop.f32.mrb[0].mxu0
  %756 = vdwg.mxu0
  %v757 = vsub.f32 0.0, %v749
  %v758 = vsub.f32 0.0, %v754
  %v759 = vmul.f32 %v757, 1.442695
  %v760 = vpow.pop %v759
  %v761 = vmul.f32 %v758, 1.442695
  %v762 = vpow.pop %v761
  %v763 = vadd.f32 %v760, 1.0
  %v764 = vadd.f32 %v762, 1.0
  %v765 = vrcp.pop %v763
  %v766 = vmul.f32 1.0, %v765
  %v767 = vrcp.pop %v764
  %v768 = vmul.f32 1.0, %v767
  %769 = vst.msk [vmem:[%s18] sm:$0xff] %vm114, %v766
  %770 = vst.msk [vmem:[%s18 + $0x8] sm:$0xff] %vm114, %v768
  %v771 = vld [vmem:[%s12] sm:$0xff]
  %v772 = vld [vmem:[%s12 + $0x8] sm:$0xff]
  %v773 = vld [vmem:[%s12 + $0x10] sm:$0xff]
  %v774 = vld [vmem:[%s12 + $0x18] sm:$0xff]
  %v775 = vld [vmem:[%s12 + $0x20] sm:$0xff]
  %v776 = vld [vmem:[%s12 + $0x28] sm:$0xff]
  %v777 = vld [vmem:[%s12 + $0x30] sm:$0xff]
  %v778 = vld [vmem:[%s12 + $0x38] sm:$0xff]
  %v780 = vsel %vm114, %v104, 0
  %v783 = vsel %vm114, %v105, 0
  %785 = vmatprep.subr.mxu0 0.0
  %786 = vmatpush1.msra.mxu0 %v771
  %787 = vmatprep.subr.mxu0 0.0
  %788 = vmatpush1.msra.mxu0 %v772
  %789 = vmatprep.subr.mxu0 0.0
  %790 = vmatpush1.msra.mxu0 %v773
  %791 = vmatprep.subr.mxu0 0.0
  %792 = vmatpush1.msra.mxu0 %v774
  %793 = vmatprep.subr.mxu0 0.0
  %794 = vmatpush1.msra.mxu0 %v775
  %795 = vmatprep.subr.mxu0 0.0
  %796 = vmatpush1.msra.mxu0 %v776
  %797 = vmatprep.subr.mxu0 0.0
  %798 = vmatpush1.msra.mxu0 %v777
  %799 = vmatprep.subr.mxu0 0.0
  %800 = vmatpush1.msra.mxu0 %v778
  %801 = vmatprep.subr.mxu0 0.0
  %802 = vmatpush1.msra.mxu0 0.0
  %803 = vmatprep.subr.mxu0 0.0
  %804 = vmatpush1.msra.mxu0 0.0
  %805 = vmatprep.subr.mxu0 0.0
  %806 = vmatpush1.msra.mxu0 0.0
  %807 = vmatprep.subr.mxu0 0.0
  %808 = vmatpush1.msra.mxu0 0.0
  %809 = vmatprep.subr.mxu0 0.0
  %810 = vmatpush1.msra.mxu0 0.0
  %811 = vmatprep.subr.mxu0 0.0
  %812 = vmatpush1.msra.mxu0 0.0
  %813 = vmatprep.subr.mxu0 0.0
  %814 = vmatpush1.msra.mxu0 0.0
  %815 = vmatprep.subr.mxu0 0.0
  %816 = vmatpush1.msra.mxu0 0.0
  %817 = vmatprep.subr.mxu0 0.0
  %818 = vmatpush1.msra.mxu0 0.0
  %819 = vmatprep.subr.mxu0 0.0
  %820 = vmatpush1.msra.mxu0 0.0
  %821 = vmatprep.subr.mxu0 0.0
  %822 = vmatpush1.msra.mxu0 0.0
  %823 = vmatprep.subr.mxu0 0.0
  %824 = vmatpush1.msra.mxu0 0.0
  %825 = vmatprep.subr.mxu0 0.0
  %826 = vmatpush1.msra.mxu0 0.0
  %827 = vmatprep.subr.mxu0 0.0
  %828 = vmatpush1.msra.mxu0 0.0
  %829 = vmatprep.subr.mxu0 0.0
  %830 = vmatpush1.msra.mxu0 0.0
  %831 = vmatprep.subr.mxu0 0.0
  %832 = vmatpush1.msra.mxu0 0.0
  %833 = vmatprep.subr.mxu0 0.0
  %834 = vmatpush1.msra.mxu0 0.0
  %835 = vmatprep.subr.mxu0 0.0
  %836 = vmatpush1.msra.mxu0 0.0
  %837 = vmatprep.subr.mxu0 0.0
  %838 = vmatpush1.msra.mxu0 0.0
  %839 = vmatprep.subr.mxu0 0.0
  %840 = vmatpush1.msra.mxu0 0.0
  %841 = vmatprep.subr.mxu0 0.0
  %842 = vmatpush1.msra.mxu0 0.0
  %843 = vmatprep.subr.mxu0 0.0
  %844 = vmatpush1.msra.mxu0 0.0
  %845 = vmatprep.subr.mxu0 0.0
  %846 = vmatpush1.msra.mxu0 0.0
  %847 = vmatprep.subr.mxu0 0.0
  %848 = vmatpush1.msra.mxu0 0.0
  %849 = vmatprep.mubr.f32.mxu0 0.0
  %850 = vmatmul.mubr.f32.gmra.mrb[0].mxu0 %v780
  %v851 = vpop.f32.mrb[0].mxu0
  %v852 = vadd.f32 0.0, %v851
  %v853 = vpop.f32.mrb[0].mxu0
  %854 = vmatprep.mubr.f32.mxu0 0.0
  %855 = vmatmul.mubr.f32.gmra.mrb[0].mxu0 %v783
  %v856 = vpop.f32.mrb[0].mxu0
  %v857 = vadd.f32 0.0, %v856
  %v858 = vpop.f32.mrb[0].mxu0
  %859 = vdwg.mxu0
  %v860 = vsub.f32 0.0, %v852
  %v861 = vsub.f32 0.0, %v857
  %v862 = vmul.f32 %v860, 1.442695
  %v863 = vpow.pop %v862
  %v864 = vmul.f32 %v861, 1.442695
  %v865 = vpow.pop %v864
  %v866 = vadd.f32 %v863, 1.0
  %v867 = vadd.f32 %v865, 1.0
  %v868 = vrcp.pop %v866
  %v869 = vmul.f32 1.0, %v868
  %v870 = vrcp.pop %v867
  %v871 = vmul.f32 1.0, %v870
  %v872 = vld [vmem:[%s13] sm:$0xff]
  %v873 = vld [vmem:[%s13 + $0x8] sm:$0xff]
  %v875 = vsel %vm480, %v869, 0
  %v878 = vsel %vm480, %v871, 0
  %880 = vmatprep.subr.mxu0 0.0
  %881 = vmatpush1.msra.mxu0 %v872
  %882 = vmatprep.subr.mxu0 0.0
  %883 = vmatpush1.msra.mxu0 %v873
  %884 = vmatprep.subr.mxu0 0.0
  %885 = vmatpush1.msra.mxu0 0.0
  %886 = vmatprep.subr.mxu0 0.0
  %887 = vmatpush1.msra.mxu0 0.0
  %888 = vmatprep.subr.mxu0 0.0
  %889 = vmatpush1.msra.mxu0 0.0
  %890 = vmatprep.subr.mxu0 0.0
  %891 = vmatpush1.msra.mxu0 0.0
  %892 = vmatprep.subr.mxu0 0.0
  %893 = vmatpush1.msra.mxu0 0.0
  %894 = vmatprep.subr.mxu0 0.0
  %895 = vmatpush1.msra.mxu0 0.0
  %896 = vmatprep.subr.mxu0 0.0
  %897 = vmatpush1.msra.mxu0 0.0
  %898 = vmatprep.subr.mxu0 0.0
  %899 = vmatpush1.msra.mxu0 0.0
  %900 = vmatprep.subr.mxu0 0.0
  %901 = vmatpush1.msra.mxu0 0.0
  %902 = vmatprep.subr.mxu0 0.0
  %903 = vmatpush1.msra.mxu0 0.0
  %904 = vmatprep.subr.mxu0 0.0
  %905 = vmatpush1.msra.mxu0 0.0
  %906 = vmatprep.subr.mxu0 0.0
  %907 = vmatpush1.msra.mxu0 0.0
  %908 = vmatprep.subr.mxu0 0.0
  %909 = vmatpush1.msra.mxu0 0.0
  %910 = vmatprep.subr.mxu0 0.0
  %911 = vmatpush1.msra.mxu0 0.0
  %912 = vmatprep.subr.mxu0 0.0
  %913 = vmatpush1.msra.mxu0 0.0
  %914 = vmatprep.subr.mxu0 0.0
  %915 = vmatpush1.msra.mxu0 0.0
  %916 = vmatprep.subr.mxu0 0.0
  %917 = vmatpush1.msra.mxu0 0.0
  %918 = vmatprep.subr.mxu0 0.0
  %919 = vmatpush1.msra.mxu0 0.0
  %920 = vmatprep.subr.mxu0 0.0
  %921 = vmatpush1.msra.mxu0 0.0
  %922 = vmatprep.subr.mxu0 0.0
  %923 = vmatpush1.msra.mxu0 0.0
  %924 = vmatprep.subr.mxu0 0.0
  %925 = vmatpush1.msra.mxu0 0.0
  %926 = vmatprep.subr.mxu0 0.0
  %927 = vmatpush1.msra.mxu0 0.0
  %928 = vmatprep.subr.mxu0 0.0
  %929 = vmatpush1.msra.mxu0 0.0
  %930 = vmatprep.subr.mxu0 0.0
  %931 = vmatpush1.msra.mxu0 0.0
  %932 = vmatprep.subr.mxu0 0.0
  %933 = vmatpush1.msra.mxu0 0.0
  %934 = vmatprep.subr.mxu0 0.0
  %935 = vmatpush1.msra.mxu0 0.0
  %936 = vmatprep.subr.mxu0 0.0
  %937 = vmatpush1.msra.mxu0 0.0
  %938 = vmatprep.subr.mxu0 0.0
  %939 = vmatpush1.msra.mxu0 0.0
  %940 = vmatprep.subr.mxu0 0.0
  %941 = vmatpush1.msra.mxu0 0.0
  %942 = vmatprep.subr.mxu0 0.0
  %943 = vmatpush1.msra.mxu0 0.0
  %944 = vmatprep.mubr.f32.mxu0 0.0
  %945 = vmatmul.mubr.f32.gmra.mrb[0].mxu0 %v875
  %v946 = vpop.f32.mrb[0].mxu0
  %v947 = vadd.f32 0.0, %v946
  %v948 = vpop.f32.mrb[0].mxu0
  %949 = vmatprep.mubr.f32.mxu0 0.0
  %950 = vmatmul.mubr.f32.gmra.mrb[0].mxu0 %v878
  %v951 = vpop.f32.mrb[0].mxu0
  %v952 = vadd.f32 0.0, %v951
  %v953 = vpop.f32.mrb[0].mxu0
  %954 = vdwg.mxu0
  %955 = vst.msk [vmem:[%s19] sm:$0xff] %vm114, %v947
  %956 = vst.msk [vmem:[%s19 + $0x8] sm:$0xff] %vm114, %v952
  // Predicated region
  $region58: #{rwkv7_forward.21} parent=0 // pred_check
    _
  $region59: #{rwkv7_forward.21} parent=0 // pred_check_branch
    %958 = sbr.rel (0) target = $region61
  $region60: #{rwkv7_forward.21} parent=0 // pred_region
    _
  $region61: #{rwkv7_forward.21} parent=0 // pred_fallthru
    _
  // Predicated region
  $region62: #{rwkv7_forward.21} parent=0 // pred_check
    _
  $region63: #{rwkv7_forward.21} parent=0 // pred_check_branch
    %960 = sbr.rel (0) target = $region65
  $region64: #{rwkv7_forward.21} parent=0 // pred_region
    _
  $region65: #{rwkv7_forward.21} parent=0 // pred_fallthru
    _
  // Predicated region
  $region66: #{rwkv7_forward.21} parent=0 // pred_check
    _
  $region67: #{rwkv7_forward.21} parent=0 // pred_check_branch
    %962 = sbr.rel (0) target = $region69
  $region68: #{rwkv7_forward.21} parent=0 // pred_region
    _
  $region69: #{rwkv7_forward.21} parent=0 // pred_fallthru
    _
  // Predicated region
  $region70: #{rwkv7_forward.21} parent=0 // pred_check
    _
  $region71: #{rwkv7_forward.21} parent=0 // pred_check_branch
    %964 = sbr.rel (0) target = $region73
  $region72: #{rwkv7_forward.21} parent=0 // pred_region
    _
  $region73: #{rwkv7_forward.21} parent=0 // pred_fallthru
    _
  // Predicated region
  $region74: #{rwkv7_forward.21} parent=0 // pred_check
    _
  $region75: #{rwkv7_forward.21} parent=0 // pred_check_branch
    %966 = sbr.rel (0) target = $region77
  $region76: #{rwkv7_forward.21} parent=0 // pred_region
    _
  $region77: #{rwkv7_forward.21} parent=0 // pred_fallthru
    _
  // Predicated region
  $region78: #{rwkv7_forward.21} parent=0 // pred_check
    _
  $region79: #{rwkv7_forward.21} parent=0 // pred_check_branch
    %968 = sbr.rel (0) target = $region81
  $region80: #{rwkv7_forward.21} parent=0 // pred_region
    _
  $region81: #{rwkv7_forward.21} parent=0 // pred_fallthru
    _
  // Predicated region
  $region82: #{rwkv7_forward.21} parent=0 // pred_check
    _
  $region83: #{rwkv7_forward.21} parent=0 // pred_check_branch
    %970 = sbr.rel (0) target = $region85
  $region84: #{rwkv7_forward.21} parent=0 // pred_region
    _
  $region85: #{rwkv7_forward.21} parent=0 // pred_fallthru
    _
  // Predicated region
  $region86: #{rwkv7_forward.21} parent=0 // pred_check
    _
  $region87: #{rwkv7_forward.21} parent=0 // pred_check_branch
    %972 = sbr.rel (0) target = $region89
  $region88: #{rwkv7_forward.21} parent=0 // pred_region
    _
  $region89: #{rwkv7_forward.21} parent=0 // pred_fallthru
    _
  // Predicated region
  $region90: #{rwkv7_forward.21} parent=0 // pred_check
    _
  $region91: #{rwkv7_forward.21} parent=0 // pred_check_branch
    %974 = sbr.rel (0) target = $region93
  $region92: #{rwkv7_forward.21} parent=0 // pred_region
    _
  $region93: #{rwkv7_forward.21} parent=0 // pred_fallthru
    _
  // Predicated region
  $region94: #{rwkv7_forward.21} parent=0 // pred_check
    _
  $region95: #{rwkv7_forward.21} parent=0 // pred_check_branch
    %976 = sbr.rel (0) target = $region97
  $region96: #{rwkv7_forward.21} parent=0 // pred_region
    _
  $region97: #{rwkv7_forward.21} parent=0 // pred_fallthru
    _
  // Predicated region
  $region98: #{rwkv7_forward.21} parent=0 // pred_check
    _
  $region99: #{rwkv7_forward.21} parent=0 // pred_check_branch
    %978 = sbr.rel (0) target = $region101
  $region100: #{rwkv7_forward.21} parent=0 // pred_region
    _
  $region101: #{rwkv7_forward.21} parent=0 // pred_fallthru
    _
  // Predicated region
  $region102: #{rwkv7_forward.21} parent=0 // pred_check
    _
  $region103: #{rwkv7_forward.21} parent=0 // pred_check_branch
    %980 = sbr.rel (0) target = $region105
  $region104: #{rwkv7_forward.21} parent=0 // pred_region
    _
  $region105: #{rwkv7_forward.21} parent=0 // pred_fallthru
    _

// kernel: rwkv7_forward.24
$region0: #{rwkv7_forward.24}
  #allocation0 [shape = 'u32[]', space=smem, size = 0x4, offset = 0x4, fixed_abs, tag = 'smem constant byte address 0x4 - core index']
  #allocation1 [shape = 'u32[144,128]{1,0:T(1,128)}', space=vmem, size = 0x12000, scoped, tag = 'internal scratch']
  %s0 = inlined_call_operand.vmem [shape: f32[16,64], index: 0, kind: input, shape index: {}]
  %s1 = inlined_call_operand.vmem [shape: f32[64,64], index: 1, kind: input, shape index: {}]
  %s2 = inlined_call_operand.vmem [shape: f32[16,64], index: 2, kind: output, shape index: {}]
  %s3 = sld [smem:[#allocation0]]
  $region18: #{rwkv7_forward.24} parent=0
    _
  %s5 = ssub.s32 1, %s3
  %s6 = scalar_select 0, %s5, %s3
  // Predicated region
  $region2: #{rwkv7_forward.24} parent=0 // pred_check
    _
  $region3: #{rwkv7_forward.24} parent=0 // pred_check_branch
    %8 = sbr.rel (0) target = $region5
  $region4: #{rwkv7_forward.24} parent=0 // pred_region
    _
  $region5: #{rwkv7_forward.24} parent=0 // pred_fallthru
    _
  // Predicated region
  $region6: #{rwkv7_forward.24} parent=0 // pred_check
    _
  $region7: #{rwkv7_forward.24} parent=0 // pred_check_branch
    %10 = sbr.rel (0) target = $region9
  $region8: #{rwkv7_forward.24} parent=0 // pred_region
    _
  $region9: #{rwkv7_forward.24} parent=0 // pred_fallthru
    _
  %v11 = vld [vmem:[%s0] sm:$0xff]
  %v12 = vld [vmem:[%s0 + $0x8] sm:$0xff]
  %v13 = vld [vmem:[%s1] sm:$0xff]
  %v14 = vld [vmem:[%s1 + $0x8] sm:$0xff]
  %v15 = vld [vmem:[%s1 + $0x10] sm:$0xff]
  %v16 = vld [vmem:[%s1 + $0x18] sm:$0xff]
  %v17 = vld [vmem:[%s1 + $0x20] sm:$0xff]
  %v18 = vld [vmem:[%s1 + $0x28] sm:$0xff]
  %v19 = vld [vmem:[%s1 + $0x30] sm:$0xff]
  %v20 = vld [vmem:[%s1 + $0x38] sm:$0xff]
  %vm21 = vcmask 523264
  %v23 = vsel %vm21, %v11, 0
  %v26 = vsel %vm21, %v12, 0
  %28 = vmatprep.subr.mxu0 0.0
  %29 = vmatpush1.msra.mxu0 %v13
  %30 = vmatprep.subr.mxu0 0.0
  %31 = vmatpush1.msra.mxu0 %v14
  %32 = vmatprep.subr.mxu0 0.0
  %33 = vmatpush1.msra.mxu0 %v15
  %34 = vmatprep.subr.mxu0 0.0
  %35 = vmatpush1.msra.mxu0 %v16
  %36 = vmatprep.subr.mxu0 0.0
  %37 = vmatpush1.msra.mxu0 %v17
  %38 = vmatprep.subr.mxu0 0.0
  %39 = vmatpush1.msra.mxu0 %v18
  %40 = vmatprep.subr.mxu0 0.0
  %41 = vmatpush1.msra.mxu0 %v19
  %42 = vmatprep.subr.mxu0 0.0
  %43 = vmatpush1.msra.mxu0 %v20
  %44 = vmatprep.subr.mxu0 0.0
  %45 = vmatpush1.msra.mxu0 0.0
  %46 = vmatprep.subr.mxu0 0.0
  %47 = vmatpush1.msra.mxu0 0.0
  %48 = vmatprep.subr.mxu0 0.0
  %49 = vmatpush1.msra.mxu0 0.0
  %50 = vmatprep.subr.mxu0 0.0
  %51 = vmatpush1.msra.mxu0 0.0
  %52 = vmatprep.subr.mxu0 0.0
  %53 = vmatpush1.msra.mxu0 0.0
  %54 = vmatprep.subr.mxu0 0.0
  %55 = vmatpush1.msra.mxu0 0.0
  %56 = vmatprep.subr.mxu0 0.0
  %57 = vmatpush1.msra.mxu0 0.0
  %58 = vmatprep.subr.mxu0 0.0
  %59 = vmatpush1.msra.mxu0 0.0
  %60 = vmatprep.subr.mxu0 0.0
  %61 = vmatpush1.msra.mxu0 0.0
  %62 = vmatprep.subr.mxu0 0.0
  %63 = vmatpush1.msra.mxu0 0.0
  %64 = vmatprep.subr.mxu0 0.0
  %65 = vmatpush1.msra.mxu0 0.0
  %66 = vmatprep.subr.mxu0 0.0
  %67 = vmatpush1.msra.mxu0 0.0
  %68 = vmatprep.subr.mxu0 0.0
  %69 = vmatpush1.msra.mxu0 0.0
  %70 = vmatprep.subr.mxu0 0.0
  %71 = vmatpush1.msra.mxu0 0.0
  %72 = vmatprep.subr.mxu0 0.0
  %73 = vmatpush1.msra.mxu0 0.0
  %74 = vmatprep.subr.mxu0 0.0
  %75 = vmatpush1.msra.mxu0 0.0
  %76 = vmatprep.subr.mxu0 0.0
  %77 = vmatpush1.msra.mxu0 0.0
  %78 = vmatprep.subr.mxu0 0.0
  %79 = vmatpush1.msra.mxu0 0.0
  %80 = vmatprep.subr.mxu0 0.0
  %81 = vmatpush1.msra.mxu0 0.0
  %82 = vmatprep.subr.mxu0 0.0
  %83 = vmatpush1.msra.mxu0 0.0
  %84 = vmatprep.subr.mxu0 0.0
  %85 = vmatpush1.msra.mxu0 0.0
  %86 = vmatprep.subr.mxu0 0.0
  %87 = vmatpush1.msra.mxu0 0.0
  %88 = vmatprep.subr.mxu0 0.0
  %89 = vmatpush1.msra.mxu0 0.0
  %90 = vmatprep.subr.mxu0 0.0
  %91 = vmatpush1.msra.mxu0 0.0
  %92 = vmatprep.mubr.f32.mxu0 0.0
  %93 = vmatmul.mubr.f32.gmra.mrb[0].mxu0 %v23
  %v94 = vpop.f32.mrb[0].mxu0
  %v95 = vadd.f32 0.0, %v94
  %v96 = vpop.f32.mrb[0].mxu0
  %97 = vmatprep.mubr.f32.mxu0 0.0
  %98 = vmatmul.mubr.f32.gmra.mrb[0].mxu0 %v26
  %v99 = vpop.f32.mrb[0].mxu0
  %v100 = vadd.f32 0.0, %v99
  %v101 = vpop.f32.mrb[0].mxu0
  %102 = vdwg.mxu0
  %103 = vst.msk [vmem:[%s2] sm:$0xff] %vm21, %v95
  %104 = vst.msk [vmem:[%s2 + $0x8] sm:$0xff] %vm21, %v100
  // Predicated region
  $region10: #{rwkv7_forward.24} parent=0 // pred_check
    _
  $region11: #{rwkv7_forward.24} parent=0 // pred_check_branch
    %106 = sbr.rel (0) target = $region13
  $region12: #{rwkv7_forward.24} parent=0 // pred_region
    _
  $region13: #{rwkv7_forward.24} parent=0 // pred_fallthru
    _
  // Predicated region
  $region14: #{rwkv7_forward.24} parent=0 // pred_check
    _
  $region15: #{rwkv7_forward.24} parent=0 // pred_check_branch
    %108 = sbr.rel (0) target = $region17
  $region16: #{rwkv7_forward.24} parent=0 // pred_region
    _
  $region17: #{rwkv7_forward.24} parent=0 // pred_fallthru
    _

// kernel: rwkv7_forward.23
$region0: #{rwkv7_forward.23}
  #allocation0 [shape = 'u32[]', space=smem, size = 0x4, offset = 0x4, fixed_abs, tag = 'smem constant byte address 0x4 - core index']
  #allocation1 [shape = 'u32[144,128]{1,0:T(1,128)}', space=vmem, size = 0x12000, scoped, tag = 'internal scratch']
  %s0 = inlined_call_operand.vmem [shape: f32[16,1,64], index: 0, kind: input, shape index: {}]
  %s1 = inlined_call_operand.vmem [shape: f32[16,1,64], index: 1, kind: input, shape index: {}]
  %s2 = inlined_call_operand.vmem [shape: f32[16,1,64], index: 2, kind: input, shape index: {}]
  %s3 = inlined_call_operand.vmem [shape: f32[1,1,64], index: 3, kind: input, shape index: {}]
  %s4 = inlined_call_operand.vmem [shape: f32[1,1,64], index: 4, kind: input, shape index: {}]
  %s5 = inlined_call_operand.vmem [shape: f32[16,1,64], index: 5, kind: output, shape index: {}]
  %s6 = sld [smem:[#allocation0]]
  $region30: #{rwkv7_forward.23} parent=0
    _
  %s8 = ssub.s32 1, %s6
  %s9 = scalar_select 0, %s8, %s6
  // Predicated region
  $region2: #{rwkv7_forward.23} parent=0 // pred_check
    _
  $region3: #{rwkv7_forward.23} parent=0 // pred_check_branch
    %11 = sbr.rel (0) target = $region5
  $region4: #{rwkv7_forward.23} parent=0 // pred_region
    _
  $region5: #{rwkv7_forward.23} parent=0 // pred_fallthru
    _
  // Predicated region
  $region6: #{rwkv7_forward.23} parent=0 // pred_check
    _
  $region7: #{rwkv7_forward.23} parent=0 // pred_check_branch
    %13 = sbr.rel (0) target = $region9
  $region8: #{rwkv7_forward.23} parent=0 // pred_region
    _
  $region9: #{rwkv7_forward.23} parent=0 // pred_fallthru
    _
  // Predicated region
  $region10: #{rwkv7_forward.23} parent=0 // pred_check
    _
  $region11: #{rwkv7_forward.23} parent=0 // pred_check_branch
    %15 = sbr.rel (0) target = $region13
  $region12: #{rwkv7_forward.23} parent=0 // pred_region
    _
  $region13: #{rwkv7_forward.23} parent=0 // pred_fallthru
    _
  // Predicated region
  $region14: #{rwkv7_forward.23} parent=0 // pred_check
    _
  $region15: #{rwkv7_forward.23} parent=0 // pred_check_branch
    %17 = sbr.rel (0) target = $region17
  $region16: #{rwkv7_forward.23} parent=0 // pred_region
    _
  $region17: #{rwkv7_forward.23} parent=0 // pred_fallthru
    _
  // Predicated region
  $region18: #{rwkv7_forward.23} parent=0 // pred_check
    _
  $region19: #{rwkv7_forward.23} parent=0 // pred_check_branch
    %19 = sbr.rel (0) target = $region21
  $region20: #{rwkv7_forward.23} parent=0 // pred_region
    _
  $region21: #{rwkv7_forward.23} parent=0 // pred_fallthru
    _
  %v20 = vld [vmem:[%s0] sm:$0x1]
  %v21 = vld [vmem:[%s0 + $0x1] sm:$0x1]
  %v22 = vld [vmem:[%s0 + $0x2] sm:$0x1]
  %v23 = vld [vmem:[%s0 + $0x3] sm:$0x1]
  %v24 = vld [vmem:[%s0 + $0x4] sm:$0x1]
  %v25 = vld [vmem:[%s0 + $0x5] sm:$0x1]
  %v26 = vld [vmem:[%s0 + $0x6] sm:$0x1]
  %v27 = vld [vmem:[%s0 + $0x7] sm:$0x1]
  %v28 = vld [vmem:[%s0 + $0x8] sm:$0x1]
  %v29 = vld [vmem:[%s0 + $0x9] sm:$0x1]
  %v30 = vld [vmem:[%s0 + $0xa] sm:$0x1]
  %v31 = vld [vmem:[%s0 + $0xb] sm:$0x1]
  %v32 = vld [vmem:[%s0 + $0xc] sm:$0x1]
  %v33 = vld [vmem:[%s0 + $0xd] sm:$0x1]
  %v34 = vld [vmem:[%s0 + $0xe] sm:$0x1]
  %v35 = vld [vmem:[%s0 + $0xf] sm:$0x1]
  %vm36 = vcmask 516096
  %v37 = vsel %vm36, %v20, 0.0
  %38 = vadd.xlane.f32.xlu0 %v37
  %v39 = vpop.xlane.xlu0 %38
  %v40 = vsel %vm36, %v21, 0.0
  %41 = vadd.xlane.f32.xlu0 %v40
  %v42 = vpop.xlane.xlu0 %41
  %v43 = vsel %vm36, %v22, 0.0
  %44 = vadd.xlane.f32.xlu0 %v43
  %v45 = vpop.xlane.xlu0 %44
  %v46 = vsel %vm36, %v23, 0.0
  %47 = vadd.xlane.f32.xlu0 %v46
  %v48 = vpop.xlane.xlu0 %47
  %v49 = vsel %vm36, %v24, 0.0
  %50 = vadd.xlane.f32.xlu0 %v49
  %v51 = vpop.xlane.xlu0 %50
  %v52 = vsel %vm36, %v25, 0.0
  %53 = vadd.xlane.f32.xlu0 %v52
  %v54 = vpop.xlane.xlu0 %53
  %v55 = vsel %vm36, %v26, 0.0
  %56 = vadd.xlane.f32.xlu0 %v55
  %v57 = vpop.xlane.xlu0 %56
  %v58 = vsel %vm36, %v27, 0.0
  %59 = vadd.xlane.f32.xlu0 %v58
  %v60 = vpop.xlane.xlu0 %59
  %v61 = vsel %vm36, %v28, 0.0
  %62 = vadd.xlane.f32.xlu0 %v61
  %v63 = vpop.xlane.xlu0 %62
  %v64 = vsel %vm36, %v29, 0.0
  %65 = vadd.xlane.f32.xlu0 %v64
  %v66 = vpop.xlane.xlu0 %65
  %v67 = vsel %vm36, %v30, 0.0
  %68 = vadd.xlane.f32.xlu0 %v67
  %v69 = vpop.xlane.xlu0 %68
  %v70 = vsel %vm36, %v31, 0.0
  %71 = vadd.xlane.f32.xlu0 %v70
  %v72 = vpop.xlane.xlu0 %71
  %v73 = vsel %vm36, %v32, 0.0
  %74 = vadd.xlane.f32.xlu0 %v73
  %v75 = vpop.xlane.xlu0 %74
  %v76 = vsel %vm36, %v33, 0.0
  %77 = vadd.xlane.f32.xlu0 %v76
  %v78 = vpop.xlane.xlu0 %77
  %v79 = vsel %vm36, %v34, 0.0
  %80 = vadd.xlane.f32.xlu0 %v79
  %v81 = vpop.xlane.xlu0 %80
  %v82 = vsel %vm36, %v35, 0.0
  %83 = vadd.xlane.f32.xlu0 %v82
  %v84 = vpop.xlane.xlu0 %83
  %v85 = vrcp.pop 64.0
  %v86 = vmul.f32 %v39, %v85
  %v87 = vmul.f32 %v42, %v85
  %v88 = vmul.f32 %v45, %v85
  %v89 = vmul.f32 %v48, %v85
  %v90 = vmul.f32 %v51, %v85
  %v91 = vmul.f32 %v54, %v85
  %v92 = vmul.f32 %v57, %v85
  %v93 = vmul.f32 %v60, %v85
  %v94 = vmul.f32 %v63, %v85
  %v95 = vmul.f32 %v66, %v85
  %v96 = vmul.f32 %v69, %v85
  %v97 = vmul.f32 %v72, %v85
  %v98 = vmul.f32 %v75, %v85
  %v99 = vmul.f32 %v78, %v85
  %v100 = vmul.f32 %v81, %v85
  %v101 = vmul.f32 %v84, %v85
  %v102 = vsub.f32 %v20, %v86
  %v103 = vsub.f32 %v21, %v87
  %v104 = vsub.f32 %v22, %v88
  %v105 = vsub.f32 %v23, %v89
  %v106 = vsub.f32 %v24, %v90
  %v107 = vsub.f32 %v25, %v91
  %v108 = vsub.f32 %v26, %v92
  %v109 = vsub.f32 %v27, %v93
  %v110 = vsub.f32 %v28, %v94
  %v111 = vsub.f32 %v29, %v95
  %v112 = vsub.f32 %v30, %v96
  %v113 = vsub.f32 %v31, %v97
  %v114 = vsub.f32 %v32, %v98
  %v115 = vsub.f32 %v33, %v99
  %v116 = vsub.f32 %v34, %v100
  %v117 = vsub.f32 %v35, %v101
  %v118 = vmul.f32 %v102, %v102
  %v119 = vmul.f32 %v103, %v103
  %v120 = vmul.f32 %v104, %v104
  %v121 = vmul.f32 %v105, %v105
  %v122 = vmul.f32 %v106, %v106
  %v123 = vmul.f32 %v107, %v107
  %v124 = vmul.f32 %v108, %v108
  %v125 = vmul.f32 %v109, %v109
  %v126 = vmul.f32 %v110, %v110
  %v127 = vmul.f32 %v111, %v111
  %v128 = vmul.f32 %v112, %v112
  %v129 = vmul.f32 %v113, %v113
  %v130 = vmul.f32 %v114, %v114
  %v131 = vmul.f32 %v115, %v115
  %v132 = vmul.f32 %v116, %v116
  %v133 = vmul.f32 %v117, %v117
  %v134 = vsel %vm36, %v118, 0.0
  %135 = vadd.xlane.f32.xlu0 %v134
  %v136 = vpop.xlane.xlu0 %135
  %v137 = vsel %vm36, %v119, 0.0
  %138 = vadd.xlane.f32.xlu0 %v137
  %v139 = vpop.xlane.xlu0 %138
  %v140 = vsel %vm36, %v120, 0.0
  %141 = vadd.xlane.f32.xlu0 %v140
  %v142 = vpop.xlane.xlu0 %141
  %v143 = vsel %vm36, %v121, 0.0
  %144 = vadd.xlane.f32.xlu0 %v143
  %v145 = vpop.xlane.xlu0 %144
  %v146 = vsel %vm36, %v122, 0.0
  %147 = vadd.xlane.f32.xlu0 %v146
  %v148 = vpop.xlane.xlu0 %147
  %v149 = vsel %vm36, %v123, 0.0
  %150 = vadd.xlane.f32.xlu0 %v149
  %v151 = vpop.xlane.xlu0 %150
  %v152 = vsel %vm36, %v124, 0.0
  %153 = vadd.xlane.f32.xlu0 %v152
  %v154 = vpop.xlane.xlu0 %153
  %v155 = vsel %vm36, %v125, 0.0
  %156 = vadd.xlane.f32.xlu0 %v155
  %v157 = vpop.xlane.xlu0 %156
  %v158 = vsel %vm36, %v126, 0.0
  %159 = vadd.xlane.f32.xlu0 %v158
  %v160 = vpop.xlane.xlu0 %159
  %v161 = vsel %vm36, %v127, 0.0
  %162 = vadd.xlane.f32.xlu0 %v161
  %v163 = vpop.xlane.xlu0 %162
  %v164 = vsel %vm36, %v128, 0.0
  %165 = vadd.xlane.f32.xlu0 %v164
  %v166 = vpop.xlane.xlu0 %165
  %v167 = vsel %vm36, %v129, 0.0
  %168 = vadd.xlane.f32.xlu0 %v167
  %v169 = vpop.xlane.xlu0 %168
  %v170 = vsel %vm36, %v130, 0.0
  %171 = vadd.xlane.f32.xlu0 %v170
  %v172 = vpop.xlane.xlu0 %171
  %v173 = vsel %vm36, %v131, 0.0
  %174 = vadd.xlane.f32.xlu0 %v173
  %v175 = vpop.xlane.xlu0 %174
  %v176 = vsel %vm36, %v132, 0.0
  %177 = vadd.xlane.f32.xlu0 %v176
  %v178 = vpop.xlane.xlu0 %177
  %v179 = vsel %vm36, %v133, 0.0
  %180 = vadd.xlane.f32.xlu0 %v179
  %v181 = vpop.xlane.xlu0 %180
  %v182 = vmul.f32 %v136, %v85
  %v183 = vmul.f32 %v139, %v85
  %v184 = vmul.f32 %v142, %v85
  %v185 = vmul.f32 %v145, %v85
  %v186 = vmul.f32 %v148, %v85
  %v187 = vmul.f32 %v151, %v85
  %v188 = vmul.f32 %v154, %v85
  %v189 = vmul.f32 %v157, %v85
  %v190 = vmul.f32 %v160, %v85
  %v191 = vmul.f32 %v163, %v85
  %v192 = vmul.f32 %v166, %v85
  %v193 = vmul.f32 %v169, %v85
  %v194 = vmul.f32 %v172, %v85
  %v195 = vmul.f32 %v175, %v85
  %v196 = vmul.f32 %v178, %v85
  %v197 = vmul.f32 %v181, %v85
  %v198 = vadd.f32 %v182, 0.00064
  %v199 = vadd.f32 %v183, 0.00064
  %v200 = vadd.f32 %v184, 0.00064
  %v201 = vadd.f32 %v185, 0.00064
  %v202 = vadd.f32 %v186, 0.00064
  %v203 = vadd.f32 %v187, 0.00064
  %v204 = vadd.f32 %v188, 0.00064
  %v205 = vadd.f32 %v189, 0.00064
  %v206 = vadd.f32 %v190, 0.00064
  %v207 = vadd.f32 %v191, 0.00064
  %v208 = vadd.f32 %v192, 0.00064
  %v209 = vadd.f32 %v193, 0.00064
  %v210 = vadd.f32 %v194, 0.00064
  %v211 = vadd.f32 %v195, 0.00064
  %v212 = vadd.f32 %v196, 0.00064
  %v213 = vadd.f32 %v197, 0.00064
  %v214 = vrsqrt.pop %v198
  %v215 = vrsqrt.pop %v199
  %v216 = vrsqrt.pop %v200
  %v217 = vrsqrt.pop %v201
  %v218 = vrsqrt.pop %v202
  %v219 = vrsqrt.pop %v203
  %v220 = vrsqrt.pop %v204
  %v221 = vrsqrt.pop %v205
  %v222 = vrsqrt.pop %v206
  %v223 = vrsqrt.pop %v207
  %v224 = vrsqrt.pop %v208
  %v225 = vrsqrt.pop %v209
  %v226 = vrsqrt.pop %v210
  %v227 = vrsqrt.pop %v211
  %v228 = vrsqrt.pop %v212
  %v229 = vrsqrt.pop %v213
  %v230 = vmul.f32 %v102, %v214
  %v231 = vmul.f32 %v103, %v215
  %v232 = vmul.f32 %v104, %v216
  %v233 = vmul.f32 %v105, %v217
  %v234 = vmul.f32 %v106, %v218
  %v235 = vmul.f32 %v107, %v219
  %v236 = vmul.f32 %v108, %v220
  %v237 = vmul.f32 %v109, %v221
  %v238 = vmul.f32 %v110, %v222
  %v239 = vmul.f32 %v111, %v223
  %v240 = vmul.f32 %v112, %v224
  %v241 = vmul.f32 %v113, %v225
  %v242 = vmul.f32 %v114, %v226
  %v243 = vmul.f32 %v115, %v227
  %v244 = vmul.f32 %v116, %v228
  %v245 = vmul.f32 %v117, %v229
  %v246 = vld [vmem:[%s3] sm:$0x1]
  %v247 = vmul.f32 %v230, %v246
  %v248 = vmul.f32 %v231, %v246
  %v249 = vmul.f32 %v232, %v246
  %v250 = vmul.f32 %v233, %v246
  %v251 = vmul.f32 %v234, %v246
  %v252 = vmul.f32 %v235, %v246
  %v253 = vmul.f32 %v236, %v246
  %v254 = vmul.f32 %v237, %v246
  %v255 = vmul.f32 %v238, %v246
  %v256 = vmul.f32 %v239, %v246
  %v257 = vmul.f32 %v240, %v246
  %v258 = vmul.f32 %v241, %v246
  %v259 = vmul.f32 %v242, %v246
  %v260 = vmul.f32 %v243, %v246
  %v261 = vmul.f32 %v244, %v246
  %v262 = vmul.f32 %v245, %v246
  %v263 = vld [vmem:[%s4] sm:$0x1]
  %v264 = vadd.f32 %v247, %v263
  %v265 = vadd.f32 %v248, %v263
  %v266 = vadd.f32 %v249, %v263
  %v267 = vadd.f32 %v250, %v263
  %v268 = vadd.f32 %v251, %v263
  %v269 = vadd.f32 %v252, %v263
  %v270 = vadd.f32 %v253, %v263
  %v271 = vadd.f32 %v254, %v263
  %v272 = vadd.f32 %v255, %v263
  %v273 = vadd.f32 %v256, %v263
  %v274 = vadd.f32 %v257, %v263
  %v275 = vadd.f32 %v258, %v263
  %v276 = vadd.f32 %v259, %v263
  %v277 = vadd.f32 %v260, %v263
  %v278 = vadd.f32 %v261, %v263
  %v279 = vadd.f32 %v262, %v263
  %v280 = vld [vmem:[%s2] sm:$0x1]
  %v281 = vld [vmem:[%s2 + $0x1] sm:$0x1]
  %v282 = vld [vmem:[%s2 + $0x2] sm:$0x1]
  %v283 = vld [vmem:[%s2 + $0x3] sm:$0x1]
  %v284 = vld [vmem:[%s2 + $0x4] sm:$0x1]
  %v285 = vld [vmem:[%s2 + $0x5] sm:$0x1]
  %v286 = vld [vmem:[%s2 + $0x6] sm:$0x1]
  %v287 = vld [vmem:[%s2 + $0x7] sm:$0x1]
  %v288 = vld [vmem:[%s2 + $0x8] sm:$0x1]
  %v289 = vld [vmem:[%s2 + $0x9] sm:$0x1]
  %v290 = vld [vmem:[%s2 + $0xa] sm:$0x1]
  %v291 = vld [vmem:[%s2 + $0xb] sm:$0x1]
  %v292 = vld [vmem:[%s2 + $0xc] sm:$0x1]
  %v293 = vld [vmem:[%s2 + $0xd] sm:$0x1]
  %v294 = vld [vmem:[%s2 + $0xe] sm:$0x1]
  %v295 = vld [vmem:[%s2 + $0xf] sm:$0x1]
  %v296 = vadd.f32 %v264, %v280
  %v297 = vadd.f32 %v265, %v281
  %v298 = vadd.f32 %v266, %v282
  %v299 = vadd.f32 %v267, %v283
  %v300 = vadd.f32 %v268, %v284
  %v301 = vadd.f32 %v269, %v285
  %v302 = vadd.f32 %v270, %v286
  %v303 = vadd.f32 %v271, %v287
  %v304 = vadd.f32 %v272, %v288
  %v305 = vadd.f32 %v273, %v289
  %v306 = vadd.f32 %v274, %v290
  %v307 = vadd.f32 %v275, %v291
  %v308 = vadd.f32 %v276, %v292
  %v309 = vadd.f32 %v277, %v293
  %v310 = vadd.f32 %v278, %v294
  %v311 = vadd.f32 %v279, %v295
  %v312 = vld [vmem:[%s1] sm:$0x1]
  %v313 = vld [vmem:[%s1 + $0x1] sm:$0x1]
  %v314 = vld [vmem:[%s1 + $0x2] sm:$0x1]
  %v315 = vld [vmem:[%s1 + $0x3] sm:$0x1]
  %v316 = vld [vmem:[%s1 + $0x4] sm:$0x1]
  %v317 = vld [vmem:[%s1 + $0x5] sm:$0x1]
  %v318 = vld [vmem:[%s1 + $0x6] sm:$0x1]
  %v319 = vld [vmem:[%s1 + $0x7] sm:$0x1]
  %v320 = vld [vmem:[%s1 + $0x8] sm:$0x1]
  %v321 = vld [vmem:[%s1 + $0x9] sm:$0x1]
  %v322 = vld [vmem:[%s1 + $0xa] sm:$0x1]
  %v323 = vld [vmem:[%s1 + $0xb] sm:$0x1]
  %v324 = vld [vmem:[%s1 + $0xc] sm:$0x1]
  %v325 = vld [vmem:[%s1 + $0xd] sm:$0x1]
  %v326 = vld [vmem:[%s1 + $0xe] sm:$0x1]
  %v327 = vld [vmem:[%s1 + $0xf] sm:$0x1]
  %v328 = vmul.f32 %v296, %v312
  %v329 = vmul.f32 %v297, %v313
  %v330 = vmul.f32 %v298, %v314
  %v331 = vmul.f32 %v299, %v315
  %v332 = vmul.f32 %v300, %v316
  %v333 = vmul.f32 %v301, %v317
  %v334 = vmul.f32 %v302, %v318
  %v335 = vmul.f32 %v303, %v319
  %v336 = vmul.f32 %v304, %v320
  %v337 = vmul.f32 %v305, %v321
  %v338 = vmul.f32 %v306, %v322
  %v339 = vmul.f32 %v307, %v323
  %v340 = vmul.f32 %v308, %v324
  %v341 = vmul.f32 %v309, %v325
  %v342 = vmul.f32 %v310, %v326
  %v343 = vmul.f32 %v311, %v327
  %344 = vst.msk [vmem:[%s5] sm:$0x1] %vm36, %v328
  %345 = vst.msk [vmem:[%s5 + $0x1] sm:$0x1] %vm36, %v329
  %346 = vst.msk [vmem:[%s5 + $0x2] sm:$0x1] %vm36, %v330
  %347 = vst.msk [vmem:[%s5 + $0x3] sm:$0x1] %vm36, %v331
  %348 = vst.msk [vmem:[%s5 + $0x4] sm:$0x1] %vm36, %v332
  %349 = vst.msk [vmem:[%s5 + $0x5] sm:$0x1] %vm36, %v333
  %350 = vst.msk [vmem:[%s5 + $0x6] sm:$0x1] %vm36, %v334
  %351 = vst.msk [vmem:[%s5 + $0x7] sm:$0x1] %vm36, %v335
  %352 = vst.msk [vmem:[%s5 + $0x8] sm:$0x1] %vm36, %v336
  %353 = vst.msk [vmem:[%s5 + $0x9] sm:$0x1] %vm36, %v337
  %354 = vst.msk [vmem:[%s5 + $0xa] sm:$0x1] %vm36, %v338
  %355 = vst.msk [vmem:[%s5 + $0xb] sm:$0x1] %vm36, %v339
  %356 = vst.msk [vmem:[%s5 + $0xc] sm:$0x1] %vm36, %v340
  %357 = vst.msk [vmem:[%s5 + $0xd] sm:$0x1] %vm36, %v341
  %358 = vst.msk [vmem:[%s5 + $0xe] sm:$0x1] %vm36, %v342
  %359 = vst.msk [vmem:[%s5 + $0xf] sm:$0x1] %vm36, %v343
  // Predicated region
  $region22: #{rwkv7_forward.23} parent=0 // pred_check
    _
  $region23: #{rwkv7_forward.23} parent=0 // pred_check_branch
    %361 = sbr.rel (0) target = $region25
  $region24: #{rwkv7_forward.23} parent=0 // pred_region
    _
  $region25: #{rwkv7_forward.23} parent=0 // pred_fallthru
    _
  // Predicated region
  $region26: #{rwkv7_forward.23} parent=0 // pred_check
    _
  $region27: #{rwkv7_forward.23} parent=0 // pred_check_branch
    %363 = sbr.rel (0) target = $region29
  $region28: #{rwkv7_forward.23} parent=0 // pred_region
    _
  $region29: #{rwkv7_forward.23} parent=0 // pred_fallthru
    _

// kernel: rwkv7_forward.26
$region0: #{rwkv7_forward.26}
  #allocation0 [shape = 'u32[]', space=smem, size = 0x4, offset = 0x4, fixed_abs, tag = 'smem constant byte address 0x4 - core index']
  #allocation1 [shape = 'u32[144,128]{1,0:T(1,128)}', space=vmem, size = 0x12000, scoped, tag = 'internal scratch']
  %s0 = inlined_call_operand.vmem [shape: f32[16,64], index: 0, kind: input, shape index: {}]
  %s1 = inlined_call_operand.vmem [shape: f32[64,128], index: 1, kind: input, shape index: {}]
  %s2 = inlined_call_operand.vmem [shape: f32[1,128], index: 2, kind: input, shape index: {}]
  %s3 = inlined_call_operand.vmem [shape: f32[16,128], index: 3, kind: output, shape index: {}]
  %s4 = sld [smem:[#allocation0]]
  $region22: #{rwkv7_forward.26} parent=0
    _
  %s6 = ssub.s32 1, %s4
  %s7 = scalar_select 0, %s6, %s4
  // Predicated region
  $region2: #{rwkv7_forward.26} parent=0 // pred_check
    _
  $region3: #{rwkv7_forward.26} parent=0 // pred_check_branch
    %9 = sbr.rel (0) target = $region5
  $region4: #{rwkv7_forward.26} parent=0 // pred_region
    _
  $region5: #{rwkv7_forward.26} parent=0 // pred_fallthru
    _
  // Predicated region
  $region6: #{rwkv7_forward.26} parent=0 // pred_check
    _
  $region7: #{rwkv7_forward.26} parent=0 // pred_check_branch
    %11 = sbr.rel (0) target = $region9
  $region8: #{rwkv7_forward.26} parent=0 // pred_region
    _
  $region9: #{rwkv7_forward.26} parent=0 // pred_fallthru
    _
  // Predicated region
  $region10: #{rwkv7_forward.26} parent=0 // pred_check
    _
  $region11: #{rwkv7_forward.26} parent=0 // pred_check_branch
    %13 = sbr.rel (0) target = $region13
  $region12: #{rwkv7_forward.26} parent=0 // pred_region
    _
  $region13: #{rwkv7_forward.26} parent=0 // pred_fallthru
    _
  %v14 = vld [vmem:[%s0] sm:$0xff]
  %v15 = vld [vmem:[%s0 + $0x8] sm:$0xff]
  %v16 = vld [vmem:[%s1] sm:$0xff]
  %v17 = vld [vmem:[%s1 + $0x8] sm:$0xff]
  %v18 = vld [vmem:[%s1 + $0x10] sm:$0xff]
  %v19 = vld [vmem:[%s1 + $0x18] sm:$0xff]
  %v20 = vld [vmem:[%s1 + $0x20] sm:$0xff]
  %v21 = vld [vmem:[%s1 + $0x28] sm:$0xff]
  %v22 = vld [vmem:[%s1 + $0x30] sm:$0xff]
  %v23 = vld [vmem:[%s1 + $0x38] sm:$0xff]
  %v24 = vld [vmem:[%s2] sm:$0x1]
  %v26 = vlaneseq
  %v27 = vshrl.u32 %v26, 7
  %v28 = vsub.s32 0, %v27
  %v29 = vrot.slane %v24, %v28
  %vm31 = vcmask 523264
  %v33 = vsel %vm31, %v14, 0
  %v36 = vsel %vm31, %v15, 0
  %38 = vmatprep.subr.mxu0 0.0
  %39 = vmatpush1.msra.mxu0 %v16
  %40 = vmatprep.subr.mxu0 0.0
  %41 = vmatpush1.msra.mxu0 %v17
  %42 = vmatprep.subr.mxu0 0.0
  %43 = vmatpush1.msra.mxu0 %v18
  %44 = vmatprep.subr.mxu0 0.0
  %45 = vmatpush1.msra.mxu0 %v19
  %46 = vmatprep.subr.mxu0 0.0
  %47 = vmatpush1.msra.mxu0 %v20
  %48 = vmatprep.subr.mxu0 0.0
  %49 = vmatpush1.msra.mxu0 %v21
  %50 = vmatprep.subr.mxu0 0.0
  %51 = vmatpush1.msra.mxu0 %v22
  %52 = vmatprep.subr.mxu0 0.0
  %53 = vmatpush1.msra.mxu0 %v23
  %54 = vmatprep.subr.mxu0 0.0
  %55 = vmatpush1.msra.mxu0 0.0
  %56 = vmatprep.subr.mxu0 0.0
  %57 = vmatpush1.msra.mxu0 0.0
  %58 = vmatprep.subr.mxu0 0.0
  %59 = vmatpush1.msra.mxu0 0.0
  %60 = vmatprep.subr.mxu0 0.0
  %61 = vmatpush1.msra.mxu0 0.0
  %62 = vmatprep.subr.mxu0 0.0
  %63 = vmatpush1.msra.mxu0 0.0
  %64 = vmatprep.subr.mxu0 0.0
  %65 = vmatpush1.msra.mxu0 0.0
  %66 = vmatprep.subr.mxu0 0.0
  %67 = vmatpush1.msra.mxu0 0.0
  %68 = vmatprep.subr.mxu0 0.0
  %69 = vmatpush1.msra.mxu0 0.0
  %70 = vmatprep.subr.mxu0 0.0
  %71 = vmatpush1.msra.mxu0 0.0
  %72 = vmatprep.subr.mxu0 0.0
  %73 = vmatpush1.msra.mxu0 0.0
  %74 = vmatprep.subr.mxu0 0.0
  %75 = vmatpush1.msra.mxu0 0.0
  %76 = vmatprep.subr.mxu0 0.0
  %77 = vmatpush1.msra.mxu0 0.0
  %78 = vmatprep.subr.mxu0 0.0
  %79 = vmatpush1.msra.mxu0 0.0
  %80 = vmatprep.subr.mxu0 0.0
  %81 = vmatpush1.msra.mxu0 0.0
  %82 = vmatprep.subr.mxu0 0.0
  %83 = vmatpush1.msra.mxu0 0.0
  %84 = vmatprep.subr.mxu0 0.0
  %85 = vmatpush1.msra.mxu0 0.0
  %86 = vmatprep.subr.mxu0 0.0
  %87 = vmatpush1.msra.mxu0 0.0
  %88 = vmatprep.subr.mxu0 0.0
  %89 = vmatpush1.msra.mxu0 0.0
  %90 = vmatprep.subr.mxu0 0.0
  %91 = vmatpush1.msra.mxu0 0.0
  %92 = vmatprep.subr.mxu0 0.0
  %93 = vmatpush1.msra.mxu0 0.0
  %94 = vmatprep.subr.mxu0 0.0
  %95 = vmatpush1.msra.mxu0 0.0
  %96 = vmatprep.subr.mxu0 0.0
  %97 = vmatpush1.msra.mxu0 0.0
  %98 = vmatprep.subr.mxu0 0.0
  %99 = vmatpush1.msra.mxu0 0.0
  %100 = vmatprep.subr.mxu0 0.0
  %101 = vmatpush1.msra.mxu0 0.0
  %102 = vmatprep.mubr.f32.mxu0 0.0
  %103 = vmatmul.mubr.f32.gmra.mrb[0].mxu0 %v33
  %v104 = vpop.f32.mrb[0].mxu0
  %v105 = vadd.f32 %v29, %v104
  %v106 = vpop.f32.mrb[0].mxu0
  %107 = vmatprep.mubr.f32.mxu0 0.0
  %108 = vmatmul.mubr.f32.gmra.mrb[0].mxu0 %v36
  %v109 = vpop.f32.mrb[0].mxu0
  %v110 = vadd.f32 %v29, %v109
  %v111 = vpop.f32.mrb[0].mxu0
  %112 = vdwg.mxu0
  %v113 = vmax.f32 %v105, 0.0
  %v114 = vmax.f32 %v110, 0.0
  %115 = vst [vmem:[%s3] sm:$0xff] %v113
  %116 = vst [vmem:[%s3 + $0x8] sm:$0xff] %v114
  // Predicated region
  $region14: #{rwkv7_forward.26} parent=0 // pred_check
    _
  $region15: #{rwkv7_forward.26} parent=0 // pred_check_branch
    %118 = sbr.rel (0) target = $region17
  $region16: #{rwkv7_forward.26} parent=0 // pred_region
    _
  $region17: #{rwkv7_forward.26} parent=0 // pred_fallthru
    _
  // Predicated region
  $region18: #{rwkv7_forward.26} parent=0 // pred_check
    _
  $region19: #{rwkv7_forward.26} parent=0 // pred_check_branch
    %120 = sbr.rel (0) target = $region21
  $region20: #{rwkv7_forward.26} parent=0 // pred_region
    _
  $region21: #{rwkv7_forward.26} parent=0 // pred_fallthru
    _

// kernel: rwkv7_forward.27
$region0: #{rwkv7_forward.27}
  #allocation0 [shape = 'u32[]', space=smem, size = 0x4, offset = 0x4, fixed_abs, tag = 'smem constant byte address 0x4 - core index']
  #allocation1 [shape = 'u32[144,128]{1,0:T(1,128)}', space=vmem, size = 0x12000, scoped, tag = 'internal scratch']
  %s0 = inlined_call_operand.vmem [shape: f32[16,128], index: 0, kind: input, shape index: {}]
  %s1 = inlined_call_operand.vmem [shape: f32[128,64], index: 1, kind: input, shape index: {}]
  %s2 = inlined_call_operand.vmem [shape: f32[1,64], index: 2, kind: input, shape index: {}]
  %s3 = inlined_call_operand.vmem [shape: f32[16,64], index: 3, kind: output, shape index: {}]
  %s4 = sld [smem:[#allocation0]]
  $region22: #{rwkv7_forward.27} parent=0
    _
  %s6 = ssub.s32 1, %s4
  %s7 = scalar_select 0, %s6, %s4
  // Predicated region
  $region2: #{rwkv7_forward.27} parent=0 // pred_check
    _
  $region3: #{rwkv7_forward.27} parent=0 // pred_check_branch
    %9 = sbr.rel (0) target = $region5
  $region4: #{rwkv7_forward.27} parent=0 // pred_region
    _
  $region5: #{rwkv7_forward.27} parent=0 // pred_fallthru
    _
  // Predicated region
  $region6: #{rwkv7_forward.27} parent=0 // pred_check
    _
  $region7: #{rwkv7_forward.27} parent=0 // pred_check_branch
    %11 = sbr.rel (0) target = $region9
  $region8: #{rwkv7_forward.27} parent=0 // pred_region
    _
  $region9: #{rwkv7_forward.27} parent=0 // pred_fallthru
    _
  // Predicated region
  $region10: #{rwkv7_forward.27} parent=0 // pred_check
    _
  $region11: #{rwkv7_forward.27} parent=0 // pred_check_branch
    %13 = sbr.rel (0) target = $region13
  $region12: #{rwkv7_forward.27} parent=0 // pred_region
    _
  $region13: #{rwkv7_forward.27} parent=0 // pred_fallthru
    _
  %v14 = vld [vmem:[%s0] sm:$0xff]
  %v15 = vld [vmem:[%s0 + $0x8] sm:$0xff]
  %v16 = vld [vmem:[%s1] sm:$0xff]
  %v17 = vld [vmem:[%s1 + $0x8] sm:$0xff]
  %v18 = vld [vmem:[%s1 + $0x10] sm:$0xff]
  %v19 = vld [vmem:[%s1 + $0x18] sm:$0xff]
  %v20 = vld [vmem:[%s1 + $0x20] sm:$0xff]
  %v21 = vld [vmem:[%s1 + $0x28] sm:$0xff]
  %v22 = vld [vmem:[%s1 + $0x30] sm:$0xff]
  %v23 = vld [vmem:[%s1 + $0x38] sm:$0xff]
  %v24 = vld [vmem:[%s1 + $0x40] sm:$0xff]
  %v25 = vld [vmem:[%s1 + $0x48] sm:$0xff]
  %v26 = vld [vmem:[%s1 + $0x50] sm:$0xff]
  %v27 = vld [vmem:[%s1 + $0x58] sm:$0xff]
  %v28 = vld [vmem:[%s1 + $0x60] sm:$0xff]
  %v29 = vld [vmem:[%s1 + $0x68] sm:$0xff]
  %v30 = vld [vmem:[%s1 + $0x70] sm:$0xff]
  %v31 = vld [vmem:[%s1 + $0x78] sm:$0xff]
  %v32 = vld [vmem:[%s2] sm:$0x1]
  %v34 = vlaneseq
  %v35 = vshrl.u32 %v34, 7
  %v36 = vsub.s32 0, %v35
  %v37 = vrot.slane %v32, %v36
  %39 = vmatprep.subr.mxu0 0.0
  %40 = vmatpush1.msra.mxu0 %v16
  %41 = vmatprep.subr.mxu0 0.0
  %42 = vmatpush1.msra.mxu0 %v17
  %43 = vmatprep.subr.mxu0 0.0
  %44 = vmatpush1.msra.mxu0 %v18
  %45 = vmatprep.subr.mxu0 0.0
  %46 = vmatpush1.msra.mxu0 %v19
  %47 = vmatprep.subr.mxu0 0.0
  %48 = vmatpush1.msra.mxu0 %v20
  %49 = vmatprep.subr.mxu0 0.0
  %50 = vmatpush1.msra.mxu0 %v21
  %51 = vmatprep.subr.mxu0 0.0
  %52 = vmatpush1.msra.mxu0 %v22
  %53 = vmatprep.subr.mxu0 0.0
  %54 = vmatpush1.msra.mxu0 %v23
  %55 = vmatprep.subr.mxu0 0.0
  %56 = vmatpush1.msra.mxu0 %v24
  %57 = vmatprep.subr.mxu0 0.0
  %58 = vmatpush1.msra.mxu0 %v25
  %59 = vmatprep.subr.mxu0 0.0
  %60 = vmatpush1.msra.mxu0 %v26
  %61 = vmatprep.subr.mxu0 0.0
  %62 = vmatpush1.msra.mxu0 %v27
  %63 = vmatprep.subr.mxu0 0.0
  %64 = vmatpush1.msra.mxu0 %v28
  %65 = vmatprep.subr.mxu0 0.0
  %66 = vmatpush1.msra.mxu0 %v29
  %67 = vmatprep.subr.mxu0 0.0
  %68 = vmatpush1.msra.mxu0 %v30
  %69 = vmatprep.subr.mxu0 0.0
  %70 = vmatpush1.msra.mxu0 %v31
  %71 = vmatprep.subr.mxu0 0.0
  %72 = vmatpush1.msra.mxu0 0.0
  %73 = vmatprep.subr.mxu0 0.0
  %74 = vmatpush1.msra.mxu0 0.0
  %75 = vmatprep.subr.mxu0 0.0
  %76 = vmatpush1.msra.mxu0 0.0
  %77 = vmatprep.subr.mxu0 0.0
  %78 = vmatpush1.msra.mxu0 0.0
  %79 = vmatprep.subr.mxu0 0.0
  %80 = vmatpush1.msra.mxu0 0.0
  %81 = vmatprep.subr.mxu0 0.0
  %82 = vmatpush1.msra.mxu0 0.0
  %83 = vmatprep.subr.mxu0 0.0
  %84 = vmatpush1.msra.mxu0 0.0
  %85 = vmatprep.subr.mxu0 0.0
  %86 = vmatpush1.msra.mxu0 0.0
  %87 = vmatprep.subr.mxu0 0.0
  %88 = vmatpush1.msra.mxu0 0.0
  %89 = vmatprep.subr.mxu0 0.0
  %90 = vmatpush1.msra.mxu0 0.0
  %91 = vmatprep.subr.mxu0 0.0
  %92 = vmatpush1.msra.mxu0 0.0
  %93 = vmatprep.subr.mxu0 0.0
  %94 = vmatpush1.msra.mxu0 0.0
  %95 = vmatprep.subr.mxu0 0.0
  %96 = vmatpush1.msra.mxu0 0.0
  %97 = vmatprep.subr.mxu0 0.0
  %98 = vmatpush1.msra.mxu0 0.0
  %99 = vmatprep.subr.mxu0 0.0
  %100 = vmatpush1.msra.mxu0 0.0
  %101 = vmatprep.subr.mxu0 0.0
  %102 = vmatpush1.msra.mxu0 0.0
  %103 = vmatprep.mubr.f32.mxu0 0.0
  %104 = vmatmul.mubr.f32.gmra.mrb[0].mxu0 %v14
  %v105 = vpop.f32.mrb[0].mxu0
  %v106 = vadd.f32 %v37, %v105
  %v107 = vpop.f32.mrb[0].mxu0
  %108 = vmatprep.mubr.f32.mxu0 0.0
  %109 = vmatmul.mubr.f32.gmra.mrb[0].mxu0 %v15
  %v110 = vpop.f32.mrb[0].mxu0
  %v111 = vadd.f32 %v37, %v110
  %v112 = vpop.f32.mrb[0].mxu0
  %113 = vdwg.mxu0
  %vm114 = vcmask 523264
  %115 = vst.msk [vmem:[%s3] sm:$0xff] %vm114, %v106
  %116 = vst.msk [vmem:[%s3 + $0x8] sm:$0xff] %vm114, %v111
  // Predicated region
  $region14: #{rwkv7_forward.27} parent=0 // pred_check
    _
  $region15: #{rwkv7_forward.27} parent=0 // pred_check_branch
    %118 = sbr.rel (0) target = $region17
  $region16: #{rwkv7_forward.27} parent=0 // pred_region
    _
  $region17: #{rwkv7_forward.27} parent=0 // pred_fallthru
    _
  // Predicated region
  $region18: #{rwkv7_forward.27} parent=0 // pred_check
    _
  $region19: #{rwkv7_forward.27} parent=0 // pred_check_branch
    %120 = sbr.rel (0) target = $region21
  $region20: #{rwkv7_forward.27} parent=0 // pred_region
    _
  $region21: #{rwkv7_forward.27} parent=0 // pred_fallthru
    _

// kernel: rwkv7_forward.22
$region0: #{rwkv7_forward.22}
  #allocation0 [shape = 'u32[]', space=smem, size = 0x4, offset = 0x4, fixed_abs, tag = 'smem constant byte address 0x4 - core index']
  #allocation1 [shape = 'u32[144,128]{1,0:T(1,128)}', space=vmem, size = 0x12000, scoped, tag = 'internal scratch']
  #allocation2 [shape = 'f32[1,64,64]{2,1,0:T(8,128)}', space=vmem, size = 0x8000, scoped, tag = 'scratch operand']
  %s0 = inlined_call_operand.vmem [shape: f32[2,8,1,64], index: 0, kind: input, shape index: {}]
  %s1 = inlined_call_operand.vmem [shape: f32[2,8,1,64], index: 1, kind: input, shape index: {}]
  %s2 = inlined_call_operand.vmem [shape: f32[2,8,1,64], index: 2, kind: input, shape index: {}]
  %s3 = inlined_call_operand.vmem [shape: f32[2,8,1,64], index: 3, kind: input, shape index: {}]
  %s4 = inlined_call_operand.vmem [shape: f32[2,8,1,64], index: 4, kind: input, shape index: {}]
  %s5 = inlined_call_operand.vmem [shape: f32[2,8,1,64], index: 5, kind: input, shape index: {}]
  %s6 = inlined_call_operand.vmem [shape: f32[2,8,1,64], index: 6, kind: output, shape index: {}]
  %s7 = sld [smem:[#allocation0]]
  $region61: #{rwkv7_forward.22} parent=0
    _
  %s9 = ssub.s32 1, %s7
  %s10 = scalar_select 0, %s9, %s7
  loop: start=0, step=1, limit=4
  $region2: #{rwkv7_forward.22} parent=0 // loop_pre_header
    _
  $region3: #{rwkv7_forward.22} parent=0 // loop_header
    %s12 = sphi 0, %s16
    %p13 = scmp.ge.s32.totalorder %s12, 4
    %s19 = sphi 0, %s31
    %s20 = sphi 0, %s27
    %s21 = sphi 0, %s19
    %s22 = sphi 0, %s20
    %s23 = sphi 0, %s21
    %s24 = sphi 0, %s22
    %s36 = sphi 0, %s38
    %s39 = sphi 0, %s36
    %s40 = sphi 0, %s39
    %s56 = sphi 0, %s40
    %s64 = sphi 0, %s66
    %s67 = sphi 0, %s64
    %s68 = sphi 0, %s67
    %s84 = sphi 0, %s68
    %s92 = sphi 0, %s94
    %s95 = sphi 0, %s92
    %s96 = sphi 0, %s95
    %s112 = sphi 0, %s96
    %s120 = sphi 0, %s122
    %s123 = sphi 0, %s120
    %s124 = sphi 0, %s123
    %s140 = sphi 0, %s124
    %s148 = sphi 0, %s150
    %s151 = sphi 0, %s148
    %s152 = sphi 0, %s151
    %s168 = sphi 0, %s152
    %s176 = sphi 0, %s178
    %s179 = sphi 0, %s176
    %s180 = sphi 0, %s179
    %s196 = sphi 0, %s180
    %s204 = sphi 0, %s206
    %s207 = sphi 0, %s204
    %s208 = sphi 0, %s207
    %s224 = sphi 0, %s208
  $region4: #{rwkv7_forward.22} parent=0 // loop_header_branch
    %15 = sbr.rel (%p13) target = $region8
  $region5: #{rwkv7_forward.22} parent=0 // loop_body
    %s17 = ssub.s32 %s12, 1
    %s18 = ssub.s32 %s12, 2
    %s25 = sadd.s32 1, %s20
    %p26 = scmp.ge.s32.totalorder %s25, 1
    %s27 = scalar_select %p26, 0, %s25
    %s28 = sadd.s32 1, %s19
    %s29 = scalar_select %p26, %s28, %s19
    %p30 = scmp.ge.s32.totalorder %s29, 2
    %s31 = scalar_select %p30, 0, %s29
    %s32 = ssub.s32 %s19, %s31
    %s33 = ssub.s32 %s20, %s27
    %s34 = sor.u32 %s32, %s33
    %p35 = scmp.eq.s32.totalorder %s34, 0
    %s37 = sadd.s32 %s36, 1
    %s38 = scalar_select %p35, %s36, %s37
    %p41 = pneg %p35
    %p42 = scmp.eq.s32.totalorder %s12, 1
    %p43 = por %p41, %p42
    %p44 = scmp.ne.s32.totalorder %s36, %s39
    %p45 = scmp.eq.s32.totalorder %s12, 0
    %p46 = por %p44, %p45
    %p47 = scmp.ne.s32.totalorder %s36, %s39
    %p48 = scmp.eq.s32.totalorder %s17, 1
    %p49 = por %p47, %p48
    %p50 = scmp.ne.s32.totalorder %s39, %s40
    %p51 = scmp.eq.s32.totalorder %s17, 0
    %p52 = por %p50, %p51
    %p53 = scmp.ne.s32.totalorder %s39, %s40
    %p54 = scmp.eq.s32.totalorder %s18, 1
    %p55 = por %p53, %p54
    %p57 = scmp.ne.s32.totalorder %s40, %s56
    %p58 = scmp.eq.s32.totalorder %s18, 0
    %p59 = por %p57, %p58
    %s60 = ssub.s32 %s19, %s31
    %s61 = ssub.s32 %s20, %s27
    %s62 = sor.u32 %s60, %s61
    %p63 = scmp.eq.s32.totalorder %s62, 0
    %s65 = sadd.s32 %s64, 1
    %s66 = scalar_select %p63, %s64, %s65
    %p69 = pneg %p63
    %p70 = scmp.eq.s32.totalorder %s12, 1
    %p71 = por %p69, %p70
    %p72 = scmp.ne.s32.totalorder %s64, %s67
    %p73 = scmp.eq.s32.totalorder %s12, 0
    %p74 = por %p72, %p73
    %p75 = scmp.ne.s32.totalorder %s64, %s67
    %p76 = scmp.eq.s32.totalorder %s17, 1
    %p77 = por %p75, %p76
    %p78 = scmp.ne.s32.totalorder %s67, %s68
    %p79 = scmp.eq.s32.totalorder %s17, 0
    %p80 = por %p78, %p79
    %p81 = scmp.ne.s32.totalorder %s67, %s68
    %p82 = scmp.eq.s32.totalorder %s18, 1
    %p83 = por %p81, %p82
    %p85 = scmp.ne.s32.totalorder %s68, %s84
    %p86 = scmp.eq.s32.totalorder %s18, 0
    %p87 = por %p85, %p86
    %s88 = ssub.s32 %s19, %s31
    %s89 = ssub.s32 %s20, %s27
    %s90 = sor.u32 %s88, %s89
    %p91 = scmp.eq.s32.totalorder %s90, 0
    %s93 = sadd.s32 %s92, 1
    %s94 = scalar_select %p91, %s92, %s93
    %p97 = pneg %p91
    %p98 = scmp.eq.s32.totalorder %s12, 1
    %p99 = por %p97, %p98
    %p100 = scmp.ne.s32.totalorder %s92, %s95
    %p101 = scmp.eq.s32.totalorder %s12, 0
    %p102 = por %p100, %p101
    %p103 = scmp.ne.s32.totalorder %s92, %s95
    %p104 = scmp.eq.s32.totalorder %s17, 1
    %p105 = por %p103, %p104
    %p106 = scmp.ne.s32.totalorder %s95, %s96
    %p107 = scmp.eq.s32.totalorder %s17, 0
    %p108 = por %p106, %p107
    %p109 = scmp.ne.s32.totalorder %s95, %s96
    %p110 = scmp.eq.s32.totalorder %s18, 1
    %p111 = por %p109, %p110
    %p113 = scmp.ne.s32.totalorder %s96, %s112
    %p114 = scmp.eq.s32.totalorder %s18, 0
    %p115 = por %p113, %p114
    %s116 = ssub.s32 %s19, %s31
    %s117 = ssub.s32 %s20, %s27
    %s118 = sor.u32 %s116, %s117
    %p119 = scmp.eq.s32.totalorder %s118, 0
    %s121 = sadd.s32 %s120, 1
    %s122 = scalar_select %p119, %s120, %s121
    %p125 = pneg %p119
    %p126 = scmp.eq.s32.totalorder %s12, 1
    %p127 = por %p125, %p126
    %p128 = scmp.ne.s32.totalorder %s120, %s123
    %p129 = scmp.eq.s32.totalorder %s12, 0
    %p130 = por %p128, %p129
    %p131 = scmp.ne.s32.totalorder %s120, %s123
    %p132 = scmp.eq.s32.totalorder %s17, 1
    %p133 = por %p131, %p132
    %p134 = scmp.ne.s32.totalorder %s123, %s124
    %p135 = scmp.eq.s32.totalorder %s17, 0
    %p136 = por %p134, %p135
    %p137 = scmp.ne.s32.totalorder %s123, %s124
    %p138 = scmp.eq.s32.totalorder %s18, 1
    %p139 = por %p137, %p138
    %p141 = scmp.ne.s32.totalorder %s124, %s140
    %p142 = scmp.eq.s32.totalorder %s18, 0
    %p143 = por %p141, %p142
    %s144 = ssub.s32 %s19, %s31
    %s145 = ssub.s32 %s20, %s27
    %s146 = sor.u32 %s144, %s145
    %p147 = scmp.eq.s32.totalorder %s146, 0
    %s149 = sadd.s32 %s148, 1
    %s150 = scalar_select %p147, %s148, %s149
    %p153 = pneg %p147
    %p154 = scmp.eq.s32.totalorder %s12, 1
    %p155 = por %p153, %p154
    %p156 = scmp.ne.s32.totalorder %s148, %s151
    %p157 = scmp.eq.s32.totalorder %s12, 0
    %p158 = por %p156, %p157
    %p159 = scmp.ne.s32.totalorder %s148, %s151
    %p160 = scmp.eq.s32.totalorder %s17, 1
    %p161 = por %p159, %p160
    %p162 = scmp.ne.s32.totalorder %s151, %s152
    %p163 = scmp.eq.s32.totalorder %s17, 0
    %p164 = por %p162, %p163
    %p165 = scmp.ne.s32.totalorder %s151, %s152
    %p166 = scmp.eq.s32.totalorder %s18, 1
    %p167 = por %p165, %p166
    %p169 = scmp.ne.s32.totalorder %s152, %s168
    %p170 = scmp.eq.s32.totalorder %s18, 0
    %p171 = por %p169, %p170
    %s172 = ssub.s32 %s19, %s31
    %s173 = ssub.s32 %s20, %s27
    %s174 = sor.u32 %s172, %s173
    %p175 = scmp.eq.s32.totalorder %s174, 0
    %s177 = sadd.s32 %s176, 1
    %s178 = scalar_select %p175, %s176, %s177
    %p181 = pneg %p175
    %p182 = scmp.eq.s32.totalorder %s12, 1
    %p183 = por %p181, %p182
    %p184 = scmp.ne.s32.totalorder %s176, %s179
    %p185 = scmp.eq.s32.totalorder %s12, 0
    %p186 = por %p184, %p185
    %p187 = scmp.ne.s32.totalorder %s176, %s179
    %p188 = scmp.eq.s32.totalorder %s17, 1
    %p189 = por %p187, %p188
    %p190 = scmp.ne.s32.totalorder %s179, %s180
    %p191 = scmp.eq.s32.totalorder %s17, 0
    %p192 = por %p190, %p191
    %p193 = scmp.ne.s32.totalorder %s179, %s180
    %p194 = scmp.eq.s32.totalorder %s18, 1
    %p195 = por %p193, %p194
    %p197 = scmp.ne.s32.totalorder %s180, %s196
    %p198 = scmp.eq.s32.totalorder %s18, 0
    %p199 = por %p197, %p198
    %s200 = ssub.s32 %s19, %s31
    %s201 = ssub.s32 %s20, %s27
    %s202 = sor.u32 %s200, %s201
    %p203 = scmp.eq.s32.totalorder %s202, 0
    %s205 = sadd.s32 %s204, 1
    %s206 = scalar_select %p203, %s204, %s205
    %p209 = pneg %p203
    %p210 = scmp.eq.s32.totalorder %s12, 1
    %p211 = por %p209, %p210
    %p212 = scmp.ne.s32.totalorder %s204, %s207
    %p213 = scmp.eq.s32.totalorder %s12, 0
    %p214 = por %p212, %p213
    %p215 = scmp.ne.s32.totalorder %s204, %s207
    %p216 = scmp.eq.s32.totalorder %s17, 1
    %p217 = por %p215, %p216
    %p218 = scmp.ne.s32.totalorder %s207, %s208
    %p219 = scmp.eq.s32.totalorder %s17, 0
    %p220 = por %p218, %p219
    %p221 = scmp.ne.s32.totalorder %s207, %s208
    %p222 = scmp.eq.s32.totalorder %s18, 1
    %p223 = por %p221, %p222
    %p225 = scmp.ne.s32.totalorder %s208, %s224
    %p226 = scmp.eq.s32.totalorder %s18, 0
    %p227 = por %p225, %p226
    %p228 = scmp.le.s32.totalorder 1, %s12
    %p229 = scmp.lt.s32.totalorder %s12, 3
    %p230 = pnand %p228, %p229
    %p231 = pneg %p230
    // Predicated region
    $region9: #{rwkv7_forward.22} parent=5 // pred_check
      _
    $region10: #{rwkv7_forward.22} parent=5 // pred_check_branch
      %233 = sbr.rel (%p230) target = $region12
    $region11: #{rwkv7_forward.22} parent=5 // pred_region
      %s234 = ssub.s32 %s12, 1
    $region12: #{rwkv7_forward.22} parent=5 // pred_fallthru
      _
    %p235 = scmp.lt.s32.totalorder %s12, 2
    // Predicated region
    $region13: #{rwkv7_forward.22} parent=5 // pred_check
      %p236 = pneg %p235
    $region14: #{rwkv7_forward.22} parent=5 // pred_check_branch
      %238 = sbr.rel (%p236) target = $region16
    $region15: #{rwkv7_forward.22} parent=5 // pred_region
      // Predicated region
      $region17: #{rwkv7_forward.22} parent=15 // pred_check
        %p239 = pneg %p46
      $region18: #{rwkv7_forward.22} parent=15 // pred_check_branch
        %241 = sbr.rel (%p239) target = $region20
      $region19: #{rwkv7_forward.22} parent=15 // pred_region
        %s242 = smul.u32 8, %s20
        %p243 = scmp.lt.s32.totalorder %s19, 1
        %s244 = scalar_select %p243, %s19, 1
        %p245 = scmp.lt.s32.totalorder %s242, 7
        %s246 = scalar_select %p245, %s242, 7
        %s247 = smul.addr %s244, 8
        %s248 = sadd.s32 %s246, %s247
        %s249 = scalar_lea.vmem %s0, %s248
        %s250 = smul.u32 8, %s20
      $region20: #{rwkv7_forward.22} parent=15 // pred_fallthru
        _
      // Predicated region
      $region21: #{rwkv7_forward.22} parent=15 // pred_check
        %p251 = pneg %p74
      $region22: #{rwkv7_forward.22} parent=15 // pred_check_branch
        %253 = sbr.rel (%p251) target = $region24
      $region23: #{rwkv7_forward.22} parent=15 // pred_region
        %s254 = smul.u32 8, %s20
        %p255 = scmp.lt.s32.totalorder %s19, 1
        %s256 = scalar_select %p255, %s19, 1
        %p257 = scmp.lt.s32.totalorder %s254, 7
        %s258 = scalar_select %p257, %s254, 7
        %s259 = smul.addr %s256, 8
        %s260 = sadd.s32 %s258, %s259
        %s261 = scalar_lea.vmem %s1, %s260
        %s262 = smul.u32 8, %s20
      $region24: #{rwkv7_forward.22} parent=15 // pred_fallthru
        _
      // Predicated region
      $region25: #{rwkv7_forward.22} parent=15 // pred_check
        %p263 = pneg %p102
      $region26: #{rwkv7_forward.22} parent=15 // pred_check_branch
        %265 = sbr.rel (%p263) target = $region28
      $region27: #{rwkv7_forward.22} parent=15 // pred_region
        %s266 = smul.u32 8, %s20
        %p267 = scmp.lt.s32.totalorder %s19, 1
        %s268 = scalar_select %p267, %s19, 1
        %p269 = scmp.lt.s32.totalorder %s266, 7
        %s270 = scalar_select %p269, %s266, 7
        %s271 = smul.addr %s268, 8
        %s272 = sadd.s32 %s270, %s271
        %s273 = scalar_lea.vmem %s2, %s272
        %s274 = smul.u32 8, %s20
      $region28: #{rwkv7_forward.22} parent=15 // pred_fallthru
        _
      // Predicated region
      $region29: #{rwkv7_forward.22} parent=15 // pred_check
        %p275 = pneg %p130
      $region30: #{rwkv7_forward.22} parent=15 // pred_check_branch
        %277 = sbr.rel (%p275) target = $region32
      $region31: #{rwkv7_forward.22} parent=15 // pred_region
        %s278 = smul.u32 8, %s20
        %p279 = scmp.lt.s32.totalorder %s19, 1
        %s280 = scalar_select %p279, %s19, 1
        %p281 = scmp.lt.s32.totalorder %s278, 7
        %s282 = scalar_select %p281, %s278, 7
        %s283 = smul.addr %s280, 8
        %s284 = sadd.s32 %s282, %s283
        %s285 = scalar_lea.vmem %s3, %s284
        %s286 = smul.u32 8, %s20
      $region32: #{rwkv7_forward.22} parent=15 // pred_fallthru
        _
      // Predicated region
      $region33: #{rwkv7_forward.22} parent=15 // pred_check
        %p287 = pneg %p158
      $region34: #{rwkv7_forward.22} parent=15 // pred_check_branch
        %289 = sbr.rel (%p287) target = $region36
      $region35: #{rwkv7_forward.22} parent=15 // pred_region
        %s290 = smul.u32 8, %s20
        %p291 = scmp.lt.s32.totalorder %s19, 1
        %s292 = scalar_select %p291, %s19, 1
        %p293 = scmp.lt.s32.totalorder %s290, 7
        %s294 = scalar_select %p293, %s290, 7
        %s295 = smul.addr %s292, 8
        %s296 = sadd.s32 %s294, %s295
        %s297 = scalar_lea.vmem %s4, %s296
        %s298 = smul.u32 8, %s20
      $region36: #{rwkv7_forward.22} parent=15 // pred_fallthru
        _
      // Predicated region
      $region37: #{rwkv7_forward.22} parent=15 // pred_check
        %p299 = pneg %p186
      $region38: #{rwkv7_forward.22} parent=15 // pred_check_branch
        %301 = sbr.rel (%p299) target = $region40
      $region39: #{rwkv7_forward.22} parent=15 // pred_region
        %s302 = smul.u32 8, %s20
        %p303 = scmp.lt.s32.totalorder %s19, 1
        %s304 = scalar_select %p303, %s19, 1
        %p305 = scmp.lt.s32.totalorder %s302, 7
        %s306 = scalar_select %p305, %s302, 7
        %s307 = smul.addr %s304, 8
        %s308 = sadd.s32 %s306, %s307
        %s309 = scalar_lea.vmem %s5, %s308
        %s310 = smul.u32 8, %s20
      $region40: #{rwkv7_forward.22} parent=15 // pred_fallthru
        _
    $region16: #{rwkv7_forward.22} parent=5 // pred_fallthru
      _
    %p311 = scmp.le.s32.totalorder 1, %s12
    %p312 = scmp.lt.s32.totalorder %s12, 3
    %p313 = pnand %p311, %p312
    %p314 = pneg %p313
    // Predicated region
    $region41: #{rwkv7_forward.22} parent=5 // pred_check
      _
    $region42: #{rwkv7_forward.22} parent=5 // pred_check_branch
      %316 = sbr.rel (%p313) target = $region44
    $region43: #{rwkv7_forward.22} parent=5 // pred_region
      %s317 = ssub.s32 %s12, 1
      %s318 = smul.u32 8, %s22
      %p319 = scmp.lt.s32.totalorder %s21, 1
      %s320 = scalar_select %p319, %s21, 1
      %p321 = scmp.lt.s32.totalorder %s318, 7
      %s322 = scalar_select %p321, %s318, 7
      %s323 = smul.addr %s320, 8
      %s324 = sadd.s32 %s322, %s323
      %s325 = scalar_lea.vmem %s0, %s324
      %p326 = pneg %p52
      %p327 = pneg %p49
      %s328 = smul.u32 8, %s22
      %p329 = scmp.lt.s32.totalorder %s21, 1
      %s330 = scalar_select %p329, %s21, 1
      %p331 = scmp.lt.s32.totalorder %s328, 7
      %s332 = scalar_select %p331, %s328, 7
      %s333 = smul.addr %s330, 8
      %s334 = sadd.s32 %s332, %s333
      %s335 = scalar_lea.vmem %s1, %s334
      %p336 = pneg %p80
      %p337 = pneg %p77
      %s338 = smul.u32 8, %s22
      %p339 = scmp.lt.s32.totalorder %s21, 1
      %s340 = scalar_select %p339, %s21, 1
      %p341 = scmp.lt.s32.totalorder %s338, 7
      %s342 = scalar_select %p341, %s338, 7
      %s343 = smul.addr %s340, 8
      %s344 = sadd.s32 %s342, %s343
      %s345 = scalar_lea.vmem %s2, %s344
      %p346 = pneg %p108
      %p347 = pneg %p105
      %s348 = smul.u32 8, %s22
      %p349 = scmp.lt.s32.totalorder %s21, 1
      %s350 = scalar_select %p349, %s21, 1
      %p351 = scmp.lt.s32.totalorder %s348, 7
      %s352 = scalar_select %p351, %s348, 7
      %s353 = smul.addr %s350, 8
      %s354 = sadd.s32 %s352, %s353
      %s355 = scalar_lea.vmem %s3, %s354
      %p356 = pneg %p136
      %p357 = pneg %p133
      %s358 = smul.u32 8, %s22
      %p359 = scmp.lt.s32.totalorder %s21, 1
      %s360 = scalar_select %p359, %s21, 1
      %p361 = scmp.lt.s32.totalorder %s358, 7
      %s362 = scalar_select %p361, %s358, 7
      %s363 = smul.addr %s360, 8
      %s364 = sadd.s32 %s362, %s363
      %s365 = scalar_lea.vmem %s4, %s364
      %p366 = pneg %p164
      %p367 = pneg %p161
      %s368 = smul.u32 8, %s22
      %p369 = scmp.lt.s32.totalorder %s21, 1
      %s370 = scalar_select %p369, %s21, 1
      %p371 = scmp.lt.s32.totalorder %s368, 7
      %s372 = scalar_select %p371, %s368, 7
      %s373 = smul.addr %s370, 8
      %s374 = sadd.s32 %s372, %s373
      %s375 = scalar_lea.vmem %s5, %s374
      %p376 = pneg %p192
      %p377 = pneg %p189
      %p378 = pneg %p220
      %p379 = pneg %p217
      %s380 = smul.u32 8, %s22
      %p381 = scmp.lt.s32.totalorder %s21, 1
      %s382 = scalar_select %p381, %s21, 1
      %p383 = scmp.lt.s32.totalorder %s380, 7
      %s384 = scalar_select %p383, %s380, 7
      %s385 = smul.addr %s382, 8
      %s386 = sadd.s32 %s384, %s385
      %s387 = scalar_lea.vmem %s6, %s386
      %s388 = smul.u32 8, %s22
      %p389 = scmp.lt.s32.totalorder %s21, 1
      %s390 = scalar_select %p389, %s21, 1
      %p391 = scmp.lt.s32.totalorder %s388, 7
      %s392 = scalar_select %p391, %s388, 7
      %s393 = smul.addr %s390, 8
      %s394 = sadd.s32 %s392, %s393
      %s395 = scalar_lea.vmem %s0, %s394
      %s396 = smul.u32 8, %s22
      %s397 = smul.u32 8, %s22
      %p398 = scmp.lt.s32.totalorder %s21, 1
      %s399 = scalar_select %p398, %s21, 1
      %p400 = scmp.lt.s32.totalorder %s397, 7
      %s401 = scalar_select %p400, %s397, 7
      %s402 = smul.addr %s399, 8
      %s403 = sadd.s32 %s401, %s402
      %s404 = scalar_lea.vmem %s1, %s403
      %s405 = smul.u32 8, %s22
      %s406 = smul.u32 8, %s22
      %p407 = scmp.lt.s32.totalorder %s21, 1
      %s408 = scalar_select %p407, %s21, 1
      %p409 = scmp.lt.s32.totalorder %s406, 7
      %s410 = scalar_select %p409, %s406, 7
      %s411 = smul.addr %s408, 8
      %s412 = sadd.s32 %s410, %s411
      %s413 = scalar_lea.vmem %s2, %s412
      %s414 = smul.u32 8, %s22
      %s415 = smul.u32 8, %s22
      %p416 = scmp.lt.s32.totalorder %s21, 1
      %s417 = scalar_select %p416, %s21, 1
      %p418 = scmp.lt.s32.totalorder %s415, 7
      %s419 = scalar_select %p418, %s415, 7
      %s420 = smul.addr %s417, 8
      %s421 = sadd.s32 %s419, %s420
      %s422 = scalar_lea.vmem %s3, %s421
      %s423 = smul.u32 8, %s22
      %s424 = smul.u32 8, %s22
      %p425 = scmp.lt.s32.totalorder %s21, 1
      %s426 = scalar_select %p425, %s21, 1
      %p427 = scmp.lt.s32.totalorder %s424, 7
      %s428 = scalar_select %p427, %s424, 7
      %s429 = smul.addr %s426, 8
      %s430 = sadd.s32 %s428, %s429
      %s431 = scalar_lea.vmem %s4, %s430
      %s432 = smul.u32 8, %s22
      %s433 = smul.u32 8, %s22
      %p434 = scmp.lt.s32.totalorder %s21, 1
      %s435 = scalar_select %p434, %s21, 1
      %p436 = scmp.lt.s32.totalorder %s433, 7
      %s437 = scalar_select %p436, %s433, 7
      %s438 = smul.addr %s435, 8
      %s439 = sadd.s32 %s437, %s438
      %s440 = scalar_lea.vmem %s5, %s439
      %s441 = smul.u32 8, %s22
      %s442 = smul.u32 8, %s22
      %p443 = scmp.lt.s32.totalorder %s21, 1
      %s444 = scalar_select %p443, %s21, 1
      %p445 = scmp.lt.s32.totalorder %s442, 7
      %s446 = scalar_select %p445, %s442, 7
      %s447 = smul.addr %s444, 8
      %s448 = sadd.s32 %s446, %s447
      %s449 = scalar_lea.vmem %s6, %s448
      %s450 = smul.u32 8, %s22
      %p451 = scmp.eq.s32.totalorder %s22, 0
      // Predicated region
      $region45: #{rwkv7_forward.22} parent=43 // pred_check
        %p452 = pneg %p451
      $region46: #{rwkv7_forward.22} parent=43 // pred_check_branch
        %454 = sbr.rel (%p452) target = $region48
      $region47: #{rwkv7_forward.22} parent=43 // pred_region
        %vm455 = vcmask 523264
        %456 = vst.msk [vmem:[#allocation2] sm:$0xff] %vm455, 0.0
        %457 = vst.msk [vmem:[#allocation2 + $0x8] sm:$0xff] %vm455, 0.0
        %458 = vst.msk [vmem:[#allocation2 + $0x10] sm:$0xff] %vm455, 0.0
        %459 = vst.msk [vmem:[#allocation2 + $0x18] sm:$0xff] %vm455, 0.0
        %460 = vst.msk [vmem:[#allocation2 + $0x20] sm:$0xff] %vm455, 0.0
        %461 = vst.msk [vmem:[#allocation2 + $0x28] sm:$0xff] %vm455, 0.0
        %462 = vst.msk [vmem:[#allocation2 + $0x30] sm:$0xff] %vm455, 0.0
        %463 = vst.msk [vmem:[#allocation2 + $0x38] sm:$0xff] %vm455, 0.0
      $region48: #{rwkv7_forward.22} parent=43 // pred_fallthru
        _
      %v464 = vld [vmem:[%s395] sm:$0x1]
      %v465 = vld [vmem:[%s395 + $0x1] sm:$0x1]
      %v466 = vld [vmem:[%s395 + $0x2] sm:$0x1]
      %v467 = vld [vmem:[%s395 + $0x3] sm:$0x1]
      %v468 = vld [vmem:[%s395 + $0x4] sm:$0x1]
      %v469 = vld [vmem:[%s395 + $0x5] sm:$0x1]
      %v470 = vld [vmem:[%s395 + $0x6] sm:$0x1]
      %v471 = vld [vmem:[%s395 + $0x7] sm:$0x1]
      %v472 = vld [vmem:[%s404] sm:$0x1]
      %v473 = vld [vmem:[%s404 + $0x1] sm:$0x1]
      %v474 = vld [vmem:[%s404 + $0x2] sm:$0x1]
      %v475 = vld [vmem:[%s404 + $0x3] sm:$0x1]
      %v476 = vld [vmem:[%s404 + $0x4] sm:$0x1]
      %v477 = vld [vmem:[%s404 + $0x5] sm:$0x1]
      %v478 = vld [vmem:[%s404 + $0x6] sm:$0x1]
      %v479 = vld [vmem:[%s404 + $0x7] sm:$0x1]
      %v480 = vld [vmem:[%s413] sm:$0x1]
      %v481 = vld [vmem:[%s413 + $0x1] sm:$0x1]
      %v482 = vld [vmem:[%s413 + $0x2] sm:$0x1]
      %v483 = vld [vmem:[%s413 + $0x3] sm:$0x1]
      %v484 = vld [vmem:[%s413 + $0x4] sm:$0x1]
      %v485 = vld [vmem:[%s413 + $0x5] sm:$0x1]
      %v486 = vld [vmem:[%s413 + $0x6] sm:$0x1]
      %v487 = vld [vmem:[%s413 + $0x7] sm:$0x1]
      %v488 = vld [vmem:[%s422] sm:$0x1]
      %v489 = vld [vmem:[%s422 + $0x1] sm:$0x1]
      %v490 = vld [vmem:[%s422 + $0x2] sm:$0x1]
      %v491 = vld [vmem:[%s422 + $0x3] sm:$0x1]
      %v492 = vld [vmem:[%s422 + $0x4] sm:$0x1]
      %v493 = vld [vmem:[%s422 + $0x5] sm:$0x1]
      %v494 = vld [vmem:[%s422 + $0x6] sm:$0x1]
      %v495 = vld [vmem:[%s422 + $0x7] sm:$0x1]
      %v496 = vld [vmem:[%s431] sm:$0x1]
      %v497 = vld [vmem:[%s431 + $0x1] sm:$0x1]
      %v498 = vld [vmem:[%s431 + $0x2] sm:$0x1]
      %v499 = vld [vmem:[%s431 + $0x3] sm:$0x1]
      %v500 = vld [vmem:[%s431 + $0x4] sm:$0x1]
      %v501 = vld [vmem:[%s431 + $0x5] sm:$0x1]
      %v502 = vld [vmem:[%s431 + $0x6] sm:$0x1]
      %v503 = vld [vmem:[%s431 + $0x7] sm:$0x1]
      %v504 = vld [vmem:[%s440] sm:$0x1]
      %v505 = vld [vmem:[%s440 + $0x1] sm:$0x1]
      %v506 = vld [vmem:[%s440 + $0x2] sm:$0x1]
      %v507 = vld [vmem:[%s440 + $0x3] sm:$0x1]
      %v508 = vld [vmem:[%s440 + $0x4] sm:$0x1]
      %v509 = vld [vmem:[%s440 + $0x5] sm:$0x1]
      %v510 = vld [vmem:[%s440 + $0x6] sm:$0x1]
      %v511 = vld [vmem:[%s440 + $0x7] sm:$0x1]
      %v512 = vlaneseq
      %v513 = vshrl.u32 %v512, 7
      %v514 = vlaneseq
      %v515 = vand.u32 %v514, 127
      %vm516 = vcmp.ge.s32.totalorder %v513, %v515
      %vm517 = vcmp.gt.s32.totalorder %v513, %v515
      %v518 = vsel %vm516, 1, 0
      %v519 = vcvt.s32.f32 %v518
      %v528 = vcombine.low %v472, %v473
      %v529 = vcombine.low %v474, %v475
      %v530 = vcombine.low %v476, %v477
      %v531 = vcombine.low %v478, %v479
      %v533 = vunpack.c.l.s4 1966171168
      %v534 = vunpack.c.0.s8 %v533
      %v535 = vlaneseq
      %v536 = vshrl.u32 %v535, 7
      %v537 = vsub.s32 %v534, %v536
      %v538 = vrot.slane %v528, %v537
      %v540 = vunpack.c.l.s4 1966171168
      %v541 = vunpack.c.0.s8 %v540
      %v542 = vlaneseq
      %v543 = vshrl.u32 %v542, 7
      %v544 = vsub.s32 %v541, %v543
      %v545 = vrot.slane %v529, %v544
      %v547 = vunpack.c.l.s4 1966171168
      %v548 = vunpack.c.0.s8 %v547
      %v549 = vlaneseq
      %v550 = vshrl.u32 %v549, 7
      %v551 = vsub.s32 %v548, %v550
      %v552 = vrot.slane %v530, %v551
      %v554 = vunpack.c.l.s4 1966171168
      %v555 = vunpack.c.0.s8 %v554
      %v556 = vlaneseq
      %v557 = vshrl.u32 %v556, 7
      %v558 = vsub.s32 %v555, %v557
      %v559 = vrot.slane %v531, %v558
      %v560 = vcombine.low %v538, %v545
      %v561 = vcombine.low %v552, %v559
      %v563 = vunpack.c.l.s4 1966171168
      %v564 = vunpack.c.0.s8 %v563
      %v565 = vlaneseq
      %v566 = vshrl.u32 %v565, 7
      %v567 = vsub.s32 %v564, %v566
      %v568 = vrot.slane %v560, %v567
      %v570 = vunpack.c.l.s4 1966171168
      %v571 = vunpack.c.0.s8 %v570
      %v572 = vlaneseq
      %v573 = vshrl.u32 %v572, 7
      %v574 = vsub.s32 %v571, %v573
      %v575 = vrot.slane %v561, %v574
      %v576 = vcombine.low %v568, %v575
      %vm578 = vcmask 64512
      %v580 = vsel %vm578, %v519, 0
      %582 = vmatprep.subr.mxu0 0.0
      %583 = vmatpush1.msra.mxu0 %v576
      %584 = vmatprep.subr.mxu0 0.0
      %585 = vmatpush1.msra.mxu0 0.0
      %586 = vmatprep.subr.mxu0 0.0
      %587 = vmatpush1.msra.mxu0 0.0
      %588 = vmatprep.subr.mxu0 0.0
      %589 = vmatpush1.msra.mxu0 0.0
      %590 = vmatprep.subr.mxu0 0.0
      %591 = vmatpush1.msra.mxu0 0.0
      %592 = vmatprep.subr.mxu0 0.0
      %593 = vmatpush1.msra.mxu0 0.0
      %594 = vmatprep.subr.mxu0 0.0
      %595 = vmatpush1.msra.mxu0 0.0
      %596 = vmatprep.subr.mxu0 0.0
      %597 = vmatpush1.msra.mxu0 0.0
      %598 = vmatprep.subr.mxu0 0.0
      %599 = vmatpush1.msra.mxu0 0.0
      %600 = vmatprep.subr.mxu0 0.0
      %601 = vmatpush1.msra.mxu0 0.0
      %602 = vmatprep.subr.mxu0 0.0
      %603 = vmatpush1.msra.mxu0 0.0
      %604 = vmatprep.subr.mxu0 0.0
      %605 = vmatpush1.msra.mxu0 0.0
      %606 = vmatprep.subr.mxu0 0.0
      %607 = vmatpush1.msra.mxu0 0.0
      %608 = vmatprep.subr.mxu0 0.0
      %609 = vmatpush1.msra.mxu0 0.0
      %610 = vmatprep.subr.mxu0 0.0
      %611 = vmatpush1.msra.mxu0 0.0
      %612 = vmatprep.subr.mxu0 0.0
      %613 = vmatpush1.msra.mxu0 0.0
      %614 = vmatprep.subr.mxu0 0.0
      %615 = vmatpush1.msra.mxu0 0.0
      %616 = vmatprep.subr.mxu0 0.0
      %617 = vmatpush1.msra.mxu0 0.0
      %618 = vmatprep.subr.mxu0 0.0
      %619 = vmatpush1.msra.mxu0 0.0
      %620 = vmatprep.subr.mxu0 0.0
      %621 = vmatpush1.msra.mxu0 0.0
      %622 = vmatprep.subr.mxu0 0.0
      %623 = vmatpush1.msra.mxu0 0.0
      %624 = vmatprep.subr.mxu0 0.0
      %625 = vmatpush1.msra.mxu0 0.0
      %626 = vmatprep.subr.mxu0 0.0
      %627 = vmatpush1.msra.mxu0 0.0
      %628 = vmatprep.subr.mxu0 0.0
      %629 = vmatpush1.msra.mxu0 0.0
      %630 = vmatprep.subr.mxu0 0.0
      %631 = vmatpush1.msra.mxu0 0.0
      %632 = vmatprep.subr.mxu0 0.0
      %633 = vmatpush1.msra.mxu0 0.0
      %634 = vmatprep.subr.mxu0 0.0
      %635 = vmatpush1.msra.mxu0 0.0
      %636 = vmatprep.subr.mxu0 0.0
      %637 = vmatpush1.msra.mxu0 0.0
      %638 = vmatprep.subr.mxu0 0.0
      %639 = vmatpush1.msra.mxu0 0.0
      %640 = vmatprep.subr.mxu0 0.0
      %641 = vmatpush1.msra.mxu0 0.0
      %642 = vmatprep.subr.mxu0 0.0
      %643 = vmatpush1.msra.mxu0 0.0
      %644 = vmatprep.subr.mxu0 0.0
      %645 = vmatpush1.msra.mxu0 0.0
      %646 = vmatprep.mubr.f32.mxu0 0.0
      %647 = vmatmul.mubr.f32.gmra.mrb[0].mxu0 %v580
      %v648 = vpop.f32.mrb[0].mxu0
      %v649 = vadd.f32 0.0, %v648
      %v650 = vpop.f32.mrb[0].mxu0
      %651 = vdwg.mxu0
      %v652 = vsub.f32 %v649, %v576
      %v653 = vmul.f32 %v649, 1.442695
      %v654 = vpow.pop %v653
      %v655 = vmul.f32 %v652, 1.442695
      %v656 = vpow.pop %v655
      %v657 = vsub.f32 0.0, %v649
      %v658 = vmul.f32 %v657, 1.442695
      %v659 = vpow.pop %v658
      %v661 = vcombine.high %v656, %v656
      %v663 = vunpack.c.l.s4 1966171168
      %v664 = vunpack.c.0.s8 %v663
      %v665 = vlaneseq
      %v666 = vshrl.u32 %v665, 7
      %v667 = vsub.s32 %v664, %v666
      %v668 = vrot.slane %v656, %v667
      %v670 = vunpack.c.l.s4 1966171168
      %v671 = vunpack.c.0.s8 %v670
      %v672 = vlaneseq
      %v673 = vshrl.u32 %v672, 7
      %v674 = vsub.s32 %v671, %v673
      %v675 = vrot.slane %v661, %v674
      %v676 = vcombine.high %v668, %v668
      %v677 = vcombine.high %v675, %v675
      %v679 = vunpack.c.l.s4 1966171168
      %v680 = vunpack.c.0.s8 %v679
      %v681 = vlaneseq
      %v682 = vshrl.u32 %v681, 7
      %v683 = vsub.s32 %v680, %v682
      %v684 = vrot.slane %v668, %v683
      %v686 = vunpack.c.l.s4 1966171168
      %v687 = vunpack.c.0.s8 %v686
      %v688 = vlaneseq
      %v689 = vshrl.u32 %v688, 7
      %v690 = vsub.s32 %v687, %v689
      %v691 = vrot.slane %v675, %v690
      %v693 = vunpack.c.l.s4 1966171168
      %v694 = vunpack.c.0.s8 %v693
      %v695 = vlaneseq
      %v696 = vshrl.u32 %v695, 7
      %v697 = vsub.s32 %v694, %v696
      %v698 = vrot.slane %v676, %v697
      %v700 = vunpack.c.l.s4 1966171168
      %v701 = vunpack.c.0.s8 %v700
      %v702 = vlaneseq
      %v703 = vshrl.u32 %v702, 7
      %v704 = vsub.s32 %v701, %v703
      %v705 = vrot.slane %v677, %v704
      %v706 = vcombine.high %v684, %v684
      %v707 = vcombine.high %v691, %v691
      %v708 = vcombine.high %v698, %v698
      %v709 = vcombine.high %v705, %v705
      %v718 = vmul.f32 %v496, %v684
      %v719 = vmul.f32 %v497, %v698
      %v720 = vmul.f32 %v498, %v706
      %v721 = vmul.f32 %v499, %v708
      %v722 = vmul.f32 %v500, %v691
      %v723 = vmul.f32 %v501, %v705
      %v724 = vmul.f32 %v502, %v707
      %v725 = vmul.f32 %v503, %v709
      %v727 = vcombine.high %v654, %v654
      %v729 = vunpack.c.l.s4 1966171168
      %v730 = vunpack.c.0.s8 %v729
      %v731 = vlaneseq
      %v732 = vshrl.u32 %v731, 7
      %v733 = vsub.s32 %v730, %v732
      %v734 = vrot.slane %v654, %v733
      %v736 = vunpack.c.l.s4 1966171168
      %v737 = vunpack.c.0.s8 %v736
      %v738 = vlaneseq
      %v739 = vshrl.u32 %v738, 7
      %v740 = vsub.s32 %v737, %v739
      %v741 = vrot.slane %v727, %v740
      %v742 = vcombine.high %v734, %v734
      %v743 = vcombine.high %v741, %v741
      %v745 = vunpack.c.l.s4 1966171168
      %v746 = vunpack.c.0.s8 %v745
      %v747 = vlaneseq
      %v748 = vshrl.u32 %v747, 7
      %v749 = vsub.s32 %v746, %v748
      %v750 = vrot.slane %v734, %v749
      %v752 = vunpack.c.l.s4 1966171168
      %v753 = vunpack.c.0.s8 %v752
      %v754 = vlaneseq
      %v755 = vshrl.u32 %v754, 7
      %v756 = vsub.s32 %v753, %v755
      %v757 = vrot.slane %v741, %v756
      %v759 = vunpack.c.l.s4 1966171168
      %v760 = vunpack.c.0.s8 %v759
      %v761 = vlaneseq
      %v762 = vshrl.u32 %v761, 7
      %v763 = vsub.s32 %v760, %v762
      %v764 = vrot.slane %v742, %v763
      %v766 = vunpack.c.l.s4 1966171168
      %v767 = vunpack.c.0.s8 %v766
      %v768 = vlaneseq
      %v769 = vshrl.u32 %v768, 7
      %v770 = vsub.s32 %v767, %v769
      %v771 = vrot.slane %v743, %v770
      %v772 = vcombine.high %v750, %v750
      %v773 = vcombine.high %v757, %v757
      %v774 = vcombine.high %v764, %v764
      %v775 = vcombine.high %v771, %v771
      %v784 = vmul.f32 %v464, %v750
      %v785 = vmul.f32 %v465, %v764
      %v786 = vmul.f32 %v466, %v772
      %v787 = vmul.f32 %v467, %v774
      %v788 = vmul.f32 %v468, %v757
      %v789 = vmul.f32 %v469, %v771
      %v790 = vmul.f32 %v470, %v773
      %v791 = vmul.f32 %v471, %v775
      %v793 = vcombine.high %v659, %v659
      %v795 = vunpack.c.l.s4 1966171168
      %v796 = vunpack.c.0.s8 %v795
      %v797 = vlaneseq
      %v798 = vshrl.u32 %v797, 7
      %v799 = vsub.s32 %v796, %v798
      %v800 = vrot.slane %v659, %v799
      %v802 = vunpack.c.l.s4 1966171168
      %v803 = vunpack.c.0.s8 %v802
      %v804 = vlaneseq
      %v805 = vshrl.u32 %v804, 7
      %v806 = vsub.s32 %v803, %v805
      %v807 = vrot.slane %v793, %v806
      %v808 = vcombine.high %v800, %v800
      %v809 = vcombine.high %v807, %v807
      %v811 = vunpack.c.l.s4 1966171168
      %v812 = vunpack.c.0.s8 %v811
      %v813 = vlaneseq
      %v814 = vshrl.u32 %v813, 7
      %v815 = vsub.s32 %v812, %v814
      %v816 = vrot.slane %v800, %v815
      %v818 = vunpack.c.l.s4 1966171168
      %v819 = vunpack.c.0.s8 %v818
      %v820 = vlaneseq
      %v821 = vshrl.u32 %v820, 7
      %v822 = vsub.s32 %v819, %v821
      %v823 = vrot.slane %v807, %v822
      %v825 = vunpack.c.l.s4 1966171168
      %v826 = vunpack.c.0.s8 %v825
      %v827 = vlaneseq
      %v828 = vshrl.u32 %v827, 7
      %v829 = vsub.s32 %v826, %v828
      %v830 = vrot.slane %v808, %v829
      %v832 = vunpack.c.l.s4 1966171168
      %v833 = vunpack.c.0.s8 %v832
      %v834 = vlaneseq
      %v835 = vshrl.u32 %v834, 7
      %v836 = vsub.s32 %v833, %v835
      %v837 = vrot.slane %v809, %v836
      %v838 = vcombine.high %v816, %v816
      %v839 = vcombine.high %v823, %v823
      %v840 = vcombine.high %v830, %v830
      %v841 = vcombine.high %v837, %v837
      %v850 = vmul.f32 %v504, %v816
      %v851 = vmul.f32 %v505, %v830
      %v852 = vmul.f32 %v506, %v838
      %v853 = vmul.f32 %v507, %v840
      %v854 = vmul.f32 %v508, %v823
      %v855 = vmul.f32 %v509, %v837
      %v856 = vmul.f32 %v510, %v839
      %v857 = vmul.f32 %v511, %v841
      %v858 = vmul.f32 %v480, %v816
      %v859 = vmul.f32 %v481, %v830
      %v860 = vmul.f32 %v482, %v838
      %v861 = vmul.f32 %v483, %v840
      %v862 = vmul.f32 %v484, %v823
      %v863 = vmul.f32 %v485, %v837
      %v864 = vmul.f32 %v486, %v839
      %v865 = vmul.f32 %v487, %v841
      %v866 = vld [vmem:[#allocation2] sm:$0xff]
      %v867 = vld [vmem:[#allocation2 + $0x8] sm:$0xff]
      %v868 = vld [vmem:[#allocation2 + $0x10] sm:$0xff]
      %v869 = vld [vmem:[#allocation2 + $0x18] sm:$0xff]
      %v870 = vld [vmem:[#allocation2 + $0x20] sm:$0xff]
      %v871 = vld [vmem:[#allocation2 + $0x28] sm:$0xff]
      %v872 = vld [vmem:[#allocation2 + $0x30] sm:$0xff]
      %v873 = vld [vmem:[#allocation2 + $0x38] sm:$0xff]
      %v882 = vcombine.low %v718, %v719
      %v883 = vcombine.low %v720, %v721
      %v884 = vcombine.low %v722, %v723
      %v885 = vcombine.low %v724, %v725
      %v887 = vunpack.c.l.s4 1966171168
      %v888 = vunpack.c.0.s8 %v887
      %v889 = vlaneseq
      %v890 = vshrl.u32 %v889, 7
      %v891 = vsub.s32 %v888, %v890
      %v892 = vrot.slane %v882, %v891
      %v894 = vunpack.c.l.s4 1966171168
      %v895 = vunpack.c.0.s8 %v894
      %v896 = vlaneseq
      %v897 = vshrl.u32 %v896, 7
      %v898 = vsub.s32 %v895, %v897
      %v899 = vrot.slane %v883, %v898
      %v901 = vunpack.c.l.s4 1966171168
      %v902 = vunpack.c.0.s8 %v901
      %v903 = vlaneseq
      %v904 = vshrl.u32 %v903, 7
      %v905 = vsub.s32 %v902, %v904
      %v906 = vrot.slane %v884, %v905
      %v908 = vunpack.c.l.s4 1966171168
      %v909 = vunpack.c.0.s8 %v908
      %v910 = vlaneseq
      %v911 = vshrl.u32 %v910, 7
      %v912 = vsub.s32 %v909, %v911
      %v913 = vrot.slane %v885, %v912
      %v914 = vcombine.low %v892, %v899
      %v915 = vcombine.low %v906, %v913
      %v917 = vunpack.c.l.s4 1966171168
      %v918 = vunpack.c.0.s8 %v917
      %v919 = vlaneseq
      %v920 = vshrl.u32 %v919, 7
      %v921 = vsub.s32 %v918, %v920
      %v922 = vrot.slane %v914, %v921
      %v924 = vunpack.c.l.s4 1966171168
      %v925 = vunpack.c.0.s8 %v924
      %v926 = vlaneseq
      %v927 = vshrl.u32 %v926, 7
      %v928 = vsub.s32 %v925, %v927
      %v929 = vrot.slane %v915, %v928
      %v930 = vcombine.low %v922, %v929
      %v939 = vcombine.low %v850, %v851
      %v940 = vcombine.low %v852, %v853
      %v941 = vcombine.low %v854, %v855
      %v942 = vcombine.low %v856, %v857
      %v944 = vunpack.c.l.s4 1966171168
      %v945 = vunpack.c.0.s8 %v944
      %v946 = vlaneseq
      %v947 = vshrl.u32 %v946, 7
      %v948 = vsub.s32 %v945, %v947
      %v949 = vrot.slane %v939, %v948
      %v951 = vunpack.c.l.s4 1966171168
      %v952 = vunpack.c.0.s8 %v951
      %v953 = vlaneseq
      %v954 = vshrl.u32 %v953, 7
      %v955 = vsub.s32 %v952, %v954
      %v956 = vrot.slane %v940, %v955
      %v958 = vunpack.c.l.s4 1966171168
      %v959 = vunpack.c.0.s8 %v958
      %v960 = vlaneseq
      %v961 = vshrl.u32 %v960, 7
      %v962 = vsub.s32 %v959, %v961
      %v963 = vrot.slane %v941, %v962
      %v965 = vunpack.c.l.s4 1966171168
      %v966 = vunpack.c.0.s8 %v965
      %v967 = vlaneseq
      %v968 = vshrl.u32 %v967, 7
      %v969 = vsub.s32 %v966, %v968
      %v970 = vrot.slane %v942, %v969
      %v971 = vcombine.low %v949, %v956
      %v972 = vcombine.low %v963, %v970
      %v974 = vunpack.c.l.s4 1966171168
      %v975 = vunpack.c.0.s8 %v974
      %v976 = vlaneseq
      %v977 = vshrl.u32 %v976, 7
      %v978 = vsub.s32 %v975, %v977
      %v979 = vrot.slane %v971, %v978
      %v981 = vunpack.c.l.s4 1966171168
      %v982 = vunpack.c.0.s8 %v981
      %v983 = vlaneseq
      %v984 = vshrl.u32 %v983, 7
      %v985 = vsub.s32 %v982, %v984
      %v986 = vrot.slane %v972, %v985
      %v987 = vcombine.low %v979, %v986
      %vm988 = vcmask 523264
      %v989 = vsel %vm988, %v930, 0
      %v991 = vsel %vm988, %v987, 0
      %993 = vmatprep.subr.mxu0 0.0
      %994 = vmatpush1.xpose.msra.mxu0 %v991
      %995 = vmatprep.subr.mxu0 0.0
      %996 = vmatpush1.xpose.msra.mxu0 0.0
      %997 = vmatprep.subr.mxu0 0.0
      %998 = vmatpush1.xpose.msra.mxu0 0.0
      %999 = vmatprep.subr.mxu0 0.0
      %1000 = vmatpush1.xpose.msra.mxu0 0.0
      %1001 = vmatprep.subr.mxu0 0.0
      %1002 = vmatpush1.xpose.msra.mxu0 0.0
      %1003 = vmatprep.subr.mxu0 0.0
      %1004 = vmatpush1.xpose.msra.mxu0 0.0
      %1005 = vmatprep.subr.mxu0 0.0
      %1006 = vmatpush1.xpose.msra.mxu0 0.0
      %1007 = vmatprep.subr.mxu0 0.0
      %1008 = vmatpush1.xpose.msra.mxu0 0.0
      %1009 = vmatprep.subr.mxu0 0.0
      %1010 = vmatpush1.xpose.msra.mxu0 0.0
      %1011 = vmatprep.subr.mxu0 0.0
      %1012 = vmatpush1.xpose.msra.mxu0 0.0
      %1013 = vmatprep.subr.mxu0 0.0
      %1014 = vmatpush1.xpose.msra.mxu0 0.0
      %1015 = vmatprep.subr.mxu0 0.0
      %1016 = vmatpush1.xpose.msra.mxu0 0.0
      %1017 = vmatprep.subr.mxu0 0.0
      %1018 = vmatpush1.xpose.msra.mxu0 0.0
      %1019 = vmatprep.subr.mxu0 0.0
      %1020 = vmatpush1.xpose.msra.mxu0 0.0
      %1021 = vmatprep.subr.mxu0 0.0
      %1022 = vmatpush1.xpose.msra.mxu0 0.0
      %1023 = vmatprep.subr.mxu0 0.0
      %1024 = vmatpush1.xpose.msra.mxu0 0.0
      %1025 = vmatprep.subr.mxu0 0.0
      %1026 = vmatpush1.xpose.msra.mxu0 0.0
      %1027 = vmatprep.subr.mxu0 0.0
      %1028 = vmatpush1.xpose.msra.mxu0 0.0
      %1029 = vmatprep.subr.mxu0 0.0
      %1030 = vmatpush1.xpose.msra.mxu0 0.0
      %1031 = vmatprep.subr.mxu0 0.0
      %1032 = vmatpush1.xpose.msra.mxu0 0.0
      %1033 = vmatprep.subr.mxu0 0.0
      %1034 = vmatpush1.xpose.msra.mxu0 0.0
      %1035 = vmatprep.subr.mxu0 0.0
      %1036 = vmatpush1.xpose.msra.mxu0 0.0
      %1037 = vmatprep.subr.mxu0 0.0
      %1038 = vmatpush1.xpose.msra.mxu0 0.0
      %1039 = vmatprep.subr.mxu0 0.0
      %1040 = vmatpush1.xpose.msra.mxu0 0.0
      %1041 = vmatprep.subr.mxu0 0.0
      %1042 = vmatpush1.xpose.msra.mxu0 0.0
      %1043 = vmatprep.subr.mxu0 0.0
      %1044 = vmatpush1.xpose.msra.mxu0 0.0
      %1045 = vmatprep.subr.mxu0 0.0
      %1046 = vmatpush1.xpose.msra.mxu0 0.0
      %1047 = vmatprep.subr.mxu0 0.0
      %1048 = vmatpush1.xpose.msra.mxu0 0.0
      %1049 = vmatprep.subr.mxu0 0.0
      %1050 = vmatpush1.xpose.msra.mxu0 0.0
      %1051 = vmatprep.subr.mxu0 0.0
      %1052 = vmatpush1.xpose.msra.mxu0 0.0
      %1053 = vmatprep.subr.mxu0 0.0
      %1054 = vmatpush1.xpose.msra.mxu0 0.0
      %1055 = vmatprep.subr.mxu0 0.0
      %1056 = vmatpush1.xpose.msra.mxu0 0.0
      %1057 = vmatprep.mubr.f32.mxu0 0.0
      %1058 = vmatmul.mubr.f32.gmra.mrb[0].mxu0 %v989
      %v1059 = vpop.f32.mrb[0].mxu0
      %v1060 = vadd.f32 0.0, %v1059
      %v1061 = vpop.f32.mrb[0].mxu0
      %1062 = vdwg.mxu0
      %v1063 = vsel %vm517, %v1060, 0.0
      %v1072 = vcombine.low %v858, %v859
      %v1073 = vcombine.low %v860, %v861
      %v1074 = vcombine.low %v862, %v863
      %v1075 = vcombine.low %v864, %v865
      %v1077 = vunpack.c.l.s4 1966171168
      %v1078 = vunpack.c.0.s8 %v1077
      %v1079 = vlaneseq
      %v1080 = vshrl.u32 %v1079, 7
      %v1081 = vsub.s32 %v1078, %v1080
      %v1082 = vrot.slane %v1072, %v1081
      %v1084 = vunpack.c.l.s4 1966171168
      %v1085 = vunpack.c.0.s8 %v1084
      %v1086 = vlaneseq
      %v1087 = vshrl.u32 %v1086, 7
      %v1088 = vsub.s32 %v1085, %v1087
      %v1089 = vrot.slane %v1073, %v1088
      %v1091 = vunpack.c.l.s4 1966171168
      %v1092 = vunpack.c.0.s8 %v1091
      %v1093 = vlaneseq
      %v1094 = vshrl.u32 %v1093, 7
      %v1095 = vsub.s32 %v1092, %v1094
      %v1096 = vrot.slane %v1074, %v1095
      %v1098 = vunpack.c.l.s4 1966171168
      %v1099 = vunpack.c.0.s8 %v1098
      %v1100 = vlaneseq
      %v1101 = vshrl.u32 %v1100, 7
      %v1102 = vsub.s32 %v1099, %v1101
      %v1103 = vrot.slane %v1075, %v1102
      %v1104 = vcombine.low %v1082, %v1089
      %v1105 = vcombine.low %v1096, %v1103
      %v1107 = vunpack.c.l.s4 1966171168
      %v1108 = vunpack.c.0.s8 %v1107
      %v1109 = vlaneseq
      %v1110 = vshrl.u32 %v1109, 7
      %v1111 = vsub.s32 %v1108, %v1110
      %v1112 = vrot.slane %v1104, %v1111
      %v1114 = vunpack.c.l.s4 1966171168
      %v1115 = vunpack.c.0.s8 %v1114
      %v1116 = vlaneseq
      %v1117 = vshrl.u32 %v1116, 7
      %v1118 = vsub.s32 %v1115, %v1117
      %v1119 = vrot.slane %v1105, %v1118
      %v1120 = vcombine.low %v1112, %v1119
      %v1121 = vsel %vm988, %v1120, 0
      %1123 = vmatprep.subr.mxu0 0.0
      %1124 = vmatpush1.xpose.msra.mxu0 %v1121
      %1125 = vmatprep.subr.mxu0 0.0
      %1126 = vmatpush1.xpose.msra.mxu0 0.0
      %1127 = vmatprep.subr.mxu0 0.0
      %1128 = vmatpush1.xpose.msra.mxu0 0.0
      %1129 = vmatprep.subr.mxu0 0.0
      %1130 = vmatpush1.xpose.msra.mxu0 0.0
      %1131 = vmatprep.subr.mxu0 0.0
      %1132 = vmatpush1.xpose.msra.mxu0 0.0
      %1133 = vmatprep.subr.mxu0 0.0
      %1134 = vmatpush1.xpose.msra.mxu0 0.0
      %1135 = vmatprep.subr.mxu0 0.0
      %1136 = vmatpush1.xpose.msra.mxu0 0.0
      %1137 = vmatprep.subr.mxu0 0.0
      %1138 = vmatpush1.xpose.msra.mxu0 0.0
      %1139 = vmatprep.subr.mxu0 0.0
      %1140 = vmatpush1.xpose.msra.mxu0 0.0
      %1141 = vmatprep.subr.mxu0 0.0
      %1142 = vmatpush1.xpose.msra.mxu0 0.0
      %1143 = vmatprep.subr.mxu0 0.0
      %1144 = vmatpush1.xpose.msra.mxu0 0.0
      %1145 = vmatprep.subr.mxu0 0.0
      %1146 = vmatpush1.xpose.msra.mxu0 0.0
      %1147 = vmatprep.subr.mxu0 0.0
      %1148 = vmatpush1.xpose.msra.mxu0 0.0
      %1149 = vmatprep.subr.mxu0 0.0
      %1150 = vmatpush1.xpose.msra.mxu0 0.0
      %1151 = vmatprep.subr.mxu0 0.0
      %1152 = vmatpush1.xpose.msra.mxu0 0.0
      %1153 = vmatprep.subr.mxu0 0.0
      %1154 = vmatpush1.xpose.msra.mxu0 0.0
      %1155 = vmatprep.subr.mxu0 0.0
      %1156 = vmatpush1.xpose.msra.mxu0 0.0
      %1157 = vmatprep.subr.mxu0 0.0
      %1158 = vmatpush1.xpose.msra.mxu0 0.0
      %1159 = vmatprep.subr.mxu0 0.0
      %1160 = vmatpush1.xpose.msra.mxu0 0.0
      %1161 = vmatprep.subr.mxu0 0.0
      %1162 = vmatpush1.xpose.msra.mxu0 0.0
      %1163 = vmatprep.subr.mxu0 0.0
      %1164 = vmatpush1.xpose.msra.mxu0 0.0
      %1165 = vmatprep.subr.mxu0 0.0
      %1166 = vmatpush1.xpose.msra.mxu0 0.0
      %1167 = vmatprep.subr.mxu0 0.0
      %1168 = vmatpush1.xpose.msra.mxu0 0.0
      %1169 = vmatprep.subr.mxu0 0.0
      %1170 = vmatpush1.xpose.msra.mxu0 0.0
      %1171 = vmatprep.subr.mxu0 0.0
      %1172 = vmatpush1.xpose.msra.mxu0 0.0
      %1173 = vmatprep.subr.mxu0 0.0
      %1174 = vmatpush1.xpose.msra.mxu0 0.0
      %1175 = vmatprep.subr.mxu0 0.0
      %1176 = vmatpush1.xpose.msra.mxu0 0.0
      %1177 = vmatprep.subr.mxu0 0.0
      %1178 = vmatpush1.xpose.msra.mxu0 0.0
      %1179 = vmatprep.subr.mxu0 0.0
      %1180 = vmatpush1.xpose.msra.mxu0 0.0
      %1181 = vmatprep.subr.mxu0 0.0
      %1182 = vmatpush1.xpose.msra.mxu0 0.0
      %1183 = vmatprep.subr.mxu0 0.0
      %1184 = vmatpush1.xpose.msra.mxu0 0.0
      %1185 = vmatprep.subr.mxu0 0.0
      %1186 = vmatpush1.xpose.msra.mxu0 0.0
      %1187 = vmatprep.mubr.f32.mxu0 0.0
      %1188 = vmatmul.mubr.f32.gmra.mrb[0].mxu0 %v989
      %v1189 = vpop.f32.mrb[0].mxu0
      %v1190 = vadd.f32 0.0, %v1189
      %v1191 = vpop.f32.mrb[0].mxu0
      %1192 = vdwg.mxu0
      %v1193 = vsel %vm517, %v1190, 0.0
      %v1202 = vcombine.low %v784, %v785
      %v1203 = vcombine.low %v786, %v787
      %v1204 = vcombine.low %v788, %v789
      %v1205 = vcombine.low %v790, %v791
      %v1207 = vunpack.c.l.s4 1966171168
      %v1208 = vunpack.c.0.s8 %v1207
      %v1209 = vlaneseq
      %v1210 = vshrl.u32 %v1209, 7
      %v1211 = vsub.s32 %v1208, %v1210
      %v1212 = vrot.slane %v1202, %v1211
      %v1214 = vunpack.c.l.s4 1966171168
      %v1215 = vunpack.c.0.s8 %v1214
      %v1216 = vlaneseq
      %v1217 = vshrl.u32 %v1216, 7
      %v1218 = vsub.s32 %v1215, %v1217
      %v1219 = vrot.slane %v1203, %v1218
      %v1221 = vunpack.c.l.s4 1966171168
      %v1222 = vunpack.c.0.s8 %v1221
      %v1223 = vlaneseq
      %v1224 = vshrl.u32 %v1223, 7
      %v1225 = vsub.s32 %v1222, %v1224
      %v1226 = vrot.slane %v1204, %v1225
      %v1228 = vunpack.c.l.s4 1966171168
      %v1229 = vunpack.c.0.s8 %v1228
      %v1230 = vlaneseq
      %v1231 = vshrl.u32 %v1230, 7
      %v1232 = vsub.s32 %v1229, %v1231
      %v1233 = vrot.slane %v1205, %v1232
      %v1234 = vcombine.low %v1212, %v1219
      %v1235 = vcombine.low %v1226, %v1233
      %v1237 = vunpack.c.l.s4 1966171168
      %v1238 = vunpack.c.0.s8 %v1237
      %v1239 = vlaneseq
      %v1240 = vshrl.u32 %v1239, 7
      %v1241 = vsub.s32 %v1238, %v1240
      %v1242 = vrot.slane %v1234, %v1241
      %v1244 = vunpack.c.l.s4 1966171168
      %v1245 = vunpack.c.0.s8 %v1244
      %v1246 = vlaneseq
      %v1247 = vshrl.u32 %v1246, 7
      %v1248 = vsub.s32 %v1245, %v1247
      %v1249 = vrot.slane %v1235, %v1248
      %v1250 = vcombine.low %v1242, %v1249
      %v1251 = vsel %vm988, %v1250, 0
      %1253 = vmatprep.subr.mxu0 0.0
      %1254 = vmatpush1.xpose.msra.mxu0 %v991
      %1255 = vmatprep.subr.mxu0 0.0
      %1256 = vmatpush1.xpose.msra.mxu0 0.0
      %1257 = vmatprep.subr.mxu0 0.0
      %1258 = vmatpush1.xpose.msra.mxu0 0.0
      %1259 = vmatprep.subr.mxu0 0.0
      %1260 = vmatpush1.xpose.msra.mxu0 0.0
      %1261 = vmatprep.subr.mxu0 0.0
      %1262 = vmatpush1.xpose.msra.mxu0 0.0
      %1263 = vmatprep.subr.mxu0 0.0
      %1264 = vmatpush1.xpose.msra.mxu0 0.0
      %1265 = vmatprep.subr.mxu0 0.0
      %1266 = vmatpush1.xpose.msra.mxu0 0.0
      %1267 = vmatprep.subr.mxu0 0.0
      %1268 = vmatpush1.xpose.msra.mxu0 0.0
      %1269 = vmatprep.subr.mxu0 0.0
      %1270 = vmatpush1.xpose.msra.mxu0 0.0
      %1271 = vmatprep.subr.mxu0 0.0
      %1272 = vmatpush1.xpose.msra.mxu0 0.0
      %1273 = vmatprep.subr.mxu0 0.0
      %1274 = vmatpush1.xpose.msra.mxu0 0.0
      %1275 = vmatprep.subr.mxu0 0.0
      %1276 = vmatpush1.xpose.msra.mxu0 0.0
      %1277 = vmatprep.subr.mxu0 0.0
      %1278 = vmatpush1.xpose.msra.mxu0 0.0
      %1279 = vmatprep.subr.mxu0 0.0
      %1280 = vmatpush1.xpose.msra.mxu0 0.0
      %1281 = vmatprep.subr.mxu0 0.0
      %1282 = vmatpush1.xpose.msra.mxu0 0.0
      %1283 = vmatprep.subr.mxu0 0.0
      %1284 = vmatpush1.xpose.msra.mxu0 0.0
      %1285 = vmatprep.subr.mxu0 0.0
      %1286 = vmatpush1.xpose.msra.mxu0 0.0
      %1287 = vmatprep.subr.mxu0 0.0
      %1288 = vmatpush1.xpose.msra.mxu0 0.0
      %1289 = vmatprep.subr.mxu0 0.0
      %1290 = vmatpush1.xpose.msra.mxu0 0.0
      %1291 = vmatprep.subr.mxu0 0.0
      %1292 = vmatpush1.xpose.msra.mxu0 0.0
      %1293 = vmatprep.subr.mxu0 0.0
      %1294 = vmatpush1.xpose.msra.mxu0 0.0
      %1295 = vmatprep.subr.mxu0 0.0
      %1296 = vmatpush1.xpose.msra.mxu0 0.0
      %1297 = vmatprep.subr.mxu0 0.0
      %1298 = vmatpush1.xpose.msra.mxu0 0.0
      %1299 = vmatprep.subr.mxu0 0.0
      %1300 = vmatpush1.xpose.msra.mxu0 0.0
      %1301 = vmatprep.subr.mxu0 0.0
      %1302 = vmatpush1.xpose.msra.mxu0 0.0
      %1303 = vmatprep.subr.mxu0 0.0
      %1304 = vmatpush1.xpose.msra.mxu0 0.0
      %1305 = vmatprep.subr.mxu0 0.0
      %1306 = vmatpush1.xpose.msra.mxu0 0.0
      %1307 = vmatprep.subr.mxu0 0.0
      %1308 = vmatpush1.xpose.msra.mxu0 0.0
      %1309 = vmatprep.subr.mxu0 0.0
      %1310 = vmatpush1.xpose.msra.mxu0 0.0
      %1311 = vmatprep.subr.mxu0 0.0
      %1312 = vmatpush1.xpose.msra.mxu0 0.0
      %1313 = vmatprep.subr.mxu0 0.0
      %1314 = vmatpush1.xpose.msra.mxu0 0.0
      %1315 = vmatprep.subr.mxu0 0.0
      %1316 = vmatpush1.xpose.msra.mxu0 0.0
      %1317 = vmatprep.mubr.f32.mxu0 0.0
      %1318 = vmatmul.mubr.f32.gmra.mrb[0].mxu0 %v1251
      %v1319 = vpop.f32.mrb[0].mxu0
      %v1320 = vadd.f32 0.0, %v1319
      %v1321 = vpop.f32.mrb[0].mxu0
      %1322 = vdwg.mxu0
      %v1323 = vsel %vm516, %v1320, 0.0
      %1324 = vmatprep.subr.mxu0 0.0
      %1325 = vmatpush1.xpose.msra.mxu0 %v1121
      %1326 = vmatprep.subr.mxu0 0.0
      %1327 = vmatpush1.xpose.msra.mxu0 0.0
      %1328 = vmatprep.subr.mxu0 0.0
      %1329 = vmatpush1.xpose.msra.mxu0 0.0
      %1330 = vmatprep.subr.mxu0 0.0
      %1331 = vmatpush1.xpose.msra.mxu0 0.0
      %1332 = vmatprep.subr.mxu0 0.0
      %1333 = vmatpush1.xpose.msra.mxu0 0.0
      %1334 = vmatprep.subr.mxu0 0.0
      %1335 = vmatpush1.xpose.msra.mxu0 0.0
      %1336 = vmatprep.subr.mxu0 0.0
      %1337 = vmatpush1.xpose.msra.mxu0 0.0
      %1338 = vmatprep.subr.mxu0 0.0
      %1339 = vmatpush1.xpose.msra.mxu0 0.0
      %1340 = vmatprep.subr.mxu0 0.0
      %1341 = vmatpush1.xpose.msra.mxu0 0.0
      %1342 = vmatprep.subr.mxu0 0.0
      %1343 = vmatpush1.xpose.msra.mxu0 0.0
      %1344 = vmatprep.subr.mxu0 0.0
      %1345 = vmatpush1.xpose.msra.mxu0 0.0
      %1346 = vmatprep.subr.mxu0 0.0
      %1347 = vmatpush1.xpose.msra.mxu0 0.0
      %1348 = vmatprep.subr.mxu0 0.0
      %1349 = vmatpush1.xpose.msra.mxu0 0.0
      %1350 = vmatprep.subr.mxu0 0.0
      %1351 = vmatpush1.xpose.msra.mxu0 0.0
      %1352 = vmatprep.subr.mxu0 0.0
      %1353 = vmatpush1.xpose.msra.mxu0 0.0
      %1354 = vmatprep.subr.mxu0 0.0
      %1355 = vmatpush1.xpose.msra.mxu0 0.0
      %1356 = vmatprep.subr.mxu0 0.0
      %1357 = vmatpush1.xpose.msra.mxu0 0.0
      %1358 = vmatprep.subr.mxu0 0.0
      %1359 = vmatpush1.xpose.msra.mxu0 0.0
      %1360 = vmatprep.subr.mxu0 0.0
      %1361 = vmatpush1.xpose.msra.mxu0 0.0
      %1362 = vmatprep.subr.mxu0 0.0
      %1363 = vmatpush1.xpose.msra.mxu0 0.0
      %1364 = vmatprep.subr.mxu0 0.0
      %1365 = vmatpush1.xpose.msra.mxu0 0.0
      %1366 = vmatprep.subr.mxu0 0.0
      %1367 = vmatpush1.xpose.msra.mxu0 0.0
      %1368 = vmatprep.subr.mxu0 0.0
      %1369 = vmatpush1.xpose.msra.mxu0 0.0
      %1370 = vmatprep.subr.mxu0 0.0
      %1371 = vmatpush1.xpose.msra.mxu0 0.0
      %1372 = vmatprep.subr.mxu0 0.0
      %1373 = vmatpush1.xpose.msra.mxu0 0.0
      %1374 = vmatprep.subr.mxu0 0.0
      %1375 = vmatpush1.xpose.msra.mxu0 0.0
      %1376 = vmatprep.subr.mxu0 0.0
      %1377 = vmatpush1.xpose.msra.mxu0 0.0
      %1378 = vmatprep.subr.mxu0 0.0
      %1379 = vmatpush1.xpose.msra.mxu0 0.0
      %1380 = vmatprep.subr.mxu0 0.0
      %1381 = vmatpush1.xpose.msra.mxu0 0.0
      %1382 = vmatprep.subr.mxu0 0.0
      %1383 = vmatpush1.xpose.msra.mxu0 0.0
      %1384 = vmatprep.subr.mxu0 0.0
      %1385 = vmatpush1.xpose.msra.mxu0 0.0
      %1386 = vmatprep.subr.mxu0 0.0
      %1387 = vmatpush1.xpose.msra.mxu0 0.0
      %1388 = vmatprep.mubr.f32.mxu0 0.0
      %1389 = vmatmul.mubr.f32.gmra.mrb[0].mxu0 %v1251
      %v1390 = vpop.f32.mrb[0].mxu0
      %v1391 = vadd.f32 0.0, %v1390
      %v1392 = vpop.f32.mrb[0].mxu0
      %1393 = vdwg.mxu0
      %v1394 = vsel %vm516, %v1391, 0.0
      %v1403 = vcombine.low %v488, %v489
      %v1404 = vcombine.low %v490, %v491
      %v1405 = vcombine.low %v492, %v493
      %v1406 = vcombine.low %v494, %v495
      %v1408 = vunpack.c.l.s4 1966171168
      %v1409 = vunpack.c.0.s8 %v1408
      %v1410 = vlaneseq
      %v1411 = vshrl.u32 %v1410, 7
      %v1412 = vsub.s32 %v1409, %v1411
      %v1413 = vrot.slane %v1403, %v1412
      %v1415 = vunpack.c.l.s4 1966171168
      %v1416 = vunpack.c.0.s8 %v1415
      %v1417 = vlaneseq
      %v1418 = vshrl.u32 %v1417, 7
      %v1419 = vsub.s32 %v1416, %v1418
      %v1420 = vrot.slane %v1404, %v1419
      %v1422 = vunpack.c.l.s4 1966171168
      %v1423 = vunpack.c.0.s8 %v1422
      %v1424 = vlaneseq
      %v1425 = vshrl.u32 %v1424, 7
      %v1426 = vsub.s32 %v1423, %v1425
      %v1427 = vrot.slane %v1405, %v1426
      %v1429 = vunpack.c.l.s4 1966171168
      %v1430 = vunpack.c.0.s8 %v1429
      %v1431 = vlaneseq
      %v1432 = vshrl.u32 %v1431, 7
      %v1433 = vsub.s32 %v1430, %v1432
      %v1434 = vrot.slane %v1406, %v1433
      %v1435 = vcombine.low %v1413, %v1420
      %v1436 = vcombine.low %v1427, %v1434
      %v1438 = vunpack.c.l.s4 1966171168
      %v1439 = vunpack.c.0.s8 %v1438
      %v1440 = vlaneseq
      %v1441 = vshrl.u32 %v1440, 7
      %v1442 = vsub.s32 %v1439, %v1441
      %v1443 = vrot.slane %v1435, %v1442
      %v1445 = vunpack.c.l.s4 1966171168
      %v1446 = vunpack.c.0.s8 %v1445
      %v1447 = vlaneseq
      %v1448 = vshrl.u32 %v1447, 7
      %v1449 = vsub.s32 %v1446, %v1448
      %v1450 = vrot.slane %v1436, %v1449
      %v1451 = vcombine.low %v1443, %v1450
      %v1454 = vsel %vm578, %v1193, 0
      %1456 = vmatprep.subr.mxu0 0.0
      %1457 = vmatpush1.msra.mxu0 %v1451
      %1458 = vmatprep.subr.mxu0 0.0
      %1459 = vmatpush1.msra.mxu0 0.0
      %1460 = vmatprep.subr.mxu0 0.0
      %1461 = vmatpush1.msra.mxu0 0.0
      %1462 = vmatprep.subr.mxu0 0.0
      %1463 = vmatpush1.msra.mxu0 0.0
      %1464 = vmatprep.subr.mxu0 0.0
      %1465 = vmatpush1.msra.mxu0 0.0
      %1466 = vmatprep.subr.mxu0 0.0
      %1467 = vmatpush1.msra.mxu0 0.0
      %1468 = vmatprep.subr.mxu0 0.0
      %1469 = vmatpush1.msra.mxu0 0.0
      %1470 = vmatprep.subr.mxu0 0.0
      %1471 = vmatpush1.msra.mxu0 0.0
      %1472 = vmatprep.subr.mxu0 0.0
      %1473 = vmatpush1.msra.mxu0 0.0
      %1474 = vmatprep.subr.mxu0 0.0
      %1475 = vmatpush1.msra.mxu0 0.0
      %1476 = vmatprep.subr.mxu0 0.0
      %1477 = vmatpush1.msra.mxu0 0.0
      %1478 = vmatprep.subr.mxu0 0.0
      %1479 = vmatpush1.msra.mxu0 0.0
      %1480 = vmatprep.subr.mxu0 0.0
      %1481 = vmatpush1.msra.mxu0 0.0
      %1482 = vmatprep.subr.mxu0 0.0
      %1483 = vmatpush1.msra.mxu0 0.0
      %1484 = vmatprep.subr.mxu0 0.0
      %1485 = vmatpush1.msra.mxu0 0.0
      %1486 = vmatprep.subr.mxu0 0.0
      %1487 = vmatpush1.msra.mxu0 0.0
      %1488 = vmatprep.subr.mxu0 0.0
      %1489 = vmatpush1.msra.mxu0 0.0
      %1490 = vmatprep.subr.mxu0 0.0
      %1491 = vmatpush1.msra.mxu0 0.0
      %1492 = vmatprep.subr.mxu0 0.0
      %1493 = vmatpush1.msra.mxu0 0.0
      %1494 = vmatprep.subr.mxu0 0.0
      %1495 = vmatpush1.msra.mxu0 0.0
      %1496 = vmatprep.subr.mxu0 0.0
      %1497 = vmatpush1.msra.mxu0 0.0
      %1498 = vmatprep.subr.mxu0 0.0
      %1499 = vmatpush1.msra.mxu0 0.0
      %1500 = vmatprep.subr.mxu0 0.0
      %1501 = vmatpush1.msra.mxu0 0.0
      %1502 = vmatprep.subr.mxu0 0.0
      %1503 = vmatpush1.msra.mxu0 0.0
      %1504 = vmatprep.subr.mxu0 0.0
      %1505 = vmatpush1.msra.mxu0 0.0
      %1506 = vmatprep.subr.mxu0 0.0
      %1507 = vmatpush1.msra.mxu0 0.0
      %1508 = vmatprep.subr.mxu0 0.0
      %1509 = vmatpush1.msra.mxu0 0.0
      %1510 = vmatprep.subr.mxu0 0.0
      %1511 = vmatpush1.msra.mxu0 0.0
      %1512 = vmatprep.subr.mxu0 0.0
      %1513 = vmatpush1.msra.mxu0 0.0
      %1514 = vmatprep.subr.mxu0 0.0
      %1515 = vmatpush1.msra.mxu0 0.0
      %1516 = vmatprep.subr.mxu0 0.0
      %1517 = vmatpush1.msra.mxu0 0.0
      %1518 = vmatprep.subr.mxu0 0.0
      %1519 = vmatpush1.msra.mxu0 0.0
      %1520 = vmatprep.mubr.f32.mxu0 0.0
      %1521 = vmatmul.mubr.f32.gmra.mrb[0].mxu0 %v1454
      %v1522 = vpop.f32.mrb[0].mxu0
      %v1523 = vadd.f32 0.0, %v1522
      %v1524 = vpop.f32.mrb[0].mxu0
      %1525 = vdwg.mxu0
      %v1527 = vsel %vm988, %v866, 0
      %v1530 = vsel %vm988, %v867, 0
      %v1533 = vsel %vm988, %v868, 0
      %v1536 = vsel %vm988, %v869, 0
      %v1539 = vsel %vm988, %v870, 0
      %v1542 = vsel %vm988, %v871, 0
      %v1545 = vsel %vm988, %v872, 0
      %v1548 = vsel %vm988, %v873, 0
      %1550 = vmatprep.subr.mxu0 0.0
      %1551 = vmatpush1.xpose.msra.mxu0 %v1527
      %1552 = vmatprep.subr.mxu0 0.0
      %1553 = vmatpush1.xpose.msra.mxu0 %v1530
      %1554 = vmatprep.subr.mxu0 0.0
      %1555 = vmatpush1.xpose.msra.mxu0 %v1533
      %1556 = vmatprep.subr.mxu0 0.0
      %1557 = vmatpush1.xpose.msra.mxu0 %v1536
      %1558 = vmatprep.subr.mxu0 0.0
      %1559 = vmatpush1.xpose.msra.mxu0 %v1539
      %1560 = vmatprep.subr.mxu0 0.0
      %1561 = vmatpush1.xpose.msra.mxu0 %v1542
      %1562 = vmatprep.subr.mxu0 0.0
      %1563 = vmatpush1.xpose.msra.mxu0 %v1545
      %1564 = vmatprep.subr.mxu0 0.0
      %1565 = vmatpush1.xpose.msra.mxu0 %v1548
      %1566 = vmatprep.subr.mxu0 0.0
      %1567 = vmatpush1.xpose.msra.mxu0 0.0
      %1568 = vmatprep.subr.mxu0 0.0
      %1569 = vmatpush1.xpose.msra.mxu0 0.0
      %1570 = vmatprep.subr.mxu0 0.0
      %1571 = vmatpush1.xpose.msra.mxu0 0.0
      %1572 = vmatprep.subr.mxu0 0.0
      %1573 = vmatpush1.xpose.msra.mxu0 0.0
      %1574 = vmatprep.subr.mxu0 0.0
      %1575 = vmatpush1.xpose.msra.mxu0 0.0
      %1576 = vmatprep.subr.mxu0 0.0
      %1577 = vmatpush1.xpose.msra.mxu0 0.0
      %1578 = vmatprep.subr.mxu0 0.0
      %1579 = vmatpush1.xpose.msra.mxu0 0.0
      %1580 = vmatprep.subr.mxu0 0.0
      %1581 = vmatpush1.xpose.msra.mxu0 0.0
      %1582 = vmatprep.subr.mxu0 0.0
      %1583 = vmatpush1.xpose.msra.mxu0 0.0
      %1584 = vmatprep.subr.mxu0 0.0
      %1585 = vmatpush1.xpose.msra.mxu0 0.0
      %1586 = vmatprep.subr.mxu0 0.0
      %1587 = vmatpush1.xpose.msra.mxu0 0.0
      %1588 = vmatprep.subr.mxu0 0.0
      %1589 = vmatpush1.xpose.msra.mxu0 0.0
      %1590 = vmatprep.subr.mxu0 0.0
      %1591 = vmatpush1.xpose.msra.mxu0 0.0
      %1592 = vmatprep.subr.mxu0 0.0
      %1593 = vmatpush1.xpose.msra.mxu0 0.0
      %1594 = vmatprep.subr.mxu0 0.0
      %1595 = vmatpush1.xpose.msra.mxu0 0.0
      %1596 = vmatprep.subr.mxu0 0.0
      %1597 = vmatpush1.xpose.msra.mxu0 0.0
      %1598 = vmatprep.subr.mxu0 0.0
      %1599 = vmatpush1.xpose.msra.mxu0 0.0
      %1600 = vmatprep.subr.mxu0 0.0
      %1601 = vmatpush1.xpose.msra.mxu0 0.0
      %1602 = vmatprep.subr.mxu0 0.0
      %1603 = vmatpush1.xpose.msra.mxu0 0.0
      %1604 = vmatprep.subr.mxu0 0.0
      %1605 = vmatpush1.xpose.msra.mxu0 0.0
      %1606 = vmatprep.subr.mxu0 0.0
      %1607 = vmatpush1.xpose.msra.mxu0 0.0
      %1608 = vmatprep.subr.mxu0 0.0
      %1609 = vmatpush1.xpose.msra.mxu0 0.0
      %1610 = vmatprep.subr.mxu0 0.0
      %1611 = vmatpush1.xpose.msra.mxu0 0.0
      %1612 = vmatprep.subr.mxu0 0.0
      %1613 = vmatpush1.xpose.msra.mxu0 0.0
      %1614 = vmatprep.mubr.f32.mxu0 0.0
      %1615 = vmatmul.mubr.f32.gmra.mrb[0].mxu0 %v989
      %v1616 = vpop.f32.mrb[0].mxu0
      %v1617 = vadd.f32 %v1523, %v1616
      %v1618 = vpop.f32.mrb[0].mxu0
      %1619 = vdwg.mxu0
      %vm1620 = vcmp.eq.s32.totalorder %v513, %v515
      %v1621 = vsel %vm1620, 1, 0
      %v1622 = vcvt.s32.f32 %v1621
      %v1623 = vadd.f32 %v1622, %v1063
      %v1625 = vsel %vm578, %v1063, 0
      %1627 = vmatprep.subr.mxu0 0.0
      %1628 = vmatpush1.msra.mxu0 %v1063
      %1629 = vmatprep.subr.mxu0 0.0
      %1630 = vmatpush1.msra.mxu0 0.0
      %1631 = vmatprep.subr.mxu0 0.0
      %1632 = vmatpush1.msra.mxu0 0.0
      %1633 = vmatprep.subr.mxu0 0.0
      %1634 = vmatpush1.msra.mxu0 0.0
      %1635 = vmatprep.subr.mxu0 0.0
      %1636 = vmatpush1.msra.mxu0 0.0
      %1637 = vmatprep.subr.mxu0 0.0
      %1638 = vmatpush1.msra.mxu0 0.0
      %1639 = vmatprep.subr.mxu0 0.0
      %1640 = vmatpush1.msra.mxu0 0.0
      %1641 = vmatprep.subr.mxu0 0.0
      %1642 = vmatpush1.msra.mxu0 0.0
      %1643 = vmatprep.subr.mxu0 0.0
      %1644 = vmatpush1.msra.mxu0 0.0
      %1645 = vmatprep.subr.mxu0 0.0
      %1646 = vmatpush1.msra.mxu0 0.0
      %1647 = vmatprep.subr.mxu0 0.0
      %1648 = vmatpush1.msra.mxu0 0.0
      %1649 = vmatprep.subr.mxu0 0.0
      %1650 = vmatpush1.msra.mxu0 0.0
      %1651 = vmatprep.subr.mxu0 0.0
      %1652 = vmatpush1.msra.mxu0 0.0
      %1653 = vmatprep.subr.mxu0 0.0
      %1654 = vmatpush1.msra.mxu0 0.0
      %1655 = vmatprep.subr.mxu0 0.0
      %1656 = vmatpush1.msra.mxu0 0.0
      %1657 = vmatprep.subr.mxu0 0.0
      %1658 = vmatpush1.msra.mxu0 0.0
      %1659 = vmatprep.subr.mxu0 0.0
      %1660 = vmatpush1.msra.mxu0 0.0
      %1661 = vmatprep.subr.mxu0 0.0
      %1662 = vmatpush1.msra.mxu0 0.0
      %1663 = vmatprep.subr.mxu0 0.0
      %1664 = vmatpush1.msra.mxu0 0.0
      %1665 = vmatprep.subr.mxu0 0.0
      %1666 = vmatpush1.msra.mxu0 0.0
      %1667 = vmatprep.subr.mxu0 0.0
      %1668 = vmatpush1.msra.mxu0 0.0
      %1669 = vmatprep.subr.mxu0 0.0
      %1670 = vmatpush1.msra.mxu0 0.0
      %1671 = vmatprep.subr.mxu0 0.0
      %1672 = vmatpush1.msra.mxu0 0.0
      %1673 = vmatprep.subr.mxu0 0.0
      %1674 = vmatpush1.msra.mxu0 0.0
      %1675 = vmatprep.subr.mxu0 0.0
      %1676 = vmatpush1.msra.mxu0 0.0
      %1677 = vmatprep.subr.mxu0 0.0
      %1678 = vmatpush1.msra.mxu0 0.0
      %1679 = vmatprep.subr.mxu0 0.0
      %1680 = vmatpush1.msra.mxu0 0.0
      %1681 = vmatprep.subr.mxu0 0.0
      %1682 = vmatpush1.msra.mxu0 0.0
      %1683 = vmatprep.subr.mxu0 0.0
      %1684 = vmatpush1.msra.mxu0 0.0
      %1685 = vmatprep.subr.mxu0 0.0
      %1686 = vmatpush1.msra.mxu0 0.0
      %1687 = vmatprep.subr.mxu0 0.0
      %1688 = vmatpush1.msra.mxu0 0.0
      %1689 = vmatprep.subr.mxu0 0.0
      %1690 = vmatpush1.msra.mxu0 0.0
      %1691 = vmatprep.mubr.f32.mxu0 0.0
      %1692 = vmatmul.mubr.f32.gmra.mrb[0].mxu0 %v1625
      %v1693 = vpop.f32.mrb[0].mxu0
      %v1694 = vadd.f32 0.0, %v1693
      %v1695 = vpop.f32.mrb[0].mxu0
      %1696 = vdwg.mxu0
      %v1698 = vsel %vm578, %v1694, 0
      %1700 = vmatprep.subr.mxu0 0.0
      %1701 = vmatpush1.msra.mxu0 %v1623
      %1702 = vmatprep.subr.mxu0 0.0
      %1703 = vmatpush1.msra.mxu0 0.0
      %1704 = vmatprep.subr.mxu0 0.0
      %1705 = vmatpush1.msra.mxu0 0.0
      %1706 = vmatprep.subr.mxu0 0.0
      %1707 = vmatpush1.msra.mxu0 0.0
      %1708 = vmatprep.subr.mxu0 0.0
      %1709 = vmatpush1.msra.mxu0 0.0
      %1710 = vmatprep.subr.mxu0 0.0
      %1711 = vmatpush1.msra.mxu0 0.0
      %1712 = vmatprep.subr.mxu0 0.0
      %1713 = vmatpush1.msra.mxu0 0.0
      %1714 = vmatprep.subr.mxu0 0.0
      %1715 = vmatpush1.msra.mxu0 0.0
      %1716 = vmatprep.subr.mxu0 0.0
      %1717 = vmatpush1.msra.mxu0 0.0
      %1718 = vmatprep.subr.mxu0 0.0
      %1719 = vmatpush1.msra.mxu0 0.0
      %1720 = vmatprep.subr.mxu0 0.0
      %1721 = vmatpush1.msra.mxu0 0.0
      %1722 = vmatprep.subr.mxu0 0.0
      %1723 = vmatpush1.msra.mxu0 0.0
      %1724 = vmatprep.subr.mxu0 0.0
      %1725 = vmatpush1.msra.mxu0 0.0
      %1726 = vmatprep.subr.mxu0 0.0
      %1727 = vmatpush1.msra.mxu0 0.0
      %1728 = vmatprep.subr.mxu0 0.0
      %1729 = vmatpush1.msra.mxu0 0.0
      %1730 = vmatprep.subr.mxu0 0.0
      %1731 = vmatpush1.msra.mxu0 0.0
      %1732 = vmatprep.subr.mxu0 0.0
      %1733 = vmatpush1.msra.mxu0 0.0
      %1734 = vmatprep.subr.mxu0 0.0
      %1735 = vmatpush1.msra.mxu0 0.0
      %1736 = vmatprep.subr.mxu0 0.0
      %1737 = vmatpush1.msra.mxu0 0.0
      %1738 = vmatprep.subr.mxu0 0.0
      %1739 = vmatpush1.msra.mxu0 0.0
      %1740 = vmatprep.subr.mxu0 0.0
      %1741 = vmatpush1.msra.mxu0 0.0
      %1742 = vmatprep.subr.mxu0 0.0
      %1743 = vmatpush1.msra.mxu0 0.0
      %1744 = vmatprep.subr.mxu0 0.0
      %1745 = vmatpush1.msra.mxu0 0.0
      %1746 = vmatprep.subr.mxu0 0.0
      %1747 = vmatpush1.msra.mxu0 0.0
      %1748 = vmatprep.subr.mxu0 0.0
      %1749 = vmatpush1.msra.mxu0 0.0
      %1750 = vmatprep.subr.mxu0 0.0
      %1751 = vmatpush1.msra.mxu0 0.0
      %1752 = vmatprep.subr.mxu0 0.0
      %1753 = vmatpush1.msra.mxu0 0.0
      %1754 = vmatprep.subr.mxu0 0.0
      %1755 = vmatpush1.msra.mxu0 0.0
      %1756 = vmatprep.subr.mxu0 0.0
      %1757 = vmatpush1.msra.mxu0 0.0
      %1758 = vmatprep.subr.mxu0 0.0
      %1759 = vmatpush1.msra.mxu0 0.0
      %1760 = vmatprep.subr.mxu0 0.0
      %1761 = vmatpush1.msra.mxu0 0.0
      %1762 = vmatprep.subr.mxu0 0.0
      %1763 = vmatpush1.msra.mxu0 0.0
      %1764 = vmatprep.mubr.f32.mxu0 0.0
      %1765 = vmatmul.mubr.f32.gmra.mrb[0].mxu0 %v1698
      %v1766 = vpop.f32.mrb[0].mxu0
      %v1767 = vadd.f32 0.0, %v1766
      %v1768 = vpop.f32.mrb[0].mxu0
      %1769 = vdwg.mxu0
      %v1770 = vadd.f32 %v1623, %v1767
      %1771 = vmatprep.subr.mxu0 0.0
      %1772 = vmatpush1.msra.mxu0 %v1694
      %1773 = vmatprep.subr.mxu0 0.0
      %1774 = vmatpush1.msra.mxu0 0.0
      %1775 = vmatprep.subr.mxu0 0.0
      %1776 = vmatpush1.msra.mxu0 0.0
      %1777 = vmatprep.subr.mxu0 0.0
      %1778 = vmatpush1.msra.mxu0 0.0
      %1779 = vmatprep.subr.mxu0 0.0
      %1780 = vmatpush1.msra.mxu0 0.0
      %1781 = vmatprep.subr.mxu0 0.0
      %1782 = vmatpush1.msra.mxu0 0.0
      %1783 = vmatprep.subr.mxu0 0.0
      %1784 = vmatpush1.msra.mxu0 0.0
      %1785 = vmatprep.subr.mxu0 0.0
      %1786 = vmatpush1.msra.mxu0 0.0
      %1787 = vmatprep.subr.mxu0 0.0
      %1788 = vmatpush1.msra.mxu0 0.0
      %1789 = vmatprep.subr.mxu0 0.0
      %1790 = vmatpush1.msra.mxu0 0.0
      %1791 = vmatprep.subr.mxu0 0.0
      %1792 = vmatpush1.msra.mxu0 0.0
      %1793 = vmatprep.subr.mxu0 0.0
      %1794 = vmatpush1.msra.mxu0 0.0
      %1795 = vmatprep.subr.mxu0 0.0
      %1796 = vmatpush1.msra.mxu0 0.0
      %1797 = vmatprep.subr.mxu0 0.0
      %1798 = vmatpush1.msra.mxu0 0.0
      %1799 = vmatprep.subr.mxu0 0.0
      %1800 = vmatpush1.msra.mxu0 0.0
      %1801 = vmatprep.subr.mxu0 0.0
      %1802 = vmatpush1.msra.mxu0 0.0
      %1803 = vmatprep.subr.mxu0 0.0
      %1804 = vmatpush1.msra.mxu0 0.0
      %1805 = vmatprep.subr.mxu0 0.0
      %1806 = vmatpush1.msra.mxu0 0.0
      %1807 = vmatprep.subr.mxu0 0.0
      %1808 = vmatpush1.msra.mxu0 0.0
      %1809 = vmatprep.subr.mxu0 0.0
      %1810 = vmatpush1.msra.mxu0 0.0
      %1811 = vmatprep.subr.mxu0 0.0
      %1812 = vmatpush1.msra.mxu0 0.0
      %1813 = vmatprep.subr.mxu0 0.0
      %1814 = vmatpush1.msra.mxu0 0.0
      %1815 = vmatprep.subr.mxu0 0.0
      %1816 = vmatpush1.msra.mxu0 0.0
      %1817 = vmatprep.subr.mxu0 0.0
      %1818 = vmatpush1.msra.mxu0 0.0
      %1819 = vmatprep.subr.mxu0 0.0
      %1820 = vmatpush1.msra.mxu0 0.0
      %1821 = vmatprep.subr.mxu0 0.0
      %1822 = vmatpush1.msra.mxu0 0.0
      %1823 = vmatprep.subr.mxu0 0.0
      %1824 = vmatpush1.msra.mxu0 0.0
      %1825 = vmatprep.subr.mxu0 0.0
      %1826 = vmatpush1.msra.mxu0 0.0
      %1827 = vmatprep.subr.mxu0 0.0
      %1828 = vmatpush1.msra.mxu0 0.0
      %1829 = vmatprep.subr.mxu0 0.0
      %1830 = vmatpush1.msra.mxu0 0.0
      %1831 = vmatprep.subr.mxu0 0.0
      %1832 = vmatpush1.msra.mxu0 0.0
      %1833 = vmatprep.subr.mxu0 0.0
      %1834 = vmatpush1.msra.mxu0 0.0
      %1835 = vmatprep.mubr.f32.mxu0 0.0
      %1836 = vmatmul.mubr.f32.gmra.mrb[0].mxu0 %v1698
      %v1837 = vpop.f32.mrb[0].mxu0
      %v1838 = vadd.f32 0.0, %v1837
      %v1839 = vpop.f32.mrb[0].mxu0
      %1840 = vdwg.mxu0
      %v1842 = vsel %vm578, %v1838, 0
      %1844 = vmatprep.subr.mxu0 0.0
      %1845 = vmatpush1.msra.mxu0 %v1770
      %1846 = vmatprep.subr.mxu0 0.0
      %1847 = vmatpush1.msra.mxu0 0.0
      %1848 = vmatprep.subr.mxu0 0.0
      %1849 = vmatpush1.msra.mxu0 0.0
      %1850 = vmatprep.subr.mxu0 0.0
      %1851 = vmatpush1.msra.mxu0 0.0
      %1852 = vmatprep.subr.mxu0 0.0
      %1853 = vmatpush1.msra.mxu0 0.0
      %1854 = vmatprep.subr.mxu0 0.0
      %1855 = vmatpush1.msra.mxu0 0.0
      %1856 = vmatprep.subr.mxu0 0.0
      %1857 = vmatpush1.msra.mxu0 0.0
      %1858 = vmatprep.subr.mxu0 0.0
      %1859 = vmatpush1.msra.mxu0 0.0
      %1860 = vmatprep.subr.mxu0 0.0
      %1861 = vmatpush1.msra.mxu0 0.0
      %1862 = vmatprep.subr.mxu0 0.0
      %1863 = vmatpush1.msra.mxu0 0.0
      %1864 = vmatprep.subr.mxu0 0.0
      %1865 = vmatpush1.msra.mxu0 0.0
      %1866 = vmatprep.subr.mxu0 0.0
      %1867 = vmatpush1.msra.mxu0 0.0
      %1868 = vmatprep.subr.mxu0 0.0
      %1869 = vmatpush1.msra.mxu0 0.0
      %1870 = vmatprep.subr.mxu0 0.0
      %1871 = vmatpush1.msra.mxu0 0.0
      %1872 = vmatprep.subr.mxu0 0.0
      %1873 = vmatpush1.msra.mxu0 0.0
      %1874 = vmatprep.subr.mxu0 0.0
      %1875 = vmatpush1.msra.mxu0 0.0
      %1876 = vmatprep.subr.mxu0 0.0
      %1877 = vmatpush1.msra.mxu0 0.0
      %1878 = vmatprep.subr.mxu0 0.0
      %1879 = vmatpush1.msra.mxu0 0.0
      %1880 = vmatprep.subr.mxu0 0.0
      %1881 = vmatpush1.msra.mxu0 0.0
      %1882 = vmatprep.subr.mxu0 0.0
      %1883 = vmatpush1.msra.mxu0 0.0
      %1884 = vmatprep.subr.mxu0 0.0
      %1885 = vmatpush1.msra.mxu0 0.0
      %1886 = vmatprep.subr.mxu0 0.0
      %1887 = vmatpush1.msra.mxu0 0.0
      %1888 = vmatprep.subr.mxu0 0.0
      %1889 = vmatpush1.msra.mxu0 0.0
      %1890 = vmatprep.subr.mxu0 0.0
      %1891 = vmatpush1.msra.mxu0 0.0
      %1892 = vmatprep.subr.mxu0 0.0
      %1893 = vmatpush1.msra.mxu0 0.0
      %1894 = vmatprep.subr.mxu0 0.0
      %1895 = vmatpush1.msra.mxu0 0.0
      %1896 = vmatprep.subr.mxu0 0.0
      %1897 = vmatpush1.msra.mxu0 0.0
      %1898 = vmatprep.subr.mxu0 0.0
      %1899 = vmatpush1.msra.mxu0 0.0
      %1900 = vmatprep.subr.mxu0 0.0
      %1901 = vmatpush1.msra.mxu0 0.0
      %1902 = vmatprep.subr.mxu0 0.0
      %1903 = vmatpush1.msra.mxu0 0.0
      %1904 = vmatprep.subr.mxu0 0.0
      %1905 = vmatpush1.msra.mxu0 0.0
      %1906 = vmatprep.subr.mxu0 0.0
      %1907 = vmatpush1.msra.mxu0 0.0
      %1908 = vmatprep.mubr.f32.mxu0 0.0
      %1909 = vmatmul.mubr.f32.gmra.mrb[0].mxu0 %v1842
      %v1910 = vpop.f32.mrb[0].mxu0
      %v1911 = vadd.f32 0.0, %v1910
      %v1912 = vpop.f32.mrb[0].mxu0
      %1913 = vdwg.mxu0
      %v1914 = vadd.f32 %v1770, %v1911
      %v1916 = vsel %vm578, %v1914, 0
      %1918 = vmatprep.subr.mxu0 0.0
      %1919 = vmatpush1.msra.mxu0 %v1617
      %1920 = vmatprep.subr.mxu0 0.0
      %1921 = vmatpush1.msra.mxu0 0.0
      %1922 = vmatprep.subr.mxu0 0.0
      %1923 = vmatpush1.msra.mxu0 0.0
      %1924 = vmatprep.subr.mxu0 0.0
      %1925 = vmatpush1.msra.mxu0 0.0
      %1926 = vmatprep.subr.mxu0 0.0
      %1927 = vmatpush1.msra.mxu0 0.0
      %1928 = vmatprep.subr.mxu0 0.0
      %1929 = vmatpush1.msra.mxu0 0.0
      %1930 = vmatprep.subr.mxu0 0.0
      %1931 = vmatpush1.msra.mxu0 0.0
      %1932 = vmatprep.subr.mxu0 0.0
      %1933 = vmatpush1.msra.mxu0 0.0
      %1934 = vmatprep.subr.mxu0 0.0
      %1935 = vmatpush1.msra.mxu0 0.0
      %1936 = vmatprep.subr.mxu0 0.0
      %1937 = vmatpush1.msra.mxu0 0.0
      %1938 = vmatprep.subr.mxu0 0.0
      %1939 = vmatpush1.msra.mxu0 0.0
      %1940 = vmatprep.subr.mxu0 0.0
      %1941 = vmatpush1.msra.mxu0 0.0
      %1942 = vmatprep.subr.mxu0 0.0
      %1943 = vmatpush1.msra.mxu0 0.0
      %1944 = vmatprep.subr.mxu0 0.0
      %1945 = vmatpush1.msra.mxu0 0.0
      %1946 = vmatprep.subr.mxu0 0.0
      %1947 = vmatpush1.msra.mxu0 0.0
      %1948 = vmatprep.subr.mxu0 0.0
      %1949 = vmatpush1.msra.mxu0 0.0
      %1950 = vmatprep.subr.mxu0 0.0
      %1951 = vmatpush1.msra.mxu0 0.0
      %1952 = vmatprep.subr.mxu0 0.0
      %1953 = vmatpush1.msra.mxu0 0.0
      %1954 = vmatprep.subr.mxu0 0.0
      %1955 = vmatpush1.msra.mxu0 0.0
      %1956 = vmatprep.subr.mxu0 0.0
      %1957 = vmatpush1.msra.mxu0 0.0
      %1958 = vmatprep.subr.mxu0 0.0
      %1959 = vmatpush1.msra.mxu0 0.0
      %1960 = vmatprep.subr.mxu0 0.0
      %1961 = vmatpush1.msra.mxu0 0.0
      %1962 = vmatprep.subr.mxu0 0.0
      %1963 = vmatpush1.msra.mxu0 0.0
      %1964 = vmatprep.subr.mxu0 0.0
      %1965 = vmatpush1.msra.mxu0 0.0
      %1966 = vmatprep.subr.mxu0 0.0
      %1967 = vmatpush1.msra.mxu0 0.0
      %1968 = vmatprep.subr.mxu0 0.0
      %1969 = vmatpush1.msra.mxu0 0.0
      %1970 = vmatprep.subr.mxu0 0.0
      %1971 = vmatpush1.msra.mxu0 0.0
      %1972 = vmatprep.subr.mxu0 0.0
      %1973 = vmatpush1.msra.mxu0 0.0
      %1974 = vmatprep.subr.mxu0 0.0
      %1975 = vmatpush1.msra.mxu0 0.0
      %1976 = vmatprep.subr.mxu0 0.0
      %1977 = vmatpush1.msra.mxu0 0.0
      %1978 = vmatprep.subr.mxu0 0.0
      %1979 = vmatpush1.msra.mxu0 0.0
      %1980 = vmatprep.subr.mxu0 0.0
      %1981 = vmatpush1.msra.mxu0 0.0
      %1982 = vmatprep.mubr.f32.mxu0 0.0
      %1983 = vmatmul.mubr.f32.gmra.mrb[0].mxu0 %v1916
      %v1984 = vpop.f32.mrb[0].mxu0
      %v1985 = vadd.f32 0.0, %v1984
      %v1986 = vpop.f32.mrb[0].mxu0
      %1987 = vdwg.mxu0
      %v1989 = vsel %vm578, %v1323, 0
      %1991 = vmatprep.subr.mxu0 0.0
      %1992 = vmatpush1.msra.mxu0 %v1985
      %1993 = vmatprep.subr.mxu0 0.0
      %1994 = vmatpush1.msra.mxu0 0.0
      %1995 = vmatprep.subr.mxu0 0.0
      %1996 = vmatpush1.msra.mxu0 0.0
      %1997 = vmatprep.subr.mxu0 0.0
      %1998 = vmatpush1.msra.mxu0 0.0
      %1999 = vmatprep.subr.mxu0 0.0
      %2000 = vmatpush1.msra.mxu0 0.0
      %2001 = vmatprep.subr.mxu0 0.0
      %2002 = vmatpush1.msra.mxu0 0.0
      %2003 = vmatprep.subr.mxu0 0.0
      %2004 = vmatpush1.msra.mxu0 0.0
      %2005 = vmatprep.subr.mxu0 0.0
      %2006 = vmatpush1.msra.mxu0 0.0
      %2007 = vmatprep.subr.mxu0 0.0
      %2008 = vmatpush1.msra.mxu0 0.0
      %2009 = vmatprep.subr.mxu0 0.0
      %2010 = vmatpush1.msra.mxu0 0.0
      %2011 = vmatprep.subr.mxu0 0.0
      %2012 = vmatpush1.msra.mxu0 0.0
      %2013 = vmatprep.subr.mxu0 0.0
      %2014 = vmatpush1.msra.mxu0 0.0
      %2015 = vmatprep.subr.mxu0 0.0
      %2016 = vmatpush1.msra.mxu0 0.0
      %2017 = vmatprep.subr.mxu0 0.0
      %2018 = vmatpush1.msra.mxu0 0.0
      %2019 = vmatprep.subr.mxu0 0.0
      %2020 = vmatpush1.msra.mxu0 0.0
      %2021 = vmatprep.subr.mxu0 0.0
      %2022 = vmatpush1.msra.mxu0 0.0
      %2023 = vmatprep.subr.mxu0 0.0
      %2024 = vmatpush1.msra.mxu0 0.0
      %2025 = vmatprep.subr.mxu0 0.0
      %2026 = vmatpush1.msra.mxu0 0.0
      %2027 = vmatprep.subr.mxu0 0.0
      %2028 = vmatpush1.msra.mxu0 0.0
      %2029 = vmatprep.subr.mxu0 0.0
      %2030 = vmatpush1.msra.mxu0 0.0
      %2031 = vmatprep.subr.mxu0 0.0
      %2032 = vmatpush1.msra.mxu0 0.0
      %2033 = vmatprep.subr.mxu0 0.0
      %2034 = vmatpush1.msra.mxu0 0.0
      %2035 = vmatprep.subr.mxu0 0.0
      %2036 = vmatpush1.msra.mxu0 0.0
      %2037 = vmatprep.subr.mxu0 0.0
      %2038 = vmatpush1.msra.mxu0 0.0
      %2039 = vmatprep.subr.mxu0 0.0
      %2040 = vmatpush1.msra.mxu0 0.0
      %2041 = vmatprep.subr.mxu0 0.0
      %2042 = vmatpush1.msra.mxu0 0.0
      %2043 = vmatprep.subr.mxu0 0.0
      %2044 = vmatpush1.msra.mxu0 0.0
      %2045 = vmatprep.subr.mxu0 0.0
      %2046 = vmatpush1.msra.mxu0 0.0
      %2047 = vmatprep.subr.mxu0 0.0
      %2048 = vmatpush1.msra.mxu0 0.0
      %2049 = vmatprep.subr.mxu0 0.0
      %2050 = vmatpush1.msra.mxu0 0.0
      %2051 = vmatprep.subr.mxu0 0.0
      %2052 = vmatpush1.msra.mxu0 0.0
      %2053 = vmatprep.subr.mxu0 0.0
      %2054 = vmatpush1.msra.mxu0 0.0
      %2055 = vmatprep.mubr.f32.mxu0 0.0
      %2056 = vmatmul.mubr.f32.gmra.mrb[0].mxu0 %v1989
      %v2057 = vpop.f32.mrb[0].mxu0
      %v2058 = vadd.f32 0.0, %v2057
      %v2059 = vpop.f32.mrb[0].mxu0
      %2060 = vdwg.mxu0
      %2061 = vmatprep.subr.mxu0 0.0
      %2062 = vmatpush1.xpose.msra.mxu0 %v1527
      %2063 = vmatprep.subr.mxu0 0.0
      %2064 = vmatpush1.xpose.msra.mxu0 %v1530
      %2065 = vmatprep.subr.mxu0 0.0
      %2066 = vmatpush1.xpose.msra.mxu0 %v1533
      %2067 = vmatprep.subr.mxu0 0.0
      %2068 = vmatpush1.xpose.msra.mxu0 %v1536
      %2069 = vmatprep.subr.mxu0 0.0
      %2070 = vmatpush1.xpose.msra.mxu0 %v1539
      %2071 = vmatprep.subr.mxu0 0.0
      %2072 = vmatpush1.xpose.msra.mxu0 %v1542
      %2073 = vmatprep.subr.mxu0 0.0
      %2074 = vmatpush1.xpose.msra.mxu0 %v1545
      %2075 = vmatprep.subr.mxu0 0.0
      %2076 = vmatpush1.xpose.msra.mxu0 %v1548
      %2077 = vmatprep.subr.mxu0 0.0
      %2078 = vmatpush1.xpose.msra.mxu0 0.0
      %2079 = vmatprep.subr.mxu0 0.0
      %2080 = vmatpush1.xpose.msra.mxu0 0.0
      %2081 = vmatprep.subr.mxu0 0.0
      %2082 = vmatpush1.xpose.msra.mxu0 0.0
      %2083 = vmatprep.subr.mxu0 0.0
      %2084 = vmatpush1.xpose.msra.mxu0 0.0
      %2085 = vmatprep.subr.mxu0 0.0
      %2086 = vmatpush1.xpose.msra.mxu0 0.0
      %2087 = vmatprep.subr.mxu0 0.0
      %2088 = vmatpush1.xpose.msra.mxu0 0.0
      %2089 = vmatprep.subr.mxu0 0.0
      %2090 = vmatpush1.xpose.msra.mxu0 0.0
      %2091 = vmatprep.subr.mxu0 0.0
      %2092 = vmatpush1.xpose.msra.mxu0 0.0
      %2093 = vmatprep.subr.mxu0 0.0
      %2094 = vmatpush1.xpose.msra.mxu0 0.0
      %2095 = vmatprep.subr.mxu0 0.0
      %2096 = vmatpush1.xpose.msra.mxu0 0.0
      %2097 = vmatprep.subr.mxu0 0.0
      %2098 = vmatpush1.xpose.msra.mxu0 0.0
      %2099 = vmatprep.subr.mxu0 0.0
      %2100 = vmatpush1.xpose.msra.mxu0 0.0
      %2101 = vmatprep.subr.mxu0 0.0
      %2102 = vmatpush1.xpose.msra.mxu0 0.0
      %2103 = vmatprep.subr.mxu0 0.0
      %2104 = vmatpush1.xpose.msra.mxu0 0.0
      %2105 = vmatprep.subr.mxu0 0.0
      %2106 = vmatpush1.xpose.msra.mxu0 0.0
      %2107 = vmatprep.subr.mxu0 0.0
      %2108 = vmatpush1.xpose.msra.mxu0 0.0
      %2109 = vmatprep.subr.mxu0 0.0
      %2110 = vmatpush1.xpose.msra.mxu0 0.0
      %2111 = vmatprep.subr.mxu0 0.0
      %2112 = vmatpush1.xpose.msra.mxu0 0.0
      %2113 = vmatprep.subr.mxu0 0.0
      %2114 = vmatpush1.xpose.msra.mxu0 0.0
      %2115 = vmatprep.subr.mxu0 0.0
      %2116 = vmatpush1.xpose.msra.mxu0 0.0
      %2117 = vmatprep.subr.mxu0 0.0
      %2118 = vmatpush1.xpose.msra.mxu0 0.0
      %2119 = vmatprep.subr.mxu0 0.0
      %2120 = vmatpush1.xpose.msra.mxu0 0.0
      %2121 = vmatprep.subr.mxu0 0.0
      %2122 = vmatpush1.xpose.msra.mxu0 0.0
      %2123 = vmatprep.subr.mxu0 0.0
      %2124 = vmatpush1.xpose.msra.mxu0 0.0
      %2125 = vmatprep.mubr.f32.mxu0 0.0
      %2126 = vmatmul.mubr.f32.gmra.mrb[0].mxu0 %v1251
      %v2127 = vpop.f32.mrb[0].mxu0
      %v2128 = vadd.f32 %v2058, %v2127
      %v2129 = vpop.f32.mrb[0].mxu0
      %2130 = vdwg.mxu0
      %v2132 = vsel %vm578, %v1394, 0
      %2134 = vmatprep.subr.mxu0 0.0
      %2135 = vmatpush1.msra.mxu0 %v1451
      %2136 = vmatprep.subr.mxu0 0.0
      %2137 = vmatpush1.msra.mxu0 0.0
      %2138 = vmatprep.subr.mxu0 0.0
      %2139 = vmatpush1.msra.mxu0 0.0
      %2140 = vmatprep.subr.mxu0 0.0
      %2141 = vmatpush1.msra.mxu0 0.0
      %2142 = vmatprep.subr.mxu0 0.0
      %2143 = vmatpush1.msra.mxu0 0.0
      %2144 = vmatprep.subr.mxu0 0.0
      %2145 = vmatpush1.msra.mxu0 0.0
      %2146 = vmatprep.subr.mxu0 0.0
      %2147 = vmatpush1.msra.mxu0 0.0
      %2148 = vmatprep.subr.mxu0 0.0
      %2149 = vmatpush1.msra.mxu0 0.0
      %2150 = vmatprep.subr.mxu0 0.0
      %2151 = vmatpush1.msra.mxu0 0.0
      %2152 = vmatprep.subr.mxu0 0.0
      %2153 = vmatpush1.msra.mxu0 0.0
      %2154 = vmatprep.subr.mxu0 0.0
      %2155 = vmatpush1.msra.mxu0 0.0
      %2156 = vmatprep.subr.mxu0 0.0
      %2157 = vmatpush1.msra.mxu0 0.0
      %2158 = vmatprep.subr.mxu0 0.0
      %2159 = vmatpush1.msra.mxu0 0.0
      %2160 = vmatprep.subr.mxu0 0.0
      %2161 = vmatpush1.msra.mxu0 0.0
      %2162 = vmatprep.subr.mxu0 0.0
      %2163 = vmatpush1.msra.mxu0 0.0
      %2164 = vmatprep.subr.mxu0 0.0
      %2165 = vmatpush1.msra.mxu0 0.0
      %2166 = vmatprep.subr.mxu0 0.0
      %2167 = vmatpush1.msra.mxu0 0.0
      %2168 = vmatprep.subr.mxu0 0.0
      %2169 = vmatpush1.msra.mxu0 0.0
      %2170 = vmatprep.subr.mxu0 0.0
      %2171 = vmatpush1.msra.mxu0 0.0
      %2172 = vmatprep.subr.mxu0 0.0
      %2173 = vmatpush1.msra.mxu0 0.0
      %2174 = vmatprep.subr.mxu0 0.0
      %2175 = vmatpush1.msra.mxu0 0.0
      %2176 = vmatprep.subr.mxu0 0.0
      %2177 = vmatpush1.msra.mxu0 0.0
      %2178 = vmatprep.subr.mxu0 0.0
      %2179 = vmatpush1.msra.mxu0 0.0
      %2180 = vmatprep.subr.mxu0 0.0
      %2181 = vmatpush1.msra.mxu0 0.0
      %2182 = vmatprep.subr.mxu0 0.0
      %2183 = vmatpush1.msra.mxu0 0.0
      %2184 = vmatprep.subr.mxu0 0.0
      %2185 = vmatpush1.msra.mxu0 0.0
      %2186 = vmatprep.subr.mxu0 0.0
      %2187 = vmatpush1.msra.mxu0 0.0
      %2188 = vmatprep.subr.mxu0 0.0
      %2189 = vmatpush1.msra.mxu0 0.0
      %2190 = vmatprep.subr.mxu0 0.0
      %2191 = vmatpush1.msra.mxu0 0.0
      %2192 = vmatprep.subr.mxu0 0.0
      %2193 = vmatpush1.msra.mxu0 0.0
      %2194 = vmatprep.subr.mxu0 0.0
      %2195 = vmatpush1.msra.mxu0 0.0
      %2196 = vmatprep.subr.mxu0 0.0
      %2197 = vmatpush1.msra.mxu0 0.0
      %2198 = vmatprep.mubr.f32.mxu0 0.0
      %2199 = vmatmul.mubr.f32.gmra.mrb[0].mxu0 %v2132
      %v2200 = vpop.f32.mrb[0].mxu0
      %v2201 = vadd.f32 0.0, %v2200
      %v2202 = vpop.f32.mrb[0].mxu0
      %2203 = vdwg.mxu0
      %v2204 = vadd.f32 %v2128, %v2201
      %2205 = vxpose.xlu0.b32.start [1/16] %v1985, 128
      %2206 = vxpose.xlu0.b32.cont [2/16] 0.0, 128
      %2207 = vxpose.xlu0.b32.cont [3/16] 0.0, 128
      %2208 = vxpose.xlu0.b32.cont [4/16] 0.0, 128
      %2209 = vxpose.xlu0.b32.cont [5/16] 0.0, 128
      %2210 = vxpose.xlu0.b32.cont [6/16] 0.0, 128
      %2211 = vxpose.xlu0.b32.cont [7/16] 0.0, 128
      %2212 = vxpose.xlu0.b32.cont [8/16] 0.0, 128
      %2213 = vxpose.xlu0.b32.cont [9/16] 0.0, 128
      %2214 = vxpose.xlu0.b32.cont [10/16] 0.0, 128
      %2215 = vxpose.xlu0.b32.cont [11/16] 0.0, 128
      %2216 = vxpose.xlu0.b32.cont [12/16] 0.0, 128
      %2217 = vxpose.xlu0.b32.cont [13/16] 0.0, 128
      %2218 = vxpose.xlu0.b32.cont [14/16] 0.0, 128
      %2219 = vxpose.xlu0.b32.cont [15/16] 0.0, 128
      %2220 = vxpose.xlu0.b32.end [16/16] 0.0, 128
      %v2221 = vpop.trf.xlu0
      %v2222 = vpop.trf.xlu0
      %v2223 = vpop.trf.xlu0
      %v2224 = vpop.trf.xlu0
      %v2225 = vpop.trf.xlu0
      %v2226 = vpop.trf.xlu0
      %v2227 = vpop.trf.xlu0
      %v2228 = vpop.trf.xlu0
      %v2229 = vpop.trf.xlu0
      %v2230 = vpop.trf.xlu0
      %v2231 = vpop.trf.xlu0
      %v2232 = vpop.trf.xlu0
      %v2233 = vpop.trf.xlu0
      %v2234 = vpop.trf.xlu0
      %v2235 = vpop.trf.xlu0
      %v2236 = vpop.trf.xlu0
      %v2239 = vsel %vm578, %v2221, 0
      %v2242 = vsel %vm578, %v2222, 0
      %v2245 = vsel %vm578, %v2223, 0
      %v2248 = vsel %vm578, %v2224, 0
      %v2251 = vsel %vm578, %v2225, 0
      %v2254 = vsel %vm578, %v2226, 0
      %v2257 = vsel %vm578, %v2227, 0
      %v2260 = vsel %vm578, %v2228, 0
      %2262 = vmatprep.subr.mxu0 0.0
      %2263 = vmatpush1.msra.mxu0 %v987
      %2264 = vmatprep.subr.mxu0 0.0
      %2265 = vmatpush1.msra.mxu0 0.0
      %2266 = vmatprep.subr.mxu0 0.0
      %2267 = vmatpush1.msra.mxu0 0.0
      %2268 = vmatprep.subr.mxu0 0.0
      %2269 = vmatpush1.msra.mxu0 0.0
      %2270 = vmatprep.subr.mxu0 0.0
      %2271 = vmatpush1.msra.mxu0 0.0
      %2272 = vmatprep.subr.mxu0 0.0
      %2273 = vmatpush1.msra.mxu0 0.0
      %2274 = vmatprep.subr.mxu0 0.0
      %2275 = vmatpush1.msra.mxu0 0.0
      %2276 = vmatprep.subr.mxu0 0.0
      %2277 = vmatpush1.msra.mxu0 0.0
      %2278 = vmatprep.subr.mxu0 0.0
      %2279 = vmatpush1.msra.mxu0 0.0
      %2280 = vmatprep.subr.mxu0 0.0
      %2281 = vmatpush1.msra.mxu0 0.0
      %2282 = vmatprep.subr.mxu0 0.0
      %2283 = vmatpush1.msra.mxu0 0.0
      %2284 = vmatprep.subr.mxu0 0.0
      %2285 = vmatpush1.msra.mxu0 0.0
      %2286 = vmatprep.subr.mxu0 0.0
      %2287 = vmatpush1.msra.mxu0 0.0
      %2288 = vmatprep.subr.mxu0 0.0
      %2289 = vmatpush1.msra.mxu0 0.0
      %2290 = vmatprep.subr.mxu0 0.0
      %2291 = vmatpush1.msra.mxu0 0.0
      %2292 = vmatprep.subr.mxu0 0.0
      %2293 = vmatpush1.msra.mxu0 0.0
      %2294 = vmatprep.subr.mxu0 0.0
      %2295 = vmatpush1.msra.mxu0 0.0
      %2296 = vmatprep.subr.mxu0 0.0
      %2297 = vmatpush1.msra.mxu0 0.0
      %2298 = vmatprep.subr.mxu0 0.0
      %2299 = vmatpush1.msra.mxu0 0.0
      %2300 = vmatprep.subr.mxu0 0.0
      %2301 = vmatpush1.msra.mxu0 0.0
      %2302 = vmatprep.subr.mxu0 0.0
      %2303 = vmatpush1.msra.mxu0 0.0
      %2304 = vmatprep.subr.mxu0 0.0
      %2305 = vmatpush1.msra.mxu0 0.0
      %2306 = vmatprep.subr.mxu0 0.0
      %2307 = vmatpush1.msra.mxu0 0.0
      %2308 = vmatprep.subr.mxu0 0.0
      %2309 = vmatpush1.msra.mxu0 0.0
      %2310 = vmatprep.subr.mxu0 0.0
      %2311 = vmatpush1.msra.mxu0 0.0
      %2312 = vmatprep.subr.mxu0 0.0
      %2313 = vmatpush1.msra.mxu0 0.0
      %2314 = vmatprep.subr.mxu0 0.0
      %2315 = vmatpush1.msra.mxu0 0.0
      %2316 = vmatprep.subr.mxu0 0.0
      %2317 = vmatpush1.msra.mxu0 0.0
      %2318 = vmatprep.subr.mxu0 0.0
      %2319 = vmatpush1.msra.mxu0 0.0
      %2320 = vmatprep.subr.mxu0 0.0
      %2321 = vmatpush1.msra.mxu0 0.0
      %2322 = vmatprep.subr.mxu0 0.0
      %2323 = vmatpush1.msra.mxu0 0.0
      %2324 = vmatprep.subr.mxu0 0.0
      %2325 = vmatpush1.msra.mxu0 0.0
      %2326 = vmatprep.mubr.f32.mxu0 0.0
      %2327 = vmatmul.mubr.f32.gmra.mrb[0].mxu0 %v2239
      %v2328 = vpop.f32.mrb[0].mxu0
      %v2329 = vadd.f32 0.0, %v2328
      %v2330 = vpop.f32.mrb[0].mxu0
      %2331 = vmatprep.mubr.f32.mxu0 0.0
      %2332 = vmatmul.mubr.f32.gmra.mrb[0].mxu0 %v2242
      %v2333 = vpop.f32.mrb[0].mxu0
      %v2334 = vadd.f32 0.0, %v2333
      %v2335 = vpop.f32.mrb[0].mxu0
      %2336 = vmatprep.mubr.f32.mxu0 0.0
      %2337 = vmatmul.mubr.f32.gmra.mrb[0].mxu0 %v2245
      %v2338 = vpop.f32.mrb[0].mxu0
      %v2339 = vadd.f32 0.0, %v2338
      %v2340 = vpop.f32.mrb[0].mxu0
      %2341 = vmatprep.mubr.f32.mxu0 0.0
      %2342 = vmatmul.mubr.f32.gmra.mrb[0].mxu0 %v2248
      %v2343 = vpop.f32.mrb[0].mxu0
      %v2344 = vadd.f32 0.0, %v2343
      %v2345 = vpop.f32.mrb[0].mxu0
      %2346 = vmatprep.mubr.f32.mxu0 0.0
      %2347 = vmatmul.mubr.f32.gmra.mrb[0].mxu0 %v2251
      %v2348 = vpop.f32.mrb[0].mxu0
      %v2349 = vadd.f32 0.0, %v2348
      %v2350 = vpop.f32.mrb[0].mxu0
      %2351 = vmatprep.mubr.f32.mxu0 0.0
      %2352 = vmatmul.mubr.f32.gmra.mrb[0].mxu0 %v2254
      %v2353 = vpop.f32.mrb[0].mxu0
      %v2354 = vadd.f32 0.0, %v2353
      %v2355 = vpop.f32.mrb[0].mxu0
      %2356 = vmatprep.mubr.f32.mxu0 0.0
      %2357 = vmatmul.mubr.f32.gmra.mrb[0].mxu0 %v2257
      %v2358 = vpop.f32.mrb[0].mxu0
      %v2359 = vadd.f32 0.0, %v2358
      %v2360 = vpop.f32.mrb[0].mxu0
      %2361 = vmatprep.mubr.f32.mxu0 0.0
      %2362 = vmatmul.mubr.f32.gmra.mrb[0].mxu0 %v2260
      %v2363 = vpop.f32.mrb[0].mxu0
      %v2364 = vadd.f32 0.0, %v2363
      %v2365 = vpop.f32.mrb[0].mxu0
      %2366 = vdwg.mxu0
      %v2367 = vadd.f32 %v866, %v2329
      %v2368 = vadd.f32 %v867, %v2334
      %v2369 = vadd.f32 %v868, %v2339
      %v2370 = vadd.f32 %v869, %v2344
      %v2371 = vadd.f32 %v870, %v2349
      %v2372 = vadd.f32 %v871, %v2354
      %v2373 = vadd.f32 %v872, %v2359
      %v2374 = vadd.f32 %v873, %v2364
      %2375 = vxpose.xlu0.b32.start [1/16] %v1451, 128
      %2376 = vxpose.xlu0.b32.cont [2/16] 0.0, 128
      %2377 = vxpose.xlu0.b32.cont [3/16] 0.0, 128
      %2378 = vxpose.xlu0.b32.cont [4/16] 0.0, 128
      %2379 = vxpose.xlu0.b32.cont [5/16] 0.0, 128
      %2380 = vxpose.xlu0.b32.cont [6/16] 0.0, 128
      %2381 = vxpose.xlu0.b32.cont [7/16] 0.0, 128
      %2382 = vxpose.xlu0.b32.cont [8/16] 0.0, 128
      %2383 = vxpose.xlu0.b32.cont [9/16] 0.0, 128
      %2384 = vxpose.xlu0.b32.cont [10/16] 0.0, 128
      %2385 = vxpose.xlu0.b32.cont [11/16] 0.0, 128
      %2386 = vxpose.xlu0.b32.cont [12/16] 0.0, 128
      %2387 = vxpose.xlu0.b32.cont [13/16] 0.0, 128
      %2388 = vxpose.xlu0.b32.cont [14/16] 0.0, 128
      %2389 = vxpose.xlu0.b32.cont [15/16] 0.0, 128
      %2390 = vxpose.xlu0.b32.end [16/16] 0.0, 128
      %v2391 = vpop.trf.xlu0
      %v2392 = vpop.trf.xlu0
      %v2393 = vpop.trf.xlu0
      %v2394 = vpop.trf.xlu0
      %v2395 = vpop.trf.xlu0
      %v2396 = vpop.trf.xlu0
      %v2397 = vpop.trf.xlu0
      %v2398 = vpop.trf.xlu0
      %v2399 = vpop.trf.xlu0
      %v2400 = vpop.trf.xlu0
      %v2401 = vpop.trf.xlu0
      %v2402 = vpop.trf.xlu0
      %v2403 = vpop.trf.xlu0
      %v2404 = vpop.trf.xlu0
      %v2405 = vpop.trf.xlu0
      %v2406 = vpop.trf.xlu0
      %v2409 = vsel %vm578, %v2391, 0
      %v2412 = vsel %vm578, %v2392, 0
      %v2415 = vsel %vm578, %v2393, 0
      %v2418 = vsel %vm578, %v2394, 0
      %v2421 = vsel %vm578, %v2395, 0
      %v2424 = vsel %vm578, %v2396, 0
      %v2427 = vsel %vm578, %v2397, 0
      %v2430 = vsel %vm578, %v2398, 0
      %2432 = vmatprep.subr.mxu0 0.0
      %2433 = vmatpush1.msra.mxu0 %v1120
      %2434 = vmatprep.subr.mxu0 0.0
      %2435 = vmatpush1.msra.mxu0 0.0
      %2436 = vmatprep.subr.mxu0 0.0
      %2437 = vmatpush1.msra.mxu0 0.0
      %2438 = vmatprep.subr.mxu0 0.0
      %2439 = vmatpush1.msra.mxu0 0.0
      %2440 = vmatprep.subr.mxu0 0.0
      %2441 = vmatpush1.msra.mxu0 0.0
      %2442 = vmatprep.subr.mxu0 0.0
      %2443 = vmatpush1.msra.mxu0 0.0
      %2444 = vmatprep.subr.mxu0 0.0
      %2445 = vmatpush1.msra.mxu0 0.0
      %2446 = vmatprep.subr.mxu0 0.0
      %2447 = vmatpush1.msra.mxu0 0.0
      %2448 = vmatprep.subr.mxu0 0.0
      %2449 = vmatpush1.msra.mxu0 0.0
      %2450 = vmatprep.subr.mxu0 0.0
      %2451 = vmatpush1.msra.mxu0 0.0
      %2452 = vmatprep.subr.mxu0 0.0
      %2453 = vmatpush1.msra.mxu0 0.0
      %2454 = vmatprep.subr.mxu0 0.0
      %2455 = vmatpush1.msra.mxu0 0.0
      %2456 = vmatprep.subr.mxu0 0.0
      %2457 = vmatpush1.msra.mxu0 0.0
      %2458 = vmatprep.subr.mxu0 0.0
      %2459 = vmatpush1.msra.mxu0 0.0
      %2460 = vmatprep.subr.mxu0 0.0
      %2461 = vmatpush1.msra.mxu0 0.0
      %2462 = vmatprep.subr.mxu0 0.0
      %2463 = vmatpush1.msra.mxu0 0.0
      %2464 = vmatprep.subr.mxu0 0.0
      %2465 = vmatpush1.msra.mxu0 0.0
      %2466 = vmatprep.subr.mxu0 0.0
      %2467 = vmatpush1.msra.mxu0 0.0
      %2468 = vmatprep.subr.mxu0 0.0
      %2469 = vmatpush1.msra.mxu0 0.0
      %2470 = vmatprep.subr.mxu0 0.0
      %2471 = vmatpush1.msra.mxu0 0.0
      %2472 = vmatprep.subr.mxu0 0.0
      %2473 = vmatpush1.msra.mxu0 0.0
      %2474 = vmatprep.subr.mxu0 0.0
      %2475 = vmatpush1.msra.mxu0 0.0
      %2476 = vmatprep.subr.mxu0 0.0
      %2477 = vmatpush1.msra.mxu0 0.0
      %2478 = vmatprep.subr.mxu0 0.0
      %2479 = vmatpush1.msra.mxu0 0.0
      %2480 = vmatprep.subr.mxu0 0.0
      %2481 = vmatpush1.msra.mxu0 0.0
      %2482 = vmatprep.subr.mxu0 0.0
      %2483 = vmatpush1.msra.mxu0 0.0
      %2484 = vmatprep.subr.mxu0 0.0
      %2485 = vmatpush1.msra.mxu0 0.0
      %2486 = vmatprep.subr.mxu0 0.0
      %2487 = vmatpush1.msra.mxu0 0.0
      %2488 = vmatprep.subr.mxu0 0.0
      %2489 = vmatpush1.msra.mxu0 0.0
      %2490 = vmatprep.subr.mxu0 0.0
      %2491 = vmatpush1.msra.mxu0 0.0
      %2492 = vmatprep.subr.mxu0 0.0
      %2493 = vmatpush1.msra.mxu0 0.0
      %2494 = vmatprep.subr.mxu0 0.0
      %2495 = vmatpush1.msra.mxu0 0.0
      %2496 = vmatprep.mubr.f32.mxu0 0.0
      %2497 = vmatmul.mubr.f32.gmra.mrb[0].mxu0 %v2409
      %v2498 = vpop.f32.mrb[0].mxu0
      %v2499 = vadd.f32 0.0, %v2498
      %v2500 = vpop.f32.mrb[0].mxu0
      %2501 = vmatprep.mubr.f32.mxu0 0.0
      %2502 = vmatmul.mubr.f32.gmra.mrb[0].mxu0 %v2412
      %v2503 = vpop.f32.mrb[0].mxu0
      %v2504 = vadd.f32 0.0, %v2503
      %v2505 = vpop.f32.mrb[0].mxu0
      %2506 = vmatprep.mubr.f32.mxu0 0.0
      %2507 = vmatmul.mubr.f32.gmra.mrb[0].mxu0 %v2415
      %v2508 = vpop.f32.mrb[0].mxu0
      %v2509 = vadd.f32 0.0, %v2508
      %v2510 = vpop.f32.mrb[0].mxu0
      %2511 = vmatprep.mubr.f32.mxu0 0.0
      %2512 = vmatmul.mubr.f32.gmra.mrb[0].mxu0 %v2418
      %v2513 = vpop.f32.mrb[0].mxu0
      %v2514 = vadd.f32 0.0, %v2513
      %v2515 = vpop.f32.mrb[0].mxu0
      %2516 = vmatprep.mubr.f32.mxu0 0.0
      %2517 = vmatmul.mubr.f32.gmra.mrb[0].mxu0 %v2421
      %v2518 = vpop.f32.mrb[0].mxu0
      %v2519 = vadd.f32 0.0, %v2518
      %v2520 = vpop.f32.mrb[0].mxu0
      %2521 = vmatprep.mubr.f32.mxu0 0.0
      %2522 = vmatmul.mubr.f32.gmra.mrb[0].mxu0 %v2424
      %v2523 = vpop.f32.mrb[0].mxu0
      %v2524 = vadd.f32 0.0, %v2523
      %v2525 = vpop.f32.mrb[0].mxu0
      %2526 = vmatprep.mubr.f32.mxu0 0.0
      %2527 = vmatmul.mubr.f32.gmra.mrb[0].mxu0 %v2427
      %v2528 = vpop.f32.mrb[0].mxu0
      %v2529 = vadd.f32 0.0, %v2528
      %v2530 = vpop.f32.mrb[0].mxu0
      %2531 = vmatprep.mubr.f32.mxu0 0.0
      %2532 = vmatmul.mubr.f32.gmra.mrb[0].mxu0 %v2430
      %v2533 = vpop.f32.mrb[0].mxu0
      %v2534 = vadd.f32 0.0, %v2533
      %v2535 = vpop.f32.mrb[0].mxu0
      %2536 = vdwg.mxu0
      %v2537 = vadd.f32 %v2367, %v2499
      %v2538 = vadd.f32 %v2368, %v2504
      %v2539 = vadd.f32 %v2369, %v2509
      %v2540 = vadd.f32 %v2370, %v2514
      %v2541 = vadd.f32 %v2371, %v2519
      %v2542 = vadd.f32 %v2372, %v2524
      %v2543 = vadd.f32 %v2373, %v2529
      %v2544 = vadd.f32 %v2374, %v2534
      %v2545 = vlaneseq
      %v2546 = vshrl.u32 %v2545, 7
      %v2547 = vsub.s32 7, %v2546
      %v2548 = vrot.slane %v654, %v2547
      %v2549 = vmul.f32 %v2537, %v2548
      %v2550 = vmul.f32 %v2538, %v2548
      %v2551 = vmul.f32 %v2539, %v2548
      %v2552 = vmul.f32 %v2540, %v2548
      %v2553 = vmul.f32 %v2541, %v2548
      %v2554 = vmul.f32 %v2542, %v2548
      %v2555 = vmul.f32 %v2543, %v2548
      %v2556 = vmul.f32 %v2544, %v2548
      %2557 = vst.msk [vmem:[#allocation2] sm:$0xff] %vm988, %v2549
      %2558 = vst.msk [vmem:[#allocation2 + $0x8] sm:$0xff] %vm988, %v2550
      %2559 = vst.msk [vmem:[#allocation2 + $0x10] sm:$0xff] %vm988, %v2551
      %2560 = vst.msk [vmem:[#allocation2 + $0x18] sm:$0xff] %vm988, %v2552
      %2561 = vst.msk [vmem:[#allocation2 + $0x20] sm:$0xff] %vm988, %v2553
      %2562 = vst.msk [vmem:[#allocation2 + $0x28] sm:$0xff] %vm988, %v2554
      %2563 = vst.msk [vmem:[#allocation2 + $0x30] sm:$0xff] %vm988, %v2555
      %2564 = vst.msk [vmem:[#allocation2 + $0x38] sm:$0xff] %vm988, %v2556
      %v2565 = vcombine.high %v2204, 0.0
      %v2567 = vunpack.c.l.s4 1983009808
      %v2568 = vunpack.c.0.s8 %v2567
      %v2569 = vlaneseq
      %v2570 = vshrl.u32 %v2569, 7
      %v2571 = vsub.s32 %v2568, %v2570
      %v2572 = vrot.slane %v2204, %v2571
      %v2574 = vunpack.c.l.s4 1983009808
      %v2575 = vunpack.c.0.s8 %v2574
      %v2576 = vlaneseq
      %v2577 = vshrl.u32 %v2576, 7
      %v2578 = vsub.s32 %v2575, %v2577
      %v2579 = vrot.slane %v2565, %v2578
      %v2580 = vcombine.high %v2572, 0.0
      %v2582 = vunpack.c.l.s4 1934713408
      %v2583 = vunpack.c.0.s8 %v2582
      %v2584 = vlaneseq
      %v2585 = vshrl.u32 %v2584, 7
      %v2586 = vsub.s32 %v2583, %v2585
      %v2587 = vrot.slane %v2572, %v2586
      %v2589 = vunpack.c.l.s4 1934713408
      %v2590 = vunpack.c.0.s8 %v2589
      %v2591 = vlaneseq
      %v2592 = vshrl.u32 %v2591, 7
      %v2593 = vsub.s32 %v2590, %v2592
      %v2594 = vrot.slane %v2580, %v2593
      %v2595 = vcombine.high %v2579, 0.0
      %v2597 = vunpack.c.l.s4 1934713408
      %v2598 = vunpack.c.0.s8 %v2597
      %v2599 = vlaneseq
      %v2600 = vshrl.u32 %v2599, 7
      %v2601 = vsub.s32 %v2598, %v2600
      %v2602 = vrot.slane %v2579, %v2601
      %v2604 = vunpack.c.l.s4 1934713408
      %v2605 = vunpack.c.0.s8 %v2604
      %v2606 = vlaneseq
      %v2607 = vshrl.u32 %v2606, 7
      %v2608 = vsub.s32 %v2605, %v2607
      %v2609 = vrot.slane %v2595, %v2608
      %v2610 = vcombine.high %v2587, 0.0
      %v2611 = vcombine.high %v2594, 0.0
      %v2612 = vcombine.high %v2602, 0.0
      %v2613 = vcombine.high %v2609, 0.0
      %vm2614 = vcmask 516096
      %2615 = vst.msk [vmem:[%s449] sm:$0x1] %vm2614, %v2587
      %2616 = vst.msk [vmem:[%s449 + $0x1] sm:$0x1] %vm2614, %v2610
      %2617 = vst.msk [vmem:[%s449 + $0x2] sm:$0x1] %vm2614, %v2594
      %2618 = vst.msk [vmem:[%s449 + $0x3] sm:$0x1] %vm2614, %v2611
      %2619 = vst.msk [vmem:[%s449 + $0x4] sm:$0x1] %vm2614, %v2602
      %2620 = vst.msk [vmem:[%s449 + $0x5] sm:$0x1] %vm2614, %v2612
      %2621 = vst.msk [vmem:[%s449 + $0x6] sm:$0x1] %vm2614, %v2609
      %2622 = vst.msk [vmem:[%s449 + $0x7] sm:$0x1] %vm2614, %v2613
      %s2623 = smul.u32 8, %s22
      %p2624 = scmp.lt.s32.totalorder %s21, 1
      %s2625 = scalar_select %p2624, %s21, 1
      %p2626 = scmp.lt.s32.totalorder %s2623, 7
      %s2627 = scalar_select %p2626, %s2623, 7
      %s2628 = smul.addr %s2625, 8
      %s2629 = sadd.s32 %s2627, %s2628
      %s2630 = scalar_lea.vmem %s6, %s2629
      // Predicated region
      $region49: #{rwkv7_forward.22} parent=43 // pred_check
        %p2631 = pneg %p217
      $region50: #{rwkv7_forward.22} parent=43 // pred_check_branch
        %2633 = sbr.rel (%p2631) target = $region52
      $region51: #{rwkv7_forward.22} parent=43 // pred_region
        %s2634 = smul.u32 8, %s22
      $region52: #{rwkv7_forward.22} parent=43 // pred_fallthru
        _
    $region44: #{rwkv7_forward.22} parent=5 // pred_fallthru
      _
    %p2635 = scmp.le.s32.totalorder 2, %s12
    // Predicated region
    $region53: #{rwkv7_forward.22} parent=5 // pred_check
      %p2636 = pneg %p2635
    $region54: #{rwkv7_forward.22} parent=5 // pred_check_branch
      %2638 = sbr.rel (%p2636) target = $region56
    $region55: #{rwkv7_forward.22} parent=5 // pred_region
      %s2639 = ssub.s32 %s12, 2
      // Predicated region
      $region57: #{rwkv7_forward.22} parent=55 // pred_check
        %p2640 = pneg %p223
      $region58: #{rwkv7_forward.22} parent=55 // pred_check_branch
        %2642 = sbr.rel (%p2640) target = $region60
      $region59: #{rwkv7_forward.22} parent=55 // pred_region
        %s2643 = smul.u32 8, %s24
        %p2644 = scmp.lt.s32.totalorder %s23, 1
        %s2645 = scalar_select %p2644, %s23, 1
        %p2646 = scmp.lt.s32.totalorder %s2643, 7
        %s2647 = scalar_select %p2646, %s2643, 7
        %s2648 = smul.addr %s2645, 8
        %s2649 = sadd.s32 %s2647, %s2648
        %s2650 = scalar_lea.vmem %s6, %s2649
      $region60: #{rwkv7_forward.22} parent=55 // pred_fallthru
        _
    $region56: #{rwkv7_forward.22} parent=5 // pred_fallthru
      _
  $region6: #{rwkv7_forward.22} parent=0 // loop_footer
    %s16 = sadd.s32 1, %s12
  $region7: #{rwkv7_forward.22} parent=0 // loop_footer_branch
    %11 = sbr.rel target = $region3
  $region8: #{rwkv7_forward.22} parent=0 // loop_exit
    _

// kernel: rwkv7_forward.37
$region0: #{rwkv7_forward.37}
  #allocation0 [shape = 'u32[]', space=smem, size = 0x4, offset = 0x4, fixed_abs, tag = 'smem constant byte address 0x4 - core index']
  #allocation1 [shape = 'u32[144,128]{1,0:T(1,128)}', space=vmem, size = 0x12000, scoped, tag = 'internal scratch']
  %s0 = inlined_call_operand.vmem [shape: f32[16,64], index: 0, kind: input, shape index: {}]
  %s1 = inlined_call_operand.vmem [shape: f32[64,128], index: 1, kind: input, shape index: {}]
  %s2 = inlined_call_operand.vmem [shape: f32[1,128], index: 2, kind: input, shape index: {}]
  %s3 = inlined_call_operand.hbm [shape: f32[16,128], index: 3, kind: output, shape index: {}]
  %s4 = sld [smem:[#allocation0]]
  $region22: #{rwkv7_forward.37} parent=0
    _
  %s6 = ssub.s32 1, %s4
  %s7 = scalar_select 0, %s6, %s4
  $region1: #{rwkv7_forward.37} parent=0
    #allocation2 [shape = 'u8[8192]{0}', space=vmem, size = 0x2000, scoped, tag = 'output window, operand 0, single buffered']
    #allocation3 [shape = 's32[1]{0}', space=sflag, size = 0x4, scoped, tag = 'scoped memory for rwkv7_forward.37']
    %8 = vsyncpa [#allocation3], 0
    // Predicated region
    $region2: #{rwkv7_forward.37} parent=1 // pred_check
      _
    $region3: #{rwkv7_forward.37} parent=1 // pred_check_branch
      %10 = sbr.rel (0) target = $region5
    $region4: #{rwkv7_forward.37} parent=1 // pred_region
      _
    $region5: #{rwkv7_forward.37} parent=1 // pred_fallthru
      _
    // Predicated region
    $region6: #{rwkv7_forward.37} parent=1 // pred_check
      _
    $region7: #{rwkv7_forward.37} parent=1 // pred_check_branch
      %12 = sbr.rel (0) target = $region9
    $region8: #{rwkv7_forward.37} parent=1 // pred_region
      _
    $region9: #{rwkv7_forward.37} parent=1 // pred_fallthru
      _
    // Predicated region
    $region10: #{rwkv7_forward.37} parent=1 // pred_check
      _
    $region11: #{rwkv7_forward.37} parent=1 // pred_check_branch
      %14 = sbr.rel (0) target = $region13
    $region12: #{rwkv7_forward.37} parent=1 // pred_region
      _
    $region13: #{rwkv7_forward.37} parent=1 // pred_fallthru
      _
    %v15 = vld [vmem:[%s0] sm:$0xff]
    %v16 = vld [vmem:[%s0 + $0x8] sm:$0xff]
    %v17 = vld [vmem:[%s1] sm:$0xff]
    %v18 = vld [vmem:[%s1 + $0x8] sm:$0xff]
    %v19 = vld [vmem:[%s1 + $0x10] sm:$0xff]
    %v20 = vld [vmem:[%s1 + $0x18] sm:$0xff]
    %v21 = vld [vmem:[%s1 + $0x20] sm:$0xff]
    %v22 = vld [vmem:[%s1 + $0x28] sm:$0xff]
    %v23 = vld [vmem:[%s1 + $0x30] sm:$0xff]
    %v24 = vld [vmem:[%s1 + $0x38] sm:$0xff]
    %v25 = vld [vmem:[%s2] sm:$0x1]
    %v27 = vlaneseq
    %v28 = vshrl.u32 %v27, 7
    %v29 = vsub.s32 0, %v28
    %v30 = vrot.slane %v25, %v29
    %vm32 = vcmask 523264
    %v34 = vsel %vm32, %v15, 0
    %v37 = vsel %vm32, %v16, 0
    %39 = vmatprep.subr.mxu0 0.0
    %40 = vmatpush1.msra.mxu0 %v17
    %41 = vmatprep.subr.mxu0 0.0
    %42 = vmatpush1.msra.mxu0 %v18
    %43 = vmatprep.subr.mxu0 0.0
    %44 = vmatpush1.msra.mxu0 %v19
    %45 = vmatprep.subr.mxu0 0.0
    %46 = vmatpush1.msra.mxu0 %v20
    %47 = vmatprep.subr.mxu0 0.0
    %48 = vmatpush1.msra.mxu0 %v21
    %49 = vmatprep.subr.mxu0 0.0
    %50 = vmatpush1.msra.mxu0 %v22
    %51 = vmatprep.subr.mxu0 0.0
    %52 = vmatpush1.msra.mxu0 %v23
    %53 = vmatprep.subr.mxu0 0.0
    %54 = vmatpush1.msra.mxu0 %v24
    %55 = vmatprep.subr.mxu0 0.0
    %56 = vmatpush1.msra.mxu0 0.0
    %57 = vmatprep.subr.mxu0 0.0
    %58 = vmatpush1.msra.mxu0 0.0
    %59 = vmatprep.subr.mxu0 0.0
    %60 = vmatpush1.msra.mxu0 0.0
    %61 = vmatprep.subr.mxu0 0.0
    %62 = vmatpush1.msra.mxu0 0.0
    %63 = vmatprep.subr.mxu0 0.0
    %64 = vmatpush1.msra.mxu0 0.0
    %65 = vmatprep.subr.mxu0 0.0
    %66 = vmatpush1.msra.mxu0 0.0
    %67 = vmatprep.subr.mxu0 0.0
    %68 = vmatpush1.msra.mxu0 0.0
    %69 = vmatprep.subr.mxu0 0.0
    %70 = vmatpush1.msra.mxu0 0.0
    %71 = vmatprep.subr.mxu0 0.0
    %72 = vmatpush1.msra.mxu0 0.0
    %73 = vmatprep.subr.mxu0 0.0
    %74 = vmatpush1.msra.mxu0 0.0
    %75 = vmatprep.subr.mxu0 0.0
    %76 = vmatpush1.msra.mxu0 0.0
    %77 = vmatprep.subr.mxu0 0.0
    %78 = vmatpush1.msra.mxu0 0.0
    %79 = vmatprep.subr.mxu0 0.0
    %80 = vmatpush1.msra.mxu0 0.0
    %81 = vmatprep.subr.mxu0 0.0
    %82 = vmatpush1.msra.mxu0 0.0
    %83 = vmatprep.subr.mxu0 0.0
    %84 = vmatpush1.msra.mxu0 0.0
    %85 = vmatprep.subr.mxu0 0.0
    %86 = vmatpush1.msra.mxu0 0.0
    %87 = vmatprep.subr.mxu0 0.0
    %88 = vmatpush1.msra.mxu0 0.0
    %89 = vmatprep.subr.mxu0 0.0
    %90 = vmatpush1.msra.mxu0 0.0
    %91 = vmatprep.subr.mxu0 0.0
    %92 = vmatpush1.msra.mxu0 0.0
    %93 = vmatprep.subr.mxu0 0.0
    %94 = vmatpush1.msra.mxu0 0.0
    %95 = vmatprep.subr.mxu0 0.0
    %96 = vmatpush1.msra.mxu0 0.0
    %97 = vmatprep.subr.mxu0 0.0
    %98 = vmatpush1.msra.mxu0 0.0
    %99 = vmatprep.subr.mxu0 0.0
    %100 = vmatpush1.msra.mxu0 0.0
    %101 = vmatprep.subr.mxu0 0.0
    %102 = vmatpush1.msra.mxu0 0.0
    %103 = vmatprep.mubr.f32.mxu0 0.0
    %104 = vmatmul.mubr.f32.gmra.mrb[0].mxu0 %v34
    %v105 = vpop.f32.mrb[0].mxu0
    %v106 = vadd.f32 %v30, %v105
    %v107 = vpop.f32.mrb[0].mxu0
    %108 = vmatprep.mubr.f32.mxu0 0.0
    %109 = vmatmul.mubr.f32.gmra.mrb[0].mxu0 %v37
    %v110 = vpop.f32.mrb[0].mxu0
    %v111 = vadd.f32 %v30, %v110
    %v112 = vpop.f32.mrb[0].mxu0
    %113 = vdwg.mxu0
    %114 = vst [vmem:[#allocation2] sm:$0xff] %v106
    %115 = vst [vmem:[#allocation2 + $0x8] sm:$0xff] %v111
    // Predicated region
    $region14: #{rwkv7_forward.37} parent=1 // pred_check
      _
    $region15: #{rwkv7_forward.37} parent=1 // pred_check_branch
      %117 = sbr.rel (0) target = $region17
    $region16: #{rwkv7_forward.37} parent=1 // pred_region
      %s119 = ssub.s32 256, 256
      %120 = vsyncadd [#allocation3], %s119
      %s121 = sshll.u32 [#allocation2], 4
      %s122 = int_to_ptr.vmem [resolvable:$true] %s121
      %127 = dma.vmem_to_hbm [thread:$0]  %s122, 256, %s3, [#allocation3], 128, 128, 8
    $region17: #{rwkv7_forward.37} parent=1 // pred_fallthru
      _
    // Predicated region
    $region18: #{rwkv7_forward.37} parent=1 // pred_check
      _
    $region19: #{rwkv7_forward.37} parent=1 // pred_check_branch
      %129 = sbr.rel (0) target = $region21
    $region20: #{rwkv7_forward.37} parent=1 // pred_region
      %130 = dma.done [#allocation3], 256
    $region21: #{rwkv7_forward.37} parent=1 // pred_fallthru
      _
    %131 = vsyncpa [#allocation3], 1

// kernel: rwkv7_forward.29
$region0: #{rwkv7_forward.29}
  #allocation0 [shape = 'u32[]', space=smem, size = 0x4, offset = 0x4, fixed_abs, tag = 'smem constant byte address 0x4 - core index']
  #allocation1 [shape = 'u32[144,128]{1,0:T(1,128)}', space=vmem, size = 0x12000, scoped, tag = 'internal scratch']
  %s0 = inlined_call_operand.vmem [shape: f32[16,64], index: 0, kind: input, shape index: {}]
  %s1 = inlined_call_operand.vmem [shape: f32[16,64], index: 1, kind: input, shape index: {}]
  %s2 = inlined_call_operand.vmem [shape: f32[6,64], index: 2, kind: input, shape index: {}]
  %s3 = inlined_call_operand.vmem [shape: f32[64,64], index: 3, kind: input, shape index: {}]
  %s4 = inlined_call_operand.vmem [shape: f32[64,64], index: 4, kind: input, shape index: {}]
  %s5 = inlined_call_operand.vmem [shape: f32[64,64], index: 5, kind: input, shape index: {}]
  %s6 = inlined_call_operand.vmem [shape: f32[64,16], index: 6, kind: input, shape index: {}]
  %s7 = inlined_call_operand.vmem [shape: f32[16,64], index: 7, kind: input, shape index: {}]
  %s8 = inlined_call_operand.vmem [shape: f32[1,64], index: 8, kind: input, shape index: {}]
  %s9 = inlined_call_operand.vmem [shape: f32[64,16], index: 9, kind: input, shape index: {}]
  %s10 = inlined_call_operand.vmem [shape: f32[16,64], index: 10, kind: input, shape index: {}]
  %s11 = inlined_call_operand.vmem [shape: f32[1,64], index: 11, kind: input, shape index: {}]
  %s12 = inlined_call_operand.vmem [shape: f32[64,16], index: 12, kind: input, shape index: {}]
  %s13 = inlined_call_operand.vmem [shape: f32[16,64], index: 13, kind: input, shape index: {}]
  %s14 = inlined_call_operand.vmem [shape: f32[64,8], index: 14, kind: input, shape index: {}]
  %s15 = inlined_call_operand.vmem [shape: f32[8,64], index: 15, kind: input, shape index: {}]
  %s16 = inlined_call_operand.vmem [shape: f32[1,64], index: 16, kind: input, shape index: {}]
  %s17 = inlined_call_operand.vmem [shape: f32[16,64], index: 17, kind: output, shape index: {0}]
  %s18 = inlined_call_operand.vmem [shape: f32[16,64], index: 18, kind: output, shape index: {1}]
  %s19 = inlined_call_operand.vmem [shape: f32[16,64], index: 19, kind: output, shape index: {2}]
  %s20 = inlined_call_operand.vmem [shape: f32[16,64], index: 20, kind: output, shape index: {3}]
  %s21 = inlined_call_operand.vmem [shape: f32[16,64], index: 21, kind: output, shape index: {4}]
  %s22 = inlined_call_operand.vmem [shape: f32[16,64], index: 22, kind: output, shape index: {5}]
  %s23 = inlined_call_operand.vmem [shape: f32[16,64], index: 23, kind: output, shape index: {6}]
  %24 = xla_tuple %s17, %s18, %s19, %s20, %s21, %s22, %s23
  %s25 = sld [smem:[#allocation0]]
  $region126: #{rwkv7_forward.29} parent=0
    _
  %s27 = ssub.s32 1, %s25
  %s28 = scalar_select 0, %s27, %s25
  // Predicated region
  $region2: #{rwkv7_forward.29} parent=0 // pred_check
    _
  $region3: #{rwkv7_forward.29} parent=0 // pred_check_branch
    %30 = sbr.rel (0) target = $region5
  $region4: #{rwkv7_forward.29} parent=0 // pred_region
    _
  $region5: #{rwkv7_forward.29} parent=0 // pred_fallthru
    _
  // Predicated region
  $region6: #{rwkv7_forward.29} parent=0 // pred_check
    _
  $region7: #{rwkv7_forward.29} parent=0 // pred_check_branch
    %32 = sbr.rel (0) target = $region9
  $region8: #{rwkv7_forward.29} parent=0 // pred_region
    _
  $region9: #{rwkv7_forward.29} parent=0 // pred_fallthru
    _
  // Predicated region
  $region10: #{rwkv7_forward.29} parent=0 // pred_check
    _
  $region11: #{rwkv7_forward.29} parent=0 // pred_check_branch
    %34 = sbr.rel (0) target = $region13
  $region12: #{rwkv7_forward.29} parent=0 // pred_region
    _
  $region13: #{rwkv7_forward.29} parent=0 // pred_fallthru
    _
  // Predicated region
  $region14: #{rwkv7_forward.29} parent=0 // pred_check
    _
  $region15: #{rwkv7_forward.29} parent=0 // pred_check_branch
    %36 = sbr.rel (0) target = $region17
  $region16: #{rwkv7_forward.29} parent=0 // pred_region
    _
  $region17: #{rwkv7_forward.29} parent=0 // pred_fallthru
    _
  // Predicated region
  $region18: #{rwkv7_forward.29} parent=0 // pred_check
    _
  $region19: #{rwkv7_forward.29} parent=0 // pred_check_branch
    %38 = sbr.rel (0) target = $region21
  $region20: #{rwkv7_forward.29} parent=0 // pred_region
    _
  $region21: #{rwkv7_forward.29} parent=0 // pred_fallthru
    _
  // Predicated region
  $region22: #{rwkv7_forward.29} parent=0 // pred_check
    _
  $region23: #{rwkv7_forward.29} parent=0 // pred_check_branch
    %40 = sbr.rel (0) target = $region25
  $region24: #{rwkv7_forward.29} parent=0 // pred_region
    _
  $region25: #{rwkv7_forward.29} parent=0 // pred_fallthru
    _
  // Predicated region
  $region26: #{rwkv7_forward.29} parent=0 // pred_check
    _
  $region27: #{rwkv7_forward.29} parent=0 // pred_check_branch
    %42 = sbr.rel (0) target = $region29
  $region28: #{rwkv7_forward.29} parent=0 // pred_region
    _
  $region29: #{rwkv7_forward.29} parent=0 // pred_fallthru
    _
  // Predicated region
  $region30: #{rwkv7_forward.29} parent=0 // pred_check
    _
  $region31: #{rwkv7_forward.29} parent=0 // pred_check_branch
    %44 = sbr.rel (0) target = $region33
  $region32: #{rwkv7_forward.29} parent=0 // pred_region
    _
  $region33: #{rwkv7_forward.29} parent=0 // pred_fallthru
    _
  // Predicated region
  $region34: #{rwkv7_forward.29} parent=0 // pred_check
    _
  $region35: #{rwkv7_forward.29} parent=0 // pred_check_branch
    %46 = sbr.rel (0) target = $region37
  $region36: #{rwkv7_forward.29} parent=0 // pred_region
    _
  $region37: #{rwkv7_forward.29} parent=0 // pred_fallthru
    _
  // Predicated region
  $region38: #{rwkv7_forward.29} parent=0 // pred_check
    _
  $region39: #{rwkv7_forward.29} parent=0 // pred_check_branch
    %48 = sbr.rel (0) target = $region41
  $region40: #{rwkv7_forward.29} parent=0 // pred_region
    _
  $region41: #{rwkv7_forward.29} parent=0 // pred_fallthru
    _
  // Predicated region
  $region42: #{rwkv7_forward.29} parent=0 // pred_check
    _
  $region43: #{rwkv7_forward.29} parent=0 // pred_check_branch
    %50 = sbr.rel (0) target = $region45
  $region44: #{rwkv7_forward.29} parent=0 // pred_region
    _
  $region45: #{rwkv7_forward.29} parent=0 // pred_fallthru
    _
  // Predicated region
  $region46: #{rwkv7_forward.29} parent=0 // pred_check
    _
  $region47: #{rwkv7_forward.29} parent=0 // pred_check_branch
    %52 = sbr.rel (0) target = $region49
  $region48: #{rwkv7_forward.29} parent=0 // pred_region
    _
  $region49: #{rwkv7_forward.29} parent=0 // pred_fallthru
    _
  // Predicated region
  $region50: #{rwkv7_forward.29} parent=0 // pred_check
    _
  $region51: #{rwkv7_forward.29} parent=0 // pred_check_branch
    %54 = sbr.rel (0) target = $region53
  $region52: #{rwkv7_forward.29} parent=0 // pred_region
    _
  $region53: #{rwkv7_forward.29} parent=0 // pred_fallthru
    _
  // Predicated region
  $region54: #{rwkv7_forward.29} parent=0 // pred_check
    _
  $region55: #{rwkv7_forward.29} parent=0 // pred_check_branch
    %56 = sbr.rel (0) target = $region57
  $region56: #{rwkv7_forward.29} parent=0 // pred_region
    _
  $region57: #{rwkv7_forward.29} parent=0 // pred_fallthru
    _
  // Predicated region
  $region58: #{rwkv7_forward.29} parent=0 // pred_check
    _
  $region59: #{rwkv7_forward.29} parent=0 // pred_check_branch
    %58 = sbr.rel (0) target = $region61
  $region60: #{rwkv7_forward.29} parent=0 // pred_region
    _
  $region61: #{rwkv7_forward.29} parent=0 // pred_fallthru
    _
  // Predicated region
  $region62: #{rwkv7_forward.29} parent=0 // pred_check
    _
  $region63: #{rwkv7_forward.29} parent=0 // pred_check_branch
    %60 = sbr.rel (0) target = $region65
  $region64: #{rwkv7_forward.29} parent=0 // pred_region
    _
  $region65: #{rwkv7_forward.29} parent=0 // pred_fallthru
    _
  // Predicated region
  $region66: #{rwkv7_forward.29} parent=0 // pred_check
    _
  $region67: #{rwkv7_forward.29} parent=0 // pred_check_branch
    %62 = sbr.rel (0) target = $region69
  $region68: #{rwkv7_forward.29} parent=0 // pred_region
    _
  $region69: #{rwkv7_forward.29} parent=0 // pred_fallthru
    _
  %v63 = vld [vmem:[%s0] sm:$0xff]
  %v64 = vld [vmem:[%s0 + $0x8] sm:$0xff]
  %v65 = vld [vmem:[%s1] sm:$0xff]
  %v66 = vld [vmem:[%s1 + $0x8] sm:$0xff]
  %v67 = vld [vmem:[%s2] sm:$0x3f]
  %v68 = vlaneseq
  %v69 = vshrl.u32 %v68, 7
  %v70 = vsub.s32 0, %v69
  %v71 = vrot.slane %v67, %v70
  %v72 = vmul.f32 %v65, %v71
  %v73 = vmul.f32 %v66, %v71
  %v74 = vadd.f32 %v63, %v72
  %v75 = vadd.f32 %v64, %v73
  %v76 = vlaneseq
  %v77 = vshrl.u32 %v76, 7
  %v78 = vsub.s32 1, %v77
  %v79 = vrot.slane %v67, %v78
  %v80 = vmul.f32 %v65, %v79
  %v81 = vmul.f32 %v66, %v79
  %v82 = vadd.f32 %v63, %v80
  %v83 = vadd.f32 %v64, %v81
  %v84 = vlaneseq
  %v85 = vshrl.u32 %v84, 7
  %v86 = vsub.s32 2, %v85
  %v87 = vrot.slane %v67, %v86
  %v88 = vmul.f32 %v65, %v87
  %v89 = vmul.f32 %v66, %v87
  %v90 = vadd.f32 %v63, %v88
  %v91 = vadd.f32 %v64, %v89
  %v92 = vlaneseq
  %v93 = vshrl.u32 %v92, 7
  %v94 = vsub.s32 3, %v93
  %v95 = vrot.slane %v67, %v94
  %v96 = vmul.f32 %v65, %v95
  %v97 = vmul.f32 %v66, %v95
  %v98 = vadd.f32 %v63, %v96
  %v99 = vadd.f32 %v64, %v97
  %v100 = vlaneseq
  %v101 = vshrl.u32 %v100, 7
  %v102 = vsub.s32 4, %v101
  %v103 = vrot.slane %v67, %v102
  %v104 = vmul.f32 %v65, %v103
  %v105 = vmul.f32 %v66, %v103
  %v106 = vadd.f32 %v63, %v104
  %v107 = vadd.f32 %v64, %v105
  %v108 = vlaneseq
  %v109 = vshrl.u32 %v108, 7
  %v110 = vsub.s32 5, %v109
  %v111 = vrot.slane %v67, %v110
  %v112 = vmul.f32 %v65, %v111
  %v113 = vmul.f32 %v66, %v111
  %v114 = vadd.f32 %v63, %v112
  %v115 = vadd.f32 %v64, %v113
  %v116 = vld [vmem:[%s3] sm:$0xff]
  %v117 = vld [vmem:[%s3 + $0x8] sm:$0xff]
  %v118 = vld [vmem:[%s3 + $0x10] sm:$0xff]
  %v119 = vld [vmem:[%s3 + $0x18] sm:$0xff]
  %v120 = vld [vmem:[%s3 + $0x20] sm:$0xff]
  %v121 = vld [vmem:[%s3 + $0x28] sm:$0xff]
  %v122 = vld [vmem:[%s3 + $0x30] sm:$0xff]
  %v123 = vld [vmem:[%s3 + $0x38] sm:$0xff]
  %vm124 = vcmask 523264
  %v126 = vsel %vm124, %v74, 0
  %v129 = vsel %vm124, %v75, 0
  %131 = vmatprep.subr.mxu0 0.0
  %132 = vmatpush1.msra.mxu0 %v116
  %133 = vmatprep.subr.mxu0 0.0
  %134 = vmatpush1.msra.mxu0 %v117
  %135 = vmatprep.subr.mxu0 0.0
  %136 = vmatpush1.msra.mxu0 %v118
  %137 = vmatprep.subr.mxu0 0.0
  %138 = vmatpush1.msra.mxu0 %v119
  %139 = vmatprep.subr.mxu0 0.0
  %140 = vmatpush1.msra.mxu0 %v120
  %141 = vmatprep.subr.mxu0 0.0
  %142 = vmatpush1.msra.mxu0 %v121
  %143 = vmatprep.subr.mxu0 0.0
  %144 = vmatpush1.msra.mxu0 %v122
  %145 = vmatprep.subr.mxu0 0.0
  %146 = vmatpush1.msra.mxu0 %v123
  %147 = vmatprep.subr.mxu0 0.0
  %148 = vmatpush1.msra.mxu0 0.0
  %149 = vmatprep.subr.mxu0 0.0
  %150 = vmatpush1.msra.mxu0 0.0
  %151 = vmatprep.subr.mxu0 0.0
  %152 = vmatpush1.msra.mxu0 0.0
  %153 = vmatprep.subr.mxu0 0.0
  %154 = vmatpush1.msra.mxu0 0.0
  %155 = vmatprep.subr.mxu0 0.0
  %156 = vmatpush1.msra.mxu0 0.0
  %157 = vmatprep.subr.mxu0 0.0
  %158 = vmatpush1.msra.mxu0 0.0
  %159 = vmatprep.subr.mxu0 0.0
  %160 = vmatpush1.msra.mxu0 0.0
  %161 = vmatprep.subr.mxu0 0.0
  %162 = vmatpush1.msra.mxu0 0.0
  %163 = vmatprep.subr.mxu0 0.0
  %164 = vmatpush1.msra.mxu0 0.0
  %165 = vmatprep.subr.mxu0 0.0
  %166 = vmatpush1.msra.mxu0 0.0
  %167 = vmatprep.subr.mxu0 0.0
  %168 = vmatpush1.msra.mxu0 0.0
  %169 = vmatprep.subr.mxu0 0.0
  %170 = vmatpush1.msra.mxu0 0.0
  %171 = vmatprep.subr.mxu0 0.0
  %172 = vmatpush1.msra.mxu0 0.0
  %173 = vmatprep.subr.mxu0 0.0
  %174 = vmatpush1.msra.mxu0 0.0
  %175 = vmatprep.subr.mxu0 0.0
  %176 = vmatpush1.msra.mxu0 0.0
  %177 = vmatprep.subr.mxu0 0.0
  %178 = vmatpush1.msra.mxu0 0.0
  %179 = vmatprep.subr.mxu0 0.0
  %180 = vmatpush1.msra.mxu0 0.0
  %181 = vmatprep.subr.mxu0 0.0
  %182 = vmatpush1.msra.mxu0 0.0
  %183 = vmatprep.subr.mxu0 0.0
  %184 = vmatpush1.msra.mxu0 0.0
  %185 = vmatprep.subr.mxu0 0.0
  %186 = vmatpush1.msra.mxu0 0.0
  %187 = vmatprep.subr.mxu0 0.0
  %188 = vmatpush1.msra.mxu0 0.0
  %189 = vmatprep.subr.mxu0 0.0
  %190 = vmatpush1.msra.mxu0 0.0
  %191 = vmatprep.subr.mxu0 0.0
  %192 = vmatpush1.msra.mxu0 0.0
  %193 = vmatprep.subr.mxu0 0.0
  %194 = vmatpush1.msra.mxu0 0.0
  %195 = vmatprep.mubr.f32.mxu0 0.0
  %196 = vmatmul.mubr.f32.gmra.mrb[0].mxu0 %v126
  %v197 = vpop.f32.mrb[0].mxu0
  %v198 = vadd.f32 0.0, %v197
  %v199 = vpop.f32.mrb[0].mxu0
  %200 = vmatprep.mubr.f32.mxu0 0.0
  %201 = vmatmul.mubr.f32.gmra.mrb[0].mxu0 %v129
  %v202 = vpop.f32.mrb[0].mxu0
  %v203 = vadd.f32 0.0, %v202
  %v204 = vpop.f32.mrb[0].mxu0
  %205 = vdwg.mxu0
  %206 = vst.msk [vmem:[%s17] sm:$0xff] %vm124, %v198
  %207 = vst.msk [vmem:[%s17 + $0x8] sm:$0xff] %vm124, %v203
  %v208 = vld [vmem:[%s4] sm:$0xff]
  %v209 = vld [vmem:[%s4 + $0x8] sm:$0xff]
  %v210 = vld [vmem:[%s4 + $0x10] sm:$0xff]
  %v211 = vld [vmem:[%s4 + $0x18] sm:$0xff]
  %v212 = vld [vmem:[%s4 + $0x20] sm:$0xff]
  %v213 = vld [vmem:[%s4 + $0x28] sm:$0xff]
  %v214 = vld [vmem:[%s4 + $0x30] sm:$0xff]
  %v215 = vld [vmem:[%s4 + $0x38] sm:$0xff]
  %v217 = vsel %vm124, %v90, 0
  %v220 = vsel %vm124, %v91, 0
  %222 = vmatprep.subr.mxu0 0.0
  %223 = vmatpush1.msra.mxu0 %v208
  %224 = vmatprep.subr.mxu0 0.0
  %225 = vmatpush1.msra.mxu0 %v209
  %226 = vmatprep.subr.mxu0 0.0
  %227 = vmatpush1.msra.mxu0 %v210
  %228 = vmatprep.subr.mxu0 0.0
  %229 = vmatpush1.msra.mxu0 %v211
  %230 = vmatprep.subr.mxu0 0.0
  %231 = vmatpush1.msra.mxu0 %v212
  %232 = vmatprep.subr.mxu0 0.0
  %233 = vmatpush1.msra.mxu0 %v213
  %234 = vmatprep.subr.mxu0 0.0
  %235 = vmatpush1.msra.mxu0 %v214
  %236 = vmatprep.subr.mxu0 0.0
  %237 = vmatpush1.msra.mxu0 %v215
  %238 = vmatprep.subr.mxu0 0.0
  %239 = vmatpush1.msra.mxu0 0.0
  %240 = vmatprep.subr.mxu0 0.0
  %241 = vmatpush1.msra.mxu0 0.0
  %242 = vmatprep.subr.mxu0 0.0
  %243 = vmatpush1.msra.mxu0 0.0
  %244 = vmatprep.subr.mxu0 0.0
  %245 = vmatpush1.msra.mxu0 0.0
  %246 = vmatprep.subr.mxu0 0.0
  %247 = vmatpush1.msra.mxu0 0.0
  %248 = vmatprep.subr.mxu0 0.0
  %249 = vmatpush1.msra.mxu0 0.0
  %250 = vmatprep.subr.mxu0 0.0
  %251 = vmatpush1.msra.mxu0 0.0
  %252 = vmatprep.subr.mxu0 0.0
  %253 = vmatpush1.msra.mxu0 0.0
  %254 = vmatprep.subr.mxu0 0.0
  %255 = vmatpush1.msra.mxu0 0.0
  %256 = vmatprep.subr.mxu0 0.0
  %257 = vmatpush1.msra.mxu0 0.0
  %258 = vmatprep.subr.mxu0 0.0
  %259 = vmatpush1.msra.mxu0 0.0
  %260 = vmatprep.subr.mxu0 0.0
  %261 = vmatpush1.msra.mxu0 0.0
  %262 = vmatprep.subr.mxu0 0.0
  %263 = vmatpush1.msra.mxu0 0.0
  %264 = vmatprep.subr.mxu0 0.0
  %265 = vmatpush1.msra.mxu0 0.0
  %266 = vmatprep.subr.mxu0 0.0
  %267 = vmatpush1.msra.mxu0 0.0
  %268 = vmatprep.subr.mxu0 0.0
  %269 = vmatpush1.msra.mxu0 0.0
  %270 = vmatprep.subr.mxu0 0.0
  %271 = vmatpush1.msra.mxu0 0.0
  %272 = vmatprep.subr.mxu0 0.0
  %273 = vmatpush1.msra.mxu0 0.0
  %274 = vmatprep.subr.mxu0 0.0
  %275 = vmatpush1.msra.mxu0 0.0
  %276 = vmatprep.subr.mxu0 0.0
  %277 = vmatpush1.msra.mxu0 0.0
  %278 = vmatprep.subr.mxu0 0.0
  %279 = vmatpush1.msra.mxu0 0.0
  %280 = vmatprep.subr.mxu0 0.0
  %281 = vmatpush1.msra.mxu0 0.0
  %282 = vmatprep.subr.mxu0 0.0
  %283 = vmatpush1.msra.mxu0 0.0
  %284 = vmatprep.subr.mxu0 0.0
  %285 = vmatpush1.msra.mxu0 0.0
  %286 = vmatprep.mubr.f32.mxu0 0.0
  %287 = vmatmul.mubr.f32.gmra.mrb[0].mxu0 %v217
  %v288 = vpop.f32.mrb[0].mxu0
  %v289 = vadd.f32 0.0, %v288
  %v290 = vpop.f32.mrb[0].mxu0
  %291 = vmatprep.mubr.f32.mxu0 0.0
  %292 = vmatmul.mubr.f32.gmra.mrb[0].mxu0 %v220
  %v293 = vpop.f32.mrb[0].mxu0
  %v294 = vadd.f32 0.0, %v293
  %v295 = vpop.f32.mrb[0].mxu0
  %296 = vdwg.mxu0
  %297 = vst.msk [vmem:[%s18] sm:$0xff] %vm124, %v289
  %298 = vst.msk [vmem:[%s18 + $0x8] sm:$0xff] %vm124, %v294
  %v299 = vld [vmem:[%s5] sm:$0xff]
  %v300 = vld [vmem:[%s5 + $0x8] sm:$0xff]
  %v301 = vld [vmem:[%s5 + $0x10] sm:$0xff]
  %v302 = vld [vmem:[%s5 + $0x18] sm:$0xff]
  %v303 = vld [vmem:[%s5 + $0x20] sm:$0xff]
  %v304 = vld [vmem:[%s5 + $0x28] sm:$0xff]
  %v305 = vld [vmem:[%s5 + $0x30] sm:$0xff]
  %v306 = vld [vmem:[%s5 + $0x38] sm:$0xff]
  %v308 = vsel %vm124, %v98, 0
  %v311 = vsel %vm124, %v99, 0
  %313 = vmatprep.subr.mxu0 0.0
  %314 = vmatpush1.msra.mxu0 %v299
  %315 = vmatprep.subr.mxu0 0.0
  %316 = vmatpush1.msra.mxu0 %v300
  %317 = vmatprep.subr.mxu0 0.0
  %318 = vmatpush1.msra.mxu0 %v301
  %319 = vmatprep.subr.mxu0 0.0
  %320 = vmatpush1.msra.mxu0 %v302
  %321 = vmatprep.subr.mxu0 0.0
  %322 = vmatpush1.msra.mxu0 %v303
  %323 = vmatprep.subr.mxu0 0.0
  %324 = vmatpush1.msra.mxu0 %v304
  %325 = vmatprep.subr.mxu0 0.0
  %326 = vmatpush1.msra.mxu0 %v305
  %327 = vmatprep.subr.mxu0 0.0
  %328 = vmatpush1.msra.mxu0 %v306
  %329 = vmatprep.subr.mxu0 0.0
  %330 = vmatpush1.msra.mxu0 0.0
  %331 = vmatprep.subr.mxu0 0.0
  %332 = vmatpush1.msra.mxu0 0.0
  %333 = vmatprep.subr.mxu0 0.0
  %334 = vmatpush1.msra.mxu0 0.0
  %335 = vmatprep.subr.mxu0 0.0
  %336 = vmatpush1.msra.mxu0 0.0
  %337 = vmatprep.subr.mxu0 0.0
  %338 = vmatpush1.msra.mxu0 0.0
  %339 = vmatprep.subr.mxu0 0.0
  %340 = vmatpush1.msra.mxu0 0.0
  %341 = vmatprep.subr.mxu0 0.0
  %342 = vmatpush1.msra.mxu0 0.0
  %343 = vmatprep.subr.mxu0 0.0
  %344 = vmatpush1.msra.mxu0 0.0
  %345 = vmatprep.subr.mxu0 0.0
  %346 = vmatpush1.msra.mxu0 0.0
  %347 = vmatprep.subr.mxu0 0.0
  %348 = vmatpush1.msra.mxu0 0.0
  %349 = vmatprep.subr.mxu0 0.0
  %350 = vmatpush1.msra.mxu0 0.0
  %351 = vmatprep.subr.mxu0 0.0
  %352 = vmatpush1.msra.mxu0 0.0
  %353 = vmatprep.subr.mxu0 0.0
  %354 = vmatpush1.msra.mxu0 0.0
  %355 = vmatprep.subr.mxu0 0.0
  %356 = vmatpush1.msra.mxu0 0.0
  %357 = vmatprep.subr.mxu0 0.0
  %358 = vmatpush1.msra.mxu0 0.0
  %359 = vmatprep.subr.mxu0 0.0
  %360 = vmatpush1.msra.mxu0 0.0
  %361 = vmatprep.subr.mxu0 0.0
  %362 = vmatpush1.msra.mxu0 0.0
  %363 = vmatprep.subr.mxu0 0.0
  %364 = vmatpush1.msra.mxu0 0.0
  %365 = vmatprep.subr.mxu0 0.0
  %366 = vmatpush1.msra.mxu0 0.0
  %367 = vmatprep.subr.mxu0 0.0
  %368 = vmatpush1.msra.mxu0 0.0
  %369 = vmatprep.subr.mxu0 0.0
  %370 = vmatpush1.msra.mxu0 0.0
  %371 = vmatprep.subr.mxu0 0.0
  %372 = vmatpush1.msra.mxu0 0.0
  %373 = vmatprep.subr.mxu0 0.0
  %374 = vmatpush1.msra.mxu0 0.0
  %375 = vmatprep.subr.mxu0 0.0
  %376 = vmatpush1.msra.mxu0 0.0
  %377 = vmatprep.mubr.f32.mxu0 0.0
  %378 = vmatmul.mubr.f32.gmra.mrb[0].mxu0 %v308
  %v379 = vpop.f32.mrb[0].mxu0
  %v380 = vadd.f32 0.0, %v379
  %v381 = vpop.f32.mrb[0].mxu0
  %382 = vmatprep.mubr.f32.mxu0 0.0
  %383 = vmatmul.mubr.f32.gmra.mrb[0].mxu0 %v311
  %v384 = vpop.f32.mrb[0].mxu0
  %v385 = vadd.f32 0.0, %v384
  %v386 = vpop.f32.mrb[0].mxu0
  %387 = vdwg.mxu0
  %388 = vst.msk [vmem:[%s19] sm:$0xff] %vm124, %v380
  %389 = vst.msk [vmem:[%s19 + $0x8] sm:$0xff] %vm124, %v385
  %v390 = vld [vmem:[%s6] sm:$0xff]
  %v391 = vld [vmem:[%s6 + $0x8] sm:$0xff]
  %v392 = vld [vmem:[%s6 + $0x10] sm:$0xff]
  %v393 = vld [vmem:[%s6 + $0x18] sm:$0xff]
  %v394 = vld [vmem:[%s6 + $0x20] sm:$0xff]
  %v395 = vld [vmem:[%s6 + $0x28] sm:$0xff]
  %v396 = vld [vmem:[%s6 + $0x30] sm:$0xff]
  %v397 = vld [vmem:[%s6 + $0x38] sm:$0xff]
  %v399 = vsel %vm124, %v82, 0
  %v402 = vsel %vm124, %v83, 0
  %404 = vmatprep.subr.mxu0 0.0
  %405 = vmatpush1.msra.mxu0 %v390
  %406 = vmatprep.subr.mxu0 0.0
  %407 = vmatpush1.msra.mxu0 %v391
  %408 = vmatprep.subr.mxu0 0.0
  %409 = vmatpush1.msra.mxu0 %v392
  %410 = vmatprep.subr.mxu0 0.0
  %411 = vmatpush1.msra.mxu0 %v393
  %412 = vmatprep.subr.mxu0 0.0
  %413 = vmatpush1.msra.mxu0 %v394
  %414 = vmatprep.subr.mxu0 0.0
  %415 = vmatpush1.msra.mxu0 %v395
  %416 = vmatprep.subr.mxu0 0.0
  %417 = vmatpush1.msra.mxu0 %v396
  %418 = vmatprep.subr.mxu0 0.0
  %419 = vmatpush1.msra.mxu0 %v397
  %420 = vmatprep.subr.mxu0 0.0
  %421 = vmatpush1.msra.mxu0 0.0
  %422 = vmatprep.subr.mxu0 0.0
  %423 = vmatpush1.msra.mxu0 0.0
  %424 = vmatprep.subr.mxu0 0.0
  %425 = vmatpush1.msra.mxu0 0.0
  %426 = vmatprep.subr.mxu0 0.0
  %427 = vmatpush1.msra.mxu0 0.0
  %428 = vmatprep.subr.mxu0 0.0
  %429 = vmatpush1.msra.mxu0 0.0
  %430 = vmatprep.subr.mxu0 0.0
  %431 = vmatpush1.msra.mxu0 0.0
  %432 = vmatprep.subr.mxu0 0.0
  %433 = vmatpush1.msra.mxu0 0.0
  %434 = vmatprep.subr.mxu0 0.0
  %435 = vmatpush1.msra.mxu0 0.0
  %436 = vmatprep.subr.mxu0 0.0
  %437 = vmatpush1.msra.mxu0 0.0
  %438 = vmatprep.subr.mxu0 0.0
  %439 = vmatpush1.msra.mxu0 0.0
  %440 = vmatprep.subr.mxu0 0.0
  %441 = vmatpush1.msra.mxu0 0.0
  %442 = vmatprep.subr.mxu0 0.0
  %443 = vmatpush1.msra.mxu0 0.0
  %444 = vmatprep.subr.mxu0 0.0
  %445 = vmatpush1.msra.mxu0 0.0
  %446 = vmatprep.subr.mxu0 0.0
  %447 = vmatpush1.msra.mxu0 0.0
  %448 = vmatprep.subr.mxu0 0.0
  %449 = vmatpush1.msra.mxu0 0.0
  %450 = vmatprep.subr.mxu0 0.0
  %451 = vmatpush1.msra.mxu0 0.0
  %452 = vmatprep.subr.mxu0 0.0
  %453 = vmatpush1.msra.mxu0 0.0
  %454 = vmatprep.subr.mxu0 0.0
  %455 = vmatpush1.msra.mxu0 0.0
  %456 = vmatprep.subr.mxu0 0.0
  %457 = vmatpush1.msra.mxu0 0.0
  %458 = vmatprep.subr.mxu0 0.0
  %459 = vmatpush1.msra.mxu0 0.0
  %460 = vmatprep.subr.mxu0 0.0
  %461 = vmatpush1.msra.mxu0 0.0
  %462 = vmatprep.subr.mxu0 0.0
  %463 = vmatpush1.msra.mxu0 0.0
  %464 = vmatprep.subr.mxu0 0.0
  %465 = vmatpush1.msra.mxu0 0.0
  %466 = vmatprep.subr.mxu0 0.0
  %467 = vmatpush1.msra.mxu0 0.0
  %468 = vmatprep.mubr.f32.mxu0 0.0
  %469 = vmatmul.mubr.f32.gmra.mrb[0].mxu0 %v399
  %v470 = vpop.f32.mrb[0].mxu0
  %v471 = vadd.f32 0.0, %v470
  %v472 = vpop.f32.mrb[0].mxu0
  %473 = vmatprep.mubr.f32.mxu0 0.0
  %474 = vmatmul.mubr.f32.gmra.mrb[0].mxu0 %v402
  %v475 = vpop.f32.mrb[0].mxu0
  %v476 = vadd.f32 0.0, %v475
  %v477 = vpop.f32.mrb[0].mxu0
  %478 = vdwg.mxu0
  %v479 = vtanh.pop %v471
  %v480 = vtanh.pop %v476
  %v481 = vld [vmem:[%s7] sm:$0xff]
  %v482 = vld [vmem:[%s7 + $0x8] sm:$0xff]
  %v483 = vld [vmem:[%s8] sm:$0x1]
  %v485 = vlaneseq
  %v486 = vshrl.u32 %v485, 7
  %v487 = vsub.s32 0, %v486
  %v488 = vrot.slane %v483, %v487
  %vm490 = vcmask 130048
  %v492 = vsel %vm490, %v479, 0
  %v495 = vsel %vm490, %v480, 0
  %497 = vmatprep.subr.mxu0 0.0
  %498 = vmatpush1.msra.mxu0 %v481
  %499 = vmatprep.subr.mxu0 0.0
  %500 = vmatpush1.msra.mxu0 %v482
  %501 = vmatprep.subr.mxu0 0.0
  %502 = vmatpush1.msra.mxu0 0.0
  %503 = vmatprep.subr.mxu0 0.0
  %504 = vmatpush1.msra.mxu0 0.0
  %505 = vmatprep.subr.mxu0 0.0
  %506 = vmatpush1.msra.mxu0 0.0
  %507 = vmatprep.subr.mxu0 0.0
  %508 = vmatpush1.msra.mxu0 0.0
  %509 = vmatprep.subr.mxu0 0.0
  %510 = vmatpush1.msra.mxu0 0.0
  %511 = vmatprep.subr.mxu0 0.0
  %512 = vmatpush1.msra.mxu0 0.0
  %513 = vmatprep.subr.mxu0 0.0
  %514 = vmatpush1.msra.mxu0 0.0
  %515 = vmatprep.subr.mxu0 0.0
  %516 = vmatpush1.msra.mxu0 0.0
  %517 = vmatprep.subr.mxu0 0.0
  %518 = vmatpush1.msra.mxu0 0.0
  %519 = vmatprep.subr.mxu0 0.0
  %520 = vmatpush1.msra.mxu0 0.0
  %521 = vmatprep.subr.mxu0 0.0
  %522 = vmatpush1.msra.mxu0 0.0
  %523 = vmatprep.subr.mxu0 0.0
  %524 = vmatpush1.msra.mxu0 0.0
  %525 = vmatprep.subr.mxu0 0.0
  %526 = vmatpush1.msra.mxu0 0.0
  %527 = vmatprep.subr.mxu0 0.0
  %528 = vmatpush1.msra.mxu0 0.0
  %529 = vmatprep.subr.mxu0 0.0
  %530 = vmatpush1.msra.mxu0 0.0
  %531 = vmatprep.subr.mxu0 0.0
  %532 = vmatpush1.msra.mxu0 0.0
  %533 = vmatprep.subr.mxu0 0.0
  %534 = vmatpush1.msra.mxu0 0.0
  %535 = vmatprep.subr.mxu0 0.0
  %536 = vmatpush1.msra.mxu0 0.0
  %537 = vmatprep.subr.mxu0 0.0
  %538 = vmatpush1.msra.mxu0 0.0
  %539 = vmatprep.subr.mxu0 0.0
  %540 = vmatpush1.msra.mxu0 0.0
  %541 = vmatprep.subr.mxu0 0.0
  %542 = vmatpush1.msra.mxu0 0.0
  %543 = vmatprep.subr.mxu0 0.0
  %544 = vmatpush1.msra.mxu0 0.0
  %545 = vmatprep.subr.mxu0 0.0
  %546 = vmatpush1.msra.mxu0 0.0
  %547 = vmatprep.subr.mxu0 0.0
  %548 = vmatpush1.msra.mxu0 0.0
  %549 = vmatprep.subr.mxu0 0.0
  %550 = vmatpush1.msra.mxu0 0.0
  %551 = vmatprep.subr.mxu0 0.0
  %552 = vmatpush1.msra.mxu0 0.0
  %553 = vmatprep.subr.mxu0 0.0
  %554 = vmatpush1.msra.mxu0 0.0
  %555 = vmatprep.subr.mxu0 0.0
  %556 = vmatpush1.msra.mxu0 0.0
  %557 = vmatprep.subr.mxu0 0.0
  %558 = vmatpush1.msra.mxu0 0.0
  %559 = vmatprep.subr.mxu0 0.0
  %560 = vmatpush1.msra.mxu0 0.0
  %561 = vmatprep.mubr.f32.mxu0 0.0
  %562 = vmatmul.mubr.f32.gmra.mrb[0].mxu0 %v492
  %v563 = vpop.f32.mrb[0].mxu0
  %v564 = vadd.f32 %v488, %v563
  %v565 = vpop.f32.mrb[0].mxu0
  %566 = vmatprep.mubr.f32.mxu0 0.0
  %567 = vmatmul.mubr.f32.gmra.mrb[0].mxu0 %v495
  %v568 = vpop.f32.mrb[0].mxu0
  %v569 = vadd.f32 %v488, %v568
  %v570 = vpop.f32.mrb[0].mxu0
  %571 = vdwg.mxu0
  %v572 = vsub.f32 0.0, %v564
  %v573 = vsub.f32 0.0, %v569
  %v574 = vmul.f32 %v572, 1.442695
  %v575 = vpow.pop %v574
  %v576 = vmul.f32 %v573, 1.442695
  %v577 = vpow.pop %v576
  %v578 = vadd.f32 %v575, 1.0
  %v579 = vadd.f32 %v577, 1.0
  %v580 = vrcp.pop %v578
  %v581 = vmul.f32 1.0, %v580
  %v582 = vrcp.pop %v579
  %v583 = vmul.f32 1.0, %v582
  %v584 = vmul.f32 %v581, -0.60653067
  %v585 = vmul.f32 %v583, -0.60653067
  %586 = vst.msk [vmem:[%s20] sm:$0xff] %vm124, %v584
  %587 = vst.msk [vmem:[%s20 + $0x8] sm:$0xff] %vm124, %v585
  %v588 = vld [vmem:[%s9] sm:$0xff]
  %v589 = vld [vmem:[%s9 + $0x8] sm:$0xff]
  %v590 = vld [vmem:[%s9 + $0x10] sm:$0xff]
  %v591 = vld [vmem:[%s9 + $0x18] sm:$0xff]
  %v592 = vld [vmem:[%s9 + $0x20] sm:$0xff]
  %v593 = vld [vmem:[%s9 + $0x28] sm:$0xff]
  %v594 = vld [vmem:[%s9 + $0x30] sm:$0xff]
  %v595 = vld [vmem:[%s9 + $0x38] sm:$0xff]
  %v597 = vsel %vm124, %v106, 0
  %v600 = vsel %vm124, %v107, 0
  %602 = vmatprep.subr.mxu0 0.0
  %603 = vmatpush1.msra.mxu0 %v588
  %604 = vmatprep.subr.mxu0 0.0
  %605 = vmatpush1.msra.mxu0 %v589
  %606 = vmatprep.subr.mxu0 0.0
  %607 = vmatpush1.msra.mxu0 %v590
  %608 = vmatprep.subr.mxu0 0.0
  %609 = vmatpush1.msra.mxu0 %v591
  %610 = vmatprep.subr.mxu0 0.0
  %611 = vmatpush1.msra.mxu0 %v592
  %612 = vmatprep.subr.mxu0 0.0
  %613 = vmatpush1.msra.mxu0 %v593
  %614 = vmatprep.subr.mxu0 0.0
  %615 = vmatpush1.msra.mxu0 %v594
  %616 = vmatprep.subr.mxu0 0.0
  %617 = vmatpush1.msra.mxu0 %v595
  %618 = vmatprep.subr.mxu0 0.0
  %619 = vmatpush1.msra.mxu0 0.0
  %620 = vmatprep.subr.mxu0 0.0
  %621 = vmatpush1.msra.mxu0 0.0
  %622 = vmatprep.subr.mxu0 0.0
  %623 = vmatpush1.msra.mxu0 0.0
  %624 = vmatprep.subr.mxu0 0.0
  %625 = vmatpush1.msra.mxu0 0.0
  %626 = vmatprep.subr.mxu0 0.0
  %627 = vmatpush1.msra.mxu0 0.0
  %628 = vmatprep.subr.mxu0 0.0
  %629 = vmatpush1.msra.mxu0 0.0
  %630 = vmatprep.subr.mxu0 0.0
  %631 = vmatpush1.msra.mxu0 0.0
  %632 = vmatprep.subr.mxu0 0.0
  %633 = vmatpush1.msra.mxu0 0.0
  %634 = vmatprep.subr.mxu0 0.0
  %635 = vmatpush1.msra.mxu0 0.0
  %636 = vmatprep.subr.mxu0 0.0
  %637 = vmatpush1.msra.mxu0 0.0
  %638 = vmatprep.subr.mxu0 0.0
  %639 = vmatpush1.msra.mxu0 0.0
  %640 = vmatprep.subr.mxu0 0.0
  %641 = vmatpush1.msra.mxu0 0.0
  %642 = vmatprep.subr.mxu0 0.0
  %643 = vmatpush1.msra.mxu0 0.0
  %644 = vmatprep.subr.mxu0 0.0
  %645 = vmatpush1.msra.mxu0 0.0
  %646 = vmatprep.subr.mxu0 0.0
  %647 = vmatpush1.msra.mxu0 0.0
  %648 = vmatprep.subr.mxu0 0.0
  %649 = vmatpush1.msra.mxu0 0.0
  %650 = vmatprep.subr.mxu0 0.0
  %651 = vmatpush1.msra.mxu0 0.0
  %652 = vmatprep.subr.mxu0 0.0
  %653 = vmatpush1.msra.mxu0 0.0
  %654 = vmatprep.subr.mxu0 0.0
  %655 = vmatpush1.msra.mxu0 0.0
  %656 = vmatprep.subr.mxu0 0.0
  %657 = vmatpush1.msra.mxu0 0.0
  %658 = vmatprep.subr.mxu0 0.0
  %659 = vmatpush1.msra.mxu0 0.0
  %660 = vmatprep.subr.mxu0 0.0
  %661 = vmatpush1.msra.mxu0 0.0
  %662 = vmatprep.subr.mxu0 0.0
  %663 = vmatpush1.msra.mxu0 0.0
  %664 = vmatprep.subr.mxu0 0.0
  %665 = vmatpush1.msra.mxu0 0.0
  %666 = vmatprep.mubr.f32.mxu0 0.0
  %667 = vmatmul.mubr.f32.gmra.mrb[0].mxu0 %v597
  %v668 = vpop.f32.mrb[0].mxu0
  %v669 = vadd.f32 0.0, %v668
  %v670 = vpop.f32.mrb[0].mxu0
  %671 = vmatprep.mubr.f32.mxu0 0.0
  %672 = vmatmul.mubr.f32.gmra.mrb[0].mxu0 %v600
  %v673 = vpop.f32.mrb[0].mxu0
  %v674 = vadd.f32 0.0, %v673
  %v675 = vpop.f32.mrb[0].mxu0
  %676 = vdwg.mxu0
  %v677 = vld [vmem:[%s10] sm:$0xff]
  %v678 = vld [vmem:[%s10 + $0x8] sm:$0xff]
  %v679 = vld [vmem:[%s11] sm:$0x1]
  %v681 = vlaneseq
  %v682 = vshrl.u32 %v681, 7
  %v683 = vsub.s32 0, %v682
  %v684 = vrot.slane %v679, %v683
  %v687 = vsel %vm490, %v669, 0
  %v690 = vsel %vm490, %v674, 0
  %692 = vmatprep.subr.mxu0 0.0
  %693 = vmatpush1.msra.mxu0 %v677
  %694 = vmatprep.subr.mxu0 0.0
  %695 = vmatpush1.msra.mxu0 %v678
  %696 = vmatprep.subr.mxu0 0.0
  %697 = vmatpush1.msra.mxu0 0.0
  %698 = vmatprep.subr.mxu0 0.0
  %699 = vmatpush1.msra.mxu0 0.0
  %700 = vmatprep.subr.mxu0 0.0
  %701 = vmatpush1.msra.mxu0 0.0
  %702 = vmatprep.subr.mxu0 0.0
  %703 = vmatpush1.msra.mxu0 0.0
  %704 = vmatprep.subr.mxu0 0.0
  %705 = vmatpush1.msra.mxu0 0.0
  %706 = vmatprep.subr.mxu0 0.0
  %707 = vmatpush1.msra.mxu0 0.0
  %708 = vmatprep.subr.mxu0 0.0
  %709 = vmatpush1.msra.mxu0 0.0
  %710 = vmatprep.subr.mxu0 0.0
  %711 = vmatpush1.msra.mxu0 0.0
  %712 = vmatprep.subr.mxu0 0.0
  %713 = vmatpush1.msra.mxu0 0.0
  %714 = vmatprep.subr.mxu0 0.0
  %715 = vmatpush1.msra.mxu0 0.0
  %716 = vmatprep.subr.mxu0 0.0
  %717 = vmatpush1.msra.mxu0 0.0
  %718 = vmatprep.subr.mxu0 0.0
  %719 = vmatpush1.msra.mxu0 0.0
  %720 = vmatprep.subr.mxu0 0.0
  %721 = vmatpush1.msra.mxu0 0.0
  %722 = vmatprep.subr.mxu0 0.0
  %723 = vmatpush1.msra.mxu0 0.0
  %724 = vmatprep.subr.mxu0 0.0
  %725 = vmatpush1.msra.mxu0 0.0
  %726 = vmatprep.subr.mxu0 0.0
  %727 = vmatpush1.msra.mxu0 0.0
  %728 = vmatprep.subr.mxu0 0.0
  %729 = vmatpush1.msra.mxu0 0.0
  %730 = vmatprep.subr.mxu0 0.0
  %731 = vmatpush1.msra.mxu0 0.0
  %732 = vmatprep.subr.mxu0 0.0
  %733 = vmatpush1.msra.mxu0 0.0
  %734 = vmatprep.subr.mxu0 0.0
  %735 = vmatpush1.msra.mxu0 0.0
  %736 = vmatprep.subr.mxu0 0.0
  %737 = vmatpush1.msra.mxu0 0.0
  %738 = vmatprep.subr.mxu0 0.0
  %739 = vmatpush1.msra.mxu0 0.0
  %740 = vmatprep.subr.mxu0 0.0
  %741 = vmatpush1.msra.mxu0 0.0
  %742 = vmatprep.subr.mxu0 0.0
  %743 = vmatpush1.msra.mxu0 0.0
  %744 = vmatprep.subr.mxu0 0.0
  %745 = vmatpush1.msra.mxu0 0.0
  %746 = vmatprep.subr.mxu0 0.0
  %747 = vmatpush1.msra.mxu0 0.0
  %748 = vmatprep.subr.mxu0 0.0
  %749 = vmatpush1.msra.mxu0 0.0
  %750 = vmatprep.subr.mxu0 0.0
  %751 = vmatpush1.msra.mxu0 0.0
  %752 = vmatprep.subr.mxu0 0.0
  %753 = vmatpush1.msra.mxu0 0.0
  %754 = vmatprep.subr.mxu0 0.0
  %755 = vmatpush1.msra.mxu0 0.0
  %756 = vmatprep.mubr.f32.mxu0 0.0
  %757 = vmatmul.mubr.f32.gmra.mrb[0].mxu0 %v687
  %v758 = vpop.f32.mrb[0].mxu0
  %v759 = vadd.f32 %v684, %v758
  %v760 = vpop.f32.mrb[0].mxu0
  %761 = vmatprep.mubr.f32.mxu0 0.0
  %762 = vmatmul.mubr.f32.gmra.mrb[0].mxu0 %v690
  %v763 = vpop.f32.mrb[0].mxu0
  %v764 = vadd.f32 %v684, %v763
  %v765 = vpop.f32.mrb[0].mxu0
  %766 = vdwg.mxu0
  %v767 = vsub.f32 0.0, %v759
  %v768 = vsub.f32 0.0, %v764
  %v769 = vmul.f32 %v767, 1.442695
  %v770 = vpow.pop %v769
  %v771 = vmul.f32 %v768, 1.442695
  %v772 = vpow.pop %v771
  %v773 = vadd.f32 %v770, 1.0
  %v774 = vadd.f32 %v772, 1.0
  %v775 = vrcp.pop %v773
  %v776 = vmul.f32 1.0, %v775
  %v777 = vrcp.pop %v774
  %v778 = vmul.f32 1.0, %v777
  %779 = vst.msk [vmem:[%s21] sm:$0xff] %vm124, %v776
  %780 = vst.msk [vmem:[%s21 + $0x8] sm:$0xff] %vm124, %v778
  %v781 = vld [vmem:[%s12] sm:$0xff]
  %v782 = vld [vmem:[%s12 + $0x8] sm:$0xff]
  %v783 = vld [vmem:[%s12 + $0x10] sm:$0xff]
  %v784 = vld [vmem:[%s12 + $0x18] sm:$0xff]
  %v785 = vld [vmem:[%s12 + $0x20] sm:$0xff]
  %v786 = vld [vmem:[%s12 + $0x28] sm:$0xff]
  %v787 = vld [vmem:[%s12 + $0x30] sm:$0xff]
  %v788 = vld [vmem:[%s12 + $0x38] sm:$0xff]
  %v790 = vsel %vm124, %v114, 0
  %v793 = vsel %vm124, %v115, 0
  %795 = vmatprep.subr.mxu0 0.0
  %796 = vmatpush1.msra.mxu0 %v781
  %797 = vmatprep.subr.mxu0 0.0
  %798 = vmatpush1.msra.mxu0 %v782
  %799 = vmatprep.subr.mxu0 0.0
  %800 = vmatpush1.msra.mxu0 %v783
  %801 = vmatprep.subr.mxu0 0.0
  %802 = vmatpush1.msra.mxu0 %v784
  %803 = vmatprep.subr.mxu0 0.0
  %804 = vmatpush1.msra.mxu0 %v785
  %805 = vmatprep.subr.mxu0 0.0
  %806 = vmatpush1.msra.mxu0 %v786
  %807 = vmatprep.subr.mxu0 0.0
  %808 = vmatpush1.msra.mxu0 %v787
  %809 = vmatprep.subr.mxu0 0.0
  %810 = vmatpush1.msra.mxu0 %v788
  %811 = vmatprep.subr.mxu0 0.0
  %812 = vmatpush1.msra.mxu0 0.0
  %813 = vmatprep.subr.mxu0 0.0
  %814 = vmatpush1.msra.mxu0 0.0
  %815 = vmatprep.subr.mxu0 0.0
  %816 = vmatpush1.msra.mxu0 0.0
  %817 = vmatprep.subr.mxu0 0.0
  %818 = vmatpush1.msra.mxu0 0.0
  %819 = vmatprep.subr.mxu0 0.0
  %820 = vmatpush1.msra.mxu0 0.0
  %821 = vmatprep.subr.mxu0 0.0
  %822 = vmatpush1.msra.mxu0 0.0
  %823 = vmatprep.subr.mxu0 0.0
  %824 = vmatpush1.msra.mxu0 0.0
  %825 = vmatprep.subr.mxu0 0.0
  %826 = vmatpush1.msra.mxu0 0.0
  %827 = vmatprep.subr.mxu0 0.0
  %828 = vmatpush1.msra.mxu0 0.0
  %829 = vmatprep.subr.mxu0 0.0
  %830 = vmatpush1.msra.mxu0 0.0
  %831 = vmatprep.subr.mxu0 0.0
  %832 = vmatpush1.msra.mxu0 0.0
  %833 = vmatprep.subr.mxu0 0.0
  %834 = vmatpush1.msra.mxu0 0.0
  %835 = vmatprep.subr.mxu0 0.0
  %836 = vmatpush1.msra.mxu0 0.0
  %837 = vmatprep.subr.mxu0 0.0
  %838 = vmatpush1.msra.mxu0 0.0
  %839 = vmatprep.subr.mxu0 0.0
  %840 = vmatpush1.msra.mxu0 0.0
  %841 = vmatprep.subr.mxu0 0.0
  %842 = vmatpush1.msra.mxu0 0.0
  %843 = vmatprep.subr.mxu0 0.0
  %844 = vmatpush1.msra.mxu0 0.0
  %845 = vmatprep.subr.mxu0 0.0
  %846 = vmatpush1.msra.mxu0 0.0
  %847 = vmatprep.subr.mxu0 0.0
  %848 = vmatpush1.msra.mxu0 0.0
  %849 = vmatprep.subr.mxu0 0.0
  %850 = vmatpush1.msra.mxu0 0.0
  %851 = vmatprep.subr.mxu0 0.0
  %852 = vmatpush1.msra.mxu0 0.0
  %853 = vmatprep.subr.mxu0 0.0
  %854 = vmatpush1.msra.mxu0 0.0
  %855 = vmatprep.subr.mxu0 0.0
  %856 = vmatpush1.msra.mxu0 0.0
  %857 = vmatprep.subr.mxu0 0.0
  %858 = vmatpush1.msra.mxu0 0.0
  %859 = vmatprep.mubr.f32.mxu0 0.0
  %860 = vmatmul.mubr.f32.gmra.mrb[0].mxu0 %v790
  %v861 = vpop.f32.mrb[0].mxu0
  %v862 = vadd.f32 0.0, %v861
  %v863 = vpop.f32.mrb[0].mxu0
  %864 = vmatprep.mubr.f32.mxu0 0.0
  %865 = vmatmul.mubr.f32.gmra.mrb[0].mxu0 %v793
  %v866 = vpop.f32.mrb[0].mxu0
  %v867 = vadd.f32 0.0, %v866
  %v868 = vpop.f32.mrb[0].mxu0
  %869 = vdwg.mxu0
  %v870 = vsub.f32 0.0, %v862
  %v871 = vsub.f32 0.0, %v867
  %v872 = vmul.f32 %v870, 1.442695
  %v873 = vpow.pop %v872
  %v874 = vmul.f32 %v871, 1.442695
  %v875 = vpow.pop %v874
  %v876 = vadd.f32 %v873, 1.0
  %v877 = vadd.f32 %v875, 1.0
  %v878 = vrcp.pop %v876
  %v879 = vmul.f32 1.0, %v878
  %v880 = vrcp.pop %v877
  %v881 = vmul.f32 1.0, %v880
  %v882 = vld [vmem:[%s13] sm:$0xff]
  %v883 = vld [vmem:[%s13 + $0x8] sm:$0xff]
  %v885 = vsel %vm490, %v879, 0
  %v888 = vsel %vm490, %v881, 0
  %890 = vmatprep.subr.mxu0 0.0
  %891 = vmatpush1.msra.mxu0 %v882
  %892 = vmatprep.subr.mxu0 0.0
  %893 = vmatpush1.msra.mxu0 %v883
  %894 = vmatprep.subr.mxu0 0.0
  %895 = vmatpush1.msra.mxu0 0.0
  %896 = vmatprep.subr.mxu0 0.0
  %897 = vmatpush1.msra.mxu0 0.0
  %898 = vmatprep.subr.mxu0 0.0
  %899 = vmatpush1.msra.mxu0 0.0
  %900 = vmatprep.subr.mxu0 0.0
  %901 = vmatpush1.msra.mxu0 0.0
  %902 = vmatprep.subr.mxu0 0.0
  %903 = vmatpush1.msra.mxu0 0.0
  %904 = vmatprep.subr.mxu0 0.0
  %905 = vmatpush1.msra.mxu0 0.0
  %906 = vmatprep.subr.mxu0 0.0
  %907 = vmatpush1.msra.mxu0 0.0
  %908 = vmatprep.subr.mxu0 0.0
  %909 = vmatpush1.msra.mxu0 0.0
  %910 = vmatprep.subr.mxu0 0.0
  %911 = vmatpush1.msra.mxu0 0.0
  %912 = vmatprep.subr.mxu0 0.0
  %913 = vmatpush1.msra.mxu0 0.0
  %914 = vmatprep.subr.mxu0 0.0
  %915 = vmatpush1.msra.mxu0 0.0
  %916 = vmatprep.subr.mxu0 0.0
  %917 = vmatpush1.msra.mxu0 0.0
  %918 = vmatprep.subr.mxu0 0.0
  %919 = vmatpush1.msra.mxu0 0.0
  %920 = vmatprep.subr.mxu0 0.0
  %921 = vmatpush1.msra.mxu0 0.0
  %922 = vmatprep.subr.mxu0 0.0
  %923 = vmatpush1.msra.mxu0 0.0
  %924 = vmatprep.subr.mxu0 0.0
  %925 = vmatpush1.msra.mxu0 0.0
  %926 = vmatprep.subr.mxu0 0.0
  %927 = vmatpush1.msra.mxu0 0.0
  %928 = vmatprep.subr.mxu0 0.0
  %929 = vmatpush1.msra.mxu0 0.0
  %930 = vmatprep.subr.mxu0 0.0
  %931 = vmatpush1.msra.mxu0 0.0
  %932 = vmatprep.subr.mxu0 0.0
  %933 = vmatpush1.msra.mxu0 0.0
  %934 = vmatprep.subr.mxu0 0.0
  %935 = vmatpush1.msra.mxu0 0.0
  %936 = vmatprep.subr.mxu0 0.0
  %937 = vmatpush1.msra.mxu0 0.0
  %938 = vmatprep.subr.mxu0 0.0
  %939 = vmatpush1.msra.mxu0 0.0
  %940 = vmatprep.subr.mxu0 0.0
  %941 = vmatpush1.msra.mxu0 0.0
  %942 = vmatprep.subr.mxu0 0.0
  %943 = vmatpush1.msra.mxu0 0.0
  %944 = vmatprep.subr.mxu0 0.0
  %945 = vmatpush1.msra.mxu0 0.0
  %946 = vmatprep.subr.mxu0 0.0
  %947 = vmatpush1.msra.mxu0 0.0
  %948 = vmatprep.subr.mxu0 0.0
  %949 = vmatpush1.msra.mxu0 0.0
  %950 = vmatprep.subr.mxu0 0.0
  %951 = vmatpush1.msra.mxu0 0.0
  %952 = vmatprep.subr.mxu0 0.0
  %953 = vmatpush1.msra.mxu0 0.0
  %954 = vmatprep.mubr.f32.mxu0 0.0
  %955 = vmatmul.mubr.f32.gmra.mrb[0].mxu0 %v885
  %v956 = vpop.f32.mrb[0].mxu0
  %v957 = vadd.f32 0.0, %v956
  %v958 = vpop.f32.mrb[0].mxu0
  %959 = vmatprep.mubr.f32.mxu0 0.0
  %960 = vmatmul.mubr.f32.gmra.mrb[0].mxu0 %v888
  %v961 = vpop.f32.mrb[0].mxu0
  %v962 = vadd.f32 0.0, %v961
  %v963 = vpop.f32.mrb[0].mxu0
  %964 = vdwg.mxu0
  %965 = vst.msk [vmem:[%s22] sm:$0xff] %vm124, %v957
  %966 = vst.msk [vmem:[%s22 + $0x8] sm:$0xff] %vm124, %v962
  %v967 = vld [vmem:[%s14] sm:$0xff]
  %v968 = vld [vmem:[%s14 + $0x8] sm:$0xff]
  %v969 = vld [vmem:[%s14 + $0x10] sm:$0xff]
  %v970 = vld [vmem:[%s14 + $0x18] sm:$0xff]
  %v971 = vld [vmem:[%s14 + $0x20] sm:$0xff]
  %v972 = vld [vmem:[%s14 + $0x28] sm:$0xff]
  %v973 = vld [vmem:[%s14 + $0x30] sm:$0xff]
  %v974 = vld [vmem:[%s14 + $0x38] sm:$0xff]
  %975 = vmatprep.subr.mxu0 0.0
  %976 = vmatpush1.msra.mxu0 %v967
  %977 = vmatprep.subr.mxu0 0.0
  %978 = vmatpush1.msra.mxu0 %v968
  %979 = vmatprep.subr.mxu0 0.0
  %980 = vmatpush1.msra.mxu0 %v969
  %981 = vmatprep.subr.mxu0 0.0
  %982 = vmatpush1.msra.mxu0 %v970
  %983 = vmatprep.subr.mxu0 0.0
  %984 = vmatpush1.msra.mxu0 %v971
  %985 = vmatprep.subr.mxu0 0.0
  %986 = vmatpush1.msra.mxu0 %v972
  %987 = vmatprep.subr.mxu0 0.0
  %988 = vmatpush1.msra.mxu0 %v973
  %989 = vmatprep.subr.mxu0 0.0
  %990 = vmatpush1.msra.mxu0 %v974
  %991 = vmatprep.subr.mxu0 0.0
  %992 = vmatpush1.msra.mxu0 0.0
  %993 = vmatprep.subr.mxu0 0.0
  %994 = vmatpush1.msra.mxu0 0.0
  %995 = vmatprep.subr.mxu0 0.0
  %996 = vmatpush1.msra.mxu0 0.0
  %997 = vmatprep.subr.mxu0 0.0
  %998 = vmatpush1.msra.mxu0 0.0
  %999 = vmatprep.subr.mxu0 0.0
  %1000 = vmatpush1.msra.mxu0 0.0
  %1001 = vmatprep.subr.mxu0 0.0
  %1002 = vmatpush1.msra.mxu0 0.0
  %1003 = vmatprep.subr.mxu0 0.0
  %1004 = vmatpush1.msra.mxu0 0.0
  %1005 = vmatprep.subr.mxu0 0.0
  %1006 = vmatpush1.msra.mxu0 0.0
  %1007 = vmatprep.subr.mxu0 0.0
  %1008 = vmatpush1.msra.mxu0 0.0
  %1009 = vmatprep.subr.mxu0 0.0
  %1010 = vmatpush1.msra.mxu0 0.0
  %1011 = vmatprep.subr.mxu0 0.0
  %1012 = vmatpush1.msra.mxu0 0.0
  %1013 = vmatprep.subr.mxu0 0.0
  %1014 = vmatpush1.msra.mxu0 0.0
  %1015 = vmatprep.subr.mxu0 0.0
  %1016 = vmatpush1.msra.mxu0 0.0
  %1017 = vmatprep.subr.mxu0 0.0
  %1018 = vmatpush1.msra.mxu0 0.0
  %1019 = vmatprep.subr.mxu0 0.0
  %1020 = vmatpush1.msra.mxu0 0.0
  %1021 = vmatprep.subr.mxu0 0.0
  %1022 = vmatpush1.msra.mxu0 0.0
  %1023 = vmatprep.subr.mxu0 0.0
  %1024 = vmatpush1.msra.mxu0 0.0
  %1025 = vmatprep.subr.mxu0 0.0
  %1026 = vmatpush1.msra.mxu0 0.0
  %1027 = vmatprep.subr.mxu0 0.0
  %1028 = vmatpush1.msra.mxu0 0.0
  %1029 = vmatprep.subr.mxu0 0.0
  %1030 = vmatpush1.msra.mxu0 0.0
  %1031 = vmatprep.subr.mxu0 0.0
  %1032 = vmatpush1.msra.mxu0 0.0
  %1033 = vmatprep.subr.mxu0 0.0
  %1034 = vmatpush1.msra.mxu0 0.0
  %1035 = vmatprep.subr.mxu0 0.0
  %1036 = vmatpush1.msra.mxu0 0.0
  %1037 = vmatprep.subr.mxu0 0.0
  %1038 = vmatpush1.msra.mxu0 0.0
  %1039 = vmatprep.mubr.f32.mxu0 0.0
  %1040 = vmatmul.mubr.f32.gmra.mrb[0].mxu0 %v308
  %v1041 = vpop.f32.mrb[0].mxu0
  %v1042 = vadd.f32 0.0, %v1041
  %v1043 = vpop.f32.mrb[0].mxu0
  %1044 = vmatprep.mubr.f32.mxu0 0.0
  %1045 = vmatmul.mubr.f32.gmra.mrb[0].mxu0 %v311
  %v1046 = vpop.f32.mrb[0].mxu0
  %v1047 = vadd.f32 0.0, %v1046
  %v1048 = vpop.f32.mrb[0].mxu0
  %1049 = vdwg.mxu0
  %v1050 = vld [vmem:[%s15] sm:$0xff]
  %v1051 = vld [vmem:[%s16] sm:$0x1]
  %v1053 = vlaneseq
  %v1054 = vshrl.u32 %v1053, 7
  %v1055 = vsub.s32 0, %v1054
  %v1056 = vrot.slane %v1051, %v1055
  %vm1058 = vcmask 64512
  %v1060 = vsel %vm1058, %v1042, 0
  %v1063 = vsel %vm1058, %v1047, 0
  %1065 = vmatprep.subr.mxu0 0.0
  %1066 = vmatpush1.msra.mxu0 %v1050
  %1067 = vmatprep.subr.mxu0 0.0
  %1068 = vmatpush1.msra.mxu0 0.0
  %1069 = vmatprep.subr.mxu0 0.0
  %1070 = vmatpush1.msra.mxu0 0.0
  %1071 = vmatprep.subr.mxu0 0.0
  %1072 = vmatpush1.msra.mxu0 0.0
  %1073 = vmatprep.subr.mxu0 0.0
  %1074 = vmatpush1.msra.mxu0 0.0
  %1075 = vmatprep.subr.mxu0 0.0
  %1076 = vmatpush1.msra.mxu0 0.0
  %1077 = vmatprep.subr.mxu0 0.0
  %1078 = vmatpush1.msra.mxu0 0.0
  %1079 = vmatprep.subr.mxu0 0.0
  %1080 = vmatpush1.msra.mxu0 0.0
  %1081 = vmatprep.subr.mxu0 0.0
  %1082 = vmatpush1.msra.mxu0 0.0
  %1083 = vmatprep.subr.mxu0 0.0
  %1084 = vmatpush1.msra.mxu0 0.0
  %1085 = vmatprep.subr.mxu0 0.0
  %1086 = vmatpush1.msra.mxu0 0.0
  %1087 = vmatprep.subr.mxu0 0.0
  %1088 = vmatpush1.msra.mxu0 0.0
  %1089 = vmatprep.subr.mxu0 0.0
  %1090 = vmatpush1.msra.mxu0 0.0
  %1091 = vmatprep.subr.mxu0 0.0
  %1092 = vmatpush1.msra.mxu0 0.0
  %1093 = vmatprep.subr.mxu0 0.0
  %1094 = vmatpush1.msra.mxu0 0.0
  %1095 = vmatprep.subr.mxu0 0.0
  %1096 = vmatpush1.msra.mxu0 0.0
  %1097 = vmatprep.subr.mxu0 0.0
  %1098 = vmatpush1.msra.mxu0 0.0
  %1099 = vmatprep.subr.mxu0 0.0
  %1100 = vmatpush1.msra.mxu0 0.0
  %1101 = vmatprep.subr.mxu0 0.0
  %1102 = vmatpush1.msra.mxu0 0.0
  %1103 = vmatprep.subr.mxu0 0.0
  %1104 = vmatpush1.msra.mxu0 0.0
  %1105 = vmatprep.subr.mxu0 0.0
  %1106 = vmatpush1.msra.mxu0 0.0
  %1107 = vmatprep.subr.mxu0 0.0
  %1108 = vmatpush1.msra.mxu0 0.0
  %1109 = vmatprep.subr.mxu0 0.0
  %1110 = vmatpush1.msra.mxu0 0.0
  %1111 = vmatprep.subr.mxu0 0.0
  %1112 = vmatpush1.msra.mxu0 0.0
  %1113 = vmatprep.subr.mxu0 0.0
  %1114 = vmatpush1.msra.mxu0 0.0
  %1115 = vmatprep.subr.mxu0 0.0
  %1116 = vmatpush1.msra.mxu0 0.0
  %1117 = vmatprep.subr.mxu0 0.0
  %1118 = vmatpush1.msra.mxu0 0.0
  %1119 = vmatprep.subr.mxu0 0.0
  %1120 = vmatpush1.msra.mxu0 0.0
  %1121 = vmatprep.subr.mxu0 0.0
  %1122 = vmatpush1.msra.mxu0 0.0
  %1123 = vmatprep.subr.mxu0 0.0
  %1124 = vmatpush1.msra.mxu0 0.0
  %1125 = vmatprep.subr.mxu0 0.0
  %1126 = vmatpush1.msra.mxu0 0.0
  %1127 = vmatprep.subr.mxu0 0.0
  %1128 = vmatpush1.msra.mxu0 0.0
  %1129 = vmatprep.mubr.f32.mxu0 0.0
  %1130 = vmatmul.mubr.f32.gmra.mrb[0].mxu0 %v1060
  %v1131 = vpop.f32.mrb[0].mxu0
  %v1132 = vadd.f32 %v1056, %v1131
  %v1133 = vpop.f32.mrb[0].mxu0
  %1134 = vmatprep.mubr.f32.mxu0 0.0
  %1135 = vmatmul.mubr.f32.gmra.mrb[0].mxu0 %v1063
  %v1136 = vpop.f32.mrb[0].mxu0
  %v1137 = vadd.f32 %v1056, %v1136
  %v1138 = vpop.f32.mrb[0].mxu0
  %1139 = vdwg.mxu0
  %v1140 = vsub.f32 0.0, %v1132
  %v1141 = vsub.f32 0.0, %v1137
  %v1142 = vmul.f32 %v1140, 1.442695
  %v1143 = vpow.pop %v1142
  %v1144 = vmul.f32 %v1141, 1.442695
  %v1145 = vpow.pop %v1144
  %v1146 = vadd.f32 %v1143, 1.0
  %v1147 = vadd.f32 %v1145, 1.0
  %v1148 = vrcp.pop %v1146
  %v1149 = vmul.f32 1.0, %v1148
  %v1150 = vrcp.pop %v1147
  %v1151 = vmul.f32 1.0, %v1150
  %1152 = vst.msk [vmem:[%s23] sm:$0xff] %vm124, %v1149
  %1153 = vst.msk [vmem:[%s23 + $0x8] sm:$0xff] %vm124, %v1151
  // Predicated region
  $region70: #{rwkv7_forward.29} parent=0 // pred_check
    _
  $region71: #{rwkv7_forward.29} parent=0 // pred_check_branch
    %1155 = sbr.rel (0) target = $region73
  $region72: #{rwkv7_forward.29} parent=0 // pred_region
    _
  $region73: #{rwkv7_forward.29} parent=0 // pred_fallthru
    _
  // Predicated region
  $region74: #{rwkv7_forward.29} parent=0 // pred_check
    _
  $region75: #{rwkv7_forward.29} parent=0 // pred_check_branch
    %1157 = sbr.rel (0) target = $region77
  $region76: #{rwkv7_forward.29} parent=0 // pred_region
    _
  $region77: #{rwkv7_forward.29} parent=0 // pred_fallthru
    _
  // Predicated region
  $region78: #{rwkv7_forward.29} parent=0 // pred_check
    _
  $region79: #{rwkv7_forward.29} parent=0 // pred_check_branch
    %1159 = sbr.rel (0) target = $region81
  $region80: #{rwkv7_forward.29} parent=0 // pred_region
    _
  $region81: #{rwkv7_forward.29} parent=0 // pred_fallthru
    _
  // Predicated region
  $region82: #{rwkv7_forward.29} parent=0 // pred_check
    _
  $region83: #{rwkv7_forward.29} parent=0 // pred_check_branch
    %1161 = sbr.rel (0) target = $region85
  $region84: #{rwkv7_forward.29} parent=0 // pred_region
    _
  $region85: #{rwkv7_forward.29} parent=0 // pred_fallthru
    _
  // Predicated region
  $region86: #{rwkv7_forward.29} parent=0 // pred_check
    _
  $region87: #{rwkv7_forward.29} parent=0 // pred_check_branch
    %1163 = sbr.rel (0) target = $region89
  $region88: #{rwkv7_forward.29} parent=0 // pred_region
    _
  $region89: #{rwkv7_forward.29} parent=0 // pred_fallthru
    _
  // Predicated region
  $region90: #{rwkv7_forward.29} parent=0 // pred_check
    _
  $region91: #{rwkv7_forward.29} parent=0 // pred_check_branch
    %1165 = sbr.rel (0) target = $region93
  $region92: #{rwkv7_forward.29} parent=0 // pred_region
    _
  $region93: #{rwkv7_forward.29} parent=0 // pred_fallthru
    _
  // Predicated region
  $region94: #{rwkv7_forward.29} parent=0 // pred_check
    _
  $region95: #{rwkv7_forward.29} parent=0 // pred_check_branch
    %1167 = sbr.rel (0) target = $region97
  $region96: #{rwkv7_forward.29} parent=0 // pred_region
    _
  $region97: #{rwkv7_forward.29} parent=0 // pred_fallthru
    _
  // Predicated region
  $region98: #{rwkv7_forward.29} parent=0 // pred_check
    _
  $region99: #{rwkv7_forward.29} parent=0 // pred_check_branch
    %1169 = sbr.rel (0) target = $region101
  $region100: #{rwkv7_forward.29} parent=0 // pred_region
    _
  $region101: #{rwkv7_forward.29} parent=0 // pred_fallthru
    _
  // Predicated region
  $region102: #{rwkv7_forward.29} parent=0 // pred_check
    _
  $region103: #{rwkv7_forward.29} parent=0 // pred_check_branch
    %1171 = sbr.rel (0) target = $region105
  $region104: #{rwkv7_forward.29} parent=0 // pred_region
    _
  $region105: #{rwkv7_forward.29} parent=0 // pred_fallthru
    _
  // Predicated region
  $region106: #{rwkv7_forward.29} parent=0 // pred_check
    _
  $region107: #{rwkv7_forward.29} parent=0 // pred_check_branch
    %1173 = sbr.rel (0) target = $region109
  $region108: #{rwkv7_forward.29} parent=0 // pred_region
    _
  $region109: #{rwkv7_forward.29} parent=0 // pred_fallthru
    _
  // Predicated region
  $region110: #{rwkv7_forward.29} parent=0 // pred_check
    _
  $region111: #{rwkv7_forward.29} parent=0 // pred_check_branch
    %1175 = sbr.rel (0) target = $region113
  $region112: #{rwkv7_forward.29} parent=0 // pred_region
    _
  $region113: #{rwkv7_forward.29} parent=0 // pred_fallthru
    _
  // Predicated region
  $region114: #{rwkv7_forward.29} parent=0 // pred_check
    _
  $region115: #{rwkv7_forward.29} parent=0 // pred_check_branch
    %1177 = sbr.rel (0) target = $region117
  $region116: #{rwkv7_forward.29} parent=0 // pred_region
    _
  $region117: #{rwkv7_forward.29} parent=0 // pred_fallthru
    _
  // Predicated region
  $region118: #{rwkv7_forward.29} parent=0 // pred_check
    _
  $region119: #{rwkv7_forward.29} parent=0 // pred_check_branch
    %1179 = sbr.rel (0) target = $region121
  $region120: #{rwkv7_forward.29} parent=0 // pred_region
    _
  $region121: #{rwkv7_forward.29} parent=0 // pred_fallthru
    _
  // Predicated region
  $region122: #{rwkv7_forward.29} parent=0 // pred_check
    _
  $region123: #{rwkv7_forward.29} parent=0 // pred_check_branch
    %1181 = sbr.rel (0) target = $region125
  $region124: #{rwkv7_forward.29} parent=0 // pred_region
    _
  $region125: #{rwkv7_forward.29} parent=0 // pred_fallthru
    _

</llo_original>
